<compile_context>
chip_gen: v7x
topology: tpu7x:2x2x1
jax: 0.10.0
libtpu: 0.0.40
codegen_flags: <defaults>
</compile_context>

<pallas_src>
import math
import functools

import jax
import jax.numpy as jnp
from jax.experimental import pallas as pl
from jax.experimental.pallas import tpu as pltpu


# ----------------------------------------------------------------------------
# Kernel helpers
# ----------------------------------------------------------------------------
def _gelu_exact(x):
    # torch nn.GELU() default = exact erf formulation (kept for strict parity;
    # the tanh approximation would move this work to the otherwise-idle EUP).
    return 0.5 * x * (1.0 + jax.lax.erf(x * (1.0 / math.sqrt(2.0))))


def _ln_fused(x, gamma, beta, eps):
    # Single-pass LayerNorm statistics: var = E[x^2] - mu^2.  One elementwise
    # traversal instead of two; the cross-lane reduces stay on the XLU slot.
    mu = jnp.mean(x, axis=-1, keepdims=True)
    m2 = jnp.mean(x * x, axis=-1, keepdims=True)
    var = jnp.maximum(m2 - mu * mu, 0.0)
    return (x - mu) * jax.lax.rsqrt(var + eps) * gamma + beta


# ----------------------------------------------------------------------------
# Pallas kernel
# ----------------------------------------------------------------------------
def _gmlp_kernel(x_ref, g1_ref, b1_ref, wi_ref, bi_ref, g2_ref, b2_ref,
                 w0_ref, b0_ref, wo_ref, bo_ref, o_ref, *,
                 fuse_in, lane_dense_out):
    eps = jnp.float32(1e-5)
    ntok, tb, c = x_ref.shape            # (Ntok, T, C) token-major block
    chh = wo_ref.shape[0]                # C * factor // 2

    # Flatten to a single 2-D slab.  T % 8 == 0 -> sublane-preserving reshape.
    # Rows [s*T:(s+1)*T] hold token s of every block in this tile.
    xf = x_ref[...].astype(jnp.float32).reshape(ntok * tb, c)

    # ---- LayerNorm over channels (f32, fused stats) ----
    xn16 = _ln_fused(xf, g1_ref[...], b1_ref[...], eps).astype(jnp.bfloat16)

    # ---- in_project (bf16 operands, f32 accumulate) ----
    wi = wi_ref[...]                     # (C, CH) bf16
    bi = bi_ref[...]                     # (1, CH) f32
    if fuse_in:
        # chh % 128 == 0: one MXU matmul, lane-tile-aligned split of the result.
        h = jnp.dot(xn16, wi, preferred_element_type=jnp.float32) + bi
        u, v = h[:, :chh], h[:, chh:]
    else:
        # Split the (small) weight instead of the big activation.
        u = jnp.dot(xn16, wi[:, :chh],
                    preferred_element_type=jnp.float32) + bi[:, :chh]
        v = jnp.dot(xn16, wi[:, chh:],
                    preferred_element_type=jnp.float32) + bi[:, chh:]
    u = _gelu_exact(u)
    v = _gelu_exact(v)

    # ---- LayerNorm on v over its channel half (f32, fused stats) ----
    vn = _ln_fused(v, g2_ref[...], b2_ref[...], eps)

    # ---- token mixing on the VPU: vmix_t = sum_s W0[t,s] * v_s + b0[t] ----
    # W0 / b0 are SMEM scalars -> sreg-broadcast MACs; Ntok is small.
    # TODO(synk): for Ntok >= ~16 switch this Ntok^2 unrolled MAC to a
    # fori_loop / MXU formulation to bound code size and VALU work.
    v_rows = [vn[s * tb:(s + 1) * tb, :] for s in range(ntok)]
    vmix_rows = []
    for t in range(ntok):
        acc = w0_ref[t, 0] * v_rows[0]
        for s in range(1, ntok):
            acc = acc + w0_ref[t, s] * v_rows[s]
        vmix_rows.append(acc + (b0_ref[t] + 1.0))    # fold the gMLP "+1"
    vmix = jnp.concatenate(vmix_rows, axis=0)        # (Ntok*T, chh) sublane concat

    # ---- gate, out_project (ONE matmul), residual, ONE bulk store ----
    g16 = (u * vmix).astype(jnp.bfloat16)
    out = jnp.dot(g16, wo_ref[...], preferred_element_type=jnp.float32)
    out = out + bo_ref[...] + xf

    if lane_dense_out:
        # (Ntok*T, C) -> (T, Ntok*C): lane-dense slab, single unmasked store.
        slab = jnp.concatenate(
            [out[s * tb:(s + 1) * tb, :] for s in range(ntok)], axis=-1)
        o_ref[...] = slab.astype(o_ref.dtype)
    else:
        o_ref[...] = out.reshape(ntok, tb, c).astype(o_ref.dtype)


# ----------------------------------------------------------------------------
# Tile selection: per-generation VMEM budget, even steps on 2-TC chips.
# ----------------------------------------------------------------------------
def _round_up(x, m):
    return (x + m - 1) // m * m


def _vmem_capacity_bytes():
    try:
        info = pltpu.get_tpu_info()
        cap = getattr(info, "vmem_capacity_bytes", None)
        if cap:
            return int(cap)
    except Exception:
        pass
    return 64 * 1024 * 1024          # v7x-safe fallback (conservative on v5e/v6e)


def _num_tensorcores():
    # Best-effort detection of 2-TensorCore chips (megacore v4/v5p, v7x).
    try:
        d = jax.devices()[0]
        if d.platform != "tpu":
            return 1
        kind = str(getattr(d, "device_kind", "")).lower()
        if ("v7" in kind) or ("v4" in kind) or ("v5p" in kind):
            return 2
    except Exception:
        pass
    return 1


def _choose_tile(M, Ntok, C, chh, x_bytes, out_bytes):
    """Largest M-tile T (and grid step count) fitting the VMEM budget."""
    cap = _vmem_capacity_bytes()
    budget = int(cap * 0.45)                      # headroom for compiler scratch
    CH = 2 * chh
    # Constant operands (single-buffered weights; generous x2 margin) + biases.
    fixed = 2 * 2 * (C * CH + chh * C) + 64 * 1024
    # Bytes that scale with T: double-buffered in/out tiles + f32/bf16 temps
    # (xf, xn, u, v, vn, vmix, out, slab, bf16 copies).
    per_t = Ntok * (2 * C * x_bytes + 2 * C * out_bytes
                    + 4 * (4 * C + 4 * chh)
                    + 2 * (C + chh))
    t_budget = max(8, max(budget - fixed, 0) // max(per_t, 1))
    steps = max(1, -(-M // t_budget))
    if _num_tensorcores() >= 2:
        # Even step count >= 2 so ("parallel",) balances the two TensorCores
        # (avoids one core doing a mostly-padded tail tile).
        steps = max(2, steps)
        steps += steps % 2
    t = _round_up(max(8, -(-M // steps)), 8)
    return int(t), int(steps), cap


def _const_spec(shape):
    """BlockSpec for a constant-index operand, single-buffered to save VMEM."""
    index_map = lambda i: (0,) * len(shape)
    try:
        return pl.BlockSpec(shape, index_map, pipeline_mode=pl.Buffered(1))
    except (TypeError, ValueError):
        # Fallback: default (double-buffered) behavior.
        return pl.BlockSpec(shape, index_map)


# ----------------------------------------------------------------------------
# pallas_call wrapper on the blocked token-major layout (Ntok, M, C).
# Returns block-major (M, Ntok, C).
# ----------------------------------------------------------------------------
def _gmlp_blocks_pallas(xb, params):
    Ntok, M, C = xb.shape
    wi = params['wi']                    # (CH, C)      torch Linear (out, in)
    wo = params['wo']                    # (C, CH//2)
    CH = wi.shape[0]
    chh = CH // 2
    fuse_in = (chh % 128 == 0)
    lane_dense_out = (C < 128)

    x_bytes = jnp.dtype(xb.dtype).itemsize
    T, steps, vmem_cap = _choose_tile(M, Ntok, C, chh, x_bytes, x_bytes)
    M_pad = T * steps
    if M_pad != M:
        # Padded rows go through LN with var=0 -> rsqrt(eps) on zeros: benign
        # (finite, no NaN), and they are cropped right after the kernel.
        xb = jnp.pad(xb, ((0, 0), (0, M_pad - M), (0, 0)))

    # Weight prep: bf16 matmul operands, f32 LN params / biases.
    wi_t = wi.T.astype(jnp.bfloat16)                  # (C, CH)
    wo_t = wo.T.astype(jnp.bfloat16)                  # (chh, C)
    g1 = params['ln1_g'].reshape(1, C).astype(jnp.float32)
    b1 = params['ln1_b'].reshape(1, C).astype(jnp.float32)
    bi = params['bi'].reshape(1, CH).astype(jnp.float32)
    g2 = params['ln2_g'].reshape(1, chh).astype(jnp.float32)
    b2 = params['ln2_b'].reshape(1, chh).astype(jnp.float32)
    w0 = params['w0'].astype(jnp.float32)             # (Ntok, Ntok) -> SMEM
    b0 = params['b0'].astype(jnp.float32)             # (Ntok,)      -> SMEM
    bo = params['bo'].reshape(1, C).astype(jnp.float32)

    smem_spec = pl.BlockSpec(memory_space=pltpu.MemorySpace.SMEM)

    if lane_dense_out:
        out_shape = jax.ShapeDtypeStruct((M_pad, Ntok * C), xb.dtype)
        out_spec = pl.BlockSpec((T, Ntok * C), lambda i: (i, 0))
    else:
        out_shape = jax.ShapeDtypeStruct((Ntok, M_pad, C), xb.dtype)
        out_spec = pl.BlockSpec((Ntok, T, C), lambda i: (0, i, 0))

    kernel = functools.partial(_gmlp_kernel, fuse_in=fuse_in,
                               lane_dense_out=lane_dense_out)

    out = pl.pallas_call(
        kernel,
        out_shape=out_shape,
        grid_spec=pltpu.PrefetchScalarGridSpec(
            num_scalar_prefetch=0,
            grid=(steps,),
            in_specs=[
                pl.BlockSpec((Ntok, T, C), lambda i: (0, i, 0)),   # x tile
                _const_spec((1, C)), _const_spec((1, C)),          # LN1 gamma/beta
                _const_spec((C, CH)), _const_spec((1, CH)),        # in_project W, b
                _const_spec((1, chh)), _const_spec((1, chh)),      # LN2 gamma/beta
                smem_spec, smem_spec,                              # token-mix W0, b0
                _const_spec((chh, C)), _const_spec((1, C)),        # out_project W, b
            ],
            out_specs=out_spec,
        ),
        compiler_params=pltpu.CompilerParams(
            dimension_semantics=("parallel",),
            # Scoped limit derived from (but safely below) physical VMEM.
            vmem_limit_bytes=min(int(vmem_cap * 0.85), 112 * 1024 * 1024),
        ),
    )(xb, g1, b1, wi_t, bi, g2, b2, w0, b0, wo_t, bo)

    if lane_dense_out:
        out = out[:M].reshape(M, Ntok, C)
    else:
        out = jnp.transpose(out[:, :M, :], (1, 0, 2))
    return out                                        # (M, Ntok, C)


# ----------------------------------------------------------------------------
# Public wrapper: pad, block (token-major), run kernel, unblock, crop.
# ----------------------------------------------------------------------------
def block_gmlp_layer(x, params, block_size):
    fh, fw, fd = block_size
    B, H, W, D, C = x.shape
    pad_h, pad_w, pad_d = (-H) % fh, (-W) % fw, (-D) % fd
    if pad_h or pad_w or pad_d:
        # Matches the PyTorch module: spatial zero-padding happens BEFORE the
        # per-block LayerNorm / token mixing, and the result is cropped after.
        x = jnp.pad(x, ((0, 0), (0, pad_h), (0, pad_w), (0, pad_d), (0, 0)))
    Hp, Wp, Dp = H + pad_h, W + pad_w, D + pad_d
    gh, gw, gd = Hp // fh, Wp // fw, Dp // fd
    Ntok, M = fh * fw * fd, B * gh * gw * gd

    # n (gh fh)(gw fw)(gd fd) c  ->  (fh fw fd) (n gh gw gd) c   (token-major)
    xb = x.reshape(B, gh, fh, gw, fw, gd, fd, C)
    xb = xb.transpose(2, 4, 6, 0, 1, 3, 5, 7).reshape(Ntok, M, C)

    yb = _gmlp_blocks_pallas(xb, params)              # (M, Ntok, C) block-major

    # TODO(synk): this un-blocking transpose is still a separate XLA op (one
    # extra HBM pass on the output); fusing it into the consumer would matter
    # most on v5e's lower HBM bandwidth.
    y = yb.reshape(B, gh, gw, gd, fh, fw, fd, C).transpose(0, 1, 4, 2, 5, 3, 6, 7)
    y = y.reshape(B, Hp, Wp, Dp, C)
    if pad_h or pad_w or pad_d:
        y = y[:, :H, :W, :D, :]
    return y


# ----------------------------------------------------------------------------
# Pure-JAX reference (same math, no Pallas).  matmul_dtype=bfloat16 mirrors
# the kernel's bf16-operand / f32-accumulate matmuls for a tight comparison.
# ----------------------------------------------------------------------------
def _ln(x, g, b, eps=1e-5):
    mu = jnp.mean(x, axis=-1, keepdims=True)
    var = jnp.mean(jnp.square(x - mu), axis=-1, keepdims=True)
    return (x - mu) * jax.lax.rsqrt(var + eps) * g + b


def block_gmlp_layer_ref(x, params, block_size, matmul_dtype=jnp.float32):
    fh, fw, fd = block_size
    B, H, W, D, C = x.shape
    pad_h, pad_w, pad_d = (-H) % fh, (-W) % fw, (-D) % fd
    x = jnp.pad(x, ((0, 0), (0, pad_h), (0, pad_w), (0, pad_d), (0, 0)))
    Hp, Wp, Dp = H + pad_h, W + pad_w, D + pad_d
    gh, gw, gd = Hp // fh, Wp // fw, Dp // fd
    xb = x.reshape(B, gh, fh, gw, fw, gd, fd, C).transpose(0, 1, 3, 5, 2, 4, 6, 7)
    xb = xb.reshape(B, gh * gw * gd, fh * fw * fd, C)

    shortcut = xb
    h = _ln(xb, params['ln1_g'], params['ln1_b'])
    h = jnp.dot(h.astype(matmul_dtype), params['wi'].T.astype(matmul_dtype),
                preferred_element_type=jnp.float32) + params['bi']
    h = jax.nn.gelu(h, approximate=False)
    ch = h.shape[-1] // 2
    u, v = h[..., :ch], h[..., ch:]
    v = _ln(v, params['ln2_g'], params['ln2_b'])
    v = jnp.einsum('ts,ngsc->ngtc', params['w0'], v) + params['b0'][:, None]
    g = u * (v + 1.0)
    out = jnp.dot(g.astype(matmul_dtype), params['wo'].T.astype(matmul_dtype),
                  preferred_element_type=jnp.float32) + params['bo']
    yb = out + shortcut

    y = yb.reshape(B, gh, gw, gd, fh, fw, fd, C).transpose(0, 1, 4, 2, 5, 3, 6, 7)
    y = y.reshape(B, Hp, Wp, Dp, C)
    return y[:, :H, :W, :D, :]


# ----------------------------------------------------------------------------
# Deterministic parameter init (shapes from BlockGmlpLayer.__init__).
# ----------------------------------------------------------------------------
def init_params(key, num_channels, block_size, factor=2):
    fh, fw, fd = block_size
    n = fh * fw * fd
    c = num_channels
    ch = c * factor
    k = jax.random.split(key, 6)
    return {
        'ln1_g': jnp.ones((c,), jnp.float32),
        'ln1_b': jnp.zeros((c,), jnp.float32),
        'wi': 0.05 * jax.random.normal(k[0], (ch, c), jnp.float32),
        'bi': 0.01 * jax.random.normal(k[1], (ch,), jnp.float32),
        'ln2_g': jnp.ones((ch // 2,), jnp.float32),
        'ln2_b': jnp.zeros((ch // 2,), jnp.float32),
        'w0': 0.05 * jax.random.normal(k[2], (n, n), jnp.float32),
        'b0': 0.01 * jax.random.normal(k[3], (n,), jnp.float32),
        'wo': 0.05 * jax.random.normal(k[4], (c, ch // 2), jnp.float32),
        'bo': 0.01 * jax.random.normal(k[5], (c,), jnp.float32),
    }
    # TODO(synk): dropout_rate=0.0 in the reference forward -> identity, omitted.


if __name__ == "__main__":
    key = jax.random.PRNGKey(0)
    kx, kp = jax.random.split(key)

    # Small but non-trivial shapes: batch=2, H=7 (exercises spatial padding),
    # W=8, D=6, C=32, block_size=(2,2,2) -> 8 tokens/block, 96 blocks total.
    B, H, W, D, C = 2, 7, 8, 6, 32
    block_size = (2, 2, 2)

    x = jax.random.normal(kx, (B, H, W, D, C), jnp.float32)
    params = init_params(kp, C, block_size, factor=2)

    fn = jax.jit(functools.partial(block_gmlp_layer, block_size=block_size))
    y = jax.block_until_ready(fn(x, params))
    assert y.shape == (B, H, W, D, C)

    # Tight check vs a reference that uses the same bf16-operand matmuls.
    y_ref_bf16 = block_gmlp_layer_ref(x, params, block_size,
                                      matmul_dtype=jnp.bfloat16)
    err_b = float(jnp.max(jnp.abs(y - y_ref_bf16)))
    assert err_b < 2e-3, f"mismatch vs bf16-matmul reference, max abs err = {err_b}"

    # Loose check vs the full-f32 reference (bf16 MXU rounding only).
    y_ref_f32 = block_gmlp_layer_ref(x, params, block_size,
                                     matmul_dtype=jnp.float32)
    err_f = float(jnp.max(jnp.abs(y - y_ref_f32)))
    assert err_f < 3e-2, f"mismatch vs f32 reference, max abs err = {err_f}"

    print("KERNEL_OK")
</pallas_src>

<mosaic_0001>
module attributes {stable_mosaic.version = 11 : i64} {
  func.func @_gmlp_kernel(%arg0: i32, %arg1: memref<8x96x32xf32, #tpu.memory_space<vmem>>, %arg2: memref<1x32xf32, #tpu.memory_space<vmem>>, %arg3: memref<1x32xf32, #tpu.memory_space<vmem>>, %arg4: memref<32x64xbf16, #tpu.memory_space<vmem>>, %arg5: memref<1x64xf32, #tpu.memory_space<vmem>>, %arg6: memref<1x32xf32, #tpu.memory_space<vmem>>, %arg7: memref<1x32xf32, #tpu.memory_space<vmem>>, %arg8: memref<8x8xf32, #tpu.memory_space<smem>>, %arg9: memref<8xf32, #tpu.memory_space<smem>>, %arg10: memref<32x32xbf16, #tpu.memory_space<vmem>>, %arg11: memref<1x32xf32, #tpu.memory_space<vmem>>, %arg12: memref<96x256xf32, #tpu.memory_space<vmem>>) attributes {dimension_semantics = [#tpu.dimension_semantics<parallel>], iteration_bounds = array<i64: 1>, scalar_prefetch = 0 : i64, scratch_operands = 0 : i64, tpu.core_type = #tpu.core_type<tc>, window_params = [{transform_indices = @transform_0, window_bounds = array<i64: 8, 96, 32>}, {pipeline_mode = #tpu.pipeline_mode<synchronous>, transform_indices = @transform_1, window_bounds = array<i64: 1, 32>}, {pipeline_mode = #tpu.pipeline_mode<synchronous>, transform_indices = @transform_2, window_bounds = array<i64: 1, 32>}, {pipeline_mode = #tpu.pipeline_mode<synchronous>, transform_indices = @transform_3, window_bounds = array<i64: 32, 64>}, {pipeline_mode = #tpu.pipeline_mode<synchronous>, transform_indices = @transform_4, window_bounds = array<i64: 1, 64>}, {pipeline_mode = #tpu.pipeline_mode<synchronous>, transform_indices = @transform_5, window_bounds = array<i64: 1, 32>}, {pipeline_mode = #tpu.pipeline_mode<synchronous>, transform_indices = @transform_6, window_bounds = array<i64: 1, 32>}, {transform_indices = @transform_7, window_bounds = array<i64: 8, 8>}, {transform_indices = @transform_8, window_bounds = array<i64: 8>}, {pipeline_mode = #tpu.pipeline_mode<synchronous>, transform_indices = @transform_9, window_bounds = array<i64: 32, 32>}, {pipeline_mode = #tpu.pipeline_mode<synchronous>, transform_indices = @transform_10, window_bounds = array<i64: 1, 32>}, {transform_indices = @transform_11, window_bounds = array<i64: 96, 256>}]} {
    %c0 = arith.constant 0 : index
    %c0_0 = arith.constant 0 : index
    %c0_1 = arith.constant 0 : index
    %0 = vector.load %arg1[%c0, %c0_0, %c0_1] : memref<8x96x32xf32, #tpu.memory_space<vmem>>, vector<8x96x32xf32>
    %1 = vector.shape_cast %0 : vector<8x96x32xf32> to vector<768x32xf32>
    %c0_2 = arith.constant 0 : index
    %c0_3 = arith.constant 0 : index
    %2 = vector.load %arg2[%c0_2, %c0_3] : memref<1x32xf32, #tpu.memory_space<vmem>>, vector<1x32xf32>
    %c0_4 = arith.constant 0 : index
    %c0_5 = arith.constant 0 : index
    %3 = vector.load %arg3[%c0_4, %c0_5] : memref<1x32xf32, #tpu.memory_space<vmem>>, vector<1x32xf32>
    %cst = arith.constant dense<0.000000e+00> : vector<768xf32>
    %4 = vector.multi_reduction <add>, %1, %cst [1] : vector<768x32xf32> to vector<768xf32>
    %5 = vector.shape_cast %4 : vector<768xf32> to vector<768x1xf32>
    %cst_6 = arith.constant 3.200000e+01 : f32
    %6 = vector.broadcast %cst_6 : f32 to vector<768x1xf32>
    %7 = arith.divf %5, %6 : vector<768x1xf32>
    %8 = arith.mulf %1, %1 : vector<768x32xf32>
    %cst_7 = arith.constant dense<0.000000e+00> : vector<768xf32>
    %9 = vector.multi_reduction <add>, %8, %cst_7 [1] : vector<768x32xf32> to vector<768xf32>
    %10 = vector.shape_cast %9 : vector<768xf32> to vector<768x1xf32>
    %cst_8 = arith.constant 3.200000e+01 : f32
    %11 = vector.broadcast %cst_8 : f32 to vector<768x1xf32>
    %12 = arith.divf %10, %11 : vector<768x1xf32>
    %13 = arith.mulf %7, %7 : vector<768x1xf32>
    %14 = arith.subf %12, %13 : vector<768x1xf32>
    %cst_9 = arith.constant 0.000000e+00 : f32
    %15 = vector.broadcast %cst_9 : f32 to vector<768x1xf32>
    %16 = arith.maximumf %14, %15 : vector<768x1xf32>
    %17 = vector.broadcast %7 : vector<768x1xf32> to vector<768x32xf32>
    %18 = arith.subf %1, %17 : vector<768x32xf32>
    %cst_10 = arith.constant 9.99999974E-6 : f32
    %19 = vector.broadcast %cst_10 : f32 to vector<768x1xf32>
    %20 = arith.addf %16, %19 : vector<768x1xf32>
    %21 = math.rsqrt %20 : vector<768x1xf32>
    %22 = vector.broadcast %21 : vector<768x1xf32> to vector<768x32xf32>
    %23 = arith.mulf %18, %22 : vector<768x32xf32>
    %24 = vector.broadcast %2 : vector<1x32xf32> to vector<768x32xf32>
    %25 = arith.mulf %23, %24 : vector<768x32xf32>
    %26 = vector.broadcast %3 : vector<1x32xf32> to vector<768x32xf32>
    %27 = arith.addf %25, %26 : vector<768x32xf32>
    %28 = arith.truncf %27 : vector<768x32xf32> to vector<768x32xbf16>
    %c0_11 = arith.constant 0 : index
    %c0_12 = arith.constant 0 : index
    %29 = vector.load %arg4[%c0_11, %c0_12] : memref<32x64xbf16, #tpu.memory_space<vmem>>, vector<32x64xbf16>
    %c0_13 = arith.constant 0 : index
    %c0_14 = arith.constant 0 : index
    %30 = vector.load %arg5[%c0_13, %c0_14] : memref<1x64xf32, #tpu.memory_space<vmem>>, vector<1x64xf32>
    %31 = vector.extract_strided_slice %29 {offsets = [0, 0], sizes = [32, 32], strides = [1, 1]} : vector<32x64xbf16> to vector<32x32xbf16>
    %cst_15 = arith.constant dense<0.000000e+00> : vector<768x32xf32>
    %32 = tpu.matmul %28, %31, %cst_15 {dimension_numbers = #tpu.dot_dimension_numbers<[1], [0], [0], [1], [0, 0, 1, 1], [], []>} : vector<768x32xbf16>, vector<32x32xbf16>, vector<768x32xf32> -> vector<768x32xf32>
    %33 = vector.extract_strided_slice %30 {offsets = [0, 0], sizes = [1, 32], strides = [1, 1]} : vector<1x64xf32> to vector<1x32xf32>
    %34 = vector.broadcast %33 : vector<1x32xf32> to vector<768x32xf32>
    %35 = arith.addf %32, %34 : vector<768x32xf32>
    %36 = vector.extract_strided_slice %29 {offsets = [0, 32], sizes = [32, 32], strides = [1, 1]} : vector<32x64xbf16> to vector<32x32xbf16>
    %cst_16 = arith.constant dense<0.000000e+00> : vector<768x32xf32>
    %37 = tpu.matmul %28, %36, %cst_16 {dimension_numbers = #tpu.dot_dimension_numbers<[1], [0], [0], [1], [0, 0, 1, 1], [], []>} : vector<768x32xbf16>, vector<32x32xbf16>, vector<768x32xf32> -> vector<768x32xf32>
    %38 = vector.extract_strided_slice %30 {offsets = [0, 32], sizes = [1, 32], strides = [1, 1]} : vector<1x64xf32> to vector<1x32xf32>
    %39 = vector.broadcast %38 : vector<1x32xf32> to vector<768x32xf32>
    %40 = arith.addf %37, %39 : vector<768x32xf32>
    %cst_17 = arith.constant 5.000000e-01 : f32
    %41 = vector.broadcast %cst_17 : f32 to vector<768x32xf32>
    %42 = arith.mulf %41, %35 : vector<768x32xf32>
    %cst_18 = arith.constant 0.707106769 : f32
    %43 = vector.broadcast %cst_18 : f32 to vector<768x32xf32>
    %44 = arith.mulf %35, %43 : vector<768x32xf32>
    %45 = math.erf %44 : vector<768x32xf32>
    %cst_19 = arith.constant 1.000000e+00 : f32
    %46 = vector.broadcast %cst_19 : f32 to vector<768x32xf32>
    %47 = arith.addf %46, %45 : vector<768x32xf32>
    %48 = arith.mulf %42, %47 : vector<768x32xf32>
    %cst_20 = arith.constant 5.000000e-01 : f32
    %49 = vector.broadcast %cst_20 : f32 to vector<768x32xf32>
    %50 = arith.mulf %49, %40 : vector<768x32xf32>
    %cst_21 = arith.constant 0.707106769 : f32
    %51 = vector.broadcast %cst_21 : f32 to vector<768x32xf32>
    %52 = arith.mulf %40, %51 : vector<768x32xf32>
    %53 = math.erf %52 : vector<768x32xf32>
    %cst_22 = arith.constant 1.000000e+00 : f32
    %54 = vector.broadcast %cst_22 : f32 to vector<768x32xf32>
    %55 = arith.addf %54, %53 : vector<768x32xf32>
    %56 = arith.mulf %50, %55 : vector<768x32xf32>
    %c0_23 = arith.constant 0 : index
    %c0_24 = arith.constant 0 : index
    %57 = vector.load %arg6[%c0_23, %c0_24] : memref<1x32xf32, #tpu.memory_space<vmem>>, vector<1x32xf32>
    %c0_25 = arith.constant 0 : index
    %c0_26 = arith.constant 0 : index
    %58 = vector.load %arg7[%c0_25, %c0_26] : memref<1x32xf32, #tpu.memory_space<vmem>>, vector<1x32xf32>
    %cst_27 = arith.constant dense<0.000000e+00> : vector<768xf32>
    %59 = vector.multi_reduction <add>, %56, %cst_27 [1] : vector<768x32xf32> to vector<768xf32>
    %60 = vector.shape_cast %59 : vector<768xf32> to vector<768x1xf32>
    %cst_28 = arith.constant 3.200000e+01 : f32
    %61 = vector.broadcast %cst_28 : f32 to vector<768x1xf32>
    %62 = arith.divf %60, %61 : vector<768x1xf32>
    %63 = arith.mulf %56, %56 : vector<768x32xf32>
    %cst_29 = arith.constant dense<0.000000e+00> : vector<768xf32>
    %64 = vector.multi_reduction <add>, %63, %cst_29 [1] : vector<768x32xf32> to vector<768xf32>
    %65 = vector.shape_cast %64 : vector<768xf32> to vector<768x1xf32>
    %cst_30 = arith.constant 3.200000e+01 : f32
    %66 = vector.broadcast %cst_30 : f32 to vector<768x1xf32>
    %67 = arith.divf %65, %66 : vector<768x1xf32>
    %68 = arith.mulf %62, %62 : vector<768x1xf32>
    %69 = arith.subf %67, %68 : vector<768x1xf32>
    %cst_31 = arith.constant 0.000000e+00 : f32
    %70 = vector.broadcast %cst_31 : f32 to vector<768x1xf32>
    %71 = arith.maximumf %69, %70 : vector<768x1xf32>
    %72 = vector.broadcast %62 : vector<768x1xf32> to vector<768x32xf32>
    %73 = arith.subf %56, %72 : vector<768x32xf32>
    %cst_32 = arith.constant 9.99999974E-6 : f32
    %74 = vector.broadcast %cst_32 : f32 to vector<768x1xf32>
    %75 = arith.addf %71, %74 : vector<768x1xf32>
    %76 = math.rsqrt %75 : vector<768x1xf32>
    %77 = vector.broadcast %76 : vector<768x1xf32> to vector<768x32xf32>
    %78 = arith.mulf %73, %77 : vector<768x32xf32>
    %79 = vector.broadcast %57 : vector<1x32xf32> to vector<768x32xf32>
    %80 = arith.mulf %78, %79 : vector<768x32xf32>
    %81 = vector.broadcast %58 : vector<1x32xf32> to vector<768x32xf32>
    %82 = arith.addf %80, %81 : vector<768x32xf32>
    %83 = vector.extract_strided_slice %82 {offsets = [0, 0], sizes = [96, 32], strides = [1, 1]} : vector<768x32xf32> to vector<96x32xf32>
    %84 = vector.extract_strided_slice %82 {offsets = [96, 0], sizes = [96, 32], strides = [1, 1]} : vector<768x32xf32> to vector<96x32xf32>
    %85 = vector.extract_strided_slice %82 {offsets = [192, 0], sizes = [96, 32], strides = [1, 1]} : vector<768x32xf32> to vector<96x32xf32>
    %86 = vector.extract_strided_slice %82 {offsets = [288, 0], sizes = [96, 32], strides = [1, 1]} : vector<768x32xf32> to vector<96x32xf32>
    %87 = vector.extract_strided_slice %82 {offsets = [384, 0], sizes = [96, 32], strides = [1, 1]} : vector<768x32xf32> to vector<96x32xf32>
    %88 = vector.extract_strided_slice %82 {offsets = [480, 0], sizes = [96, 32], strides = [1, 1]} : vector<768x32xf32> to vector<96x32xf32>
    %89 = vector.extract_strided_slice %82 {offsets = [576, 0], sizes = [96, 32], strides = [1, 1]} : vector<768x32xf32> to vector<96x32xf32>
    %90 = vector.extract_strided_slice %82 {offsets = [672, 0], sizes = [96, 32], strides = [1, 1]} : vector<768x32xf32> to vector<96x32xf32>
    %c0_33 = arith.constant 0 : index
    %c0_34 = arith.constant 0 : index
    %91 = memref.load %arg8[%c0_33, %c0_34] : memref<8x8xf32, #tpu.memory_space<smem>>
    %92 = vector.broadcast %91 : f32 to vector<96x32xf32>
    %93 = arith.mulf %92, %83 : vector<96x32xf32>
    %c0_35 = arith.constant 0 : index
    %c1 = arith.constant 1 : index
    %94 = memref.load %arg8[%c0_35, %c1] : memref<8x8xf32, #tpu.memory_space<smem>>
    %95 = vector.broadcast %94 : f32 to vector<96x32xf32>
    %96 = arith.mulf %95, %84 : vector<96x32xf32>
    %97 = arith.addf %93, %96 : vector<96x32xf32>
    %c0_36 = arith.constant 0 : index
    %c2 = arith.constant 2 : index
    %98 = memref.load %arg8[%c0_36, %c2] : memref<8x8xf32, #tpu.memory_space<smem>>
    %99 = vector.broadcast %98 : f32 to vector<96x32xf32>
    %100 = arith.mulf %99, %85 : vector<96x32xf32>
    %101 = arith.addf %97, %100 : vector<96x32xf32>
    %c0_37 = arith.constant 0 : index
    %c3 = arith.constant 3 : index
    %102 = memref.load %arg8[%c0_37, %c3] : memref<8x8xf32, #tpu.memory_space<smem>>
    %103 = vector.broadcast %102 : f32 to vector<96x32xf32>
    %104 = arith.mulf %103, %86 : vector<96x32xf32>
    %105 = arith.addf %101, %104 : vector<96x32xf32>
    %c0_38 = arith.constant 0 : index
    %c4 = arith.constant 4 : index
    %106 = memref.load %arg8[%c0_38, %c4] : memref<8x8xf32, #tpu.memory_space<smem>>
    %107 = vector.broadcast %106 : f32 to vector<96x32xf32>
    %108 = arith.mulf %107, %87 : vector<96x32xf32>
    %109 = arith.addf %105, %108 : vector<96x32xf32>
    %c0_39 = arith.constant 0 : index
    %c5 = arith.constant 5 : index
    %110 = memref.load %arg8[%c0_39, %c5] : memref<8x8xf32, #tpu.memory_space<smem>>
    %111 = vector.broadcast %110 : f32 to vector<96x32xf32>
    %112 = arith.mulf %111, %88 : vector<96x32xf32>
    %113 = arith.addf %109, %112 : vector<96x32xf32>
    %c0_40 = arith.constant 0 : index
    %c6 = arith.constant 6 : index
    %114 = memref.load %arg8[%c0_40, %c6] : memref<8x8xf32, #tpu.memory_space<smem>>
    %115 = vector.broadcast %114 : f32 to vector<96x32xf32>
    %116 = arith.mulf %115, %89 : vector<96x32xf32>
    %117 = arith.addf %113, %116 : vector<96x32xf32>
    %c0_41 = arith.constant 0 : index
    %c7 = arith.constant 7 : index
    %118 = memref.load %arg8[%c0_41, %c7] : memref<8x8xf32, #tpu.memory_space<smem>>
    %119 = vector.broadcast %118 : f32 to vector<96x32xf32>
    %120 = arith.mulf %119, %90 : vector<96x32xf32>
    %121 = arith.addf %117, %120 : vector<96x32xf32>
    %c0_42 = arith.constant 0 : index
    %122 = memref.load %arg9[%c0_42] : memref<8xf32, #tpu.memory_space<smem>>
    %cst_43 = arith.constant 1.000000e+00 : f32
    %123 = arith.addf %122, %cst_43 : f32
    %124 = vector.broadcast %123 : f32 to vector<96x32xf32>
    %125 = arith.addf %121, %124 : vector<96x32xf32>
    %c1_44 = arith.constant 1 : index
    %c0_45 = arith.constant 0 : index
    %126 = memref.load %arg8[%c1_44, %c0_45] : memref<8x8xf32, #tpu.memory_space<smem>>
    %127 = vector.broadcast %126 : f32 to vector<96x32xf32>
    %128 = arith.mulf %127, %83 : vector<96x32xf32>
    %c1_46 = arith.constant 1 : index
    %c1_47 = arith.constant 1 : index
    %129 = memref.load %arg8[%c1_46, %c1_47] : memref<8x8xf32, #tpu.memory_space<smem>>
    %130 = vector.broadcast %129 : f32 to vector<96x32xf32>
    %131 = arith.mulf %130, %84 : vector<96x32xf32>
    %132 = arith.addf %128, %131 : vector<96x32xf32>
    %c1_48 = arith.constant 1 : index
    %c2_49 = arith.constant 2 : index
    %133 = memref.load %arg8[%c1_48, %c2_49] : memref<8x8xf32, #tpu.memory_space<smem>>
    %134 = vector.broadcast %133 : f32 to vector<96x32xf32>
    %135 = arith.mulf %134, %85 : vector<96x32xf32>
    %136 = arith.addf %132, %135 : vector<96x32xf32>
    %c1_50 = arith.constant 1 : index
    %c3_51 = arith.constant 3 : index
    %137 = memref.load %arg8[%c1_50, %c3_51] : memref<8x8xf32, #tpu.memory_space<smem>>
    %138 = vector.broadcast %137 : f32 to vector<96x32xf32>
    %139 = arith.mulf %138, %86 : vector<96x32xf32>
    %140 = arith.addf %136, %139 : vector<96x32xf32>
    %c1_52 = arith.constant 1 : index
    %c4_53 = arith.constant 4 : index
    %141 = memref.load %arg8[%c1_52, %c4_53] : memref<8x8xf32, #tpu.memory_space<smem>>
    %142 = vector.broadcast %141 : f32 to vector<96x32xf32>
    %143 = arith.mulf %142, %87 : vector<96x32xf32>
    %144 = arith.addf %140, %143 : vector<96x32xf32>
    %c1_54 = arith.constant 1 : index
    %c5_55 = arith.constant 5 : index
    %145 = memref.load %arg8[%c1_54, %c5_55] : memref<8x8xf32, #tpu.memory_space<smem>>
    %146 = vector.broadcast %145 : f32 to vector<96x32xf32>
    %147 = arith.mulf %146, %88 : vector<96x32xf32>
    %148 = arith.addf %144, %147 : vector<96x32xf32>
    %c1_56 = arith.constant 1 : index
    %c6_57 = arith.constant 6 : index
    %149 = memref.load %arg8[%c1_56, %c6_57] : memref<8x8xf32, #tpu.memory_space<smem>>
    %150 = vector.broadcast %149 : f32 to vector<96x32xf32>
    %151 = arith.mulf %150, %89 : vector<96x32xf32>
    %152 = arith.addf %148, %151 : vector<96x32xf32>
    %c1_58 = arith.constant 1 : index
    %c7_59 = arith.constant 7 : index
    %153 = memref.load %arg8[%c1_58, %c7_59] : memref<8x8xf32, #tpu.memory_space<smem>>
    %154 = vector.broadcast %153 : f32 to vector<96x32xf32>
    %155 = arith.mulf %154, %90 : vector<96x32xf32>
    %156 = arith.addf %152, %155 : vector<96x32xf32>
    %c1_60 = arith.constant 1 : index
    %157 = memref.load %arg9[%c1_60] : memref<8xf32, #tpu.memory_space<smem>>
    %cst_61 = arith.constant 1.000000e+00 : f32
    %158 = arith.addf %157, %cst_61 : f32
    %159 = vector.broadcast %158 : f32 to vector<96x32xf32>
    %160 = arith.addf %156, %159 : vector<96x32xf32>
    %c2_62 = arith.constant 2 : index
    %c0_63 = arith.constant 0 : index
    %161 = memref.load %arg8[%c2_62, %c0_63] : memref<8x8xf32, #tpu.memory_space<smem>>
    %162 = vector.broadcast %161 : f32 to vector<96x32xf32>
    %163 = arith.mulf %162, %83 : vector<96x32xf32>
    %c2_64 = arith.constant 2 : index
    %c1_65 = arith.constant 1 : index
    %164 = memref.load %arg8[%c2_64, %c1_65] : memref<8x8xf32, #tpu.memory_space<smem>>
    %165 = vector.broadcast %164 : f32 to vector<96x32xf32>
    %166 = arith.mulf %165, %84 : vector<96x32xf32>
    %167 = arith.addf %163, %166 : vector<96x32xf32>
    %c2_66 = arith.constant 2 : index
    %c2_67 = arith.constant 2 : index
    %168 = memref.load %arg8[%c2_66, %c2_67] : memref<8x8xf32, #tpu.memory_space<smem>>
    %169 = vector.broadcast %168 : f32 to vector<96x32xf32>
    %170 = arith.mulf %169, %85 : vector<96x32xf32>
    %171 = arith.addf %167, %170 : vector<96x32xf32>
    %c2_68 = arith.constant 2 : index
    %c3_69 = arith.constant 3 : index
    %172 = memref.load %arg8[%c2_68, %c3_69] : memref<8x8xf32, #tpu.memory_space<smem>>
    %173 = vector.broadcast %172 : f32 to vector<96x32xf32>
    %174 = arith.mulf %173, %86 : vector<96x32xf32>
    %175 = arith.addf %171, %174 : vector<96x32xf32>
    %c2_70 = arith.constant 2 : index
    %c4_71 = arith.constant 4 : index
    %176 = memref.load %arg8[%c2_70, %c4_71] : memref<8x8xf32, #tpu.memory_space<smem>>
    %177 = vector.broadcast %176 : f32 to vector<96x32xf32>
    %178 = arith.mulf %177, %87 : vector<96x32xf32>
    %179 = arith.addf %175, %178 : vector<96x32xf32>
    %c2_72 = arith.constant 2 : index
    %c5_73 = arith.constant 5 : index
    %180 = memref.load %arg8[%c2_72, %c5_73] : memref<8x8xf32, #tpu.memory_space<smem>>
    %181 = vector.broadcast %180 : f32 to vector<96x32xf32>
    %182 = arith.mulf %181, %88 : vector<96x32xf32>
    %183 = arith.addf %179, %182 : vector<96x32xf32>
    %c2_74 = arith.constant 2 : index
    %c6_75 = arith.constant 6 : index
    %184 = memref.load %arg8[%c2_74, %c6_75] : memref<8x8xf32, #tpu.memory_space<smem>>
    %185 = vector.broadcast %184 : f32 to vector<96x32xf32>
    %186 = arith.mulf %185, %89 : vector<96x32xf32>
    %187 = arith.addf %183, %186 : vector<96x32xf32>
    %c2_76 = arith.constant 2 : index
    %c7_77 = arith.constant 7 : index
    %188 = memref.load %arg8[%c2_76, %c7_77] : memref<8x8xf32, #tpu.memory_space<smem>>
    %189 = vector.broadcast %188 : f32 to vector<96x32xf32>
    %190 = arith.mulf %189, %90 : vector<96x32xf32>
    %191 = arith.addf %187, %190 : vector<96x32xf32>
    %c2_78 = arith.constant 2 : index
    %192 = memref.load %arg9[%c2_78] : memref<8xf32, #tpu.memory_space<smem>>
    %cst_79 = arith.constant 1.000000e+00 : f32
    %193 = arith.addf %192, %cst_79 : f32
    %194 = vector.broadcast %193 : f32 to vector<96x32xf32>
    %195 = arith.addf %191, %194 : vector<96x32xf32>
    %c3_80 = arith.constant 3 : index
    %c0_81 = arith.constant 0 : index
    %196 = memref.load %arg8[%c3_80, %c0_81] : memref<8x8xf32, #tpu.memory_space<smem>>
    %197 = vector.broadcast %196 : f32 to vector<96x32xf32>
    %198 = arith.mulf %197, %83 : vector<96x32xf32>
    %c3_82 = arith.constant 3 : index
    %c1_83 = arith.constant 1 : index
    %199 = memref.load %arg8[%c3_82, %c1_83] : memref<8x8xf32, #tpu.memory_space<smem>>
    %200 = vector.broadcast %199 : f32 to vector<96x32xf32>
    %201 = arith.mulf %200, %84 : vector<96x32xf32>
    %202 = arith.addf %198, %201 : vector<96x32xf32>
    %c3_84 = arith.constant 3 : index
    %c2_85 = arith.constant 2 : index
    %203 = memref.load %arg8[%c3_84, %c2_85] : memref<8x8xf32, #tpu.memory_space<smem>>
    %204 = vector.broadcast %203 : f32 to vector<96x32xf32>
    %205 = arith.mulf %204, %85 : vector<96x32xf32>
    %206 = arith.addf %202, %205 : vector<96x32xf32>
    %c3_86 = arith.constant 3 : index
    %c3_87 = arith.constant 3 : index
    %207 = memref.load %arg8[%c3_86, %c3_87] : memref<8x8xf32, #tpu.memory_space<smem>>
    %208 = vector.broadcast %207 : f32 to vector<96x32xf32>
    %209 = arith.mulf %208, %86 : vector<96x32xf32>
    %210 = arith.addf %206, %209 : vector<96x32xf32>
    %c3_88 = arith.constant 3 : index
    %c4_89 = arith.constant 4 : index
    %211 = memref.load %arg8[%c3_88, %c4_89] : memref<8x8xf32, #tpu.memory_space<smem>>
    %212 = vector.broadcast %211 : f32 to vector<96x32xf32>
    %213 = arith.mulf %212, %87 : vector<96x32xf32>
    %214 = arith.addf %210, %213 : vector<96x32xf32>
    %c3_90 = arith.constant 3 : index
    %c5_91 = arith.constant 5 : index
    %215 = memref.load %arg8[%c3_90, %c5_91] : memref<8x8xf32, #tpu.memory_space<smem>>
    %216 = vector.broadcast %215 : f32 to vector<96x32xf32>
    %217 = arith.mulf %216, %88 : vector<96x32xf32>
    %218 = arith.addf %214, %217 : vector<96x32xf32>
    %c3_92 = arith.constant 3 : index
    %c6_93 = arith.constant 6 : index
    %219 = memref.load %arg8[%c3_92, %c6_93] : memref<8x8xf32, #tpu.memory_space<smem>>
    %220 = vector.broadcast %219 : f32 to vector<96x32xf32>
    %221 = arith.mulf %220, %89 : vector<96x32xf32>
    %222 = arith.addf %218, %221 : vector<96x32xf32>
    %c3_94 = arith.constant 3 : index
    %c7_95 = arith.constant 7 : index
    %223 = memref.load %arg8[%c3_94, %c7_95] : memref<8x8xf32, #tpu.memory_space<smem>>
    %224 = vector.broadcast %223 : f32 to vector<96x32xf32>
    %225 = arith.mulf %224, %90 : vector<96x32xf32>
    %226 = arith.addf %222, %225 : vector<96x32xf32>
    %c3_96 = arith.constant 3 : index
    %227 = memref.load %arg9[%c3_96] : memref<8xf32, #tpu.memory_space<smem>>
    %cst_97 = arith.constant 1.000000e+00 : f32
    %228 = arith.addf %227, %cst_97 : f32
    %229 = vector.broadcast %228 : f32 to vector<96x32xf32>
    %230 = arith.addf %226, %229 : vector<96x32xf32>
    %c4_98 = arith.constant 4 : index
    %c0_99 = arith.constant 0 : index
    %231 = memref.load %arg8[%c4_98, %c0_99] : memref<8x8xf32, #tpu.memory_space<smem>>
    %232 = vector.broadcast %231 : f32 to vector<96x32xf32>
    %233 = arith.mulf %232, %83 : vector<96x32xf32>
    %c4_100 = arith.constant 4 : index
    %c1_101 = arith.constant 1 : index
    %234 = memref.load %arg8[%c4_100, %c1_101] : memref<8x8xf32, #tpu.memory_space<smem>>
    %235 = vector.broadcast %234 : f32 to vector<96x32xf32>
    %236 = arith.mulf %235, %84 : vector<96x32xf32>
    %237 = arith.addf %233, %236 : vector<96x32xf32>
    %c4_102 = arith.constant 4 : index
    %c2_103 = arith.constant 2 : index
    %238 = memref.load %arg8[%c4_102, %c2_103] : memref<8x8xf32, #tpu.memory_space<smem>>
    %239 = vector.broadcast %238 : f32 to vector<96x32xf32>
    %240 = arith.mulf %239, %85 : vector<96x32xf32>
    %241 = arith.addf %237, %240 : vector<96x32xf32>
    %c4_104 = arith.constant 4 : index
    %c3_105 = arith.constant 3 : index
    %242 = memref.load %arg8[%c4_104, %c3_105] : memref<8x8xf32, #tpu.memory_space<smem>>
    %243 = vector.broadcast %242 : f32 to vector<96x32xf32>
    %244 = arith.mulf %243, %86 : vector<96x32xf32>
    %245 = arith.addf %241, %244 : vector<96x32xf32>
    %c4_106 = arith.constant 4 : index
    %c4_107 = arith.constant 4 : index
    %246 = memref.load %arg8[%c4_106, %c4_107] : memref<8x8xf32, #tpu.memory_space<smem>>
    %247 = vector.broadcast %246 : f32 to vector<96x32xf32>
    %248 = arith.mulf %247, %87 : vector<96x32xf32>
    %249 = arith.addf %245, %248 : vector<96x32xf32>
    %c4_108 = arith.constant 4 : index
    %c5_109 = arith.constant 5 : index
    %250 = memref.load %arg8[%c4_108, %c5_109] : memref<8x8xf32, #tpu.memory_space<smem>>
    %251 = vector.broadcast %250 : f32 to vector<96x32xf32>
    %252 = arith.mulf %251, %88 : vector<96x32xf32>
    %253 = arith.addf %249, %252 : vector<96x32xf32>
    %c4_110 = arith.constant 4 : index
    %c6_111 = arith.constant 6 : index
    %254 = memref.load %arg8[%c4_110, %c6_111] : memref<8x8xf32, #tpu.memory_space<smem>>
    %255 = vector.broadcast %254 : f32 to vector<96x32xf32>
    %256 = arith.mulf %255, %89 : vector<96x32xf32>
    %257 = arith.addf %253, %256 : vector<96x32xf32>
    %c4_112 = arith.constant 4 : index
    %c7_113 = arith.constant 7 : index
    %258 = memref.load %arg8[%c4_112, %c7_113] : memref<8x8xf32, #tpu.memory_space<smem>>
    %259 = vector.broadcast %258 : f32 to vector<96x32xf32>
    %260 = arith.mulf %259, %90 : vector<96x32xf32>
    %261 = arith.addf %257, %260 : vector<96x32xf32>
    %c4_114 = arith.constant 4 : index
    %262 = memref.load %arg9[%c4_114] : memref<8xf32, #tpu.memory_space<smem>>
    %cst_115 = arith.constant 1.000000e+00 : f32
    %263 = arith.addf %262, %cst_115 : f32
    %264 = vector.broadcast %263 : f32 to vector<96x32xf32>
    %265 = arith.addf %261, %264 : vector<96x32xf32>
    %c5_116 = arith.constant 5 : index
    %c0_117 = arith.constant 0 : index
    %266 = memref.load %arg8[%c5_116, %c0_117] : memref<8x8xf32, #tpu.memory_space<smem>>
    %267 = vector.broadcast %266 : f32 to vector<96x32xf32>
    %268 = arith.mulf %267, %83 : vector<96x32xf32>
    %c5_118 = arith.constant 5 : index
    %c1_119 = arith.constant 1 : index
    %269 = memref.load %arg8[%c5_118, %c1_119] : memref<8x8xf32, #tpu.memory_space<smem>>
    %270 = vector.broadcast %269 : f32 to vector<96x32xf32>
    %271 = arith.mulf %270, %84 : vector<96x32xf32>
    %272 = arith.addf %268, %271 : vector<96x32xf32>
    %c5_120 = arith.constant 5 : index
    %c2_121 = arith.constant 2 : index
    %273 = memref.load %arg8[%c5_120, %c2_121] : memref<8x8xf32, #tpu.memory_space<smem>>
    %274 = vector.broadcast %273 : f32 to vector<96x32xf32>
    %275 = arith.mulf %274, %85 : vector<96x32xf32>
    %276 = arith.addf %272, %275 : vector<96x32xf32>
    %c5_122 = arith.constant 5 : index
    %c3_123 = arith.constant 3 : index
    %277 = memref.load %arg8[%c5_122, %c3_123] : memref<8x8xf32, #tpu.memory_space<smem>>
    %278 = vector.broadcast %277 : f32 to vector<96x32xf32>
    %279 = arith.mulf %278, %86 : vector<96x32xf32>
    %280 = arith.addf %276, %279 : vector<96x32xf32>
    %c5_124 = arith.constant 5 : index
    %c4_125 = arith.constant 4 : index
    %281 = memref.load %arg8[%c5_124, %c4_125] : memref<8x8xf32, #tpu.memory_space<smem>>
    %282 = vector.broadcast %281 : f32 to vector<96x32xf32>
    %283 = arith.mulf %282, %87 : vector<96x32xf32>
    %284 = arith.addf %280, %283 : vector<96x32xf32>
    %c5_126 = arith.constant 5 : index
    %c5_127 = arith.constant 5 : index
    %285 = memref.load %arg8[%c5_126, %c5_127] : memref<8x8xf32, #tpu.memory_space<smem>>
    %286 = vector.broadcast %285 : f32 to vector<96x32xf32>
    %287 = arith.mulf %286, %88 : vector<96x32xf32>
    %288 = arith.addf %284, %287 : vector<96x32xf32>
    %c5_128 = arith.constant 5 : index
    %c6_129 = arith.constant 6 : index
    %289 = memref.load %arg8[%c5_128, %c6_129] : memref<8x8xf32, #tpu.memory_space<smem>>
    %290 = vector.broadcast %289 : f32 to vector<96x32xf32>
    %291 = arith.mulf %290, %89 : vector<96x32xf32>
    %292 = arith.addf %288, %291 : vector<96x32xf32>
    %c5_130 = arith.constant 5 : index
    %c7_131 = arith.constant 7 : index
    %293 = memref.load %arg8[%c5_130, %c7_131] : memref<8x8xf32, #tpu.memory_space<smem>>
    %294 = vector.broadcast %293 : f32 to vector<96x32xf32>
    %295 = arith.mulf %294, %90 : vector<96x32xf32>
    %296 = arith.addf %292, %295 : vector<96x32xf32>
    %c5_132 = arith.constant 5 : index
    %297 = memref.load %arg9[%c5_132] : memref<8xf32, #tpu.memory_space<smem>>
    %cst_133 = arith.constant 1.000000e+00 : f32
    %298 = arith.addf %297, %cst_133 : f32
    %299 = vector.broadcast %298 : f32 to vector<96x32xf32>
    %300 = arith.addf %296, %299 : vector<96x32xf32>
    %c6_134 = arith.constant 6 : index
    %c0_135 = arith.constant 0 : index
    %301 = memref.load %arg8[%c6_134, %c0_135] : memref<8x8xf32, #tpu.memory_space<smem>>
    %302 = vector.broadcast %301 : f32 to vector<96x32xf32>
    %303 = arith.mulf %302, %83 : vector<96x32xf32>
    %c6_136 = arith.constant 6 : index
    %c1_137 = arith.constant 1 : index
    %304 = memref.load %arg8[%c6_136, %c1_137] : memref<8x8xf32, #tpu.memory_space<smem>>
    %305 = vector.broadcast %304 : f32 to vector<96x32xf32>
    %306 = arith.mulf %305, %84 : vector<96x32xf32>
    %307 = arith.addf %303, %306 : vector<96x32xf32>
    %c6_138 = arith.constant 6 : index
    %c2_139 = arith.constant 2 : index
    %308 = memref.load %arg8[%c6_138, %c2_139] : memref<8x8xf32, #tpu.memory_space<smem>>
    %309 = vector.broadcast %308 : f32 to vector<96x32xf32>
    %310 = arith.mulf %309, %85 : vector<96x32xf32>
    %311 = arith.addf %307, %310 : vector<96x32xf32>
    %c6_140 = arith.constant 6 : index
    %c3_141 = arith.constant 3 : index
    %312 = memref.load %arg8[%c6_140, %c3_141] : memref<8x8xf32, #tpu.memory_space<smem>>
    %313 = vector.broadcast %312 : f32 to vector<96x32xf32>
    %314 = arith.mulf %313, %86 : vector<96x32xf32>
    %315 = arith.addf %311, %314 : vector<96x32xf32>
    %c6_142 = arith.constant 6 : index
    %c4_143 = arith.constant 4 : index
    %316 = memref.load %arg8[%c6_142, %c4_143] : memref<8x8xf32, #tpu.memory_space<smem>>
    %317 = vector.broadcast %316 : f32 to vector<96x32xf32>
    %318 = arith.mulf %317, %87 : vector<96x32xf32>
    %319 = arith.addf %315, %318 : vector<96x32xf32>
    %c6_144 = arith.constant 6 : index
    %c5_145 = arith.constant 5 : index
    %320 = memref.load %arg8[%c6_144, %c5_145] : memref<8x8xf32, #tpu.memory_space<smem>>
    %321 = vector.broadcast %320 : f32 to vector<96x32xf32>
    %322 = arith.mulf %321, %88 : vector<96x32xf32>
    %323 = arith.addf %319, %322 : vector<96x32xf32>
    %c6_146 = arith.constant 6 : index
    %c6_147 = arith.constant 6 : index
    %324 = memref.load %arg8[%c6_146, %c6_147] : memref<8x8xf32, #tpu.memory_space<smem>>
    %325 = vector.broadcast %324 : f32 to vector<96x32xf32>
    %326 = arith.mulf %325, %89 : vector<96x32xf32>
    %327 = arith.addf %323, %326 : vector<96x32xf32>
    %c6_148 = arith.constant 6 : index
    %c7_149 = arith.constant 7 : index
    %328 = memref.load %arg8[%c6_148, %c7_149] : memref<8x8xf32, #tpu.memory_space<smem>>
    %329 = vector.broadcast %328 : f32 to vector<96x32xf32>
    %330 = arith.mulf %329, %90 : vector<96x32xf32>
    %331 = arith.addf %327, %330 : vector<96x32xf32>
    %c6_150 = arith.constant 6 : index
    %332 = memref.load %arg9[%c6_150] : memref<8xf32, #tpu.memory_space<smem>>
    %cst_151 = arith.constant 1.000000e+00 : f32
    %333 = arith.addf %332, %cst_151 : f32
    %334 = vector.broadcast %333 : f32 to vector<96x32xf32>
    %335 = arith.addf %331, %334 : vector<96x32xf32>
    %c7_152 = arith.constant 7 : index
    %c0_153 = arith.constant 0 : index
    %336 = memref.load %arg8[%c7_152, %c0_153] : memref<8x8xf32, #tpu.memory_space<smem>>
    %337 = vector.broadcast %336 : f32 to vector<96x32xf32>
    %338 = arith.mulf %337, %83 : vector<96x32xf32>
    %c7_154 = arith.constant 7 : index
    %c1_155 = arith.constant 1 : index
    %339 = memref.load %arg8[%c7_154, %c1_155] : memref<8x8xf32, #tpu.memory_space<smem>>
    %340 = vector.broadcast %339 : f32 to vector<96x32xf32>
    %341 = arith.mulf %340, %84 : vector<96x32xf32>
    %342 = arith.addf %338, %341 : vector<96x32xf32>
    %c7_156 = arith.constant 7 : index
    %c2_157 = arith.constant 2 : index
    %343 = memref.load %arg8[%c7_156, %c2_157] : memref<8x8xf32, #tpu.memory_space<smem>>
    %344 = vector.broadcast %343 : f32 to vector<96x32xf32>
    %345 = arith.mulf %344, %85 : vector<96x32xf32>
    %346 = arith.addf %342, %345 : vector<96x32xf32>
    %c7_158 = arith.constant 7 : index
    %c3_159 = arith.constant 3 : index
    %347 = memref.load %arg8[%c7_158, %c3_159] : memref<8x8xf32, #tpu.memory_space<smem>>
    %348 = vector.broadcast %347 : f32 to vector<96x32xf32>
    %349 = arith.mulf %348, %86 : vector<96x32xf32>
    %350 = arith.addf %346, %349 : vector<96x32xf32>
    %c7_160 = arith.constant 7 : index
    %c4_161 = arith.constant 4 : index
    %351 = memref.load %arg8[%c7_160, %c4_161] : memref<8x8xf32, #tpu.memory_space<smem>>
    %352 = vector.broadcast %351 : f32 to vector<96x32xf32>
    %353 = arith.mulf %352, %87 : vector<96x32xf32>
    %354 = arith.addf %350, %353 : vector<96x32xf32>
    %c7_162 = arith.constant 7 : index
    %c5_163 = arith.constant 5 : index
    %355 = memref.load %arg8[%c7_162, %c5_163] : memref<8x8xf32, #tpu.memory_space<smem>>
    %356 = vector.broadcast %355 : f32 to vector<96x32xf32>
    %357 = arith.mulf %356, %88 : vector<96x32xf32>
    %358 = arith.addf %354, %357 : vector<96x32xf32>
    %c7_164 = arith.constant 7 : index
    %c6_165 = arith.constant 6 : index
    %359 = memref.load %arg8[%c7_164, %c6_165] : memref<8x8xf32, #tpu.memory_space<smem>>
    %360 = vector.broadcast %359 : f32 to vector<96x32xf32>
    %361 = arith.mulf %360, %89 : vector<96x32xf32>
    %362 = arith.addf %358, %361 : vector<96x32xf32>
    %c7_166 = arith.constant 7 : index
    %c7_167 = arith.constant 7 : index
    %363 = memref.load %arg8[%c7_166, %c7_167] : memref<8x8xf32, #tpu.memory_space<smem>>
    %364 = vector.broadcast %363 : f32 to vector<96x32xf32>
    %365 = arith.mulf %364, %90 : vector<96x32xf32>
    %366 = arith.addf %362, %365 : vector<96x32xf32>
    %c7_168 = arith.constant 7 : index
    %367 = memref.load %arg9[%c7_168] : memref<8xf32, #tpu.memory_space<smem>>
    %cst_169 = arith.constant 1.000000e+00 : f32
    %368 = arith.addf %367, %cst_169 : f32
    %369 = vector.broadcast %368 : f32 to vector<96x32xf32>
    %370 = arith.addf %366, %369 : vector<96x32xf32>
    %371 = tpu.concatenate %125, %160, %195, %230, %265, %300, %335, %370 in 0 : vector<96x32xf32>, vector<96x32xf32>, vector<96x32xf32>, vector<96x32xf32>, vector<96x32xf32>, vector<96x32xf32>, vector<96x32xf32>, vector<96x32xf32> -> vector<768x32xf32>
    %372 = arith.mulf %48, %371 : vector<768x32xf32>
    %373 = arith.truncf %372 : vector<768x32xf32> to vector<768x32xbf16>
    %c0_170 = arith.constant 0 : index
    %c0_171 = arith.constant 0 : index
    %374 = vector.load %arg10[%c0_170, %c0_171] : memref<32x32xbf16, #tpu.memory_space<vmem>>, vector<32x32xbf16>
    %cst_172 = arith.constant dense<0.000000e+00> : vector<768x32xf32>
    %375 = tpu.matmul %373, %374, %cst_172 {dimension_numbers = #tpu.dot_dimension_numbers<[1], [0], [0], [1], [0, 0, 1, 1], [], []>} : vector<768x32xbf16>, vector<32x32xbf16>, vector<768x32xf32> -> vector<768x32xf32>
    %c0_173 = arith.constant 0 : index
    %c0_174 = arith.constant 0 : index
    %376 = vector.load %arg11[%c0_173, %c0_174] : memref<1x32xf32, #tpu.memory_space<vmem>>, vector<1x32xf32>
    %377 = vector.broadcast %376 : vector<1x32xf32> to vector<768x32xf32>
    %378 = arith.addf %375, %377 : vector<768x32xf32>
    %379 = arith.addf %378, %1 : vector<768x32xf32>
    %380 = vector.extract_strided_slice %379 {offsets = [0, 0], sizes = [96, 32], strides = [1, 1]} : vector<768x32xf32> to vector<96x32xf32>
    %381 = vector.extract_strided_slice %379 {offsets = [96, 0], sizes = [96, 32], strides = [1, 1]} : vector<768x32xf32> to vector<96x32xf32>
    %382 = vector.extract_strided_slice %379 {offsets = [192, 0], sizes = [96, 32], strides = [1, 1]} : vector<768x32xf32> to vector<96x32xf32>
    %383 = vector.extract_strided_slice %379 {offsets = [288, 0], sizes = [96, 32], strides = [1, 1]} : vector<768x32xf32> to vector<96x32xf32>
    %384 = vector.extract_strided_slice %379 {offsets = [384, 0], sizes = [96, 32], strides = [1, 1]} : vector<768x32xf32> to vector<96x32xf32>
    %385 = vector.extract_strided_slice %379 {offsets = [480, 0], sizes = [96, 32], strides = [1, 1]} : vector<768x32xf32> to vector<96x32xf32>
    %386 = vector.extract_strided_slice %379 {offsets = [576, 0], sizes = [96, 32], strides = [1, 1]} : vector<768x32xf32> to vector<96x32xf32>
    %387 = vector.extract_strided_slice %379 {offsets = [672, 0], sizes = [96, 32], strides = [1, 1]} : vector<768x32xf32> to vector<96x32xf32>
    %388 = tpu.concatenate %380, %381, %382, %383, %384, %385, %386, %387 in 1 : vector<96x32xf32>, vector<96x32xf32>, vector<96x32xf32>, vector<96x32xf32>, vector<96x32xf32>, vector<96x32xf32>, vector<96x32xf32>, vector<96x32xf32> -> vector<96x256xf32>
    %c0_175 = arith.constant 0 : index
    %c0_176 = arith.constant 0 : index
    %389 = vector.load %arg12[%c0_175, %c0_176] : memref<96x256xf32, #tpu.memory_space<vmem>>, vector<96x256xf32>
    tpu.vector_store %arg12[%c0_175, %c0_176], %388 {strides = array<i32>} : memref<96x256xf32, #tpu.memory_space<vmem>>, vector<96x256xf32>,
    return
  }
  func.func @transform_0(%arg0: i32) -> (i32, i32, i32) {
    %c0_i32 = arith.constant 0 : i32
    %c0_i32_0 = arith.constant 0 : i32
    %c0_i32_1 = arith.constant 0 : i32
    return %c0_i32, %arg0, %c0_i32_0 : i32, i32, i32
  }
  func.func @transform_1(%arg0: i32) -> (i32, i32) {
    %c0_i32 = arith.constant 0 : i32
    %c0_i32_0 = arith.constant 0 : i32
    %c0_i32_1 = arith.constant 0 : i32
    return %c0_i32, %c0_i32_0 : i32, i32
  }
  func.func @transform_2(%arg0: i32) -> (i32, i32) {
    %c0_i32 = arith.constant 0 : i32
    %c0_i32_0 = arith.constant 0 : i32
    %c0_i32_1 = arith.constant 0 : i32
    return %c0_i32, %c0_i32_0 : i32, i32
  }
  func.func @transform_3(%arg0: i32) -> (i32, i32) {
    %c0_i32 = arith.constant 0 : i32
    %c0_i32_0 = arith.constant 0 : i32
    %c0_i32_1 = arith.constant 0 : i32
    return %c0_i32, %c0_i32_0 : i32, i32
  }
  func.func @transform_4(%arg0: i32) -> (i32, i32) {
    %c0_i32 = arith.constant 0 : i32
    %c0_i32_0 = arith.constant 0 : i32
    %c0_i32_1 = arith.constant 0 : i32
    return %c0_i32, %c0_i32_0 : i32, i32
  }
  func.func @transform_5(%arg0: i32) -> (i32, i32) {
    %c0_i32 = arith.constant 0 : i32
    %c0_i32_0 = arith.constant 0 : i32
    %c0_i32_1 = arith.constant 0 : i32
    return %c0_i32, %c0_i32_0 : i32, i32
  }
  func.func @transform_6(%arg0: i32) -> (i32, i32) {
    %c0_i32 = arith.constant 0 : i32
    %c0_i32_0 = arith.constant 0 : i32
    %c0_i32_1 = arith.constant 0 : i32
    return %c0_i32, %c0_i32_0 : i32, i32
  }
  func.func @transform_7(%arg0: i32) -> (i32, i32) {
    %c0_i32 = arith.constant 0 : i32
    %c0_i32_0 = arith.constant 0 : i32
    %c0_i32_1 = arith.constant 0 : i32
    return %c0_i32, %c0_i32_0 : i32, i32
  }
  func.func @transform_8(%arg0: i32) -> i32 {
    %c0_i32 = arith.constant 0 : i32
    %c0_i32_0 = arith.constant 0 : i32
    return %c0_i32 : i32
  }
  func.func @transform_9(%arg0: i32) -> (i32, i32) {
    %c0_i32 = arith.constant 0 : i32
    %c0_i32_0 = arith.constant 0 : i32
    %c0_i32_1 = arith.constant 0 : i32
    return %c0_i32, %c0_i32_0 : i32, i32
  }
  func.func @transform_10(%arg0: i32) -> (i32, i32) {
    %c0_i32 = arith.constant 0 : i32
    %c0_i32_0 = arith.constant 0 : i32
    %c0_i32_1 = arith.constant 0 : i32
    return %c0_i32, %c0_i32_0 : i32, i32
  }
  func.func @transform_11(%arg0: i32) -> (i32, i32) {
    %c0_i32 = arith.constant 0 : i32
    %c0_i32_0 = arith.constant 0 : i32
    return %arg0, %c0_i32 : i32, i32
  }
}

</mosaic_0001>

<llo_original>
// kernel: block_gmlp_layer.1
$region0: #{block_gmlp_layer.1}
  #allocation0 [shape = 'u32[]', space=smem, size = 0x4, offset = 0x4, fixed_abs, tag = 'smem constant byte address 0x4 - core index']
  #allocation1 [shape = 'u32[144,128]{1,0:T(1,128)}', space=vmem, size = 0x12000, scoped, tag = 'internal scratch']
  %s0 = inlined_call_operand.vmem [shape: f32[8,96,32], index: 0, kind: input, shape index: {}]
  %s1 = inlined_call_operand.vmem [shape: f32[1,32], index: 1, kind: input, shape index: {}]
  %s2 = inlined_call_operand.vmem [shape: f32[1,32], index: 2, kind: input, shape index: {}]
  %s3 = inlined_call_operand.vmem [shape: bf16[32,64], index: 3, kind: input, shape index: {}]
  %s4 = inlined_call_operand.vmem [shape: f32[1,64], index: 4, kind: input, shape index: {}]
  %s5 = inlined_call_operand.vmem [shape: f32[1,32], index: 5, kind: input, shape index: {}]
  %s6 = inlined_call_operand.vmem [shape: f32[1,32], index: 6, kind: input, shape index: {}]
  %s7 = inlined_call_operand.vmem [shape: f32[8,8], index: 7, kind: input, shape index: {}]
  %s8 = inlined_call_operand.vmem [shape: f32[8], index: 8, kind: input, shape index: {}]
  %s9 = inlined_call_operand.vmem [shape: bf16[32,32], index: 9, kind: input, shape index: {}]
  %s10 = inlined_call_operand.vmem [shape: f32[1,32], index: 10, kind: input, shape index: {}]
  %s11 = inlined_call_operand.vmem [shape: f32[96,256], index: 11, kind: output, shape index: {}]
  %s12 = sld [smem:[#allocation0]]
  $region62: #{block_gmlp_layer.1} parent=0
    _
  %s14 = ssub.s32 1, %s12
  %s15 = scalar_select 0, %s14, %s12
  $region1: #{block_gmlp_layer.1} parent=0
    #allocation2 [shape = 'u8[4096]{0}', space=smem, size = 0x1000, scoped, tag = 'input window, operand 7, single buffered']
    #allocation3 [shape = 's32[1]{0}', space=sflag, size = 0x4, scoped, tag = 'scoped memory for block_gmlp_layer.1']
    #allocation4 [shape = 'u8[512]{0}', space=smem, size = 0x200, scoped, tag = 'input window, operand 8, single buffered']
    #allocation5 [shape = 's32[1]{0}', space=sflag, size = 0x4, scoped, tag = 'scoped memory for block_gmlp_layer.1']
    %16 = vsyncpa [#allocation3], 0
    %17 = vsyncpa [#allocation5], 0
    // Predicated region
    $region2: #{block_gmlp_layer.1} parent=1 // pred_check
      _
    $region3: #{block_gmlp_layer.1} parent=1 // pred_check_branch
      %19 = sbr.rel (0) target = $region5
    $region4: #{block_gmlp_layer.1} parent=1 // pred_region
      _
    $region5: #{block_gmlp_layer.1} parent=1 // pred_fallthru
      _
    // Predicated region
    $region6: #{block_gmlp_layer.1} parent=1 // pred_check
      _
    $region7: #{block_gmlp_layer.1} parent=1 // pred_check_branch
      %21 = sbr.rel (0) target = $region9
    $region8: #{block_gmlp_layer.1} parent=1 // pred_region
      _
    $region9: #{block_gmlp_layer.1} parent=1 // pred_fallthru
      _
    // Predicated region
    $region10: #{block_gmlp_layer.1} parent=1 // pred_check
      _
    $region11: #{block_gmlp_layer.1} parent=1 // pred_check_branch
      %23 = sbr.rel (0) target = $region13
    $region12: #{block_gmlp_layer.1} parent=1 // pred_region
      _
    $region13: #{block_gmlp_layer.1} parent=1 // pred_fallthru
      _
    // Predicated region
    $region14: #{block_gmlp_layer.1} parent=1 // pred_check
      _
    $region15: #{block_gmlp_layer.1} parent=1 // pred_check_branch
      %25 = sbr.rel (0) target = $region17
    $region16: #{block_gmlp_layer.1} parent=1 // pred_region
      _
    $region17: #{block_gmlp_layer.1} parent=1 // pred_fallthru
      _
    // Predicated region
    $region18: #{block_gmlp_layer.1} parent=1 // pred_check
      _
    $region19: #{block_gmlp_layer.1} parent=1 // pred_check_branch
      %27 = sbr.rel (0) target = $region21
    $region20: #{block_gmlp_layer.1} parent=1 // pred_region
      _
    $region21: #{block_gmlp_layer.1} parent=1 // pred_fallthru
      _
    // Predicated region
    $region22: #{block_gmlp_layer.1} parent=1 // pred_check
      _
    $region23: #{block_gmlp_layer.1} parent=1 // pred_check_branch
      %29 = sbr.rel (0) target = $region25
    $region24: #{block_gmlp_layer.1} parent=1 // pred_region
      _
    $region25: #{block_gmlp_layer.1} parent=1 // pred_fallthru
      _
    // Predicated region
    $region26: #{block_gmlp_layer.1} parent=1 // pred_check
      _
    $region27: #{block_gmlp_layer.1} parent=1 // pred_check_branch
      %31 = sbr.rel (0) target = $region29
    $region28: #{block_gmlp_layer.1} parent=1 // pred_region
      _
    $region29: #{block_gmlp_layer.1} parent=1 // pred_fallthru
      _
    // Predicated region
    $region30: #{block_gmlp_layer.1} parent=1 // pred_check
      _
    $region31: #{block_gmlp_layer.1} parent=1 // pred_check_branch
      %33 = sbr.rel (0) target = $region33
    $region32: #{block_gmlp_layer.1} parent=1 // pred_region
      %s35 = ssub.s32 128, 128
      %36 = vsyncadd [#allocation3], %s35
      %s38 = sshll.u32 %s7, 4
      %s39 = int_to_ptr.vmem [resolvable:$true] %s38
      %41 = dma.vmem_to_smem %s39, 128, [#allocation2], [#allocation3]
    $region33: #{block_gmlp_layer.1} parent=1 // pred_fallthru
      _
    // Predicated region
    $region34: #{block_gmlp_layer.1} parent=1 // pred_check
      _
    $region35: #{block_gmlp_layer.1} parent=1 // pred_check_branch
      %43 = sbr.rel (0) target = $region37
    $region36: #{block_gmlp_layer.1} parent=1 // pred_region
      %s45 = ssub.s32 16, 16
      %46 = vsyncadd [#allocation5], %s45
      %s48 = sshll.u32 %s8, 4
      %s49 = int_to_ptr.vmem [resolvable:$true] %s48
      %51 = dma.vmem_to_smem %s49, 16, [#allocation4], [#allocation5]
    $region37: #{block_gmlp_layer.1} parent=1 // pred_fallthru
      _
    // Predicated region
    $region38: #{block_gmlp_layer.1} parent=1 // pred_check
      _
    $region39: #{block_gmlp_layer.1} parent=1 // pred_check_branch
      %53 = sbr.rel (0) target = $region41
    $region40: #{block_gmlp_layer.1} parent=1 // pred_region
      _
    $region41: #{block_gmlp_layer.1} parent=1 // pred_fallthru
      _
    // Predicated region
    $region42: #{block_gmlp_layer.1} parent=1 // pred_check
      _
    $region43: #{block_gmlp_layer.1} parent=1 // pred_check_branch
      %55 = sbr.rel (0) target = $region45
    $region44: #{block_gmlp_layer.1} parent=1 // pred_region
      _
    $region45: #{block_gmlp_layer.1} parent=1 // pred_fallthru
      _
    // Predicated region
    $region46: #{block_gmlp_layer.1} parent=1 // pred_check
      _
    $region47: #{block_gmlp_layer.1} parent=1 // pred_check_branch
      %57 = sbr.rel (0) target = $region49
    $region48: #{block_gmlp_layer.1} parent=1 // pred_region
      %58 = dma.done [#allocation3], 128
    $region49: #{block_gmlp_layer.1} parent=1 // pred_fallthru
      _
    // Predicated region
    $region50: #{block_gmlp_layer.1} parent=1 // pred_check
      _
    $region51: #{block_gmlp_layer.1} parent=1 // pred_check_branch
      %60 = sbr.rel (0) target = $region53
    $region52: #{block_gmlp_layer.1} parent=1 // pred_region
      %61 = dma.done [#allocation5], 16
    $region53: #{block_gmlp_layer.1} parent=1 // pred_fallthru
      _
    %62 = sfence
    %v64 = vld [vmem:[%s0] sm:$0xff]
    %v65 = vld [vmem:[%s0 + $0x8] sm:$0xff]
    %v66 = vld [vmem:[%s0 + $0x10] sm:$0xff]
    %v67 = vld [vmem:[%s0 + $0x18] sm:$0xff]
    %v68 = vld [vmem:[%s0 + $0x20] sm:$0xff]
    %v69 = vld [vmem:[%s0 + $0x28] sm:$0xff]
    %v70 = vld [vmem:[%s0 + $0x30] sm:$0xff]
    %v71 = vld [vmem:[%s0 + $0x38] sm:$0xff]
    %v72 = vld [vmem:[%s0 + $0x40] sm:$0xff]
    %v73 = vld [vmem:[%s0 + $0x48] sm:$0xff]
    %v74 = vld [vmem:[%s0 + $0x50] sm:$0xff]
    %v75 = vld [vmem:[%s0 + $0x58] sm:$0xff]
    %v76 = vld [vmem:[%s0 + $0x60] sm:$0xff]
    %v77 = vld [vmem:[%s0 + $0x68] sm:$0xff]
    %v78 = vld [vmem:[%s0 + $0x70] sm:$0xff]
    %v79 = vld [vmem:[%s0 + $0x78] sm:$0xff]
    %v80 = vld [vmem:[%s0 + $0x80] sm:$0xff]
    %v81 = vld [vmem:[%s0 + $0x88] sm:$0xff]
    %v82 = vld [vmem:[%s0 + $0x90] sm:$0xff]
    %v83 = vld [vmem:[%s0 + $0x98] sm:$0xff]
    %v84 = vld [vmem:[%s0 + $0xa0] sm:$0xff]
    %v85 = vld [vmem:[%s0 + $0xa8] sm:$0xff]
    %v86 = vld [vmem:[%s0 + $0xb0] sm:$0xff]
    %v87 = vld [vmem:[%s0 + $0xb8] sm:$0xff]
    %v88 = vld [vmem:[%s0 + $0xc0] sm:$0xff]
    %v89 = vld [vmem:[%s0 + $0xc8] sm:$0xff]
    %v90 = vld [vmem:[%s0 + $0xd0] sm:$0xff]
    %v91 = vld [vmem:[%s0 + $0xd8] sm:$0xff]
    %v92 = vld [vmem:[%s0 + $0xe0] sm:$0xff]
    %v93 = vld [vmem:[%s0 + $0xe8] sm:$0xff]
    %v94 = vld [vmem:[%s0 + $0xf0] sm:$0xff]
    %v95 = vld [vmem:[%s0 + $0xf8] sm:$0xff]
    %v96 = vld [vmem:[%s0 + $0x100] sm:$0xff]
    %v97 = vld [vmem:[%s0 + $0x108] sm:$0xff]
    %v98 = vld [vmem:[%s0 + $0x110] sm:$0xff]
    %v99 = vld [vmem:[%s0 + $0x118] sm:$0xff]
    %v100 = vld [vmem:[%s0 + $0x120] sm:$0xff]
    %v101 = vld [vmem:[%s0 + $0x128] sm:$0xff]
    %v102 = vld [vmem:[%s0 + $0x130] sm:$0xff]
    %v103 = vld [vmem:[%s0 + $0x138] sm:$0xff]
    %v104 = vld [vmem:[%s0 + $0x140] sm:$0xff]
    %v105 = vld [vmem:[%s0 + $0x148] sm:$0xff]
    %v106 = vld [vmem:[%s0 + $0x150] sm:$0xff]
    %v107 = vld [vmem:[%s0 + $0x158] sm:$0xff]
    %v108 = vld [vmem:[%s0 + $0x160] sm:$0xff]
    %v109 = vld [vmem:[%s0 + $0x168] sm:$0xff]
    %v110 = vld [vmem:[%s0 + $0x170] sm:$0xff]
    %v111 = vld [vmem:[%s0 + $0x178] sm:$0xff]
    %v112 = vld [vmem:[%s0 + $0x180] sm:$0xff]
    %v113 = vld [vmem:[%s0 + $0x188] sm:$0xff]
    %v114 = vld [vmem:[%s0 + $0x190] sm:$0xff]
    %v115 = vld [vmem:[%s0 + $0x198] sm:$0xff]
    %v116 = vld [vmem:[%s0 + $0x1a0] sm:$0xff]
    %v117 = vld [vmem:[%s0 + $0x1a8] sm:$0xff]
    %v118 = vld [vmem:[%s0 + $0x1b0] sm:$0xff]
    %v119 = vld [vmem:[%s0 + $0x1b8] sm:$0xff]
    %v120 = vld [vmem:[%s0 + $0x1c0] sm:$0xff]
    %v121 = vld [vmem:[%s0 + $0x1c8] sm:$0xff]
    %v122 = vld [vmem:[%s0 + $0x1d0] sm:$0xff]
    %v123 = vld [vmem:[%s0 + $0x1d8] sm:$0xff]
    %v124 = vld [vmem:[%s0 + $0x1e0] sm:$0xff]
    %v125 = vld [vmem:[%s0 + $0x1e8] sm:$0xff]
    %v126 = vld [vmem:[%s0 + $0x1f0] sm:$0xff]
    %v127 = vld [vmem:[%s0 + $0x1f8] sm:$0xff]
    %v128 = vld [vmem:[%s0 + $0x200] sm:$0xff]
    %v129 = vld [vmem:[%s0 + $0x208] sm:$0xff]
    %v130 = vld [vmem:[%s0 + $0x210] sm:$0xff]
    %v131 = vld [vmem:[%s0 + $0x218] sm:$0xff]
    %v132 = vld [vmem:[%s0 + $0x220] sm:$0xff]
    %v133 = vld [vmem:[%s0 + $0x228] sm:$0xff]
    %v134 = vld [vmem:[%s0 + $0x230] sm:$0xff]
    %v135 = vld [vmem:[%s0 + $0x238] sm:$0xff]
    %v136 = vld [vmem:[%s0 + $0x240] sm:$0xff]
    %v137 = vld [vmem:[%s0 + $0x248] sm:$0xff]
    %v138 = vld [vmem:[%s0 + $0x250] sm:$0xff]
    %v139 = vld [vmem:[%s0 + $0x258] sm:$0xff]
    %v140 = vld [vmem:[%s0 + $0x260] sm:$0xff]
    %v141 = vld [vmem:[%s0 + $0x268] sm:$0xff]
    %v142 = vld [vmem:[%s0 + $0x270] sm:$0xff]
    %v143 = vld [vmem:[%s0 + $0x278] sm:$0xff]
    %v144 = vld [vmem:[%s0 + $0x280] sm:$0xff]
    %v145 = vld [vmem:[%s0 + $0x288] sm:$0xff]
    %v146 = vld [vmem:[%s0 + $0x290] sm:$0xff]
    %v147 = vld [vmem:[%s0 + $0x298] sm:$0xff]
    %v148 = vld [vmem:[%s0 + $0x2a0] sm:$0xff]
    %v149 = vld [vmem:[%s0 + $0x2a8] sm:$0xff]
    %v150 = vld [vmem:[%s0 + $0x2b0] sm:$0xff]
    %v151 = vld [vmem:[%s0 + $0x2b8] sm:$0xff]
    %v152 = vld [vmem:[%s0 + $0x2c0] sm:$0xff]
    %v153 = vld [vmem:[%s0 + $0x2c8] sm:$0xff]
    %v154 = vld [vmem:[%s0 + $0x2d0] sm:$0xff]
    %v155 = vld [vmem:[%s0 + $0x2d8] sm:$0xff]
    %v156 = vld [vmem:[%s0 + $0x2e0] sm:$0xff]
    %v157 = vld [vmem:[%s0 + $0x2e8] sm:$0xff]
    %v158 = vld [vmem:[%s0 + $0x2f0] sm:$0xff]
    %v159 = vld [vmem:[%s0 + $0x2f8] sm:$0xff]
    %v160 = vld [vmem:[%s1] sm:$0x1]
    %v161 = vld [vmem:[%s2] sm:$0x1]
    %vm162 = vcmask 261120
    %v163 = vsel %vm162, %v64, 0.0
    %164 = vadd.xlane.f32.xlu0 %v163
    %v165 = vpop.xlane.xlu0 %164
    %v166 = vsel %vm162, %v65, 0.0
    %167 = vadd.xlane.f32.xlu0 %v166
    %v168 = vpop.xlane.xlu0 %167
    %v169 = vsel %vm162, %v66, 0.0
    %170 = vadd.xlane.f32.xlu0 %v169
    %v171 = vpop.xlane.xlu0 %170
    %v172 = vsel %vm162, %v67, 0.0
    %173 = vadd.xlane.f32.xlu0 %v172
    %v174 = vpop.xlane.xlu0 %173
    %v175 = vsel %vm162, %v68, 0.0
    %176 = vadd.xlane.f32.xlu0 %v175
    %v177 = vpop.xlane.xlu0 %176
    %v178 = vsel %vm162, %v69, 0.0
    %179 = vadd.xlane.f32.xlu0 %v178
    %v180 = vpop.xlane.xlu0 %179
    %v181 = vsel %vm162, %v70, 0.0
    %182 = vadd.xlane.f32.xlu0 %v181
    %v183 = vpop.xlane.xlu0 %182
    %v184 = vsel %vm162, %v71, 0.0
    %185 = vadd.xlane.f32.xlu0 %v184
    %v186 = vpop.xlane.xlu0 %185
    %v187 = vsel %vm162, %v72, 0.0
    %188 = vadd.xlane.f32.xlu0 %v187
    %v189 = vpop.xlane.xlu0 %188
    %v190 = vsel %vm162, %v73, 0.0
    %191 = vadd.xlane.f32.xlu0 %v190
    %v192 = vpop.xlane.xlu0 %191
    %v193 = vsel %vm162, %v74, 0.0
    %194 = vadd.xlane.f32.xlu0 %v193
    %v195 = vpop.xlane.xlu0 %194
    %v196 = vsel %vm162, %v75, 0.0
    %197 = vadd.xlane.f32.xlu0 %v196
    %v198 = vpop.xlane.xlu0 %197
    %v199 = vsel %vm162, %v76, 0.0
    %200 = vadd.xlane.f32.xlu0 %v199
    %v201 = vpop.xlane.xlu0 %200
    %v202 = vsel %vm162, %v77, 0.0
    %203 = vadd.xlane.f32.xlu0 %v202
    %v204 = vpop.xlane.xlu0 %203
    %v205 = vsel %vm162, %v78, 0.0
    %206 = vadd.xlane.f32.xlu0 %v205
    %v207 = vpop.xlane.xlu0 %206
    %v208 = vsel %vm162, %v79, 0.0
    %209 = vadd.xlane.f32.xlu0 %v208
    %v210 = vpop.xlane.xlu0 %209
    %v211 = vsel %vm162, %v80, 0.0
    %212 = vadd.xlane.f32.xlu0 %v211
    %v213 = vpop.xlane.xlu0 %212
    %v214 = vsel %vm162, %v81, 0.0
    %215 = vadd.xlane.f32.xlu0 %v214
    %v216 = vpop.xlane.xlu0 %215
    %v217 = vsel %vm162, %v82, 0.0
    %218 = vadd.xlane.f32.xlu0 %v217
    %v219 = vpop.xlane.xlu0 %218
    %v220 = vsel %vm162, %v83, 0.0
    %221 = vadd.xlane.f32.xlu0 %v220
    %v222 = vpop.xlane.xlu0 %221
    %v223 = vsel %vm162, %v84, 0.0
    %224 = vadd.xlane.f32.xlu0 %v223
    %v225 = vpop.xlane.xlu0 %224
    %v226 = vsel %vm162, %v85, 0.0
    %227 = vadd.xlane.f32.xlu0 %v226
    %v228 = vpop.xlane.xlu0 %227
    %v229 = vsel %vm162, %v86, 0.0
    %230 = vadd.xlane.f32.xlu0 %v229
    %v231 = vpop.xlane.xlu0 %230
    %v232 = vsel %vm162, %v87, 0.0
    %233 = vadd.xlane.f32.xlu0 %v232
    %v234 = vpop.xlane.xlu0 %233
    %v235 = vsel %vm162, %v88, 0.0
    %236 = vadd.xlane.f32.xlu0 %v235
    %v237 = vpop.xlane.xlu0 %236
    %v238 = vsel %vm162, %v89, 0.0
    %239 = vadd.xlane.f32.xlu0 %v238
    %v240 = vpop.xlane.xlu0 %239
    %v241 = vsel %vm162, %v90, 0.0
    %242 = vadd.xlane.f32.xlu0 %v241
    %v243 = vpop.xlane.xlu0 %242
    %v244 = vsel %vm162, %v91, 0.0
    %245 = vadd.xlane.f32.xlu0 %v244
    %v246 = vpop.xlane.xlu0 %245
    %v247 = vsel %vm162, %v92, 0.0
    %248 = vadd.xlane.f32.xlu0 %v247
    %v249 = vpop.xlane.xlu0 %248
    %v250 = vsel %vm162, %v93, 0.0
    %251 = vadd.xlane.f32.xlu0 %v250
    %v252 = vpop.xlane.xlu0 %251
    %v253 = vsel %vm162, %v94, 0.0
    %254 = vadd.xlane.f32.xlu0 %v253
    %v255 = vpop.xlane.xlu0 %254
    %v256 = vsel %vm162, %v95, 0.0
    %257 = vadd.xlane.f32.xlu0 %v256
    %v258 = vpop.xlane.xlu0 %257
    %v259 = vsel %vm162, %v96, 0.0
    %260 = vadd.xlane.f32.xlu0 %v259
    %v261 = vpop.xlane.xlu0 %260
    %v262 = vsel %vm162, %v97, 0.0
    %263 = vadd.xlane.f32.xlu0 %v262
    %v264 = vpop.xlane.xlu0 %263
    %v265 = vsel %vm162, %v98, 0.0
    %266 = vadd.xlane.f32.xlu0 %v265
    %v267 = vpop.xlane.xlu0 %266
    %v268 = vsel %vm162, %v99, 0.0
    %269 = vadd.xlane.f32.xlu0 %v268
    %v270 = vpop.xlane.xlu0 %269
    %v271 = vsel %vm162, %v100, 0.0
    %272 = vadd.xlane.f32.xlu0 %v271
    %v273 = vpop.xlane.xlu0 %272
    %v274 = vsel %vm162, %v101, 0.0
    %275 = vadd.xlane.f32.xlu0 %v274
    %v276 = vpop.xlane.xlu0 %275
    %v277 = vsel %vm162, %v102, 0.0
    %278 = vadd.xlane.f32.xlu0 %v277
    %v279 = vpop.xlane.xlu0 %278
    %v280 = vsel %vm162, %v103, 0.0
    %281 = vadd.xlane.f32.xlu0 %v280
    %v282 = vpop.xlane.xlu0 %281
    %v283 = vsel %vm162, %v104, 0.0
    %284 = vadd.xlane.f32.xlu0 %v283
    %v285 = vpop.xlane.xlu0 %284
    %v286 = vsel %vm162, %v105, 0.0
    %287 = vadd.xlane.f32.xlu0 %v286
    %v288 = vpop.xlane.xlu0 %287
    %v289 = vsel %vm162, %v106, 0.0
    %290 = vadd.xlane.f32.xlu0 %v289
    %v291 = vpop.xlane.xlu0 %290
    %v292 = vsel %vm162, %v107, 0.0
    %293 = vadd.xlane.f32.xlu0 %v292
    %v294 = vpop.xlane.xlu0 %293
    %v295 = vsel %vm162, %v108, 0.0
    %296 = vadd.xlane.f32.xlu0 %v295
    %v297 = vpop.xlane.xlu0 %296
    %v298 = vsel %vm162, %v109, 0.0
    %299 = vadd.xlane.f32.xlu0 %v298
    %v300 = vpop.xlane.xlu0 %299
    %v301 = vsel %vm162, %v110, 0.0
    %302 = vadd.xlane.f32.xlu0 %v301
    %v303 = vpop.xlane.xlu0 %302
    %v304 = vsel %vm162, %v111, 0.0
    %305 = vadd.xlane.f32.xlu0 %v304
    %v306 = vpop.xlane.xlu0 %305
    %v307 = vsel %vm162, %v112, 0.0
    %308 = vadd.xlane.f32.xlu0 %v307
    %v309 = vpop.xlane.xlu0 %308
    %v310 = vsel %vm162, %v113, 0.0
    %311 = vadd.xlane.f32.xlu0 %v310
    %v312 = vpop.xlane.xlu0 %311
    %v313 = vsel %vm162, %v114, 0.0
    %314 = vadd.xlane.f32.xlu0 %v313
    %v315 = vpop.xlane.xlu0 %314
    %v316 = vsel %vm162, %v115, 0.0
    %317 = vadd.xlane.f32.xlu0 %v316
    %v318 = vpop.xlane.xlu0 %317
    %v319 = vsel %vm162, %v116, 0.0
    %320 = vadd.xlane.f32.xlu0 %v319
    %v321 = vpop.xlane.xlu0 %320
    %v322 = vsel %vm162, %v117, 0.0
    %323 = vadd.xlane.f32.xlu0 %v322
    %v324 = vpop.xlane.xlu0 %323
    %v325 = vsel %vm162, %v118, 0.0
    %326 = vadd.xlane.f32.xlu0 %v325
    %v327 = vpop.xlane.xlu0 %326
    %v328 = vsel %vm162, %v119, 0.0
    %329 = vadd.xlane.f32.xlu0 %v328
    %v330 = vpop.xlane.xlu0 %329
    %v331 = vsel %vm162, %v120, 0.0
    %332 = vadd.xlane.f32.xlu0 %v331
    %v333 = vpop.xlane.xlu0 %332
    %v334 = vsel %vm162, %v121, 0.0
    %335 = vadd.xlane.f32.xlu0 %v334
    %v336 = vpop.xlane.xlu0 %335
    %v337 = vsel %vm162, %v122, 0.0
    %338 = vadd.xlane.f32.xlu0 %v337
    %v339 = vpop.xlane.xlu0 %338
    %v340 = vsel %vm162, %v123, 0.0
    %341 = vadd.xlane.f32.xlu0 %v340
    %v342 = vpop.xlane.xlu0 %341
    %v343 = vsel %vm162, %v124, 0.0
    %344 = vadd.xlane.f32.xlu0 %v343
    %v345 = vpop.xlane.xlu0 %344
    %v346 = vsel %vm162, %v125, 0.0
    %347 = vadd.xlane.f32.xlu0 %v346
    %v348 = vpop.xlane.xlu0 %347
    %v349 = vsel %vm162, %v126, 0.0
    %350 = vadd.xlane.f32.xlu0 %v349
    %v351 = vpop.xlane.xlu0 %350
    %v352 = vsel %vm162, %v127, 0.0
    %353 = vadd.xlane.f32.xlu0 %v352
    %v354 = vpop.xlane.xlu0 %353
    %v355 = vsel %vm162, %v128, 0.0
    %356 = vadd.xlane.f32.xlu0 %v355
    %v357 = vpop.xlane.xlu0 %356
    %v358 = vsel %vm162, %v129, 0.0
    %359 = vadd.xlane.f32.xlu0 %v358
    %v360 = vpop.xlane.xlu0 %359
    %v361 = vsel %vm162, %v130, 0.0
    %362 = vadd.xlane.f32.xlu0 %v361
    %v363 = vpop.xlane.xlu0 %362
    %v364 = vsel %vm162, %v131, 0.0
    %365 = vadd.xlane.f32.xlu0 %v364
    %v366 = vpop.xlane.xlu0 %365
    %v367 = vsel %vm162, %v132, 0.0
    %368 = vadd.xlane.f32.xlu0 %v367
    %v369 = vpop.xlane.xlu0 %368
    %v370 = vsel %vm162, %v133, 0.0
    %371 = vadd.xlane.f32.xlu0 %v370
    %v372 = vpop.xlane.xlu0 %371
    %v373 = vsel %vm162, %v134, 0.0
    %374 = vadd.xlane.f32.xlu0 %v373
    %v375 = vpop.xlane.xlu0 %374
    %v376 = vsel %vm162, %v135, 0.0
    %377 = vadd.xlane.f32.xlu0 %v376
    %v378 = vpop.xlane.xlu0 %377
    %v379 = vsel %vm162, %v136, 0.0
    %380 = vadd.xlane.f32.xlu0 %v379
    %v381 = vpop.xlane.xlu0 %380
    %v382 = vsel %vm162, %v137, 0.0
    %383 = vadd.xlane.f32.xlu0 %v382
    %v384 = vpop.xlane.xlu0 %383
    %v385 = vsel %vm162, %v138, 0.0
    %386 = vadd.xlane.f32.xlu0 %v385
    %v387 = vpop.xlane.xlu0 %386
    %v388 = vsel %vm162, %v139, 0.0
    %389 = vadd.xlane.f32.xlu0 %v388
    %v390 = vpop.xlane.xlu0 %389
    %v391 = vsel %vm162, %v140, 0.0
    %392 = vadd.xlane.f32.xlu0 %v391
    %v393 = vpop.xlane.xlu0 %392
    %v394 = vsel %vm162, %v141, 0.0
    %395 = vadd.xlane.f32.xlu0 %v394
    %v396 = vpop.xlane.xlu0 %395
    %v397 = vsel %vm162, %v142, 0.0
    %398 = vadd.xlane.f32.xlu0 %v397
    %v399 = vpop.xlane.xlu0 %398
    %v400 = vsel %vm162, %v143, 0.0
    %401 = vadd.xlane.f32.xlu0 %v400
    %v402 = vpop.xlane.xlu0 %401
    %v403 = vsel %vm162, %v144, 0.0
    %404 = vadd.xlane.f32.xlu0 %v403
    %v405 = vpop.xlane.xlu0 %404
    %v406 = vsel %vm162, %v145, 0.0
    %407 = vadd.xlane.f32.xlu0 %v406
    %v408 = vpop.xlane.xlu0 %407
    %v409 = vsel %vm162, %v146, 0.0
    %410 = vadd.xlane.f32.xlu0 %v409
    %v411 = vpop.xlane.xlu0 %410
    %v412 = vsel %vm162, %v147, 0.0
    %413 = vadd.xlane.f32.xlu0 %v412
    %v414 = vpop.xlane.xlu0 %413
    %v415 = vsel %vm162, %v148, 0.0
    %416 = vadd.xlane.f32.xlu0 %v415
    %v417 = vpop.xlane.xlu0 %416
    %v418 = vsel %vm162, %v149, 0.0
    %419 = vadd.xlane.f32.xlu0 %v418
    %v420 = vpop.xlane.xlu0 %419
    %v421 = vsel %vm162, %v150, 0.0
    %422 = vadd.xlane.f32.xlu0 %v421
    %v423 = vpop.xlane.xlu0 %422
    %v424 = vsel %vm162, %v151, 0.0
    %425 = vadd.xlane.f32.xlu0 %v424
    %v426 = vpop.xlane.xlu0 %425
    %v427 = vsel %vm162, %v152, 0.0
    %428 = vadd.xlane.f32.xlu0 %v427
    %v429 = vpop.xlane.xlu0 %428
    %v430 = vsel %vm162, %v153, 0.0
    %431 = vadd.xlane.f32.xlu0 %v430
    %v432 = vpop.xlane.xlu0 %431
    %v433 = vsel %vm162, %v154, 0.0
    %434 = vadd.xlane.f32.xlu0 %v433
    %v435 = vpop.xlane.xlu0 %434
    %v436 = vsel %vm162, %v155, 0.0
    %437 = vadd.xlane.f32.xlu0 %v436
    %v438 = vpop.xlane.xlu0 %437
    %v439 = vsel %vm162, %v156, 0.0
    %440 = vadd.xlane.f32.xlu0 %v439
    %v441 = vpop.xlane.xlu0 %440
    %v442 = vsel %vm162, %v157, 0.0
    %443 = vadd.xlane.f32.xlu0 %v442
    %v444 = vpop.xlane.xlu0 %443
    %v445 = vsel %vm162, %v158, 0.0
    %446 = vadd.xlane.f32.xlu0 %v445
    %v447 = vpop.xlane.xlu0 %446
    %v448 = vsel %vm162, %v159, 0.0
    %449 = vadd.xlane.f32.xlu0 %v448
    %v450 = vpop.xlane.xlu0 %449
    %v451 = vrcp.pop 32.0
    %v452 = vmul.f32 %v165, %v451
    %v453 = vmul.f32 %v168, %v451
    %v454 = vmul.f32 %v171, %v451
    %v455 = vmul.f32 %v174, %v451
    %v456 = vmul.f32 %v177, %v451
    %v457 = vmul.f32 %v180, %v451
    %v458 = vmul.f32 %v183, %v451
    %v459 = vmul.f32 %v186, %v451
    %v460 = vmul.f32 %v189, %v451
    %v461 = vmul.f32 %v192, %v451
    %v462 = vmul.f32 %v195, %v451
    %v463 = vmul.f32 %v198, %v451
    %v464 = vmul.f32 %v201, %v451
    %v465 = vmul.f32 %v204, %v451
    %v466 = vmul.f32 %v207, %v451
    %v467 = vmul.f32 %v210, %v451
    %v468 = vmul.f32 %v213, %v451
    %v469 = vmul.f32 %v216, %v451
    %v470 = vmul.f32 %v219, %v451
    %v471 = vmul.f32 %v222, %v451
    %v472 = vmul.f32 %v225, %v451
    %v473 = vmul.f32 %v228, %v451
    %v474 = vmul.f32 %v231, %v451
    %v475 = vmul.f32 %v234, %v451
    %v476 = vmul.f32 %v237, %v451
    %v477 = vmul.f32 %v240, %v451
    %v478 = vmul.f32 %v243, %v451
    %v479 = vmul.f32 %v246, %v451
    %v480 = vmul.f32 %v249, %v451
    %v481 = vmul.f32 %v252, %v451
    %v482 = vmul.f32 %v255, %v451
    %v483 = vmul.f32 %v258, %v451
    %v484 = vmul.f32 %v261, %v451
    %v485 = vmul.f32 %v264, %v451
    %v486 = vmul.f32 %v267, %v451
    %v487 = vmul.f32 %v270, %v451
    %v488 = vmul.f32 %v273, %v451
    %v489 = vmul.f32 %v276, %v451
    %v490 = vmul.f32 %v279, %v451
    %v491 = vmul.f32 %v282, %v451
    %v492 = vmul.f32 %v285, %v451
    %v493 = vmul.f32 %v288, %v451
    %v494 = vmul.f32 %v291, %v451
    %v495 = vmul.f32 %v294, %v451
    %v496 = vmul.f32 %v297, %v451
    %v497 = vmul.f32 %v300, %v451
    %v498 = vmul.f32 %v303, %v451
    %v499 = vmul.f32 %v306, %v451
    %v500 = vmul.f32 %v309, %v451
    %v501 = vmul.f32 %v312, %v451
    %v502 = vmul.f32 %v315, %v451
    %v503 = vmul.f32 %v318, %v451
    %v504 = vmul.f32 %v321, %v451
    %v505 = vmul.f32 %v324, %v451
    %v506 = vmul.f32 %v327, %v451
    %v507 = vmul.f32 %v330, %v451
    %v508 = vmul.f32 %v333, %v451
    %v509 = vmul.f32 %v336, %v451
    %v510 = vmul.f32 %v339, %v451
    %v511 = vmul.f32 %v342, %v451
    %v512 = vmul.f32 %v345, %v451
    %v513 = vmul.f32 %v348, %v451
    %v514 = vmul.f32 %v351, %v451
    %v515 = vmul.f32 %v354, %v451
    %v516 = vmul.f32 %v357, %v451
    %v517 = vmul.f32 %v360, %v451
    %v518 = vmul.f32 %v363, %v451
    %v519 = vmul.f32 %v366, %v451
    %v520 = vmul.f32 %v369, %v451
    %v521 = vmul.f32 %v372, %v451
    %v522 = vmul.f32 %v375, %v451
    %v523 = vmul.f32 %v378, %v451
    %v524 = vmul.f32 %v381, %v451
    %v525 = vmul.f32 %v384, %v451
    %v526 = vmul.f32 %v387, %v451
    %v527 = vmul.f32 %v390, %v451
    %v528 = vmul.f32 %v393, %v451
    %v529 = vmul.f32 %v396, %v451
    %v530 = vmul.f32 %v399, %v451
    %v531 = vmul.f32 %v402, %v451
    %v532 = vmul.f32 %v405, %v451
    %v533 = vmul.f32 %v408, %v451
    %v534 = vmul.f32 %v411, %v451
    %v535 = vmul.f32 %v414, %v451
    %v536 = vmul.f32 %v417, %v451
    %v537 = vmul.f32 %v420, %v451
    %v538 = vmul.f32 %v423, %v451
    %v539 = vmul.f32 %v426, %v451
    %v540 = vmul.f32 %v429, %v451
    %v541 = vmul.f32 %v432, %v451
    %v542 = vmul.f32 %v435, %v451
    %v543 = vmul.f32 %v438, %v451
    %v544 = vmul.f32 %v441, %v451
    %v545 = vmul.f32 %v444, %v451
    %v546 = vmul.f32 %v447, %v451
    %v547 = vmul.f32 %v450, %v451
    %v548 = vmul.f32 %v64, %v64
    %v549 = vmul.f32 %v65, %v65
    %v550 = vmul.f32 %v66, %v66
    %v551 = vmul.f32 %v67, %v67
    %v552 = vmul.f32 %v68, %v68
    %v553 = vmul.f32 %v69, %v69
    %v554 = vmul.f32 %v70, %v70
    %v555 = vmul.f32 %v71, %v71
    %v556 = vmul.f32 %v72, %v72
    %v557 = vmul.f32 %v73, %v73
    %v558 = vmul.f32 %v74, %v74
    %v559 = vmul.f32 %v75, %v75
    %v560 = vmul.f32 %v76, %v76
    %v561 = vmul.f32 %v77, %v77
    %v562 = vmul.f32 %v78, %v78
    %v563 = vmul.f32 %v79, %v79
    %v564 = vmul.f32 %v80, %v80
    %v565 = vmul.f32 %v81, %v81
    %v566 = vmul.f32 %v82, %v82
    %v567 = vmul.f32 %v83, %v83
    %v568 = vmul.f32 %v84, %v84
    %v569 = vmul.f32 %v85, %v85
    %v570 = vmul.f32 %v86, %v86
    %v571 = vmul.f32 %v87, %v87
    %v572 = vmul.f32 %v88, %v88
    %v573 = vmul.f32 %v89, %v89
    %v574 = vmul.f32 %v90, %v90
    %v575 = vmul.f32 %v91, %v91
    %v576 = vmul.f32 %v92, %v92
    %v577 = vmul.f32 %v93, %v93
    %v578 = vmul.f32 %v94, %v94
    %v579 = vmul.f32 %v95, %v95
    %v580 = vmul.f32 %v96, %v96
    %v581 = vmul.f32 %v97, %v97
    %v582 = vmul.f32 %v98, %v98
    %v583 = vmul.f32 %v99, %v99
    %v584 = vmul.f32 %v100, %v100
    %v585 = vmul.f32 %v101, %v101
    %v586 = vmul.f32 %v102, %v102
    %v587 = vmul.f32 %v103, %v103
    %v588 = vmul.f32 %v104, %v104
    %v589 = vmul.f32 %v105, %v105
    %v590 = vmul.f32 %v106, %v106
    %v591 = vmul.f32 %v107, %v107
    %v592 = vmul.f32 %v108, %v108
    %v593 = vmul.f32 %v109, %v109
    %v594 = vmul.f32 %v110, %v110
    %v595 = vmul.f32 %v111, %v111
    %v596 = vmul.f32 %v112, %v112
    %v597 = vmul.f32 %v113, %v113
    %v598 = vmul.f32 %v114, %v114
    %v599 = vmul.f32 %v115, %v115
    %v600 = vmul.f32 %v116, %v116
    %v601 = vmul.f32 %v117, %v117
    %v602 = vmul.f32 %v118, %v118
    %v603 = vmul.f32 %v119, %v119
    %v604 = vmul.f32 %v120, %v120
    %v605 = vmul.f32 %v121, %v121
    %v606 = vmul.f32 %v122, %v122
    %v607 = vmul.f32 %v123, %v123
    %v608 = vmul.f32 %v124, %v124
    %v609 = vmul.f32 %v125, %v125
    %v610 = vmul.f32 %v126, %v126
    %v611 = vmul.f32 %v127, %v127
    %v612 = vmul.f32 %v128, %v128
    %v613 = vmul.f32 %v129, %v129
    %v614 = vmul.f32 %v130, %v130
    %v615 = vmul.f32 %v131, %v131
    %v616 = vmul.f32 %v132, %v132
    %v617 = vmul.f32 %v133, %v133
    %v618 = vmul.f32 %v134, %v134
    %v619 = vmul.f32 %v135, %v135
    %v620 = vmul.f32 %v136, %v136
    %v621 = vmul.f32 %v137, %v137
    %v622 = vmul.f32 %v138, %v138
    %v623 = vmul.f32 %v139, %v139
    %v624 = vmul.f32 %v140, %v140
    %v625 = vmul.f32 %v141, %v141
    %v626 = vmul.f32 %v142, %v142
    %v627 = vmul.f32 %v143, %v143
    %v628 = vmul.f32 %v144, %v144
    %v629 = vmul.f32 %v145, %v145
    %v630 = vmul.f32 %v146, %v146
    %v631 = vmul.f32 %v147, %v147
    %v632 = vmul.f32 %v148, %v148
    %v633 = vmul.f32 %v149, %v149
    %v634 = vmul.f32 %v150, %v150
    %v635 = vmul.f32 %v151, %v151
    %v636 = vmul.f32 %v152, %v152
    %v637 = vmul.f32 %v153, %v153
    %v638 = vmul.f32 %v154, %v154
    %v639 = vmul.f32 %v155, %v155
    %v640 = vmul.f32 %v156, %v156
    %v641 = vmul.f32 %v157, %v157
    %v642 = vmul.f32 %v158, %v158
    %v643 = vmul.f32 %v159, %v159
    %v644 = vsel %vm162, %v548, 0.0
    %645 = vadd.xlane.f32.xlu0 %v644
    %v646 = vpop.xlane.xlu0 %645
    %v647 = vsel %vm162, %v549, 0.0
    %648 = vadd.xlane.f32.xlu0 %v647
    %v649 = vpop.xlane.xlu0 %648
    %v650 = vsel %vm162, %v550, 0.0
    %651 = vadd.xlane.f32.xlu0 %v650
    %v652 = vpop.xlane.xlu0 %651
    %v653 = vsel %vm162, %v551, 0.0
    %654 = vadd.xlane.f32.xlu0 %v653
    %v655 = vpop.xlane.xlu0 %654
    %v656 = vsel %vm162, %v552, 0.0
    %657 = vadd.xlane.f32.xlu0 %v656
    %v658 = vpop.xlane.xlu0 %657
    %v659 = vsel %vm162, %v553, 0.0
    %660 = vadd.xlane.f32.xlu0 %v659
    %v661 = vpop.xlane.xlu0 %660
    %v662 = vsel %vm162, %v554, 0.0
    %663 = vadd.xlane.f32.xlu0 %v662
    %v664 = vpop.xlane.xlu0 %663
    %v665 = vsel %vm162, %v555, 0.0
    %666 = vadd.xlane.f32.xlu0 %v665
    %v667 = vpop.xlane.xlu0 %666
    %v668 = vsel %vm162, %v556, 0.0
    %669 = vadd.xlane.f32.xlu0 %v668
    %v670 = vpop.xlane.xlu0 %669
    %v671 = vsel %vm162, %v557, 0.0
    %672 = vadd.xlane.f32.xlu0 %v671
    %v673 = vpop.xlane.xlu0 %672
    %v674 = vsel %vm162, %v558, 0.0
    %675 = vadd.xlane.f32.xlu0 %v674
    %v676 = vpop.xlane.xlu0 %675
    %v677 = vsel %vm162, %v559, 0.0
    %678 = vadd.xlane.f32.xlu0 %v677
    %v679 = vpop.xlane.xlu0 %678
    %v680 = vsel %vm162, %v560, 0.0
    %681 = vadd.xlane.f32.xlu0 %v680
    %v682 = vpop.xlane.xlu0 %681
    %v683 = vsel %vm162, %v561, 0.0
    %684 = vadd.xlane.f32.xlu0 %v683
    %v685 = vpop.xlane.xlu0 %684
    %v686 = vsel %vm162, %v562, 0.0
    %687 = vadd.xlane.f32.xlu0 %v686
    %v688 = vpop.xlane.xlu0 %687
    %v689 = vsel %vm162, %v563, 0.0
    %690 = vadd.xlane.f32.xlu0 %v689
    %v691 = vpop.xlane.xlu0 %690
    %v692 = vsel %vm162, %v564, 0.0
    %693 = vadd.xlane.f32.xlu0 %v692
    %v694 = vpop.xlane.xlu0 %693
    %v695 = vsel %vm162, %v565, 0.0
    %696 = vadd.xlane.f32.xlu0 %v695
    %v697 = vpop.xlane.xlu0 %696
    %v698 = vsel %vm162, %v566, 0.0
    %699 = vadd.xlane.f32.xlu0 %v698
    %v700 = vpop.xlane.xlu0 %699
    %v701 = vsel %vm162, %v567, 0.0
    %702 = vadd.xlane.f32.xlu0 %v701
    %v703 = vpop.xlane.xlu0 %702
    %v704 = vsel %vm162, %v568, 0.0
    %705 = vadd.xlane.f32.xlu0 %v704
    %v706 = vpop.xlane.xlu0 %705
    %v707 = vsel %vm162, %v569, 0.0
    %708 = vadd.xlane.f32.xlu0 %v707
    %v709 = vpop.xlane.xlu0 %708
    %v710 = vsel %vm162, %v570, 0.0
    %711 = vadd.xlane.f32.xlu0 %v710
    %v712 = vpop.xlane.xlu0 %711
    %v713 = vsel %vm162, %v571, 0.0
    %714 = vadd.xlane.f32.xlu0 %v713
    %v715 = vpop.xlane.xlu0 %714
    %v716 = vsel %vm162, %v572, 0.0
    %717 = vadd.xlane.f32.xlu0 %v716
    %v718 = vpop.xlane.xlu0 %717
    %v719 = vsel %vm162, %v573, 0.0
    %720 = vadd.xlane.f32.xlu0 %v719
    %v721 = vpop.xlane.xlu0 %720
    %v722 = vsel %vm162, %v574, 0.0
    %723 = vadd.xlane.f32.xlu0 %v722
    %v724 = vpop.xlane.xlu0 %723
    %v725 = vsel %vm162, %v575, 0.0
    %726 = vadd.xlane.f32.xlu0 %v725
    %v727 = vpop.xlane.xlu0 %726
    %v728 = vsel %vm162, %v576, 0.0
    %729 = vadd.xlane.f32.xlu0 %v728
    %v730 = vpop.xlane.xlu0 %729
    %v731 = vsel %vm162, %v577, 0.0
    %732 = vadd.xlane.f32.xlu0 %v731
    %v733 = vpop.xlane.xlu0 %732
    %v734 = vsel %vm162, %v578, 0.0
    %735 = vadd.xlane.f32.xlu0 %v734
    %v736 = vpop.xlane.xlu0 %735
    %v737 = vsel %vm162, %v579, 0.0
    %738 = vadd.xlane.f32.xlu0 %v737
    %v739 = vpop.xlane.xlu0 %738
    %v740 = vsel %vm162, %v580, 0.0
    %741 = vadd.xlane.f32.xlu0 %v740
    %v742 = vpop.xlane.xlu0 %741
    %v743 = vsel %vm162, %v581, 0.0
    %744 = vadd.xlane.f32.xlu0 %v743
    %v745 = vpop.xlane.xlu0 %744
    %v746 = vsel %vm162, %v582, 0.0
    %747 = vadd.xlane.f32.xlu0 %v746
    %v748 = vpop.xlane.xlu0 %747
    %v749 = vsel %vm162, %v583, 0.0
    %750 = vadd.xlane.f32.xlu0 %v749
    %v751 = vpop.xlane.xlu0 %750
    %v752 = vsel %vm162, %v584, 0.0
    %753 = vadd.xlane.f32.xlu0 %v752
    %v754 = vpop.xlane.xlu0 %753
    %v755 = vsel %vm162, %v585, 0.0
    %756 = vadd.xlane.f32.xlu0 %v755
    %v757 = vpop.xlane.xlu0 %756
    %v758 = vsel %vm162, %v586, 0.0
    %759 = vadd.xlane.f32.xlu0 %v758
    %v760 = vpop.xlane.xlu0 %759
    %v761 = vsel %vm162, %v587, 0.0
    %762 = vadd.xlane.f32.xlu0 %v761
    %v763 = vpop.xlane.xlu0 %762
    %v764 = vsel %vm162, %v588, 0.0
    %765 = vadd.xlane.f32.xlu0 %v764
    %v766 = vpop.xlane.xlu0 %765
    %v767 = vsel %vm162, %v589, 0.0
    %768 = vadd.xlane.f32.xlu0 %v767
    %v769 = vpop.xlane.xlu0 %768
    %v770 = vsel %vm162, %v590, 0.0
    %771 = vadd.xlane.f32.xlu0 %v770
    %v772 = vpop.xlane.xlu0 %771
    %v773 = vsel %vm162, %v591, 0.0
    %774 = vadd.xlane.f32.xlu0 %v773
    %v775 = vpop.xlane.xlu0 %774
    %v776 = vsel %vm162, %v592, 0.0
    %777 = vadd.xlane.f32.xlu0 %v776
    %v778 = vpop.xlane.xlu0 %777
    %v779 = vsel %vm162, %v593, 0.0
    %780 = vadd.xlane.f32.xlu0 %v779
    %v781 = vpop.xlane.xlu0 %780
    %v782 = vsel %vm162, %v594, 0.0
    %783 = vadd.xlane.f32.xlu0 %v782
    %v784 = vpop.xlane.xlu0 %783
    %v785 = vsel %vm162, %v595, 0.0
    %786 = vadd.xlane.f32.xlu0 %v785
    %v787 = vpop.xlane.xlu0 %786
    %v788 = vsel %vm162, %v596, 0.0
    %789 = vadd.xlane.f32.xlu0 %v788
    %v790 = vpop.xlane.xlu0 %789
    %v791 = vsel %vm162, %v597, 0.0
    %792 = vadd.xlane.f32.xlu0 %v791
    %v793 = vpop.xlane.xlu0 %792
    %v794 = vsel %vm162, %v598, 0.0
    %795 = vadd.xlane.f32.xlu0 %v794
    %v796 = vpop.xlane.xlu0 %795
    %v797 = vsel %vm162, %v599, 0.0
    %798 = vadd.xlane.f32.xlu0 %v797
    %v799 = vpop.xlane.xlu0 %798
    %v800 = vsel %vm162, %v600, 0.0
    %801 = vadd.xlane.f32.xlu0 %v800
    %v802 = vpop.xlane.xlu0 %801
    %v803 = vsel %vm162, %v601, 0.0
    %804 = vadd.xlane.f32.xlu0 %v803
    %v805 = vpop.xlane.xlu0 %804
    %v806 = vsel %vm162, %v602, 0.0
    %807 = vadd.xlane.f32.xlu0 %v806
    %v808 = vpop.xlane.xlu0 %807
    %v809 = vsel %vm162, %v603, 0.0
    %810 = vadd.xlane.f32.xlu0 %v809
    %v811 = vpop.xlane.xlu0 %810
    %v812 = vsel %vm162, %v604, 0.0
    %813 = vadd.xlane.f32.xlu0 %v812
    %v814 = vpop.xlane.xlu0 %813
    %v815 = vsel %vm162, %v605, 0.0
    %816 = vadd.xlane.f32.xlu0 %v815
    %v817 = vpop.xlane.xlu0 %816
    %v818 = vsel %vm162, %v606, 0.0
    %819 = vadd.xlane.f32.xlu0 %v818
    %v820 = vpop.xlane.xlu0 %819
    %v821 = vsel %vm162, %v607, 0.0
    %822 = vadd.xlane.f32.xlu0 %v821
    %v823 = vpop.xlane.xlu0 %822
    %v824 = vsel %vm162, %v608, 0.0
    %825 = vadd.xlane.f32.xlu0 %v824
    %v826 = vpop.xlane.xlu0 %825
    %v827 = vsel %vm162, %v609, 0.0
    %828 = vadd.xlane.f32.xlu0 %v827
    %v829 = vpop.xlane.xlu0 %828
    %v830 = vsel %vm162, %v610, 0.0
    %831 = vadd.xlane.f32.xlu0 %v830
    %v832 = vpop.xlane.xlu0 %831
    %v833 = vsel %vm162, %v611, 0.0
    %834 = vadd.xlane.f32.xlu0 %v833
    %v835 = vpop.xlane.xlu0 %834
    %v836 = vsel %vm162, %v612, 0.0
    %837 = vadd.xlane.f32.xlu0 %v836
    %v838 = vpop.xlane.xlu0 %837
    %v839 = vsel %vm162, %v613, 0.0
    %840 = vadd.xlane.f32.xlu0 %v839
    %v841 = vpop.xlane.xlu0 %840
    %v842 = vsel %vm162, %v614, 0.0
    %843 = vadd.xlane.f32.xlu0 %v842
    %v844 = vpop.xlane.xlu0 %843
    %v845 = vsel %vm162, %v615, 0.0
    %846 = vadd.xlane.f32.xlu0 %v845
    %v847 = vpop.xlane.xlu0 %846
    %v848 = vsel %vm162, %v616, 0.0
    %849 = vadd.xlane.f32.xlu0 %v848
    %v850 = vpop.xlane.xlu0 %849
    %v851 = vsel %vm162, %v617, 0.0
    %852 = vadd.xlane.f32.xlu0 %v851
    %v853 = vpop.xlane.xlu0 %852
    %v854 = vsel %vm162, %v618, 0.0
    %855 = vadd.xlane.f32.xlu0 %v854
    %v856 = vpop.xlane.xlu0 %855
    %v857 = vsel %vm162, %v619, 0.0
    %858 = vadd.xlane.f32.xlu0 %v857
    %v859 = vpop.xlane.xlu0 %858
    %v860 = vsel %vm162, %v620, 0.0
    %861 = vadd.xlane.f32.xlu0 %v860
    %v862 = vpop.xlane.xlu0 %861
    %v863 = vsel %vm162, %v621, 0.0
    %864 = vadd.xlane.f32.xlu0 %v863
    %v865 = vpop.xlane.xlu0 %864
    %v866 = vsel %vm162, %v622, 0.0
    %867 = vadd.xlane.f32.xlu0 %v866
    %v868 = vpop.xlane.xlu0 %867
    %v869 = vsel %vm162, %v623, 0.0
    %870 = vadd.xlane.f32.xlu0 %v869
    %v871 = vpop.xlane.xlu0 %870
    %v872 = vsel %vm162, %v624, 0.0
    %873 = vadd.xlane.f32.xlu0 %v872
    %v874 = vpop.xlane.xlu0 %873
    %v875 = vsel %vm162, %v625, 0.0
    %876 = vadd.xlane.f32.xlu0 %v875
    %v877 = vpop.xlane.xlu0 %876
    %v878 = vsel %vm162, %v626, 0.0
    %879 = vadd.xlane.f32.xlu0 %v878
    %v880 = vpop.xlane.xlu0 %879
    %v881 = vsel %vm162, %v627, 0.0
    %882 = vadd.xlane.f32.xlu0 %v881
    %v883 = vpop.xlane.xlu0 %882
    %v884 = vsel %vm162, %v628, 0.0
    %885 = vadd.xlane.f32.xlu0 %v884
    %v886 = vpop.xlane.xlu0 %885
    %v887 = vsel %vm162, %v629, 0.0
    %888 = vadd.xlane.f32.xlu0 %v887
    %v889 = vpop.xlane.xlu0 %888
    %v890 = vsel %vm162, %v630, 0.0
    %891 = vadd.xlane.f32.xlu0 %v890
    %v892 = vpop.xlane.xlu0 %891
    %v893 = vsel %vm162, %v631, 0.0
    %894 = vadd.xlane.f32.xlu0 %v893
    %v895 = vpop.xlane.xlu0 %894
    %v896 = vsel %vm162, %v632, 0.0
    %897 = vadd.xlane.f32.xlu0 %v896
    %v898 = vpop.xlane.xlu0 %897
    %v899 = vsel %vm162, %v633, 0.0
    %900 = vadd.xlane.f32.xlu0 %v899
    %v901 = vpop.xlane.xlu0 %900
    %v902 = vsel %vm162, %v634, 0.0
    %903 = vadd.xlane.f32.xlu0 %v902
    %v904 = vpop.xlane.xlu0 %903
    %v905 = vsel %vm162, %v635, 0.0
    %906 = vadd.xlane.f32.xlu0 %v905
    %v907 = vpop.xlane.xlu0 %906
    %v908 = vsel %vm162, %v636, 0.0
    %909 = vadd.xlane.f32.xlu0 %v908
    %v910 = vpop.xlane.xlu0 %909
    %v911 = vsel %vm162, %v637, 0.0
    %912 = vadd.xlane.f32.xlu0 %v911
    %v913 = vpop.xlane.xlu0 %912
    %v914 = vsel %vm162, %v638, 0.0
    %915 = vadd.xlane.f32.xlu0 %v914
    %v916 = vpop.xlane.xlu0 %915
    %v917 = vsel %vm162, %v639, 0.0
    %918 = vadd.xlane.f32.xlu0 %v917
    %v919 = vpop.xlane.xlu0 %918
    %v920 = vsel %vm162, %v640, 0.0
    %921 = vadd.xlane.f32.xlu0 %v920
    %v922 = vpop.xlane.xlu0 %921
    %v923 = vsel %vm162, %v641, 0.0
    %924 = vadd.xlane.f32.xlu0 %v923
    %v925 = vpop.xlane.xlu0 %924
    %v926 = vsel %vm162, %v642, 0.0
    %927 = vadd.xlane.f32.xlu0 %v926
    %v928 = vpop.xlane.xlu0 %927
    %v929 = vsel %vm162, %v643, 0.0
    %930 = vadd.xlane.f32.xlu0 %v929
    %v931 = vpop.xlane.xlu0 %930
    %v932 = vmul.f32 %v646, %v451
    %v933 = vmul.f32 %v649, %v451
    %v934 = vmul.f32 %v652, %v451
    %v935 = vmul.f32 %v655, %v451
    %v936 = vmul.f32 %v658, %v451
    %v937 = vmul.f32 %v661, %v451
    %v938 = vmul.f32 %v664, %v451
    %v939 = vmul.f32 %v667, %v451
    %v940 = vmul.f32 %v670, %v451
    %v941 = vmul.f32 %v673, %v451
    %v942 = vmul.f32 %v676, %v451
    %v943 = vmul.f32 %v679, %v451
    %v944 = vmul.f32 %v682, %v451
    %v945 = vmul.f32 %v685, %v451
    %v946 = vmul.f32 %v688, %v451
    %v947 = vmul.f32 %v691, %v451
    %v948 = vmul.f32 %v694, %v451
    %v949 = vmul.f32 %v697, %v451
    %v950 = vmul.f32 %v700, %v451
    %v951 = vmul.f32 %v703, %v451
    %v952 = vmul.f32 %v706, %v451
    %v953 = vmul.f32 %v709, %v451
    %v954 = vmul.f32 %v712, %v451
    %v955 = vmul.f32 %v715, %v451
    %v956 = vmul.f32 %v718, %v451
    %v957 = vmul.f32 %v721, %v451
    %v958 = vmul.f32 %v724, %v451
    %v959 = vmul.f32 %v727, %v451
    %v960 = vmul.f32 %v730, %v451
    %v961 = vmul.f32 %v733, %v451
    %v962 = vmul.f32 %v736, %v451
    %v963 = vmul.f32 %v739, %v451
    %v964 = vmul.f32 %v742, %v451
    %v965 = vmul.f32 %v745, %v451
    %v966 = vmul.f32 %v748, %v451
    %v967 = vmul.f32 %v751, %v451
    %v968 = vmul.f32 %v754, %v451
    %v969 = vmul.f32 %v757, %v451
    %v970 = vmul.f32 %v760, %v451
    %v971 = vmul.f32 %v763, %v451
    %v972 = vmul.f32 %v766, %v451
    %v973 = vmul.f32 %v769, %v451
    %v974 = vmul.f32 %v772, %v451
    %v975 = vmul.f32 %v775, %v451
    %v976 = vmul.f32 %v778, %v451
    %v977 = vmul.f32 %v781, %v451
    %v978 = vmul.f32 %v784, %v451
    %v979 = vmul.f32 %v787, %v451
    %v980 = vmul.f32 %v790, %v451
    %v981 = vmul.f32 %v793, %v451
    %v982 = vmul.f32 %v796, %v451
    %v983 = vmul.f32 %v799, %v451
    %v984 = vmul.f32 %v802, %v451
    %v985 = vmul.f32 %v805, %v451
    %v986 = vmul.f32 %v808, %v451
    %v987 = vmul.f32 %v811, %v451
    %v988 = vmul.f32 %v814, %v451
    %v989 = vmul.f32 %v817, %v451
    %v990 = vmul.f32 %v820, %v451
    %v991 = vmul.f32 %v823, %v451
    %v992 = vmul.f32 %v826, %v451
    %v993 = vmul.f32 %v829, %v451
    %v994 = vmul.f32 %v832, %v451
    %v995 = vmul.f32 %v835, %v451
    %v996 = vmul.f32 %v838, %v451
    %v997 = vmul.f32 %v841, %v451
    %v998 = vmul.f32 %v844, %v451
    %v999 = vmul.f32 %v847, %v451
    %v1000 = vmul.f32 %v850, %v451
    %v1001 = vmul.f32 %v853, %v451
    %v1002 = vmul.f32 %v856, %v451
    %v1003 = vmul.f32 %v859, %v451
    %v1004 = vmul.f32 %v862, %v451
    %v1005 = vmul.f32 %v865, %v451
    %v1006 = vmul.f32 %v868, %v451
    %v1007 = vmul.f32 %v871, %v451
    %v1008 = vmul.f32 %v874, %v451
    %v1009 = vmul.f32 %v877, %v451
    %v1010 = vmul.f32 %v880, %v451
    %v1011 = vmul.f32 %v883, %v451
    %v1012 = vmul.f32 %v886, %v451
    %v1013 = vmul.f32 %v889, %v451
    %v1014 = vmul.f32 %v892, %v451
    %v1015 = vmul.f32 %v895, %v451
    %v1016 = vmul.f32 %v898, %v451
    %v1017 = vmul.f32 %v901, %v451
    %v1018 = vmul.f32 %v904, %v451
    %v1019 = vmul.f32 %v907, %v451
    %v1020 = vmul.f32 %v910, %v451
    %v1021 = vmul.f32 %v913, %v451
    %v1022 = vmul.f32 %v916, %v451
    %v1023 = vmul.f32 %v919, %v451
    %v1024 = vmul.f32 %v922, %v451
    %v1025 = vmul.f32 %v925, %v451
    %v1026 = vmul.f32 %v928, %v451
    %v1027 = vmul.f32 %v931, %v451
    %v1028 = vmul.f32 %v452, %v452
    %v1029 = vmul.f32 %v453, %v453
    %v1030 = vmul.f32 %v454, %v454
    %v1031 = vmul.f32 %v455, %v455
    %v1032 = vmul.f32 %v456, %v456
    %v1033 = vmul.f32 %v457, %v457
    %v1034 = vmul.f32 %v458, %v458
    %v1035 = vmul.f32 %v459, %v459
    %v1036 = vmul.f32 %v460, %v460
    %v1037 = vmul.f32 %v461, %v461
    %v1038 = vmul.f32 %v462, %v462
    %v1039 = vmul.f32 %v463, %v463
    %v1040 = vmul.f32 %v464, %v464
    %v1041 = vmul.f32 %v465, %v465
    %v1042 = vmul.f32 %v466, %v466
    %v1043 = vmul.f32 %v467, %v467
    %v1044 = vmul.f32 %v468, %v468
    %v1045 = vmul.f32 %v469, %v469
    %v1046 = vmul.f32 %v470, %v470
    %v1047 = vmul.f32 %v471, %v471
    %v1048 = vmul.f32 %v472, %v472
    %v1049 = vmul.f32 %v473, %v473
    %v1050 = vmul.f32 %v474, %v474
    %v1051 = vmul.f32 %v475, %v475
    %v1052 = vmul.f32 %v476, %v476
    %v1053 = vmul.f32 %v477, %v477
    %v1054 = vmul.f32 %v478, %v478
    %v1055 = vmul.f32 %v479, %v479
    %v1056 = vmul.f32 %v480, %v480
    %v1057 = vmul.f32 %v481, %v481
    %v1058 = vmul.f32 %v482, %v482
    %v1059 = vmul.f32 %v483, %v483
    %v1060 = vmul.f32 %v484, %v484
    %v1061 = vmul.f32 %v485, %v485
    %v1062 = vmul.f32 %v486, %v486
    %v1063 = vmul.f32 %v487, %v487
    %v1064 = vmul.f32 %v488, %v488
    %v1065 = vmul.f32 %v489, %v489
    %v1066 = vmul.f32 %v490, %v490
    %v1067 = vmul.f32 %v491, %v491
    %v1068 = vmul.f32 %v492, %v492
    %v1069 = vmul.f32 %v493, %v493
    %v1070 = vmul.f32 %v494, %v494
    %v1071 = vmul.f32 %v495, %v495
    %v1072 = vmul.f32 %v496, %v496
    %v1073 = vmul.f32 %v497, %v497
    %v1074 = vmul.f32 %v498, %v498
    %v1075 = vmul.f32 %v499, %v499
    %v1076 = vmul.f32 %v500, %v500
    %v1077 = vmul.f32 %v501, %v501
    %v1078 = vmul.f32 %v502, %v502
    %v1079 = vmul.f32 %v503, %v503
    %v1080 = vmul.f32 %v504, %v504
    %v1081 = vmul.f32 %v505, %v505
    %v1082 = vmul.f32 %v506, %v506
    %v1083 = vmul.f32 %v507, %v507
    %v1084 = vmul.f32 %v508, %v508
    %v1085 = vmul.f32 %v509, %v509
    %v1086 = vmul.f32 %v510, %v510
    %v1087 = vmul.f32 %v511, %v511
    %v1088 = vmul.f32 %v512, %v512
    %v1089 = vmul.f32 %v513, %v513
    %v1090 = vmul.f32 %v514, %v514
    %v1091 = vmul.f32 %v515, %v515
    %v1092 = vmul.f32 %v516, %v516
    %v1093 = vmul.f32 %v517, %v517
    %v1094 = vmul.f32 %v518, %v518
    %v1095 = vmul.f32 %v519, %v519
    %v1096 = vmul.f32 %v520, %v520
    %v1097 = vmul.f32 %v521, %v521
    %v1098 = vmul.f32 %v522, %v522
    %v1099 = vmul.f32 %v523, %v523
    %v1100 = vmul.f32 %v524, %v524
    %v1101 = vmul.f32 %v525, %v525
    %v1102 = vmul.f32 %v526, %v526
    %v1103 = vmul.f32 %v527, %v527
    %v1104 = vmul.f32 %v528, %v528
    %v1105 = vmul.f32 %v529, %v529
    %v1106 = vmul.f32 %v530, %v530
    %v1107 = vmul.f32 %v531, %v531
    %v1108 = vmul.f32 %v532, %v532
    %v1109 = vmul.f32 %v533, %v533
    %v1110 = vmul.f32 %v534, %v534
    %v1111 = vmul.f32 %v535, %v535
    %v1112 = vmul.f32 %v536, %v536
    %v1113 = vmul.f32 %v537, %v537
    %v1114 = vmul.f32 %v538, %v538
    %v1115 = vmul.f32 %v539, %v539
    %v1116 = vmul.f32 %v540, %v540
    %v1117 = vmul.f32 %v541, %v541
    %v1118 = vmul.f32 %v542, %v542
    %v1119 = vmul.f32 %v543, %v543
    %v1120 = vmul.f32 %v544, %v544
    %v1121 = vmul.f32 %v545, %v545
    %v1122 = vmul.f32 %v546, %v546
    %v1123 = vmul.f32 %v547, %v547
    %v1124 = vsub.f32 %v932, %v1028
    %v1125 = vsub.f32 %v933, %v1029
    %v1126 = vsub.f32 %v934, %v1030
    %v1127 = vsub.f32 %v935, %v1031
    %v1128 = vsub.f32 %v936, %v1032
    %v1129 = vsub.f32 %v937, %v1033
    %v1130 = vsub.f32 %v938, %v1034
    %v1131 = vsub.f32 %v939, %v1035
    %v1132 = vsub.f32 %v940, %v1036
    %v1133 = vsub.f32 %v941, %v1037
    %v1134 = vsub.f32 %v942, %v1038
    %v1135 = vsub.f32 %v943, %v1039
    %v1136 = vsub.f32 %v944, %v1040
    %v1137 = vsub.f32 %v945, %v1041
    %v1138 = vsub.f32 %v946, %v1042
    %v1139 = vsub.f32 %v947, %v1043
    %v1140 = vsub.f32 %v948, %v1044
    %v1141 = vsub.f32 %v949, %v1045
    %v1142 = vsub.f32 %v950, %v1046
    %v1143 = vsub.f32 %v951, %v1047
    %v1144 = vsub.f32 %v952, %v1048
    %v1145 = vsub.f32 %v953, %v1049
    %v1146 = vsub.f32 %v954, %v1050
    %v1147 = vsub.f32 %v955, %v1051
    %v1148 = vsub.f32 %v956, %v1052
    %v1149 = vsub.f32 %v957, %v1053
    %v1150 = vsub.f32 %v958, %v1054
    %v1151 = vsub.f32 %v959, %v1055
    %v1152 = vsub.f32 %v960, %v1056
    %v1153 = vsub.f32 %v961, %v1057
    %v1154 = vsub.f32 %v962, %v1058
    %v1155 = vsub.f32 %v963, %v1059
    %v1156 = vsub.f32 %v964, %v1060
    %v1157 = vsub.f32 %v965, %v1061
    %v1158 = vsub.f32 %v966, %v1062
    %v1159 = vsub.f32 %v967, %v1063
    %v1160 = vsub.f32 %v968, %v1064
    %v1161 = vsub.f32 %v969, %v1065
    %v1162 = vsub.f32 %v970, %v1066
    %v1163 = vsub.f32 %v971, %v1067
    %v1164 = vsub.f32 %v972, %v1068
    %v1165 = vsub.f32 %v973, %v1069
    %v1166 = vsub.f32 %v974, %v1070
    %v1167 = vsub.f32 %v975, %v1071
    %v1168 = vsub.f32 %v976, %v1072
    %v1169 = vsub.f32 %v977, %v1073
    %v1170 = vsub.f32 %v978, %v1074
    %v1171 = vsub.f32 %v979, %v1075
    %v1172 = vsub.f32 %v980, %v1076
    %v1173 = vsub.f32 %v981, %v1077
    %v1174 = vsub.f32 %v982, %v1078
    %v1175 = vsub.f32 %v983, %v1079
    %v1176 = vsub.f32 %v984, %v1080
    %v1177 = vsub.f32 %v985, %v1081
    %v1178 = vsub.f32 %v986, %v1082
    %v1179 = vsub.f32 %v987, %v1083
    %v1180 = vsub.f32 %v988, %v1084
    %v1181 = vsub.f32 %v989, %v1085
    %v1182 = vsub.f32 %v990, %v1086
    %v1183 = vsub.f32 %v991, %v1087
    %v1184 = vsub.f32 %v992, %v1088
    %v1185 = vsub.f32 %v993, %v1089
    %v1186 = vsub.f32 %v994, %v1090
    %v1187 = vsub.f32 %v995, %v1091
    %v1188 = vsub.f32 %v996, %v1092
    %v1189 = vsub.f32 %v997, %v1093
    %v1190 = vsub.f32 %v998, %v1094
    %v1191 = vsub.f32 %v999, %v1095
    %v1192 = vsub.f32 %v1000, %v1096
    %v1193 = vsub.f32 %v1001, %v1097
    %v1194 = vsub.f32 %v1002, %v1098
    %v1195 = vsub.f32 %v1003, %v1099
    %v1196 = vsub.f32 %v1004, %v1100
    %v1197 = vsub.f32 %v1005, %v1101
    %v1198 = vsub.f32 %v1006, %v1102
    %v1199 = vsub.f32 %v1007, %v1103
    %v1200 = vsub.f32 %v1008, %v1104
    %v1201 = vsub.f32 %v1009, %v1105
    %v1202 = vsub.f32 %v1010, %v1106
    %v1203 = vsub.f32 %v1011, %v1107
    %v1204 = vsub.f32 %v1012, %v1108
    %v1205 = vsub.f32 %v1013, %v1109
    %v1206 = vsub.f32 %v1014, %v1110
    %v1207 = vsub.f32 %v1015, %v1111
    %v1208 = vsub.f32 %v1016, %v1112
    %v1209 = vsub.f32 %v1017, %v1113
    %v1210 = vsub.f32 %v1018, %v1114
    %v1211 = vsub.f32 %v1019, %v1115
    %v1212 = vsub.f32 %v1020, %v1116
    %v1213 = vsub.f32 %v1021, %v1117
    %v1214 = vsub.f32 %v1022, %v1118
    %v1215 = vsub.f32 %v1023, %v1119
    %v1216 = vsub.f32 %v1024, %v1120
    %v1217 = vsub.f32 %v1025, %v1121
    %v1218 = vsub.f32 %v1026, %v1122
    %v1219 = vsub.f32 %v1027, %v1123
    %v1220 = vmax.f32 %v1124, 0.0
    %v1221 = vmax.f32 %v1125, 0.0
    %v1222 = vmax.f32 %v1126, 0.0
    %v1223 = vmax.f32 %v1127, 0.0
    %v1224 = vmax.f32 %v1128, 0.0
    %v1225 = vmax.f32 %v1129, 0.0
    %v1226 = vmax.f32 %v1130, 0.0
    %v1227 = vmax.f32 %v1131, 0.0
    %v1228 = vmax.f32 %v1132, 0.0
    %v1229 = vmax.f32 %v1133, 0.0
    %v1230 = vmax.f32 %v1134, 0.0
    %v1231 = vmax.f32 %v1135, 0.0
    %v1232 = vmax.f32 %v1136, 0.0
    %v1233 = vmax.f32 %v1137, 0.0
    %v1234 = vmax.f32 %v1138, 0.0
    %v1235 = vmax.f32 %v1139, 0.0
    %v1236 = vmax.f32 %v1140, 0.0
    %v1237 = vmax.f32 %v1141, 0.0
    %v1238 = vmax.f32 %v1142, 0.0
    %v1239 = vmax.f32 %v1143, 0.0
    %v1240 = vmax.f32 %v1144, 0.0
    %v1241 = vmax.f32 %v1145, 0.0
    %v1242 = vmax.f32 %v1146, 0.0
    %v1243 = vmax.f32 %v1147, 0.0
    %v1244 = vmax.f32 %v1148, 0.0
    %v1245 = vmax.f32 %v1149, 0.0
    %v1246 = vmax.f32 %v1150, 0.0
    %v1247 = vmax.f32 %v1151, 0.0
    %v1248 = vmax.f32 %v1152, 0.0
    %v1249 = vmax.f32 %v1153, 0.0
    %v1250 = vmax.f32 %v1154, 0.0
    %v1251 = vmax.f32 %v1155, 0.0
    %v1252 = vmax.f32 %v1156, 0.0
    %v1253 = vmax.f32 %v1157, 0.0
    %v1254 = vmax.f32 %v1158, 0.0
    %v1255 = vmax.f32 %v1159, 0.0
    %v1256 = vmax.f32 %v1160, 0.0
    %v1257 = vmax.f32 %v1161, 0.0
    %v1258 = vmax.f32 %v1162, 0.0
    %v1259 = vmax.f32 %v1163, 0.0
    %v1260 = vmax.f32 %v1164, 0.0
    %v1261 = vmax.f32 %v1165, 0.0
    %v1262 = vmax.f32 %v1166, 0.0
    %v1263 = vmax.f32 %v1167, 0.0
    %v1264 = vmax.f32 %v1168, 0.0
    %v1265 = vmax.f32 %v1169, 0.0
    %v1266 = vmax.f32 %v1170, 0.0
    %v1267 = vmax.f32 %v1171, 0.0
    %v1268 = vmax.f32 %v1172, 0.0
    %v1269 = vmax.f32 %v1173, 0.0
    %v1270 = vmax.f32 %v1174, 0.0
    %v1271 = vmax.f32 %v1175, 0.0
    %v1272 = vmax.f32 %v1176, 0.0
    %v1273 = vmax.f32 %v1177, 0.0
    %v1274 = vmax.f32 %v1178, 0.0
    %v1275 = vmax.f32 %v1179, 0.0
    %v1276 = vmax.f32 %v1180, 0.0
    %v1277 = vmax.f32 %v1181, 0.0
    %v1278 = vmax.f32 %v1182, 0.0
    %v1279 = vmax.f32 %v1183, 0.0
    %v1280 = vmax.f32 %v1184, 0.0
    %v1281 = vmax.f32 %v1185, 0.0
    %v1282 = vmax.f32 %v1186, 0.0
    %v1283 = vmax.f32 %v1187, 0.0
    %v1284 = vmax.f32 %v1188, 0.0
    %v1285 = vmax.f32 %v1189, 0.0
    %v1286 = vmax.f32 %v1190, 0.0
    %v1287 = vmax.f32 %v1191, 0.0
    %v1288 = vmax.f32 %v1192, 0.0
    %v1289 = vmax.f32 %v1193, 0.0
    %v1290 = vmax.f32 %v1194, 0.0
    %v1291 = vmax.f32 %v1195, 0.0
    %v1292 = vmax.f32 %v1196, 0.0
    %v1293 = vmax.f32 %v1197, 0.0
    %v1294 = vmax.f32 %v1198, 0.0
    %v1295 = vmax.f32 %v1199, 0.0
    %v1296 = vmax.f32 %v1200, 0.0
    %v1297 = vmax.f32 %v1201, 0.0
    %v1298 = vmax.f32 %v1202, 0.0
    %v1299 = vmax.f32 %v1203, 0.0
    %v1300 = vmax.f32 %v1204, 0.0
    %v1301 = vmax.f32 %v1205, 0.0
    %v1302 = vmax.f32 %v1206, 0.0
    %v1303 = vmax.f32 %v1207, 0.0
    %v1304 = vmax.f32 %v1208, 0.0
    %v1305 = vmax.f32 %v1209, 0.0
    %v1306 = vmax.f32 %v1210, 0.0
    %v1307 = vmax.f32 %v1211, 0.0
    %v1308 = vmax.f32 %v1212, 0.0
    %v1309 = vmax.f32 %v1213, 0.0
    %v1310 = vmax.f32 %v1214, 0.0
    %v1311 = vmax.f32 %v1215, 0.0
    %v1312 = vmax.f32 %v1216, 0.0
    %v1313 = vmax.f32 %v1217, 0.0
    %v1314 = vmax.f32 %v1218, 0.0
    %v1315 = vmax.f32 %v1219, 0.0
    %v1316 = vsub.f32 %v64, %v452
    %v1317 = vsub.f32 %v65, %v453
    %v1318 = vsub.f32 %v66, %v454
    %v1319 = vsub.f32 %v67, %v455
    %v1320 = vsub.f32 %v68, %v456
    %v1321 = vsub.f32 %v69, %v457
    %v1322 = vsub.f32 %v70, %v458
    %v1323 = vsub.f32 %v71, %v459
    %v1324 = vsub.f32 %v72, %v460
    %v1325 = vsub.f32 %v73, %v461
    %v1326 = vsub.f32 %v74, %v462
    %v1327 = vsub.f32 %v75, %v463
    %v1328 = vsub.f32 %v76, %v464
    %v1329 = vsub.f32 %v77, %v465
    %v1330 = vsub.f32 %v78, %v466
    %v1331 = vsub.f32 %v79, %v467
    %v1332 = vsub.f32 %v80, %v468
    %v1333 = vsub.f32 %v81, %v469
    %v1334 = vsub.f32 %v82, %v470
    %v1335 = vsub.f32 %v83, %v471
    %v1336 = vsub.f32 %v84, %v472
    %v1337 = vsub.f32 %v85, %v473
    %v1338 = vsub.f32 %v86, %v474
    %v1339 = vsub.f32 %v87, %v475
    %v1340 = vsub.f32 %v88, %v476
    %v1341 = vsub.f32 %v89, %v477
    %v1342 = vsub.f32 %v90, %v478
    %v1343 = vsub.f32 %v91, %v479
    %v1344 = vsub.f32 %v92, %v480
    %v1345 = vsub.f32 %v93, %v481
    %v1346 = vsub.f32 %v94, %v482
    %v1347 = vsub.f32 %v95, %v483
    %v1348 = vsub.f32 %v96, %v484
    %v1349 = vsub.f32 %v97, %v485
    %v1350 = vsub.f32 %v98, %v486
    %v1351 = vsub.f32 %v99, %v487
    %v1352 = vsub.f32 %v100, %v488
    %v1353 = vsub.f32 %v101, %v489
    %v1354 = vsub.f32 %v102, %v490
    %v1355 = vsub.f32 %v103, %v491
    %v1356 = vsub.f32 %v104, %v492
    %v1357 = vsub.f32 %v105, %v493
    %v1358 = vsub.f32 %v106, %v494
    %v1359 = vsub.f32 %v107, %v495
    %v1360 = vsub.f32 %v108, %v496
    %v1361 = vsub.f32 %v109, %v497
    %v1362 = vsub.f32 %v110, %v498
    %v1363 = vsub.f32 %v111, %v499
    %v1364 = vsub.f32 %v112, %v500
    %v1365 = vsub.f32 %v113, %v501
    %v1366 = vsub.f32 %v114, %v502
    %v1367 = vsub.f32 %v115, %v503
    %v1368 = vsub.f32 %v116, %v504
    %v1369 = vsub.f32 %v117, %v505
    %v1370 = vsub.f32 %v118, %v506
    %v1371 = vsub.f32 %v119, %v507
    %v1372 = vsub.f32 %v120, %v508
    %v1373 = vsub.f32 %v121, %v509
    %v1374 = vsub.f32 %v122, %v510
    %v1375 = vsub.f32 %v123, %v511
    %v1376 = vsub.f32 %v124, %v512
    %v1377 = vsub.f32 %v125, %v513
    %v1378 = vsub.f32 %v126, %v514
    %v1379 = vsub.f32 %v127, %v515
    %v1380 = vsub.f32 %v128, %v516
    %v1381 = vsub.f32 %v129, %v517
    %v1382 = vsub.f32 %v130, %v518
    %v1383 = vsub.f32 %v131, %v519
    %v1384 = vsub.f32 %v132, %v520
    %v1385 = vsub.f32 %v133, %v521
    %v1386 = vsub.f32 %v134, %v522
    %v1387 = vsub.f32 %v135, %v523
    %v1388 = vsub.f32 %v136, %v524
    %v1389 = vsub.f32 %v137, %v525
    %v1390 = vsub.f32 %v138, %v526
    %v1391 = vsub.f32 %v139, %v527
    %v1392 = vsub.f32 %v140, %v528
    %v1393 = vsub.f32 %v141, %v529
    %v1394 = vsub.f32 %v142, %v530
    %v1395 = vsub.f32 %v143, %v531
    %v1396 = vsub.f32 %v144, %v532
    %v1397 = vsub.f32 %v145, %v533
    %v1398 = vsub.f32 %v146, %v534
    %v1399 = vsub.f32 %v147, %v535
    %v1400 = vsub.f32 %v148, %v536
    %v1401 = vsub.f32 %v149, %v537
    %v1402 = vsub.f32 %v150, %v538
    %v1403 = vsub.f32 %v151, %v539
    %v1404 = vsub.f32 %v152, %v540
    %v1405 = vsub.f32 %v153, %v541
    %v1406 = vsub.f32 %v154, %v542
    %v1407 = vsub.f32 %v155, %v543
    %v1408 = vsub.f32 %v156, %v544
    %v1409 = vsub.f32 %v157, %v545
    %v1410 = vsub.f32 %v158, %v546
    %v1411 = vsub.f32 %v159, %v547
    %v1412 = vadd.f32 %v1220, 1e-05
    %v1413 = vadd.f32 %v1221, 1e-05
    %v1414 = vadd.f32 %v1222, 1e-05
    %v1415 = vadd.f32 %v1223, 1e-05
    %v1416 = vadd.f32 %v1224, 1e-05
    %v1417 = vadd.f32 %v1225, 1e-05
    %v1418 = vadd.f32 %v1226, 1e-05
    %v1419 = vadd.f32 %v1227, 1e-05
    %v1420 = vadd.f32 %v1228, 1e-05
    %v1421 = vadd.f32 %v1229, 1e-05
    %v1422 = vadd.f32 %v1230, 1e-05
    %v1423 = vadd.f32 %v1231, 1e-05
    %v1424 = vadd.f32 %v1232, 1e-05
    %v1425 = vadd.f32 %v1233, 1e-05
    %v1426 = vadd.f32 %v1234, 1e-05
    %v1427 = vadd.f32 %v1235, 1e-05
    %v1428 = vadd.f32 %v1236, 1e-05
    %v1429 = vadd.f32 %v1237, 1e-05
    %v1430 = vadd.f32 %v1238, 1e-05
    %v1431 = vadd.f32 %v1239, 1e-05
    %v1432 = vadd.f32 %v1240, 1e-05
    %v1433 = vadd.f32 %v1241, 1e-05
    %v1434 = vadd.f32 %v1242, 1e-05
    %v1435 = vadd.f32 %v1243, 1e-05
    %v1436 = vadd.f32 %v1244, 1e-05
    %v1437 = vadd.f32 %v1245, 1e-05
    %v1438 = vadd.f32 %v1246, 1e-05
    %v1439 = vadd.f32 %v1247, 1e-05
    %v1440 = vadd.f32 %v1248, 1e-05
    %v1441 = vadd.f32 %v1249, 1e-05
    %v1442 = vadd.f32 %v1250, 1e-05
    %v1443 = vadd.f32 %v1251, 1e-05
    %v1444 = vadd.f32 %v1252, 1e-05
    %v1445 = vadd.f32 %v1253, 1e-05
    %v1446 = vadd.f32 %v1254, 1e-05
    %v1447 = vadd.f32 %v1255, 1e-05
    %v1448 = vadd.f32 %v1256, 1e-05
    %v1449 = vadd.f32 %v1257, 1e-05
    %v1450 = vadd.f32 %v1258, 1e-05
    %v1451 = vadd.f32 %v1259, 1e-05
    %v1452 = vadd.f32 %v1260, 1e-05
    %v1453 = vadd.f32 %v1261, 1e-05
    %v1454 = vadd.f32 %v1262, 1e-05
    %v1455 = vadd.f32 %v1263, 1e-05
    %v1456 = vadd.f32 %v1264, 1e-05
    %v1457 = vadd.f32 %v1265, 1e-05
    %v1458 = vadd.f32 %v1266, 1e-05
    %v1459 = vadd.f32 %v1267, 1e-05
    %v1460 = vadd.f32 %v1268, 1e-05
    %v1461 = vadd.f32 %v1269, 1e-05
    %v1462 = vadd.f32 %v1270, 1e-05
    %v1463 = vadd.f32 %v1271, 1e-05
    %v1464 = vadd.f32 %v1272, 1e-05
    %v1465 = vadd.f32 %v1273, 1e-05
    %v1466 = vadd.f32 %v1274, 1e-05
    %v1467 = vadd.f32 %v1275, 1e-05
    %v1468 = vadd.f32 %v1276, 1e-05
    %v1469 = vadd.f32 %v1277, 1e-05
    %v1470 = vadd.f32 %v1278, 1e-05
    %v1471 = vadd.f32 %v1279, 1e-05
    %v1472 = vadd.f32 %v1280, 1e-05
    %v1473 = vadd.f32 %v1281, 1e-05
    %v1474 = vadd.f32 %v1282, 1e-05
    %v1475 = vadd.f32 %v1283, 1e-05
    %v1476 = vadd.f32 %v1284, 1e-05
    %v1477 = vadd.f32 %v1285, 1e-05
    %v1478 = vadd.f32 %v1286, 1e-05
    %v1479 = vadd.f32 %v1287, 1e-05
    %v1480 = vadd.f32 %v1288, 1e-05
    %v1481 = vadd.f32 %v1289, 1e-05
    %v1482 = vadd.f32 %v1290, 1e-05
    %v1483 = vadd.f32 %v1291, 1e-05
    %v1484 = vadd.f32 %v1292, 1e-05
    %v1485 = vadd.f32 %v1293, 1e-05
    %v1486 = vadd.f32 %v1294, 1e-05
    %v1487 = vadd.f32 %v1295, 1e-05
    %v1488 = vadd.f32 %v1296, 1e-05
    %v1489 = vadd.f32 %v1297, 1e-05
    %v1490 = vadd.f32 %v1298, 1e-05
    %v1491 = vadd.f32 %v1299, 1e-05
    %v1492 = vadd.f32 %v1300, 1e-05
    %v1493 = vadd.f32 %v1301, 1e-05
    %v1494 = vadd.f32 %v1302, 1e-05
    %v1495 = vadd.f32 %v1303, 1e-05
    %v1496 = vadd.f32 %v1304, 1e-05
    %v1497 = vadd.f32 %v1305, 1e-05
    %v1498 = vadd.f32 %v1306, 1e-05
    %v1499 = vadd.f32 %v1307, 1e-05
    %v1500 = vadd.f32 %v1308, 1e-05
    %v1501 = vadd.f32 %v1309, 1e-05
    %v1502 = vadd.f32 %v1310, 1e-05
    %v1503 = vadd.f32 %v1311, 1e-05
    %v1504 = vadd.f32 %v1312, 1e-05
    %v1505 = vadd.f32 %v1313, 1e-05
    %v1506 = vadd.f32 %v1314, 1e-05
    %v1507 = vadd.f32 %v1315, 1e-05
    %v1508 = vrsqrt.pop %v1412
    %v1509 = vrsqrt.pop %v1413
    %v1510 = vrsqrt.pop %v1414
    %v1511 = vrsqrt.pop %v1415
    %v1512 = vrsqrt.pop %v1416
    %v1513 = vrsqrt.pop %v1417
    %v1514 = vrsqrt.pop %v1418
    %v1515 = vrsqrt.pop %v1419
    %v1516 = vrsqrt.pop %v1420
    %v1517 = vrsqrt.pop %v1421
    %v1518 = vrsqrt.pop %v1422
    %v1519 = vrsqrt.pop %v1423
    %v1520 = vrsqrt.pop %v1424
    %v1521 = vrsqrt.pop %v1425
    %v1522 = vrsqrt.pop %v1426
    %v1523 = vrsqrt.pop %v1427
    %v1524 = vrsqrt.pop %v1428
    %v1525 = vrsqrt.pop %v1429
    %v1526 = vrsqrt.pop %v1430
    %v1527 = vrsqrt.pop %v1431
    %v1528 = vrsqrt.pop %v1432
    %v1529 = vrsqrt.pop %v1433
    %v1530 = vrsqrt.pop %v1434
    %v1531 = vrsqrt.pop %v1435
    %v1532 = vrsqrt.pop %v1436
    %v1533 = vrsqrt.pop %v1437
    %v1534 = vrsqrt.pop %v1438
    %v1535 = vrsqrt.pop %v1439
    %v1536 = vrsqrt.pop %v1440
    %v1537 = vrsqrt.pop %v1441
    %v1538 = vrsqrt.pop %v1442
    %v1539 = vrsqrt.pop %v1443
    %v1540 = vrsqrt.pop %v1444
    %v1541 = vrsqrt.pop %v1445
    %v1542 = vrsqrt.pop %v1446
    %v1543 = vrsqrt.pop %v1447
    %v1544 = vrsqrt.pop %v1448
    %v1545 = vrsqrt.pop %v1449
    %v1546 = vrsqrt.pop %v1450
    %v1547 = vrsqrt.pop %v1451
    %v1548 = vrsqrt.pop %v1452
    %v1549 = vrsqrt.pop %v1453
    %v1550 = vrsqrt.pop %v1454
    %v1551 = vrsqrt.pop %v1455
    %v1552 = vrsqrt.pop %v1456
    %v1553 = vrsqrt.pop %v1457
    %v1554 = vrsqrt.pop %v1458
    %v1555 = vrsqrt.pop %v1459
    %v1556 = vrsqrt.pop %v1460
    %v1557 = vrsqrt.pop %v1461
    %v1558 = vrsqrt.pop %v1462
    %v1559 = vrsqrt.pop %v1463
    %v1560 = vrsqrt.pop %v1464
    %v1561 = vrsqrt.pop %v1465
    %v1562 = vrsqrt.pop %v1466
    %v1563 = vrsqrt.pop %v1467
    %v1564 = vrsqrt.pop %v1468
    %v1565 = vrsqrt.pop %v1469
    %v1566 = vrsqrt.pop %v1470
    %v1567 = vrsqrt.pop %v1471
    %v1568 = vrsqrt.pop %v1472
    %v1569 = vrsqrt.pop %v1473
    %v1570 = vrsqrt.pop %v1474
    %v1571 = vrsqrt.pop %v1475
    %v1572 = vrsqrt.pop %v1476
    %v1573 = vrsqrt.pop %v1477
    %v1574 = vrsqrt.pop %v1478
    %v1575 = vrsqrt.pop %v1479
    %v1576 = vrsqrt.pop %v1480
    %v1577 = vrsqrt.pop %v1481
    %v1578 = vrsqrt.pop %v1482
    %v1579 = vrsqrt.pop %v1483
    %v1580 = vrsqrt.pop %v1484
    %v1581 = vrsqrt.pop %v1485
    %v1582 = vrsqrt.pop %v1486
    %v1583 = vrsqrt.pop %v1487
    %v1584 = vrsqrt.pop %v1488
    %v1585 = vrsqrt.pop %v1489
    %v1586 = vrsqrt.pop %v1490
    %v1587 = vrsqrt.pop %v1491
    %v1588 = vrsqrt.pop %v1492
    %v1589 = vrsqrt.pop %v1493
    %v1590 = vrsqrt.pop %v1494
    %v1591 = vrsqrt.pop %v1495
    %v1592 = vrsqrt.pop %v1496
    %v1593 = vrsqrt.pop %v1497
    %v1594 = vrsqrt.pop %v1498
    %v1595 = vrsqrt.pop %v1499
    %v1596 = vrsqrt.pop %v1500
    %v1597 = vrsqrt.pop %v1501
    %v1598 = vrsqrt.pop %v1502
    %v1599 = vrsqrt.pop %v1503
    %v1600 = vrsqrt.pop %v1504
    %v1601 = vrsqrt.pop %v1505
    %v1602 = vrsqrt.pop %v1506
    %v1603 = vrsqrt.pop %v1507
    %v1604 = vmul.f32 %v1316, %v1508
    %v1605 = vmul.f32 %v1317, %v1509
    %v1606 = vmul.f32 %v1318, %v1510
    %v1607 = vmul.f32 %v1319, %v1511
    %v1608 = vmul.f32 %v1320, %v1512
    %v1609 = vmul.f32 %v1321, %v1513
    %v1610 = vmul.f32 %v1322, %v1514
    %v1611 = vmul.f32 %v1323, %v1515
    %v1612 = vmul.f32 %v1324, %v1516
    %v1613 = vmul.f32 %v1325, %v1517
    %v1614 = vmul.f32 %v1326, %v1518
    %v1615 = vmul.f32 %v1327, %v1519
    %v1616 = vmul.f32 %v1328, %v1520
    %v1617 = vmul.f32 %v1329, %v1521
    %v1618 = vmul.f32 %v1330, %v1522
    %v1619 = vmul.f32 %v1331, %v1523
    %v1620 = vmul.f32 %v1332, %v1524
    %v1621 = vmul.f32 %v1333, %v1525
    %v1622 = vmul.f32 %v1334, %v1526
    %v1623 = vmul.f32 %v1335, %v1527
    %v1624 = vmul.f32 %v1336, %v1528
    %v1625 = vmul.f32 %v1337, %v1529
    %v1626 = vmul.f32 %v1338, %v1530
    %v1627 = vmul.f32 %v1339, %v1531
    %v1628 = vmul.f32 %v1340, %v1532
    %v1629 = vmul.f32 %v1341, %v1533
    %v1630 = vmul.f32 %v1342, %v1534
    %v1631 = vmul.f32 %v1343, %v1535
    %v1632 = vmul.f32 %v1344, %v1536
    %v1633 = vmul.f32 %v1345, %v1537
    %v1634 = vmul.f32 %v1346, %v1538
    %v1635 = vmul.f32 %v1347, %v1539
    %v1636 = vmul.f32 %v1348, %v1540
    %v1637 = vmul.f32 %v1349, %v1541
    %v1638 = vmul.f32 %v1350, %v1542
    %v1639 = vmul.f32 %v1351, %v1543
    %v1640 = vmul.f32 %v1352, %v1544
    %v1641 = vmul.f32 %v1353, %v1545
    %v1642 = vmul.f32 %v1354, %v1546
    %v1643 = vmul.f32 %v1355, %v1547
    %v1644 = vmul.f32 %v1356, %v1548
    %v1645 = vmul.f32 %v1357, %v1549
    %v1646 = vmul.f32 %v1358, %v1550
    %v1647 = vmul.f32 %v1359, %v1551
    %v1648 = vmul.f32 %v1360, %v1552
    %v1649 = vmul.f32 %v1361, %v1553
    %v1650 = vmul.f32 %v1362, %v1554
    %v1651 = vmul.f32 %v1363, %v1555
    %v1652 = vmul.f32 %v1364, %v1556
    %v1653 = vmul.f32 %v1365, %v1557
    %v1654 = vmul.f32 %v1366, %v1558
    %v1655 = vmul.f32 %v1367, %v1559
    %v1656 = vmul.f32 %v1368, %v1560
    %v1657 = vmul.f32 %v1369, %v1561
    %v1658 = vmul.f32 %v1370, %v1562
    %v1659 = vmul.f32 %v1371, %v1563
    %v1660 = vmul.f32 %v1372, %v1564
    %v1661 = vmul.f32 %v1373, %v1565
    %v1662 = vmul.f32 %v1374, %v1566
    %v1663 = vmul.f32 %v1375, %v1567
    %v1664 = vmul.f32 %v1376, %v1568
    %v1665 = vmul.f32 %v1377, %v1569
    %v1666 = vmul.f32 %v1378, %v1570
    %v1667 = vmul.f32 %v1379, %v1571
    %v1668 = vmul.f32 %v1380, %v1572
    %v1669 = vmul.f32 %v1381, %v1573
    %v1670 = vmul.f32 %v1382, %v1574
    %v1671 = vmul.f32 %v1383, %v1575
    %v1672 = vmul.f32 %v1384, %v1576
    %v1673 = vmul.f32 %v1385, %v1577
    %v1674 = vmul.f32 %v1386, %v1578
    %v1675 = vmul.f32 %v1387, %v1579
    %v1676 = vmul.f32 %v1388, %v1580
    %v1677 = vmul.f32 %v1389, %v1581
    %v1678 = vmul.f32 %v1390, %v1582
    %v1679 = vmul.f32 %v1391, %v1583
    %v1680 = vmul.f32 %v1392, %v1584
    %v1681 = vmul.f32 %v1393, %v1585
    %v1682 = vmul.f32 %v1394, %v1586
    %v1683 = vmul.f32 %v1395, %v1587
    %v1684 = vmul.f32 %v1396, %v1588
    %v1685 = vmul.f32 %v1397, %v1589
    %v1686 = vmul.f32 %v1398, %v1590
    %v1687 = vmul.f32 %v1399, %v1591
    %v1688 = vmul.f32 %v1400, %v1592
    %v1689 = vmul.f32 %v1401, %v1593
    %v1690 = vmul.f32 %v1402, %v1594
    %v1691 = vmul.f32 %v1403, %v1595
    %v1692 = vmul.f32 %v1404, %v1596
    %v1693 = vmul.f32 %v1405, %v1597
    %v1694 = vmul.f32 %v1406, %v1598
    %v1695 = vmul.f32 %v1407, %v1599
    %v1696 = vmul.f32 %v1408, %v1600
    %v1697 = vmul.f32 %v1409, %v1601
    %v1698 = vmul.f32 %v1410, %v1602
    %v1699 = vmul.f32 %v1411, %v1603
    %v1701 = vlaneseq
    %v1702 = vshrl.u32 %v1701, 7
    %v1703 = vsub.s32 0, %v1702
    %v1704 = vrot.slane %v160, %v1703
    %v1706 = vmul.f32 %v1604, %v1704
    %v1707 = vmul.f32 %v1605, %v1704
    %v1708 = vmul.f32 %v1606, %v1704
    %v1709 = vmul.f32 %v1607, %v1704
    %v1710 = vmul.f32 %v1608, %v1704
    %v1711 = vmul.f32 %v1609, %v1704
    %v1712 = vmul.f32 %v1610, %v1704
    %v1713 = vmul.f32 %v1611, %v1704
    %v1714 = vmul.f32 %v1612, %v1704
    %v1715 = vmul.f32 %v1613, %v1704
    %v1716 = vmul.f32 %v1614, %v1704
    %v1717 = vmul.f32 %v1615, %v1704
    %v1718 = vmul.f32 %v1616, %v1704
    %v1719 = vmul.f32 %v1617, %v1704
    %v1720 = vmul.f32 %v1618, %v1704
    %v1721 = vmul.f32 %v1619, %v1704
    %v1722 = vmul.f32 %v1620, %v1704
    %v1723 = vmul.f32 %v1621, %v1704
    %v1724 = vmul.f32 %v1622, %v1704
    %v1725 = vmul.f32 %v1623, %v1704
    %v1726 = vmul.f32 %v1624, %v1704
    %v1727 = vmul.f32 %v1625, %v1704
    %v1728 = vmul.f32 %v1626, %v1704
    %v1729 = vmul.f32 %v1627, %v1704
    %v1730 = vmul.f32 %v1628, %v1704
    %v1731 = vmul.f32 %v1629, %v1704
    %v1732 = vmul.f32 %v1630, %v1704
    %v1733 = vmul.f32 %v1631, %v1704
    %v1734 = vmul.f32 %v1632, %v1704
    %v1735 = vmul.f32 %v1633, %v1704
    %v1736 = vmul.f32 %v1634, %v1704
    %v1737 = vmul.f32 %v1635, %v1704
    %v1738 = vmul.f32 %v1636, %v1704
    %v1739 = vmul.f32 %v1637, %v1704
    %v1740 = vmul.f32 %v1638, %v1704
    %v1741 = vmul.f32 %v1639, %v1704
    %v1742 = vmul.f32 %v1640, %v1704
    %v1743 = vmul.f32 %v1641, %v1704
    %v1744 = vmul.f32 %v1642, %v1704
    %v1745 = vmul.f32 %v1643, %v1704
    %v1746 = vmul.f32 %v1644, %v1704
    %v1747 = vmul.f32 %v1645, %v1704
    %v1748 = vmul.f32 %v1646, %v1704
    %v1749 = vmul.f32 %v1647, %v1704
    %v1750 = vmul.f32 %v1648, %v1704
    %v1751 = vmul.f32 %v1649, %v1704
    %v1752 = vmul.f32 %v1650, %v1704
    %v1753 = vmul.f32 %v1651, %v1704
    %v1754 = vmul.f32 %v1652, %v1704
    %v1755 = vmul.f32 %v1653, %v1704
    %v1756 = vmul.f32 %v1654, %v1704
    %v1757 = vmul.f32 %v1655, %v1704
    %v1758 = vmul.f32 %v1656, %v1704
    %v1759 = vmul.f32 %v1657, %v1704
    %v1760 = vmul.f32 %v1658, %v1704
    %v1761 = vmul.f32 %v1659, %v1704
    %v1762 = vmul.f32 %v1660, %v1704
    %v1763 = vmul.f32 %v1661, %v1704
    %v1764 = vmul.f32 %v1662, %v1704
    %v1765 = vmul.f32 %v1663, %v1704
    %v1766 = vmul.f32 %v1664, %v1704
    %v1767 = vmul.f32 %v1665, %v1704
    %v1768 = vmul.f32 %v1666, %v1704
    %v1769 = vmul.f32 %v1667, %v1704
    %v1770 = vmul.f32 %v1668, %v1704
    %v1771 = vmul.f32 %v1669, %v1704
    %v1772 = vmul.f32 %v1670, %v1704
    %v1773 = vmul.f32 %v1671, %v1704
    %v1774 = vmul.f32 %v1672, %v1704
    %v1775 = vmul.f32 %v1673, %v1704
    %v1776 = vmul.f32 %v1674, %v1704
    %v1777 = vmul.f32 %v1675, %v1704
    %v1778 = vmul.f32 %v1676, %v1704
    %v1779 = vmul.f32 %v1677, %v1704
    %v1780 = vmul.f32 %v1678, %v1704
    %v1781 = vmul.f32 %v1679, %v1704
    %v1782 = vmul.f32 %v1680, %v1704
    %v1783 = vmul.f32 %v1681, %v1704
    %v1784 = vmul.f32 %v1682, %v1704
    %v1785 = vmul.f32 %v1683, %v1704
    %v1786 = vmul.f32 %v1684, %v1704
    %v1787 = vmul.f32 %v1685, %v1704
    %v1788 = vmul.f32 %v1686, %v1704
    %v1789 = vmul.f32 %v1687, %v1704
    %v1790 = vmul.f32 %v1688, %v1704
    %v1791 = vmul.f32 %v1689, %v1704
    %v1792 = vmul.f32 %v1690, %v1704
    %v1793 = vmul.f32 %v1691, %v1704
    %v1794 = vmul.f32 %v1692, %v1704
    %v1795 = vmul.f32 %v1693, %v1704
    %v1796 = vmul.f32 %v1694, %v1704
    %v1797 = vmul.f32 %v1695, %v1704
    %v1798 = vmul.f32 %v1696, %v1704
    %v1799 = vmul.f32 %v1697, %v1704
    %v1800 = vmul.f32 %v1698, %v1704
    %v1801 = vmul.f32 %v1699, %v1704
    %v1803 = vlaneseq
    %v1804 = vshrl.u32 %v1803, 7
    %v1805 = vsub.s32 0, %v1804
    %v1806 = vrot.slane %v161, %v1805
    %v1808 = vadd.f32 %v1706, %v1806
    %v1809 = vadd.f32 %v1707, %v1806
    %v1810 = vadd.f32 %v1708, %v1806
    %v1811 = vadd.f32 %v1709, %v1806
    %v1812 = vadd.f32 %v1710, %v1806
    %v1813 = vadd.f32 %v1711, %v1806
    %v1814 = vadd.f32 %v1712, %v1806
    %v1815 = vadd.f32 %v1713, %v1806
    %v1816 = vadd.f32 %v1714, %v1806
    %v1817 = vadd.f32 %v1715, %v1806
    %v1818 = vadd.f32 %v1716, %v1806
    %v1819 = vadd.f32 %v1717, %v1806
    %v1820 = vadd.f32 %v1718, %v1806
    %v1821 = vadd.f32 %v1719, %v1806
    %v1822 = vadd.f32 %v1720, %v1806
    %v1823 = vadd.f32 %v1721, %v1806
    %v1824 = vadd.f32 %v1722, %v1806
    %v1825 = vadd.f32 %v1723, %v1806
    %v1826 = vadd.f32 %v1724, %v1806
    %v1827 = vadd.f32 %v1725, %v1806
    %v1828 = vadd.f32 %v1726, %v1806
    %v1829 = vadd.f32 %v1727, %v1806
    %v1830 = vadd.f32 %v1728, %v1806
    %v1831 = vadd.f32 %v1729, %v1806
    %v1832 = vadd.f32 %v1730, %v1806
    %v1833 = vadd.f32 %v1731, %v1806
    %v1834 = vadd.f32 %v1732, %v1806
    %v1835 = vadd.f32 %v1733, %v1806
    %v1836 = vadd.f32 %v1734, %v1806
    %v1837 = vadd.f32 %v1735, %v1806
    %v1838 = vadd.f32 %v1736, %v1806
    %v1839 = vadd.f32 %v1737, %v1806
    %v1840 = vadd.f32 %v1738, %v1806
    %v1841 = vadd.f32 %v1739, %v1806
    %v1842 = vadd.f32 %v1740, %v1806
    %v1843 = vadd.f32 %v1741, %v1806
    %v1844 = vadd.f32 %v1742, %v1806
    %v1845 = vadd.f32 %v1743, %v1806
    %v1846 = vadd.f32 %v1744, %v1806
    %v1847 = vadd.f32 %v1745, %v1806
    %v1848 = vadd.f32 %v1746, %v1806
    %v1849 = vadd.f32 %v1747, %v1806
    %v1850 = vadd.f32 %v1748, %v1806
    %v1851 = vadd.f32 %v1749, %v1806
    %v1852 = vadd.f32 %v1750, %v1806
    %v1853 = vadd.f32 %v1751, %v1806
    %v1854 = vadd.f32 %v1752, %v1806
    %v1855 = vadd.f32 %v1753, %v1806
    %v1856 = vadd.f32 %v1754, %v1806
    %v1857 = vadd.f32 %v1755, %v1806
    %v1858 = vadd.f32 %v1756, %v1806
    %v1859 = vadd.f32 %v1757, %v1806
    %v1860 = vadd.f32 %v1758, %v1806
    %v1861 = vadd.f32 %v1759, %v1806
    %v1862 = vadd.f32 %v1760, %v1806
    %v1863 = vadd.f32 %v1761, %v1806
    %v1864 = vadd.f32 %v1762, %v1806
    %v1865 = vadd.f32 %v1763, %v1806
    %v1866 = vadd.f32 %v1764, %v1806
    %v1867 = vadd.f32 %v1765, %v1806
    %v1868 = vadd.f32 %v1766, %v1806
    %v1869 = vadd.f32 %v1767, %v1806
    %v1870 = vadd.f32 %v1768, %v1806
    %v1871 = vadd.f32 %v1769, %v1806
    %v1872 = vadd.f32 %v1770, %v1806
    %v1873 = vadd.f32 %v1771, %v1806
    %v1874 = vadd.f32 %v1772, %v1806
    %v1875 = vadd.f32 %v1773, %v1806
    %v1876 = vadd.f32 %v1774, %v1806
    %v1877 = vadd.f32 %v1775, %v1806
    %v1878 = vadd.f32 %v1776, %v1806
    %v1879 = vadd.f32 %v1777, %v1806
    %v1880 = vadd.f32 %v1778, %v1806
    %v1881 = vadd.f32 %v1779, %v1806
    %v1882 = vadd.f32 %v1780, %v1806
    %v1883 = vadd.f32 %v1781, %v1806
    %v1884 = vadd.f32 %v1782, %v1806
    %v1885 = vadd.f32 %v1783, %v1806
    %v1886 = vadd.f32 %v1784, %v1806
    %v1887 = vadd.f32 %v1785, %v1806
    %v1888 = vadd.f32 %v1786, %v1806
    %v1889 = vadd.f32 %v1787, %v1806
    %v1890 = vadd.f32 %v1788, %v1806
    %v1891 = vadd.f32 %v1789, %v1806
    %v1892 = vadd.f32 %v1790, %v1806
    %v1893 = vadd.f32 %v1791, %v1806
    %v1894 = vadd.f32 %v1792, %v1806
    %v1895 = vadd.f32 %v1793, %v1806
    %v1896 = vadd.f32 %v1794, %v1806
    %v1897 = vadd.f32 %v1795, %v1806
    %v1898 = vadd.f32 %v1796, %v1806
    %v1899 = vadd.f32 %v1797, %v1806
    %v1900 = vadd.f32 %v1798, %v1806
    %v1901 = vadd.f32 %v1799, %v1806
    %v1902 = vadd.f32 %v1800, %v1806
    %v1903 = vadd.f32 %v1801, %v1806
    %v1904 = vpack.c.bf16 %v1809, %v1808
    %v1905 = vpack.c.bf16 %v1811, %v1810
    %v1906 = vpack.c.bf16 %v1813, %v1812
    %v1907 = vpack.c.bf16 %v1815, %v1814
    %v1908 = vpack.c.bf16 %v1817, %v1816
    %v1909 = vpack.c.bf16 %v1819, %v1818
    %v1910 = vpack.c.bf16 %v1821, %v1820
    %v1911 = vpack.c.bf16 %v1823, %v1822
    %v1912 = vpack.c.bf16 %v1825, %v1824
    %v1913 = vpack.c.bf16 %v1827, %v1826
    %v1914 = vpack.c.bf16 %v1829, %v1828
    %v1915 = vpack.c.bf16 %v1831, %v1830
    %v1916 = vpack.c.bf16 %v1833, %v1832
    %v1917 = vpack.c.bf16 %v1835, %v1834
    %v1918 = vpack.c.bf16 %v1837, %v1836
    %v1919 = vpack.c.bf16 %v1839, %v1838
    %v1920 = vpack.c.bf16 %v1841, %v1840
    %v1921 = vpack.c.bf16 %v1843, %v1842
    %v1922 = vpack.c.bf16 %v1845, %v1844
    %v1923 = vpack.c.bf16 %v1847, %v1846
    %v1924 = vpack.c.bf16 %v1849, %v1848
    %v1925 = vpack.c.bf16 %v1851, %v1850
    %v1926 = vpack.c.bf16 %v1853, %v1852
    %v1927 = vpack.c.bf16 %v1855, %v1854
    %v1928 = vpack.c.bf16 %v1857, %v1856
    %v1929 = vpack.c.bf16 %v1859, %v1858
    %v1930 = vpack.c.bf16 %v1861, %v1860
    %v1931 = vpack.c.bf16 %v1863, %v1862
    %v1932 = vpack.c.bf16 %v1865, %v1864
    %v1933 = vpack.c.bf16 %v1867, %v1866
    %v1934 = vpack.c.bf16 %v1869, %v1868
    %v1935 = vpack.c.bf16 %v1871, %v1870
    %v1936 = vpack.c.bf16 %v1873, %v1872
    %v1937 = vpack.c.bf16 %v1875, %v1874
    %v1938 = vpack.c.bf16 %v1877, %v1876
    %v1939 = vpack.c.bf16 %v1879, %v1878
    %v1940 = vpack.c.bf16 %v1881, %v1880
    %v1941 = vpack.c.bf16 %v1883, %v1882
    %v1942 = vpack.c.bf16 %v1885, %v1884
    %v1943 = vpack.c.bf16 %v1887, %v1886
    %v1944 = vpack.c.bf16 %v1889, %v1888
    %v1945 = vpack.c.bf16 %v1891, %v1890
    %v1946 = vpack.c.bf16 %v1893, %v1892
    %v1947 = vpack.c.bf16 %v1895, %v1894
    %v1948 = vpack.c.bf16 %v1897, %v1896
    %v1949 = vpack.c.bf16 %v1899, %v1898
    %v1950 = vpack.c.bf16 %v1901, %v1900
    %v1951 = vpack.c.bf16 %v1903, %v1902
    %v1952 = vld [vmem:[%s3] sm:$0xf]
    %v1953 = vld [vmem:[%s3 + $0x4] sm:$0xf]
    %v1954 = vld [vmem:[%s3 + $0x8] sm:$0xf]
    %v1955 = vld [vmem:[%s3 + $0xc] sm:$0xf]
    %v1956 = vld [vmem:[%s4] sm:$0x1]
    %v1958 = vlaneseq
    %v1959 = vshrl.u32 %v1958, 7
    %v1960 = vsub.s32 0, %v1959
    %v1961 = vrot.slane %v1956, %v1960
    %v1967 = vunpack.c.l.b16 %v1952
    %v1968 = vunpack.c.l.b16 %v1953
    %v1969 = vunpack.c.l.b16 %v1954
    %v1970 = vunpack.c.l.b16 %v1955
    %v1971 = vpack.c.b16 %v1968, %v1967
    %v1972 = vpack.c.b16 %v1970, %v1969
    %v1976 = vsel %vm162, %v1904, 0
    %v1979 = vsel %vm162, %v1905, 0
    %v1982 = vsel %vm162, %v1906, 0
    %v1985 = vsel %vm162, %v1907, 0
    %v1988 = vsel %vm162, %v1908, 0
    %v1991 = vsel %vm162, %v1909, 0
    %v1994 = vsel %vm162, %v1910, 0
    %v1997 = vsel %vm162, %v1911, 0
    %v2000 = vsel %vm162, %v1912, 0
    %v2003 = vsel %vm162, %v1913, 0
    %v2006 = vsel %vm162, %v1914, 0
    %v2009 = vsel %vm162, %v1915, 0
    %v2012 = vsel %vm162, %v1916, 0
    %v2015 = vsel %vm162, %v1917, 0
    %v2018 = vsel %vm162, %v1918, 0
    %v2021 = vsel %vm162, %v1919, 0
    %v2024 = vsel %vm162, %v1920, 0
    %v2027 = vsel %vm162, %v1921, 0
    %v2030 = vsel %vm162, %v1922, 0
    %v2033 = vsel %vm162, %v1923, 0
    %v2036 = vsel %vm162, %v1924, 0
    %v2039 = vsel %vm162, %v1925, 0
    %v2042 = vsel %vm162, %v1926, 0
    %v2045 = vsel %vm162, %v1927, 0
    %v2048 = vsel %vm162, %v1928, 0
    %v2051 = vsel %vm162, %v1929, 0
    %v2054 = vsel %vm162, %v1930, 0
    %v2057 = vsel %vm162, %v1931, 0
    %v2060 = vsel %vm162, %v1932, 0
    %v2063 = vsel %vm162, %v1933, 0
    %v2066 = vsel %vm162, %v1934, 0
    %v2069 = vsel %vm162, %v1935, 0
    %v2072 = vsel %vm162, %v1936, 0
    %v2075 = vsel %vm162, %v1937, 0
    %v2078 = vsel %vm162, %v1938, 0
    %v2081 = vsel %vm162, %v1939, 0
    %v2084 = vsel %vm162, %v1940, 0
    %v2087 = vsel %vm162, %v1941, 0
    %v2090 = vsel %vm162, %v1942, 0
    %v2093 = vsel %vm162, %v1943, 0
    %v2096 = vsel %vm162, %v1944, 0
    %v2099 = vsel %vm162, %v1945, 0
    %v2102 = vsel %vm162, %v1946, 0
    %v2105 = vsel %vm162, %v1947, 0
    %v2108 = vsel %vm162, %v1948, 0
    %v2111 = vsel %vm162, %v1949, 0
    %v2114 = vsel %vm162, %v1950, 0
    %v2117 = vsel %vm162, %v1951, 0
    %2119 = vmatprep.subr.bf16.mxu0 0
    %2120 = vmatpush1.bf16.msra.mxu0 %v1971
    %2121 = vmatprep.subr.bf16.mxu0 0
    %2122 = vmatpush1.bf16.msra.mxu0 %v1972
    %2123 = vmatprep.subr.bf16.mxu0 0
    %2124 = vmatpush1.bf16.msra.mxu0 0
    %2125 = vmatprep.subr.bf16.mxu0 0
    %2126 = vmatpush1.bf16.msra.mxu0 0
    %2127 = vmatprep.subr.bf16.mxu0 0
    %2128 = vmatpush1.bf16.msra.mxu0 0
    %2129 = vmatprep.subr.bf16.mxu0 0
    %2130 = vmatpush1.bf16.msra.mxu0 0
    %2131 = vmatprep.subr.bf16.mxu0 0
    %2132 = vmatpush1.bf16.msra.mxu0 0
    %2133 = vmatprep.subr.bf16.mxu0 0
    %2134 = vmatpush1.bf16.msra.mxu0 0
    %2135 = vmatprep.subr.bf16.mxu0 0
    %2136 = vmatpush1.bf16.msra.mxu0 0
    %2137 = vmatprep.subr.bf16.mxu0 0
    %2138 = vmatpush1.bf16.msra.mxu0 0
    %2139 = vmatprep.subr.bf16.mxu0 0
    %2140 = vmatpush1.bf16.msra.mxu0 0
    %2141 = vmatprep.subr.bf16.mxu0 0
    %2142 = vmatpush1.bf16.msra.mxu0 0
    %2143 = vmatprep.subr.bf16.mxu0 0
    %2144 = vmatpush1.bf16.msra.mxu0 0
    %2145 = vmatprep.subr.bf16.mxu0 0
    %2146 = vmatpush1.bf16.msra.mxu0 0
    %2147 = vmatprep.subr.bf16.mxu0 0
    %2148 = vmatpush1.bf16.msra.mxu0 0
    %2149 = vmatprep.subr.bf16.mxu0 0
    %2150 = vmatpush1.bf16.msra.mxu0 0
    %2151 = vmatprep.mubr.bf16.mxu0 0
    %2152 = vmatmul.mubr.bf16.gmra.mrb[0].mxu0 %v1976
    %v2153 = vpop.f32.mrb[0].mxu0
    %v2154 = vadd.f32 %v1961, %v2153
    %v2155 = vpop.f32.mrb[0].mxu0
    %v2156 = vpop.f32.mrb[0].mxu0
    %v2157 = vadd.f32 %v1961, %v2156
    %v2158 = vpop.f32.mrb[0].mxu0
    %2159 = vmatprep.mubr.bf16.mxu0 0
    %2160 = vmatmul.mubr.bf16.gmra.mrb[0].mxu0 %v1979
    %v2161 = vpop.f32.mrb[0].mxu0
    %v2162 = vadd.f32 %v1961, %v2161
    %v2163 = vpop.f32.mrb[0].mxu0
    %v2164 = vpop.f32.mrb[0].mxu0
    %v2165 = vadd.f32 %v1961, %v2164
    %v2166 = vpop.f32.mrb[0].mxu0
    %2167 = vmatprep.mubr.bf16.mxu0 0
    %2168 = vmatmul.mubr.bf16.gmra.mrb[0].mxu0 %v1982
    %v2169 = vpop.f32.mrb[0].mxu0
    %v2170 = vadd.f32 %v1961, %v2169
    %v2171 = vpop.f32.mrb[0].mxu0
    %v2172 = vpop.f32.mrb[0].mxu0
    %v2173 = vadd.f32 %v1961, %v2172
    %v2174 = vpop.f32.mrb[0].mxu0
    %2175 = vmatprep.mubr.bf16.mxu0 0
    %2176 = vmatmul.mubr.bf16.gmra.mrb[0].mxu0 %v1985
    %v2177 = vpop.f32.mrb[0].mxu0
    %v2178 = vadd.f32 %v1961, %v2177
    %v2179 = vpop.f32.mrb[0].mxu0
    %v2180 = vpop.f32.mrb[0].mxu0
    %v2181 = vadd.f32 %v1961, %v2180
    %v2182 = vpop.f32.mrb[0].mxu0
    %2183 = vmatprep.mubr.bf16.mxu0 0
    %2184 = vmatmul.mubr.bf16.gmra.mrb[0].mxu0 %v1988
    %v2185 = vpop.f32.mrb[0].mxu0
    %v2186 = vadd.f32 %v1961, %v2185
    %v2187 = vpop.f32.mrb[0].mxu0
    %v2188 = vpop.f32.mrb[0].mxu0
    %v2189 = vadd.f32 %v1961, %v2188
    %v2190 = vpop.f32.mrb[0].mxu0
    %2191 = vmatprep.mubr.bf16.mxu0 0
    %2192 = vmatmul.mubr.bf16.gmra.mrb[0].mxu0 %v1991
    %v2193 = vpop.f32.mrb[0].mxu0
    %v2194 = vadd.f32 %v1961, %v2193
    %v2195 = vpop.f32.mrb[0].mxu0
    %v2196 = vpop.f32.mrb[0].mxu0
    %v2197 = vadd.f32 %v1961, %v2196
    %v2198 = vpop.f32.mrb[0].mxu0
    %2199 = vmatprep.mubr.bf16.mxu0 0
    %2200 = vmatmul.mubr.bf16.gmra.mrb[0].mxu0 %v1994
    %v2201 = vpop.f32.mrb[0].mxu0
    %v2202 = vadd.f32 %v1961, %v2201
    %v2203 = vpop.f32.mrb[0].mxu0
    %v2204 = vpop.f32.mrb[0].mxu0
    %v2205 = vadd.f32 %v1961, %v2204
    %v2206 = vpop.f32.mrb[0].mxu0
    %2207 = vmatprep.mubr.bf16.mxu0 0
    %2208 = vmatmul.mubr.bf16.gmra.mrb[0].mxu0 %v1997
    %v2209 = vpop.f32.mrb[0].mxu0
    %v2210 = vadd.f32 %v1961, %v2209
    %v2211 = vpop.f32.mrb[0].mxu0
    %v2212 = vpop.f32.mrb[0].mxu0
    %v2213 = vadd.f32 %v1961, %v2212
    %v2214 = vpop.f32.mrb[0].mxu0
    %2215 = vmatprep.mubr.bf16.mxu0 0
    %2216 = vmatmul.mubr.bf16.gmra.mrb[0].mxu0 %v2000
    %v2217 = vpop.f32.mrb[0].mxu0
    %v2218 = vadd.f32 %v1961, %v2217
    %v2219 = vpop.f32.mrb[0].mxu0
    %v2220 = vpop.f32.mrb[0].mxu0
    %v2221 = vadd.f32 %v1961, %v2220
    %v2222 = vpop.f32.mrb[0].mxu0
    %2223 = vmatprep.mubr.bf16.mxu0 0
    %2224 = vmatmul.mubr.bf16.gmra.mrb[0].mxu0 %v2003
    %v2225 = vpop.f32.mrb[0].mxu0
    %v2226 = vadd.f32 %v1961, %v2225
    %v2227 = vpop.f32.mrb[0].mxu0
    %v2228 = vpop.f32.mrb[0].mxu0
    %v2229 = vadd.f32 %v1961, %v2228
    %v2230 = vpop.f32.mrb[0].mxu0
    %2231 = vmatprep.mubr.bf16.mxu0 0
    %2232 = vmatmul.mubr.bf16.gmra.mrb[0].mxu0 %v2006
    %v2233 = vpop.f32.mrb[0].mxu0
    %v2234 = vadd.f32 %v1961, %v2233
    %v2235 = vpop.f32.mrb[0].mxu0
    %v2236 = vpop.f32.mrb[0].mxu0
    %v2237 = vadd.f32 %v1961, %v2236
    %v2238 = vpop.f32.mrb[0].mxu0
    %2239 = vmatprep.mubr.bf16.mxu0 0
    %2240 = vmatmul.mubr.bf16.gmra.mrb[0].mxu0 %v2009
    %v2241 = vpop.f32.mrb[0].mxu0
    %v2242 = vadd.f32 %v1961, %v2241
    %v2243 = vpop.f32.mrb[0].mxu0
    %v2244 = vpop.f32.mrb[0].mxu0
    %v2245 = vadd.f32 %v1961, %v2244
    %v2246 = vpop.f32.mrb[0].mxu0
    %2247 = vmatprep.mubr.bf16.mxu0 0
    %2248 = vmatmul.mubr.bf16.gmra.mrb[0].mxu0 %v2012
    %v2249 = vpop.f32.mrb[0].mxu0
    %v2250 = vadd.f32 %v1961, %v2249
    %v2251 = vpop.f32.mrb[0].mxu0
    %v2252 = vpop.f32.mrb[0].mxu0
    %v2253 = vadd.f32 %v1961, %v2252
    %v2254 = vpop.f32.mrb[0].mxu0
    %2255 = vmatprep.mubr.bf16.mxu0 0
    %2256 = vmatmul.mubr.bf16.gmra.mrb[0].mxu0 %v2015
    %v2257 = vpop.f32.mrb[0].mxu0
    %v2258 = vadd.f32 %v1961, %v2257
    %v2259 = vpop.f32.mrb[0].mxu0
    %v2260 = vpop.f32.mrb[0].mxu0
    %v2261 = vadd.f32 %v1961, %v2260
    %v2262 = vpop.f32.mrb[0].mxu0
    %2263 = vmatprep.mubr.bf16.mxu0 0
    %2264 = vmatmul.mubr.bf16.gmra.mrb[0].mxu0 %v2018
    %v2265 = vpop.f32.mrb[0].mxu0
    %v2266 = vadd.f32 %v1961, %v2265
    %v2267 = vpop.f32.mrb[0].mxu0
    %v2268 = vpop.f32.mrb[0].mxu0
    %v2269 = vadd.f32 %v1961, %v2268
    %v2270 = vpop.f32.mrb[0].mxu0
    %2271 = vmatprep.mubr.bf16.mxu0 0
    %2272 = vmatmul.mubr.bf16.gmra.mrb[0].mxu0 %v2021
    %v2273 = vpop.f32.mrb[0].mxu0
    %v2274 = vadd.f32 %v1961, %v2273
    %v2275 = vpop.f32.mrb[0].mxu0
    %v2276 = vpop.f32.mrb[0].mxu0
    %v2277 = vadd.f32 %v1961, %v2276
    %v2278 = vpop.f32.mrb[0].mxu0
    %2279 = vmatprep.mubr.bf16.mxu0 0
    %2280 = vmatmul.mubr.bf16.gmra.mrb[0].mxu0 %v2024
    %v2281 = vpop.f32.mrb[0].mxu0
    %v2282 = vadd.f32 %v1961, %v2281
    %v2283 = vpop.f32.mrb[0].mxu0
    %v2284 = vpop.f32.mrb[0].mxu0
    %v2285 = vadd.f32 %v1961, %v2284
    %v2286 = vpop.f32.mrb[0].mxu0
    %2287 = vmatprep.mubr.bf16.mxu0 0
    %2288 = vmatmul.mubr.bf16.gmra.mrb[0].mxu0 %v2027
    %v2289 = vpop.f32.mrb[0].mxu0
    %v2290 = vadd.f32 %v1961, %v2289
    %v2291 = vpop.f32.mrb[0].mxu0
    %v2292 = vpop.f32.mrb[0].mxu0
    %v2293 = vadd.f32 %v1961, %v2292
    %v2294 = vpop.f32.mrb[0].mxu0
    %2295 = vmatprep.mubr.bf16.mxu0 0
    %2296 = vmatmul.mubr.bf16.gmra.mrb[0].mxu0 %v2030
    %v2297 = vpop.f32.mrb[0].mxu0
    %v2298 = vadd.f32 %v1961, %v2297
    %v2299 = vpop.f32.mrb[0].mxu0
    %v2300 = vpop.f32.mrb[0].mxu0
    %v2301 = vadd.f32 %v1961, %v2300
    %v2302 = vpop.f32.mrb[0].mxu0
    %2303 = vmatprep.mubr.bf16.mxu0 0
    %2304 = vmatmul.mubr.bf16.gmra.mrb[0].mxu0 %v2033
    %v2305 = vpop.f32.mrb[0].mxu0
    %v2306 = vadd.f32 %v1961, %v2305
    %v2307 = vpop.f32.mrb[0].mxu0
    %v2308 = vpop.f32.mrb[0].mxu0
    %v2309 = vadd.f32 %v1961, %v2308
    %v2310 = vpop.f32.mrb[0].mxu0
    %2311 = vmatprep.mubr.bf16.mxu0 0
    %2312 = vmatmul.mubr.bf16.gmra.mrb[0].mxu0 %v2036
    %v2313 = vpop.f32.mrb[0].mxu0
    %v2314 = vadd.f32 %v1961, %v2313
    %v2315 = vpop.f32.mrb[0].mxu0
    %v2316 = vpop.f32.mrb[0].mxu0
    %v2317 = vadd.f32 %v1961, %v2316
    %v2318 = vpop.f32.mrb[0].mxu0
    %2319 = vmatprep.mubr.bf16.mxu0 0
    %2320 = vmatmul.mubr.bf16.gmra.mrb[0].mxu0 %v2039
    %v2321 = vpop.f32.mrb[0].mxu0
    %v2322 = vadd.f32 %v1961, %v2321
    %v2323 = vpop.f32.mrb[0].mxu0
    %v2324 = vpop.f32.mrb[0].mxu0
    %v2325 = vadd.f32 %v1961, %v2324
    %v2326 = vpop.f32.mrb[0].mxu0
    %2327 = vmatprep.mubr.bf16.mxu0 0
    %2328 = vmatmul.mubr.bf16.gmra.mrb[0].mxu0 %v2042
    %v2329 = vpop.f32.mrb[0].mxu0
    %v2330 = vadd.f32 %v1961, %v2329
    %v2331 = vpop.f32.mrb[0].mxu0
    %v2332 = vpop.f32.mrb[0].mxu0
    %v2333 = vadd.f32 %v1961, %v2332
    %v2334 = vpop.f32.mrb[0].mxu0
    %2335 = vmatprep.mubr.bf16.mxu0 0
    %2336 = vmatmul.mubr.bf16.gmra.mrb[0].mxu0 %v2045
    %v2337 = vpop.f32.mrb[0].mxu0
    %v2338 = vadd.f32 %v1961, %v2337
    %v2339 = vpop.f32.mrb[0].mxu0
    %v2340 = vpop.f32.mrb[0].mxu0
    %v2341 = vadd.f32 %v1961, %v2340
    %v2342 = vpop.f32.mrb[0].mxu0
    %2343 = vmatprep.mubr.bf16.mxu0 0
    %2344 = vmatmul.mubr.bf16.gmra.mrb[0].mxu0 %v2048
    %v2345 = vpop.f32.mrb[0].mxu0
    %v2346 = vadd.f32 %v1961, %v2345
    %v2347 = vpop.f32.mrb[0].mxu0
    %v2348 = vpop.f32.mrb[0].mxu0
    %v2349 = vadd.f32 %v1961, %v2348
    %v2350 = vpop.f32.mrb[0].mxu0
    %2351 = vmatprep.mubr.bf16.mxu0 0
    %2352 = vmatmul.mubr.bf16.gmra.mrb[0].mxu0 %v2051
    %v2353 = vpop.f32.mrb[0].mxu0
    %v2354 = vadd.f32 %v1961, %v2353
    %v2355 = vpop.f32.mrb[0].mxu0
    %v2356 = vpop.f32.mrb[0].mxu0
    %v2357 = vadd.f32 %v1961, %v2356
    %v2358 = vpop.f32.mrb[0].mxu0
    %2359 = vmatprep.mubr.bf16.mxu0 0
    %2360 = vmatmul.mubr.bf16.gmra.mrb[0].mxu0 %v2054
    %v2361 = vpop.f32.mrb[0].mxu0
    %v2362 = vadd.f32 %v1961, %v2361
    %v2363 = vpop.f32.mrb[0].mxu0
    %v2364 = vpop.f32.mrb[0].mxu0
    %v2365 = vadd.f32 %v1961, %v2364
    %v2366 = vpop.f32.mrb[0].mxu0
    %2367 = vmatprep.mubr.bf16.mxu0 0
    %2368 = vmatmul.mubr.bf16.gmra.mrb[0].mxu0 %v2057
    %v2369 = vpop.f32.mrb[0].mxu0
    %v2370 = vadd.f32 %v1961, %v2369
    %v2371 = vpop.f32.mrb[0].mxu0
    %v2372 = vpop.f32.mrb[0].mxu0
    %v2373 = vadd.f32 %v1961, %v2372
    %v2374 = vpop.f32.mrb[0].mxu0
    %2375 = vmatprep.mubr.bf16.mxu0 0
    %2376 = vmatmul.mubr.bf16.gmra.mrb[0].mxu0 %v2060
    %v2377 = vpop.f32.mrb[0].mxu0
    %v2378 = vadd.f32 %v1961, %v2377
    %v2379 = vpop.f32.mrb[0].mxu0
    %v2380 = vpop.f32.mrb[0].mxu0
    %v2381 = vadd.f32 %v1961, %v2380
    %v2382 = vpop.f32.mrb[0].mxu0
    %2383 = vmatprep.mubr.bf16.mxu0 0
    %2384 = vmatmul.mubr.bf16.gmra.mrb[0].mxu0 %v2063
    %v2385 = vpop.f32.mrb[0].mxu0
    %v2386 = vadd.f32 %v1961, %v2385
    %v2387 = vpop.f32.mrb[0].mxu0
    %v2388 = vpop.f32.mrb[0].mxu0
    %v2389 = vadd.f32 %v1961, %v2388
    %v2390 = vpop.f32.mrb[0].mxu0
    %2391 = vmatprep.mubr.bf16.mxu0 0
    %2392 = vmatmul.mubr.bf16.gmra.mrb[0].mxu0 %v2066
    %v2393 = vpop.f32.mrb[0].mxu0
    %v2394 = vadd.f32 %v1961, %v2393
    %v2395 = vpop.f32.mrb[0].mxu0
    %v2396 = vpop.f32.mrb[0].mxu0
    %v2397 = vadd.f32 %v1961, %v2396
    %v2398 = vpop.f32.mrb[0].mxu0
    %2399 = vmatprep.mubr.bf16.mxu0 0
    %2400 = vmatmul.mubr.bf16.gmra.mrb[0].mxu0 %v2069
    %v2401 = vpop.f32.mrb[0].mxu0
    %v2402 = vadd.f32 %v1961, %v2401
    %v2403 = vpop.f32.mrb[0].mxu0
    %v2404 = vpop.f32.mrb[0].mxu0
    %v2405 = vadd.f32 %v1961, %v2404
    %v2406 = vpop.f32.mrb[0].mxu0
    %2407 = vmatprep.mubr.bf16.mxu0 0
    %2408 = vmatmul.mubr.bf16.gmra.mrb[0].mxu0 %v2072
    %v2409 = vpop.f32.mrb[0].mxu0
    %v2410 = vadd.f32 %v1961, %v2409
    %v2411 = vpop.f32.mrb[0].mxu0
    %v2412 = vpop.f32.mrb[0].mxu0
    %v2413 = vadd.f32 %v1961, %v2412
    %v2414 = vpop.f32.mrb[0].mxu0
    %2415 = vmatprep.mubr.bf16.mxu0 0
    %2416 = vmatmul.mubr.bf16.gmra.mrb[0].mxu0 %v2075
    %v2417 = vpop.f32.mrb[0].mxu0
    %v2418 = vadd.f32 %v1961, %v2417
    %v2419 = vpop.f32.mrb[0].mxu0
    %v2420 = vpop.f32.mrb[0].mxu0
    %v2421 = vadd.f32 %v1961, %v2420
    %v2422 = vpop.f32.mrb[0].mxu0
    %2423 = vmatprep.mubr.bf16.mxu0 0
    %2424 = vmatmul.mubr.bf16.gmra.mrb[0].mxu0 %v2078
    %v2425 = vpop.f32.mrb[0].mxu0
    %v2426 = vadd.f32 %v1961, %v2425
    %v2427 = vpop.f32.mrb[0].mxu0
    %v2428 = vpop.f32.mrb[0].mxu0
    %v2429 = vadd.f32 %v1961, %v2428
    %v2430 = vpop.f32.mrb[0].mxu0
    %2431 = vmatprep.mubr.bf16.mxu0 0
    %2432 = vmatmul.mubr.bf16.gmra.mrb[0].mxu0 %v2081
    %v2433 = vpop.f32.mrb[0].mxu0
    %v2434 = vadd.f32 %v1961, %v2433
    %v2435 = vpop.f32.mrb[0].mxu0
    %v2436 = vpop.f32.mrb[0].mxu0
    %v2437 = vadd.f32 %v1961, %v2436
    %v2438 = vpop.f32.mrb[0].mxu0
    %2439 = vmatprep.mubr.bf16.mxu0 0
    %2440 = vmatmul.mubr.bf16.gmra.mrb[0].mxu0 %v2084
    %v2441 = vpop.f32.mrb[0].mxu0
    %v2442 = vadd.f32 %v1961, %v2441
    %v2443 = vpop.f32.mrb[0].mxu0
    %v2444 = vpop.f32.mrb[0].mxu0
    %v2445 = vadd.f32 %v1961, %v2444
    %v2446 = vpop.f32.mrb[0].mxu0
    %2447 = vmatprep.mubr.bf16.mxu0 0
    %2448 = vmatmul.mubr.bf16.gmra.mrb[0].mxu0 %v2087
    %v2449 = vpop.f32.mrb[0].mxu0
    %v2450 = vadd.f32 %v1961, %v2449
    %v2451 = vpop.f32.mrb[0].mxu0
    %v2452 = vpop.f32.mrb[0].mxu0
    %v2453 = vadd.f32 %v1961, %v2452
    %v2454 = vpop.f32.mrb[0].mxu0
    %2455 = vmatprep.mubr.bf16.mxu0 0
    %2456 = vmatmul.mubr.bf16.gmra.mrb[0].mxu0 %v2090
    %v2457 = vpop.f32.mrb[0].mxu0
    %v2458 = vadd.f32 %v1961, %v2457
    %v2459 = vpop.f32.mrb[0].mxu0
    %v2460 = vpop.f32.mrb[0].mxu0
    %v2461 = vadd.f32 %v1961, %v2460
    %v2462 = vpop.f32.mrb[0].mxu0
    %2463 = vmatprep.mubr.bf16.mxu0 0
    %2464 = vmatmul.mubr.bf16.gmra.mrb[0].mxu0 %v2093
    %v2465 = vpop.f32.mrb[0].mxu0
    %v2466 = vadd.f32 %v1961, %v2465
    %v2467 = vpop.f32.mrb[0].mxu0
    %v2468 = vpop.f32.mrb[0].mxu0
    %v2469 = vadd.f32 %v1961, %v2468
    %v2470 = vpop.f32.mrb[0].mxu0
    %2471 = vmatprep.mubr.bf16.mxu0 0
    %2472 = vmatmul.mubr.bf16.gmra.mrb[0].mxu0 %v2096
    %v2473 = vpop.f32.mrb[0].mxu0
    %v2474 = vadd.f32 %v1961, %v2473
    %v2475 = vpop.f32.mrb[0].mxu0
    %v2476 = vpop.f32.mrb[0].mxu0
    %v2477 = vadd.f32 %v1961, %v2476
    %v2478 = vpop.f32.mrb[0].mxu0
    %2479 = vmatprep.mubr.bf16.mxu0 0
    %2480 = vmatmul.mubr.bf16.gmra.mrb[0].mxu0 %v2099
    %v2481 = vpop.f32.mrb[0].mxu0
    %v2482 = vadd.f32 %v1961, %v2481
    %v2483 = vpop.f32.mrb[0].mxu0
    %v2484 = vpop.f32.mrb[0].mxu0
    %v2485 = vadd.f32 %v1961, %v2484
    %v2486 = vpop.f32.mrb[0].mxu0
    %2487 = vmatprep.mubr.bf16.mxu0 0
    %2488 = vmatmul.mubr.bf16.gmra.mrb[0].mxu0 %v2102
    %v2489 = vpop.f32.mrb[0].mxu0
    %v2490 = vadd.f32 %v1961, %v2489
    %v2491 = vpop.f32.mrb[0].mxu0
    %v2492 = vpop.f32.mrb[0].mxu0
    %v2493 = vadd.f32 %v1961, %v2492
    %v2494 = vpop.f32.mrb[0].mxu0
    %2495 = vmatprep.mubr.bf16.mxu0 0
    %2496 = vmatmul.mubr.bf16.gmra.mrb[0].mxu0 %v2105
    %v2497 = vpop.f32.mrb[0].mxu0
    %v2498 = vadd.f32 %v1961, %v2497
    %v2499 = vpop.f32.mrb[0].mxu0
    %v2500 = vpop.f32.mrb[0].mxu0
    %v2501 = vadd.f32 %v1961, %v2500
    %v2502 = vpop.f32.mrb[0].mxu0
    %2503 = vmatprep.mubr.bf16.mxu0 0
    %2504 = vmatmul.mubr.bf16.gmra.mrb[0].mxu0 %v2108
    %v2505 = vpop.f32.mrb[0].mxu0
    %v2506 = vadd.f32 %v1961, %v2505
    %v2507 = vpop.f32.mrb[0].mxu0
    %v2508 = vpop.f32.mrb[0].mxu0
    %v2509 = vadd.f32 %v1961, %v2508
    %v2510 = vpop.f32.mrb[0].mxu0
    %2511 = vmatprep.mubr.bf16.mxu0 0
    %2512 = vmatmul.mubr.bf16.gmra.mrb[0].mxu0 %v2111
    %v2513 = vpop.f32.mrb[0].mxu0
    %v2514 = vadd.f32 %v1961, %v2513
    %v2515 = vpop.f32.mrb[0].mxu0
    %v2516 = vpop.f32.mrb[0].mxu0
    %v2517 = vadd.f32 %v1961, %v2516
    %v2518 = vpop.f32.mrb[0].mxu0
    %2519 = vmatprep.mubr.bf16.mxu0 0
    %2520 = vmatmul.mubr.bf16.gmra.mrb[0].mxu0 %v2114
    %v2521 = vpop.f32.mrb[0].mxu0
    %v2522 = vadd.f32 %v1961, %v2521
    %v2523 = vpop.f32.mrb[0].mxu0
    %v2524 = vpop.f32.mrb[0].mxu0
    %v2525 = vadd.f32 %v1961, %v2524
    %v2526 = vpop.f32.mrb[0].mxu0
    %2527 = vmatprep.mubr.bf16.mxu0 0
    %2528 = vmatmul.mubr.bf16.gmra.mrb[0].mxu0 %v2117
    %v2529 = vpop.f32.mrb[0].mxu0
    %v2530 = vadd.f32 %v1961, %v2529
    %v2531 = vpop.f32.mrb[0].mxu0
    %v2532 = vpop.f32.mrb[0].mxu0
    %v2533 = vadd.f32 %v1961, %v2532
    %v2534 = vpop.f32.mrb[0].mxu0
    %2535 = vdwg.mxu0
    %2536 = vrot.lane.b32.xlu0 %v1971, 96
    %v2537 = vpop.permute.xlu0 %2536
    %2538 = vrot.lane.b32.xlu0 %v1972, 96
    %v2539 = vpop.permute.xlu0 %2538
    %2542 = vrot.lane.b32.xlu0 %v1961, 96
    %v2543 = vpop.permute.xlu0 %2542
    %2545 = vmatprep.subr.bf16.mxu0 0
    %2546 = vmatpush1.bf16.msra.mxu0 %v2537
    %2547 = vmatprep.subr.bf16.mxu0 0
    %2548 = vmatpush1.bf16.msra.mxu0 %v2539
    %2549 = vmatprep.subr.bf16.mxu0 0
    %2550 = vmatpush1.bf16.msra.mxu0 0
    %2551 = vmatprep.subr.bf16.mxu0 0
    %2552 = vmatpush1.bf16.msra.mxu0 0
    %2553 = vmatprep.subr.bf16.mxu0 0
    %2554 = vmatpush1.bf16.msra.mxu0 0
    %2555 = vmatprep.subr.bf16.mxu0 0
    %2556 = vmatpush1.bf16.msra.mxu0 0
    %2557 = vmatprep.subr.bf16.mxu0 0
    %2558 = vmatpush1.bf16.msra.mxu0 0
    %2559 = vmatprep.subr.bf16.mxu0 0
    %2560 = vmatpush1.bf16.msra.mxu0 0
    %2561 = vmatprep.subr.bf16.mxu0 0
    %2562 = vmatpush1.bf16.msra.mxu0 0
    %2563 = vmatprep.subr.bf16.mxu0 0
    %2564 = vmatpush1.bf16.msra.mxu0 0
    %2565 = vmatprep.subr.bf16.mxu0 0
    %2566 = vmatpush1.bf16.msra.mxu0 0
    %2567 = vmatprep.subr.bf16.mxu0 0
    %2568 = vmatpush1.bf16.msra.mxu0 0
    %2569 = vmatprep.subr.bf16.mxu0 0
    %2570 = vmatpush1.bf16.msra.mxu0 0
    %2571 = vmatprep.subr.bf16.mxu0 0
    %2572 = vmatpush1.bf16.msra.mxu0 0
    %2573 = vmatprep.subr.bf16.mxu0 0
    %2574 = vmatpush1.bf16.msra.mxu0 0
    %2575 = vmatprep.subr.bf16.mxu0 0
    %2576 = vmatpush1.bf16.msra.mxu0 0
    %2577 = vmatprep.mubr.bf16.mxu0 0
    %2578 = vmatmul.mubr.bf16.gmra.mrb[0].mxu0 %v1976
    %v2579 = vpop.f32.mrb[0].mxu0
    %v2580 = vadd.f32 %v2543, %v2579
    %v2581 = vpop.f32.mrb[0].mxu0
    %v2582 = vpop.f32.mrb[0].mxu0
    %v2583 = vadd.f32 %v2543, %v2582
    %v2584 = vpop.f32.mrb[0].mxu0
    %2585 = vmatprep.mubr.bf16.mxu0 0
    %2586 = vmatmul.mubr.bf16.gmra.mrb[0].mxu0 %v1979
    %v2587 = vpop.f32.mrb[0].mxu0
    %v2588 = vadd.f32 %v2543, %v2587
    %v2589 = vpop.f32.mrb[0].mxu0
    %v2590 = vpop.f32.mrb[0].mxu0
    %v2591 = vadd.f32 %v2543, %v2590
    %v2592 = vpop.f32.mrb[0].mxu0
    %2593 = vmatprep.mubr.bf16.mxu0 0
    %2594 = vmatmul.mubr.bf16.gmra.mrb[0].mxu0 %v1982
    %v2595 = vpop.f32.mrb[0].mxu0
    %v2596 = vadd.f32 %v2543, %v2595
    %v2597 = vpop.f32.mrb[0].mxu0
    %v2598 = vpop.f32.mrb[0].mxu0
    %v2599 = vadd.f32 %v2543, %v2598
    %v2600 = vpop.f32.mrb[0].mxu0
    %2601 = vmatprep.mubr.bf16.mxu0 0
    %2602 = vmatmul.mubr.bf16.gmra.mrb[0].mxu0 %v1985
    %v2603 = vpop.f32.mrb[0].mxu0
    %v2604 = vadd.f32 %v2543, %v2603
    %v2605 = vpop.f32.mrb[0].mxu0
    %v2606 = vpop.f32.mrb[0].mxu0
    %v2607 = vadd.f32 %v2543, %v2606
    %v2608 = vpop.f32.mrb[0].mxu0
    %2609 = vmatprep.mubr.bf16.mxu0 0
    %2610 = vmatmul.mubr.bf16.gmra.mrb[0].mxu0 %v1988
    %v2611 = vpop.f32.mrb[0].mxu0
    %v2612 = vadd.f32 %v2543, %v2611
    %v2613 = vpop.f32.mrb[0].mxu0
    %v2614 = vpop.f32.mrb[0].mxu0
    %v2615 = vadd.f32 %v2543, %v2614
    %v2616 = vpop.f32.mrb[0].mxu0
    %2617 = vmatprep.mubr.bf16.mxu0 0
    %2618 = vmatmul.mubr.bf16.gmra.mrb[0].mxu0 %v1991
    %v2619 = vpop.f32.mrb[0].mxu0
    %v2620 = vadd.f32 %v2543, %v2619
    %v2621 = vpop.f32.mrb[0].mxu0
    %v2622 = vpop.f32.mrb[0].mxu0
    %v2623 = vadd.f32 %v2543, %v2622
    %v2624 = vpop.f32.mrb[0].mxu0
    %2625 = vmatprep.mubr.bf16.mxu0 0
    %2626 = vmatmul.mubr.bf16.gmra.mrb[0].mxu0 %v1994
    %v2627 = vpop.f32.mrb[0].mxu0
    %v2628 = vadd.f32 %v2543, %v2627
    %v2629 = vpop.f32.mrb[0].mxu0
    %v2630 = vpop.f32.mrb[0].mxu0
    %v2631 = vadd.f32 %v2543, %v2630
    %v2632 = vpop.f32.mrb[0].mxu0
    %2633 = vmatprep.mubr.bf16.mxu0 0
    %2634 = vmatmul.mubr.bf16.gmra.mrb[0].mxu0 %v1997
    %v2635 = vpop.f32.mrb[0].mxu0
    %v2636 = vadd.f32 %v2543, %v2635
    %v2637 = vpop.f32.mrb[0].mxu0
    %v2638 = vpop.f32.mrb[0].mxu0
    %v2639 = vadd.f32 %v2543, %v2638
    %v2640 = vpop.f32.mrb[0].mxu0
    %2641 = vmatprep.mubr.bf16.mxu0 0
    %2642 = vmatmul.mubr.bf16.gmra.mrb[0].mxu0 %v2000
    %v2643 = vpop.f32.mrb[0].mxu0
    %v2644 = vadd.f32 %v2543, %v2643
    %v2645 = vpop.f32.mrb[0].mxu0
    %v2646 = vpop.f32.mrb[0].mxu0
    %v2647 = vadd.f32 %v2543, %v2646
    %v2648 = vpop.f32.mrb[0].mxu0
    %2649 = vmatprep.mubr.bf16.mxu0 0
    %2650 = vmatmul.mubr.bf16.gmra.mrb[0].mxu0 %v2003
    %v2651 = vpop.f32.mrb[0].mxu0
    %v2652 = vadd.f32 %v2543, %v2651
    %v2653 = vpop.f32.mrb[0].mxu0
    %v2654 = vpop.f32.mrb[0].mxu0
    %v2655 = vadd.f32 %v2543, %v2654
    %v2656 = vpop.f32.mrb[0].mxu0
    %2657 = vmatprep.mubr.bf16.mxu0 0
    %2658 = vmatmul.mubr.bf16.gmra.mrb[0].mxu0 %v2006
    %v2659 = vpop.f32.mrb[0].mxu0
    %v2660 = vadd.f32 %v2543, %v2659
    %v2661 = vpop.f32.mrb[0].mxu0
    %v2662 = vpop.f32.mrb[0].mxu0
    %v2663 = vadd.f32 %v2543, %v2662
    %v2664 = vpop.f32.mrb[0].mxu0
    %2665 = vmatprep.mubr.bf16.mxu0 0
    %2666 = vmatmul.mubr.bf16.gmra.mrb[0].mxu0 %v2009
    %v2667 = vpop.f32.mrb[0].mxu0
    %v2668 = vadd.f32 %v2543, %v2667
    %v2669 = vpop.f32.mrb[0].mxu0
    %v2670 = vpop.f32.mrb[0].mxu0
    %v2671 = vadd.f32 %v2543, %v2670
    %v2672 = vpop.f32.mrb[0].mxu0
    %2673 = vmatprep.mubr.bf16.mxu0 0
    %2674 = vmatmul.mubr.bf16.gmra.mrb[0].mxu0 %v2012
    %v2675 = vpop.f32.mrb[0].mxu0
    %v2676 = vadd.f32 %v2543, %v2675
    %v2677 = vpop.f32.mrb[0].mxu0
    %v2678 = vpop.f32.mrb[0].mxu0
    %v2679 = vadd.f32 %v2543, %v2678
    %v2680 = vpop.f32.mrb[0].mxu0
    %2681 = vmatprep.mubr.bf16.mxu0 0
    %2682 = vmatmul.mubr.bf16.gmra.mrb[0].mxu0 %v2015
    %v2683 = vpop.f32.mrb[0].mxu0
    %v2684 = vadd.f32 %v2543, %v2683
    %v2685 = vpop.f32.mrb[0].mxu0
    %v2686 = vpop.f32.mrb[0].mxu0
    %v2687 = vadd.f32 %v2543, %v2686
    %v2688 = vpop.f32.mrb[0].mxu0
    %2689 = vmatprep.mubr.bf16.mxu0 0
    %2690 = vmatmul.mubr.bf16.gmra.mrb[0].mxu0 %v2018
    %v2691 = vpop.f32.mrb[0].mxu0
    %v2692 = vadd.f32 %v2543, %v2691
    %v2693 = vpop.f32.mrb[0].mxu0
    %v2694 = vpop.f32.mrb[0].mxu0
    %v2695 = vadd.f32 %v2543, %v2694
    %v2696 = vpop.f32.mrb[0].mxu0
    %2697 = vmatprep.mubr.bf16.mxu0 0
    %2698 = vmatmul.mubr.bf16.gmra.mrb[0].mxu0 %v2021
    %v2699 = vpop.f32.mrb[0].mxu0
    %v2700 = vadd.f32 %v2543, %v2699
    %v2701 = vpop.f32.mrb[0].mxu0
    %v2702 = vpop.f32.mrb[0].mxu0
    %v2703 = vadd.f32 %v2543, %v2702
    %v2704 = vpop.f32.mrb[0].mxu0
    %2705 = vmatprep.mubr.bf16.mxu0 0
    %2706 = vmatmul.mubr.bf16.gmra.mrb[0].mxu0 %v2024
    %v2707 = vpop.f32.mrb[0].mxu0
    %v2708 = vadd.f32 %v2543, %v2707
    %v2709 = vpop.f32.mrb[0].mxu0
    %v2710 = vpop.f32.mrb[0].mxu0
    %v2711 = vadd.f32 %v2543, %v2710
    %v2712 = vpop.f32.mrb[0].mxu0
    %2713 = vmatprep.mubr.bf16.mxu0 0
    %2714 = vmatmul.mubr.bf16.gmra.mrb[0].mxu0 %v2027
    %v2715 = vpop.f32.mrb[0].mxu0
    %v2716 = vadd.f32 %v2543, %v2715
    %v2717 = vpop.f32.mrb[0].mxu0
    %v2718 = vpop.f32.mrb[0].mxu0
    %v2719 = vadd.f32 %v2543, %v2718
    %v2720 = vpop.f32.mrb[0].mxu0
    %2721 = vmatprep.mubr.bf16.mxu0 0
    %2722 = vmatmul.mubr.bf16.gmra.mrb[0].mxu0 %v2030
    %v2723 = vpop.f32.mrb[0].mxu0
    %v2724 = vadd.f32 %v2543, %v2723
    %v2725 = vpop.f32.mrb[0].mxu0
    %v2726 = vpop.f32.mrb[0].mxu0
    %v2727 = vadd.f32 %v2543, %v2726
    %v2728 = vpop.f32.mrb[0].mxu0
    %2729 = vmatprep.mubr.bf16.mxu0 0
    %2730 = vmatmul.mubr.bf16.gmra.mrb[0].mxu0 %v2033
    %v2731 = vpop.f32.mrb[0].mxu0
    %v2732 = vadd.f32 %v2543, %v2731
    %v2733 = vpop.f32.mrb[0].mxu0
    %v2734 = vpop.f32.mrb[0].mxu0
    %v2735 = vadd.f32 %v2543, %v2734
    %v2736 = vpop.f32.mrb[0].mxu0
    %2737 = vmatprep.mubr.bf16.mxu0 0
    %2738 = vmatmul.mubr.bf16.gmra.mrb[0].mxu0 %v2036
    %v2739 = vpop.f32.mrb[0].mxu0
    %v2740 = vadd.f32 %v2543, %v2739
    %v2741 = vpop.f32.mrb[0].mxu0
    %v2742 = vpop.f32.mrb[0].mxu0
    %v2743 = vadd.f32 %v2543, %v2742
    %v2744 = vpop.f32.mrb[0].mxu0
    %2745 = vmatprep.mubr.bf16.mxu0 0
    %2746 = vmatmul.mubr.bf16.gmra.mrb[0].mxu0 %v2039
    %v2747 = vpop.f32.mrb[0].mxu0
    %v2748 = vadd.f32 %v2543, %v2747
    %v2749 = vpop.f32.mrb[0].mxu0
    %v2750 = vpop.f32.mrb[0].mxu0
    %v2751 = vadd.f32 %v2543, %v2750
    %v2752 = vpop.f32.mrb[0].mxu0
    %2753 = vmatprep.mubr.bf16.mxu0 0
    %2754 = vmatmul.mubr.bf16.gmra.mrb[0].mxu0 %v2042
    %v2755 = vpop.f32.mrb[0].mxu0
    %v2756 = vadd.f32 %v2543, %v2755
    %v2757 = vpop.f32.mrb[0].mxu0
    %v2758 = vpop.f32.mrb[0].mxu0
    %v2759 = vadd.f32 %v2543, %v2758
    %v2760 = vpop.f32.mrb[0].mxu0
    %2761 = vmatprep.mubr.bf16.mxu0 0
    %2762 = vmatmul.mubr.bf16.gmra.mrb[0].mxu0 %v2045
    %v2763 = vpop.f32.mrb[0].mxu0
    %v2764 = vadd.f32 %v2543, %v2763
    %v2765 = vpop.f32.mrb[0].mxu0
    %v2766 = vpop.f32.mrb[0].mxu0
    %v2767 = vadd.f32 %v2543, %v2766
    %v2768 = vpop.f32.mrb[0].mxu0
    %2769 = vmatprep.mubr.bf16.mxu0 0
    %2770 = vmatmul.mubr.bf16.gmra.mrb[0].mxu0 %v2048
    %v2771 = vpop.f32.mrb[0].mxu0
    %v2772 = vadd.f32 %v2543, %v2771
    %v2773 = vpop.f32.mrb[0].mxu0
    %v2774 = vpop.f32.mrb[0].mxu0
    %v2775 = vadd.f32 %v2543, %v2774
    %v2776 = vpop.f32.mrb[0].mxu0
    %2777 = vmatprep.mubr.bf16.mxu0 0
    %2778 = vmatmul.mubr.bf16.gmra.mrb[0].mxu0 %v2051
    %v2779 = vpop.f32.mrb[0].mxu0
    %v2780 = vadd.f32 %v2543, %v2779
    %v2781 = vpop.f32.mrb[0].mxu0
    %v2782 = vpop.f32.mrb[0].mxu0
    %v2783 = vadd.f32 %v2543, %v2782
    %v2784 = vpop.f32.mrb[0].mxu0
    %2785 = vmatprep.mubr.bf16.mxu0 0
    %2786 = vmatmul.mubr.bf16.gmra.mrb[0].mxu0 %v2054
    %v2787 = vpop.f32.mrb[0].mxu0
    %v2788 = vadd.f32 %v2543, %v2787
    %v2789 = vpop.f32.mrb[0].mxu0
    %v2790 = vpop.f32.mrb[0].mxu0
    %v2791 = vadd.f32 %v2543, %v2790
    %v2792 = vpop.f32.mrb[0].mxu0
    %2793 = vmatprep.mubr.bf16.mxu0 0
    %2794 = vmatmul.mubr.bf16.gmra.mrb[0].mxu0 %v2057
    %v2795 = vpop.f32.mrb[0].mxu0
    %v2796 = vadd.f32 %v2543, %v2795
    %v2797 = vpop.f32.mrb[0].mxu0
    %v2798 = vpop.f32.mrb[0].mxu0
    %v2799 = vadd.f32 %v2543, %v2798
    %v2800 = vpop.f32.mrb[0].mxu0
    %2801 = vmatprep.mubr.bf16.mxu0 0
    %2802 = vmatmul.mubr.bf16.gmra.mrb[0].mxu0 %v2060
    %v2803 = vpop.f32.mrb[0].mxu0
    %v2804 = vadd.f32 %v2543, %v2803
    %v2805 = vpop.f32.mrb[0].mxu0
    %v2806 = vpop.f32.mrb[0].mxu0
    %v2807 = vadd.f32 %v2543, %v2806
    %v2808 = vpop.f32.mrb[0].mxu0
    %2809 = vmatprep.mubr.bf16.mxu0 0
    %2810 = vmatmul.mubr.bf16.gmra.mrb[0].mxu0 %v2063
    %v2811 = vpop.f32.mrb[0].mxu0
    %v2812 = vadd.f32 %v2543, %v2811
    %v2813 = vpop.f32.mrb[0].mxu0
    %v2814 = vpop.f32.mrb[0].mxu0
    %v2815 = vadd.f32 %v2543, %v2814
    %v2816 = vpop.f32.mrb[0].mxu0
    %2817 = vmatprep.mubr.bf16.mxu0 0
    %2818 = vmatmul.mubr.bf16.gmra.mrb[0].mxu0 %v2066
    %v2819 = vpop.f32.mrb[0].mxu0
    %v2820 = vadd.f32 %v2543, %v2819
    %v2821 = vpop.f32.mrb[0].mxu0
    %v2822 = vpop.f32.mrb[0].mxu0
    %v2823 = vadd.f32 %v2543, %v2822
    %v2824 = vpop.f32.mrb[0].mxu0
    %2825 = vmatprep.mubr.bf16.mxu0 0
    %2826 = vmatmul.mubr.bf16.gmra.mrb[0].mxu0 %v2069
    %v2827 = vpop.f32.mrb[0].mxu0
    %v2828 = vadd.f32 %v2543, %v2827
    %v2829 = vpop.f32.mrb[0].mxu0
    %v2830 = vpop.f32.mrb[0].mxu0
    %v2831 = vadd.f32 %v2543, %v2830
    %v2832 = vpop.f32.mrb[0].mxu0
    %2833 = vmatprep.mubr.bf16.mxu0 0
    %2834 = vmatmul.mubr.bf16.gmra.mrb[0].mxu0 %v2072
    %v2835 = vpop.f32.mrb[0].mxu0
    %v2836 = vadd.f32 %v2543, %v2835
    %v2837 = vpop.f32.mrb[0].mxu0
    %v2838 = vpop.f32.mrb[0].mxu0
    %v2839 = vadd.f32 %v2543, %v2838
    %v2840 = vpop.f32.mrb[0].mxu0
    %2841 = vmatprep.mubr.bf16.mxu0 0
    %2842 = vmatmul.mubr.bf16.gmra.mrb[0].mxu0 %v2075
    %v2843 = vpop.f32.mrb[0].mxu0
    %v2844 = vadd.f32 %v2543, %v2843
    %v2845 = vpop.f32.mrb[0].mxu0
    %v2846 = vpop.f32.mrb[0].mxu0
    %v2847 = vadd.f32 %v2543, %v2846
    %v2848 = vpop.f32.mrb[0].mxu0
    %2849 = vmatprep.mubr.bf16.mxu0 0
    %2850 = vmatmul.mubr.bf16.gmra.mrb[0].mxu0 %v2078
    %v2851 = vpop.f32.mrb[0].mxu0
    %v2852 = vadd.f32 %v2543, %v2851
    %v2853 = vpop.f32.mrb[0].mxu0
    %v2854 = vpop.f32.mrb[0].mxu0
    %v2855 = vadd.f32 %v2543, %v2854
    %v2856 = vpop.f32.mrb[0].mxu0
    %2857 = vmatprep.mubr.bf16.mxu0 0
    %2858 = vmatmul.mubr.bf16.gmra.mrb[0].mxu0 %v2081
    %v2859 = vpop.f32.mrb[0].mxu0
    %v2860 = vadd.f32 %v2543, %v2859
    %v2861 = vpop.f32.mrb[0].mxu0
    %v2862 = vpop.f32.mrb[0].mxu0
    %v2863 = vadd.f32 %v2543, %v2862
    %v2864 = vpop.f32.mrb[0].mxu0
    %2865 = vmatprep.mubr.bf16.mxu0 0
    %2866 = vmatmul.mubr.bf16.gmra.mrb[0].mxu0 %v2084
    %v2867 = vpop.f32.mrb[0].mxu0
    %v2868 = vadd.f32 %v2543, %v2867
    %v2869 = vpop.f32.mrb[0].mxu0
    %v2870 = vpop.f32.mrb[0].mxu0
    %v2871 = vadd.f32 %v2543, %v2870
    %v2872 = vpop.f32.mrb[0].mxu0
    %2873 = vmatprep.mubr.bf16.mxu0 0
    %2874 = vmatmul.mubr.bf16.gmra.mrb[0].mxu0 %v2087
    %v2875 = vpop.f32.mrb[0].mxu0
    %v2876 = vadd.f32 %v2543, %v2875
    %v2877 = vpop.f32.mrb[0].mxu0
    %v2878 = vpop.f32.mrb[0].mxu0
    %v2879 = vadd.f32 %v2543, %v2878
    %v2880 = vpop.f32.mrb[0].mxu0
    %2881 = vmatprep.mubr.bf16.mxu0 0
    %2882 = vmatmul.mubr.bf16.gmra.mrb[0].mxu0 %v2090
    %v2883 = vpop.f32.mrb[0].mxu0
    %v2884 = vadd.f32 %v2543, %v2883
    %v2885 = vpop.f32.mrb[0].mxu0
    %v2886 = vpop.f32.mrb[0].mxu0
    %v2887 = vadd.f32 %v2543, %v2886
    %v2888 = vpop.f32.mrb[0].mxu0
    %2889 = vmatprep.mubr.bf16.mxu0 0
    %2890 = vmatmul.mubr.bf16.gmra.mrb[0].mxu0 %v2093
    %v2891 = vpop.f32.mrb[0].mxu0
    %v2892 = vadd.f32 %v2543, %v2891
    %v2893 = vpop.f32.mrb[0].mxu0
    %v2894 = vpop.f32.mrb[0].mxu0
    %v2895 = vadd.f32 %v2543, %v2894
    %v2896 = vpop.f32.mrb[0].mxu0
    %2897 = vmatprep.mubr.bf16.mxu0 0
    %2898 = vmatmul.mubr.bf16.gmra.mrb[0].mxu0 %v2096
    %v2899 = vpop.f32.mrb[0].mxu0
    %v2900 = vadd.f32 %v2543, %v2899
    %v2901 = vpop.f32.mrb[0].mxu0
    %v2902 = vpop.f32.mrb[0].mxu0
    %v2903 = vadd.f32 %v2543, %v2902
    %v2904 = vpop.f32.mrb[0].mxu0
    %2905 = vmatprep.mubr.bf16.mxu0 0
    %2906 = vmatmul.mubr.bf16.gmra.mrb[0].mxu0 %v2099
    %v2907 = vpop.f32.mrb[0].mxu0
    %v2908 = vadd.f32 %v2543, %v2907
    %v2909 = vpop.f32.mrb[0].mxu0
    %v2910 = vpop.f32.mrb[0].mxu0
    %v2911 = vadd.f32 %v2543, %v2910
    %v2912 = vpop.f32.mrb[0].mxu0
    %2913 = vmatprep.mubr.bf16.mxu0 0
    %2914 = vmatmul.mubr.bf16.gmra.mrb[0].mxu0 %v2102
    %v2915 = vpop.f32.mrb[0].mxu0
    %v2916 = vadd.f32 %v2543, %v2915
    %v2917 = vpop.f32.mrb[0].mxu0
    %v2918 = vpop.f32.mrb[0].mxu0
    %v2919 = vadd.f32 %v2543, %v2918
    %v2920 = vpop.f32.mrb[0].mxu0
    %2921 = vmatprep.mubr.bf16.mxu0 0
    %2922 = vmatmul.mubr.bf16.gmra.mrb[0].mxu0 %v2105
    %v2923 = vpop.f32.mrb[0].mxu0
    %v2924 = vadd.f32 %v2543, %v2923
    %v2925 = vpop.f32.mrb[0].mxu0
    %v2926 = vpop.f32.mrb[0].mxu0
    %v2927 = vadd.f32 %v2543, %v2926
    %v2928 = vpop.f32.mrb[0].mxu0
    %2929 = vmatprep.mubr.bf16.mxu0 0
    %2930 = vmatmul.mubr.bf16.gmra.mrb[0].mxu0 %v2108
    %v2931 = vpop.f32.mrb[0].mxu0
    %v2932 = vadd.f32 %v2543, %v2931
    %v2933 = vpop.f32.mrb[0].mxu0
    %v2934 = vpop.f32.mrb[0].mxu0
    %v2935 = vadd.f32 %v2543, %v2934
    %v2936 = vpop.f32.mrb[0].mxu0
    %2937 = vmatprep.mubr.bf16.mxu0 0
    %2938 = vmatmul.mubr.bf16.gmra.mrb[0].mxu0 %v2111
    %v2939 = vpop.f32.mrb[0].mxu0
    %v2940 = vadd.f32 %v2543, %v2939
    %v2941 = vpop.f32.mrb[0].mxu0
    %v2942 = vpop.f32.mrb[0].mxu0
    %v2943 = vadd.f32 %v2543, %v2942
    %v2944 = vpop.f32.mrb[0].mxu0
    %2945 = vmatprep.mubr.bf16.mxu0 0
    %2946 = vmatmul.mubr.bf16.gmra.mrb[0].mxu0 %v2114
    %v2947 = vpop.f32.mrb[0].mxu0
    %v2948 = vadd.f32 %v2543, %v2947
    %v2949 = vpop.f32.mrb[0].mxu0
    %v2950 = vpop.f32.mrb[0].mxu0
    %v2951 = vadd.f32 %v2543, %v2950
    %v2952 = vpop.f32.mrb[0].mxu0
    %2953 = vmatprep.mubr.bf16.mxu0 0
    %2954 = vmatmul.mubr.bf16.gmra.mrb[0].mxu0 %v2117
    %v2955 = vpop.f32.mrb[0].mxu0
    %v2956 = vadd.f32 %v2543, %v2955
    %v2957 = vpop.f32.mrb[0].mxu0
    %v2958 = vpop.f32.mrb[0].mxu0
    %v2959 = vadd.f32 %v2543, %v2958
    %v2960 = vpop.f32.mrb[0].mxu0
    %2961 = vdwg.mxu0
    %v2962 = vmul.f32 %v2154, 0.5
    %v2963 = vmul.f32 %v2157, 0.5
    %v2964 = vmul.f32 %v2162, 0.5
    %v2965 = vmul.f32 %v2165, 0.5
    %v2966 = vmul.f32 %v2170, 0.5
    %v2967 = vmul.f32 %v2173, 0.5
    %v2968 = vmul.f32 %v2178, 0.5
    %v2969 = vmul.f32 %v2181, 0.5
    %v2970 = vmul.f32 %v2186, 0.5
    %v2971 = vmul.f32 %v2189, 0.5
    %v2972 = vmul.f32 %v2194, 0.5
    %v2973 = vmul.f32 %v2197, 0.5
    %v2974 = vmul.f32 %v2202, 0.5
    %v2975 = vmul.f32 %v2205, 0.5
    %v2976 = vmul.f32 %v2210, 0.5
    %v2977 = vmul.f32 %v2213, 0.5
    %v2978 = vmul.f32 %v2218, 0.5
    %v2979 = vmul.f32 %v2221, 0.5
    %v2980 = vmul.f32 %v2226, 0.5
    %v2981 = vmul.f32 %v2229, 0.5
    %v2982 = vmul.f32 %v2234, 0.5
    %v2983 = vmul.f32 %v2237, 0.5
    %v2984 = vmul.f32 %v2242, 0.5
    %v2985 = vmul.f32 %v2245, 0.5
    %v2986 = vmul.f32 %v2250, 0.5
    %v2987 = vmul.f32 %v2253, 0.5
    %v2988 = vmul.f32 %v2258, 0.5
    %v2989 = vmul.f32 %v2261, 0.5
    %v2990 = vmul.f32 %v2266, 0.5
    %v2991 = vmul.f32 %v2269, 0.5
    %v2992 = vmul.f32 %v2274, 0.5
    %v2993 = vmul.f32 %v2277, 0.5
    %v2994 = vmul.f32 %v2282, 0.5
    %v2995 = vmul.f32 %v2285, 0.5
    %v2996 = vmul.f32 %v2290, 0.5
    %v2997 = vmul.f32 %v2293, 0.5
    %v2998 = vmul.f32 %v2298, 0.5
    %v2999 = vmul.f32 %v2301, 0.5
    %v3000 = vmul.f32 %v2306, 0.5
    %v3001 = vmul.f32 %v2309, 0.5
    %v3002 = vmul.f32 %v2314, 0.5
    %v3003 = vmul.f32 %v2317, 0.5
    %v3004 = vmul.f32 %v2322, 0.5
    %v3005 = vmul.f32 %v2325, 0.5
    %v3006 = vmul.f32 %v2330, 0.5
    %v3007 = vmul.f32 %v2333, 0.5
    %v3008 = vmul.f32 %v2338, 0.5
    %v3009 = vmul.f32 %v2341, 0.5
    %v3010 = vmul.f32 %v2346, 0.5
    %v3011 = vmul.f32 %v2349, 0.5
    %v3012 = vmul.f32 %v2354, 0.5
    %v3013 = vmul.f32 %v2357, 0.5
    %v3014 = vmul.f32 %v2362, 0.5
    %v3015 = vmul.f32 %v2365, 0.5
    %v3016 = vmul.f32 %v2370, 0.5
    %v3017 = vmul.f32 %v2373, 0.5
    %v3018 = vmul.f32 %v2378, 0.5
    %v3019 = vmul.f32 %v2381, 0.5
    %v3020 = vmul.f32 %v2386, 0.5
    %v3021 = vmul.f32 %v2389, 0.5
    %v3022 = vmul.f32 %v2394, 0.5
    %v3023 = vmul.f32 %v2397, 0.5
    %v3024 = vmul.f32 %v2402, 0.5
    %v3025 = vmul.f32 %v2405, 0.5
    %v3026 = vmul.f32 %v2410, 0.5
    %v3027 = vmul.f32 %v2413, 0.5
    %v3028 = vmul.f32 %v2418, 0.5
    %v3029 = vmul.f32 %v2421, 0.5
    %v3030 = vmul.f32 %v2426, 0.5
    %v3031 = vmul.f32 %v2429, 0.5
    %v3032 = vmul.f32 %v2434, 0.5
    %v3033 = vmul.f32 %v2437, 0.5
    %v3034 = vmul.f32 %v2442, 0.5
    %v3035 = vmul.f32 %v2445, 0.5
    %v3036 = vmul.f32 %v2450, 0.5
    %v3037 = vmul.f32 %v2453, 0.5
    %v3038 = vmul.f32 %v2458, 0.5
    %v3039 = vmul.f32 %v2461, 0.5
    %v3040 = vmul.f32 %v2466, 0.5
    %v3041 = vmul.f32 %v2469, 0.5
    %v3042 = vmul.f32 %v2474, 0.5
    %v3043 = vmul.f32 %v2477, 0.5
    %v3044 = vmul.f32 %v2482, 0.5
    %v3045 = vmul.f32 %v2485, 0.5
    %v3046 = vmul.f32 %v2490, 0.5
    %v3047 = vmul.f32 %v2493, 0.5
    %v3048 = vmul.f32 %v2498, 0.5
    %v3049 = vmul.f32 %v2501, 0.5
    %v3050 = vmul.f32 %v2506, 0.5
    %v3051 = vmul.f32 %v2509, 0.5
    %v3052 = vmul.f32 %v2514, 0.5
    %v3053 = vmul.f32 %v2517, 0.5
    %v3054 = vmul.f32 %v2522, 0.5
    %v3055 = vmul.f32 %v2525, 0.5
    %v3056 = vmul.f32 %v2530, 0.5
    %v3057 = vmul.f32 %v2533, 0.5
    %v3058 = vmul.f32 %v2154, 0.70710677
    %v3059 = vmul.f32 %v2157, 0.70710677
    %v3060 = vmul.f32 %v2162, 0.70710677
    %v3061 = vmul.f32 %v2165, 0.70710677
    %v3062 = vmul.f32 %v2170, 0.70710677
    %v3063 = vmul.f32 %v2173, 0.70710677
    %v3064 = vmul.f32 %v2178, 0.70710677
    %v3065 = vmul.f32 %v2181, 0.70710677
    %v3066 = vmul.f32 %v2186, 0.70710677
    %v3067 = vmul.f32 %v2189, 0.70710677
    %v3068 = vmul.f32 %v2194, 0.70710677
    %v3069 = vmul.f32 %v2197, 0.70710677
    %v3070 = vmul.f32 %v2202, 0.70710677
    %v3071 = vmul.f32 %v2205, 0.70710677
    %v3072 = vmul.f32 %v2210, 0.70710677
    %v3073 = vmul.f32 %v2213, 0.70710677
    %v3074 = vmul.f32 %v2218, 0.70710677
    %v3075 = vmul.f32 %v2221, 0.70710677
    %v3076 = vmul.f32 %v2226, 0.70710677
    %v3077 = vmul.f32 %v2229, 0.70710677
    %v3078 = vmul.f32 %v2234, 0.70710677
    %v3079 = vmul.f32 %v2237, 0.70710677
    %v3080 = vmul.f32 %v2242, 0.70710677
    %v3081 = vmul.f32 %v2245, 0.70710677
    %v3082 = vmul.f32 %v2250, 0.70710677
    %v3083 = vmul.f32 %v2253, 0.70710677
    %v3084 = vmul.f32 %v2258, 0.70710677
    %v3085 = vmul.f32 %v2261, 0.70710677
    %v3086 = vmul.f32 %v2266, 0.70710677
    %v3087 = vmul.f32 %v2269, 0.70710677
    %v3088 = vmul.f32 %v2274, 0.70710677
    %v3089 = vmul.f32 %v2277, 0.70710677
    %v3090 = vmul.f32 %v2282, 0.70710677
    %v3091 = vmul.f32 %v2285, 0.70710677
    %v3092 = vmul.f32 %v2290, 0.70710677
    %v3093 = vmul.f32 %v2293, 0.70710677
    %v3094 = vmul.f32 %v2298, 0.70710677
    %v3095 = vmul.f32 %v2301, 0.70710677
    %v3096 = vmul.f32 %v2306, 0.70710677
    %v3097 = vmul.f32 %v2309, 0.70710677
    %v3098 = vmul.f32 %v2314, 0.70710677
    %v3099 = vmul.f32 %v2317, 0.70710677
    %v3100 = vmul.f32 %v2322, 0.70710677
    %v3101 = vmul.f32 %v2325, 0.70710677
    %v3102 = vmul.f32 %v2330, 0.70710677
    %v3103 = vmul.f32 %v2333, 0.70710677
    %v3104 = vmul.f32 %v2338, 0.70710677
    %v3105 = vmul.f32 %v2341, 0.70710677
    %v3106 = vmul.f32 %v2346, 0.70710677
    %v3107 = vmul.f32 %v2349, 0.70710677
    %v3108 = vmul.f32 %v2354, 0.70710677
    %v3109 = vmul.f32 %v2357, 0.70710677
    %v3110 = vmul.f32 %v2362, 0.70710677
    %v3111 = vmul.f32 %v2365, 0.70710677
    %v3112 = vmul.f32 %v2370, 0.70710677
    %v3113 = vmul.f32 %v2373, 0.70710677
    %v3114 = vmul.f32 %v2378, 0.70710677
    %v3115 = vmul.f32 %v2381, 0.70710677
    %v3116 = vmul.f32 %v2386, 0.70710677
    %v3117 = vmul.f32 %v2389, 0.70710677
    %v3118 = vmul.f32 %v2394, 0.70710677
    %v3119 = vmul.f32 %v2397, 0.70710677
    %v3120 = vmul.f32 %v2402, 0.70710677
    %v3121 = vmul.f32 %v2405, 0.70710677
    %v3122 = vmul.f32 %v2410, 0.70710677
    %v3123 = vmul.f32 %v2413, 0.70710677
    %v3124 = vmul.f32 %v2418, 0.70710677
    %v3125 = vmul.f32 %v2421, 0.70710677
    %v3126 = vmul.f32 %v2426, 0.70710677
    %v3127 = vmul.f32 %v2429, 0.70710677
    %v3128 = vmul.f32 %v2434, 0.70710677
    %v3129 = vmul.f32 %v2437, 0.70710677
    %v3130 = vmul.f32 %v2442, 0.70710677
    %v3131 = vmul.f32 %v2445, 0.70710677
    %v3132 = vmul.f32 %v2450, 0.70710677
    %v3133 = vmul.f32 %v2453, 0.70710677
    %v3134 = vmul.f32 %v2458, 0.70710677
    %v3135 = vmul.f32 %v2461, 0.70710677
    %v3136 = vmul.f32 %v2466, 0.70710677
    %v3137 = vmul.f32 %v2469, 0.70710677
    %v3138 = vmul.f32 %v2474, 0.70710677
    %v3139 = vmul.f32 %v2477, 0.70710677
    %v3140 = vmul.f32 %v2482, 0.70710677
    %v3141 = vmul.f32 %v2485, 0.70710677
    %v3142 = vmul.f32 %v2490, 0.70710677
    %v3143 = vmul.f32 %v2493, 0.70710677
    %v3144 = vmul.f32 %v2498, 0.70710677
    %v3145 = vmul.f32 %v2501, 0.70710677
    %v3146 = vmul.f32 %v2506, 0.70710677
    %v3147 = vmul.f32 %v2509, 0.70710677
    %v3148 = vmul.f32 %v2514, 0.70710677
    %v3149 = vmul.f32 %v2517, 0.70710677
    %v3150 = vmul.f32 %v2522, 0.70710677
    %v3151 = vmul.f32 %v2525, 0.70710677
    %v3152 = vmul.f32 %v2530, 0.70710677
    %v3153 = vmul.f32 %v2533, 0.70710677
    %v3154 = verf.f32.pop %v3058
    %v3155 = verf.f32.pop %v3059
    %v3156 = verf.f32.pop %v3060
    %v3157 = verf.f32.pop %v3061
    %v3158 = verf.f32.pop %v3062
    %v3159 = verf.f32.pop %v3063
    %v3160 = verf.f32.pop %v3064
    %v3161 = verf.f32.pop %v3065
    %v3162 = verf.f32.pop %v3066
    %v3163 = verf.f32.pop %v3067
    %v3164 = verf.f32.pop %v3068
    %v3165 = verf.f32.pop %v3069
    %v3166 = verf.f32.pop %v3070
    %v3167 = verf.f32.pop %v3071
    %v3168 = verf.f32.pop %v3072
    %v3169 = verf.f32.pop %v3073
    %v3170 = verf.f32.pop %v3074
    %v3171 = verf.f32.pop %v3075
    %v3172 = verf.f32.pop %v3076
    %v3173 = verf.f32.pop %v3077
    %v3174 = verf.f32.pop %v3078
    %v3175 = verf.f32.pop %v3079
    %v3176 = verf.f32.pop %v3080
    %v3177 = verf.f32.pop %v3081
    %v3178 = verf.f32.pop %v3082
    %v3179 = verf.f32.pop %v3083
    %v3180 = verf.f32.pop %v3084
    %v3181 = verf.f32.pop %v3085
    %v3182 = verf.f32.pop %v3086
    %v3183 = verf.f32.pop %v3087
    %v3184 = verf.f32.pop %v3088
    %v3185 = verf.f32.pop %v3089
    %v3186 = verf.f32.pop %v3090
    %v3187 = verf.f32.pop %v3091
    %v3188 = verf.f32.pop %v3092
    %v3189 = verf.f32.pop %v3093
    %v3190 = verf.f32.pop %v3094
    %v3191 = verf.f32.pop %v3095
    %v3192 = verf.f32.pop %v3096
    %v3193 = verf.f32.pop %v3097
    %v3194 = verf.f32.pop %v3098
    %v3195 = verf.f32.pop %v3099
    %v3196 = verf.f32.pop %v3100
    %v3197 = verf.f32.pop %v3101
    %v3198 = verf.f32.pop %v3102
    %v3199 = verf.f32.pop %v3103
    %v3200 = verf.f32.pop %v3104
    %v3201 = verf.f32.pop %v3105
    %v3202 = verf.f32.pop %v3106
    %v3203 = verf.f32.pop %v3107
    %v3204 = verf.f32.pop %v3108
    %v3205 = verf.f32.pop %v3109
    %v3206 = verf.f32.pop %v3110
    %v3207 = verf.f32.pop %v3111
    %v3208 = verf.f32.pop %v3112
    %v3209 = verf.f32.pop %v3113
    %v3210 = verf.f32.pop %v3114
    %v3211 = verf.f32.pop %v3115
    %v3212 = verf.f32.pop %v3116
    %v3213 = verf.f32.pop %v3117
    %v3214 = verf.f32.pop %v3118
    %v3215 = verf.f32.pop %v3119
    %v3216 = verf.f32.pop %v3120
    %v3217 = verf.f32.pop %v3121
    %v3218 = verf.f32.pop %v3122
    %v3219 = verf.f32.pop %v3123
    %v3220 = verf.f32.pop %v3124
    %v3221 = verf.f32.pop %v3125
    %v3222 = verf.f32.pop %v3126
    %v3223 = verf.f32.pop %v3127
    %v3224 = verf.f32.pop %v3128
    %v3225 = verf.f32.pop %v3129
    %v3226 = verf.f32.pop %v3130
    %v3227 = verf.f32.pop %v3131
    %v3228 = verf.f32.pop %v3132
    %v3229 = verf.f32.pop %v3133
    %v3230 = verf.f32.pop %v3134
    %v3231 = verf.f32.pop %v3135
    %v3232 = verf.f32.pop %v3136
    %v3233 = verf.f32.pop %v3137
    %v3234 = verf.f32.pop %v3138
    %v3235 = verf.f32.pop %v3139
    %v3236 = verf.f32.pop %v3140
    %v3237 = verf.f32.pop %v3141
    %v3238 = verf.f32.pop %v3142
    %v3239 = verf.f32.pop %v3143
    %v3240 = verf.f32.pop %v3144
    %v3241 = verf.f32.pop %v3145
    %v3242 = verf.f32.pop %v3146
    %v3243 = verf.f32.pop %v3147
    %v3244 = verf.f32.pop %v3148
    %v3245 = verf.f32.pop %v3149
    %v3246 = verf.f32.pop %v3150
    %v3247 = verf.f32.pop %v3151
    %v3248 = verf.f32.pop %v3152
    %v3249 = verf.f32.pop %v3153
    %v3250 = vadd.f32 %v3154, 1.0
    %v3251 = vadd.f32 %v3155, 1.0
    %v3252 = vadd.f32 %v3156, 1.0
    %v3253 = vadd.f32 %v3157, 1.0
    %v3254 = vadd.f32 %v3158, 1.0
    %v3255 = vadd.f32 %v3159, 1.0
    %v3256 = vadd.f32 %v3160, 1.0
    %v3257 = vadd.f32 %v3161, 1.0
    %v3258 = vadd.f32 %v3162, 1.0
    %v3259 = vadd.f32 %v3163, 1.0
    %v3260 = vadd.f32 %v3164, 1.0
    %v3261 = vadd.f32 %v3165, 1.0
    %v3262 = vadd.f32 %v3166, 1.0
    %v3263 = vadd.f32 %v3167, 1.0
    %v3264 = vadd.f32 %v3168, 1.0
    %v3265 = vadd.f32 %v3169, 1.0
    %v3266 = vadd.f32 %v3170, 1.0
    %v3267 = vadd.f32 %v3171, 1.0
    %v3268 = vadd.f32 %v3172, 1.0
    %v3269 = vadd.f32 %v3173, 1.0
    %v3270 = vadd.f32 %v3174, 1.0
    %v3271 = vadd.f32 %v3175, 1.0
    %v3272 = vadd.f32 %v3176, 1.0
    %v3273 = vadd.f32 %v3177, 1.0
    %v3274 = vadd.f32 %v3178, 1.0
    %v3275 = vadd.f32 %v3179, 1.0
    %v3276 = vadd.f32 %v3180, 1.0
    %v3277 = vadd.f32 %v3181, 1.0
    %v3278 = vadd.f32 %v3182, 1.0
    %v3279 = vadd.f32 %v3183, 1.0
    %v3280 = vadd.f32 %v3184, 1.0
    %v3281 = vadd.f32 %v3185, 1.0
    %v3282 = vadd.f32 %v3186, 1.0
    %v3283 = vadd.f32 %v3187, 1.0
    %v3284 = vadd.f32 %v3188, 1.0
    %v3285 = vadd.f32 %v3189, 1.0
    %v3286 = vadd.f32 %v3190, 1.0
    %v3287 = vadd.f32 %v3191, 1.0
    %v3288 = vadd.f32 %v3192, 1.0
    %v3289 = vadd.f32 %v3193, 1.0
    %v3290 = vadd.f32 %v3194, 1.0
    %v3291 = vadd.f32 %v3195, 1.0
    %v3292 = vadd.f32 %v3196, 1.0
    %v3293 = vadd.f32 %v3197, 1.0
    %v3294 = vadd.f32 %v3198, 1.0
    %v3295 = vadd.f32 %v3199, 1.0
    %v3296 = vadd.f32 %v3200, 1.0
    %v3297 = vadd.f32 %v3201, 1.0
    %v3298 = vadd.f32 %v3202, 1.0
    %v3299 = vadd.f32 %v3203, 1.0
    %v3300 = vadd.f32 %v3204, 1.0
    %v3301 = vadd.f32 %v3205, 1.0
    %v3302 = vadd.f32 %v3206, 1.0
    %v3303 = vadd.f32 %v3207, 1.0
    %v3304 = vadd.f32 %v3208, 1.0
    %v3305 = vadd.f32 %v3209, 1.0
    %v3306 = vadd.f32 %v3210, 1.0
    %v3307 = vadd.f32 %v3211, 1.0
    %v3308 = vadd.f32 %v3212, 1.0
    %v3309 = vadd.f32 %v3213, 1.0
    %v3310 = vadd.f32 %v3214, 1.0
    %v3311 = vadd.f32 %v3215, 1.0
    %v3312 = vadd.f32 %v3216, 1.0
    %v3313 = vadd.f32 %v3217, 1.0
    %v3314 = vadd.f32 %v3218, 1.0
    %v3315 = vadd.f32 %v3219, 1.0
    %v3316 = vadd.f32 %v3220, 1.0
    %v3317 = vadd.f32 %v3221, 1.0
    %v3318 = vadd.f32 %v3222, 1.0
    %v3319 = vadd.f32 %v3223, 1.0
    %v3320 = vadd.f32 %v3224, 1.0
    %v3321 = vadd.f32 %v3225, 1.0
    %v3322 = vadd.f32 %v3226, 1.0
    %v3323 = vadd.f32 %v3227, 1.0
    %v3324 = vadd.f32 %v3228, 1.0
    %v3325 = vadd.f32 %v3229, 1.0
    %v3326 = vadd.f32 %v3230, 1.0
    %v3327 = vadd.f32 %v3231, 1.0
    %v3328 = vadd.f32 %v3232, 1.0
    %v3329 = vadd.f32 %v3233, 1.0
    %v3330 = vadd.f32 %v3234, 1.0
    %v3331 = vadd.f32 %v3235, 1.0
    %v3332 = vadd.f32 %v3236, 1.0
    %v3333 = vadd.f32 %v3237, 1.0
    %v3334 = vadd.f32 %v3238, 1.0
    %v3335 = vadd.f32 %v3239, 1.0
    %v3336 = vadd.f32 %v3240, 1.0
    %v3337 = vadd.f32 %v3241, 1.0
    %v3338 = vadd.f32 %v3242, 1.0
    %v3339 = vadd.f32 %v3243, 1.0
    %v3340 = vadd.f32 %v3244, 1.0
    %v3341 = vadd.f32 %v3245, 1.0
    %v3342 = vadd.f32 %v3246, 1.0
    %v3343 = vadd.f32 %v3247, 1.0
    %v3344 = vadd.f32 %v3248, 1.0
    %v3345 = vadd.f32 %v3249, 1.0
    %v3346 = vmul.f32 %v2962, %v3250
    %v3347 = vmul.f32 %v2963, %v3251
    %v3348 = vmul.f32 %v2964, %v3252
    %v3349 = vmul.f32 %v2965, %v3253
    %v3350 = vmul.f32 %v2966, %v3254
    %v3351 = vmul.f32 %v2967, %v3255
    %v3352 = vmul.f32 %v2968, %v3256
    %v3353 = vmul.f32 %v2969, %v3257
    %v3354 = vmul.f32 %v2970, %v3258
    %v3355 = vmul.f32 %v2971, %v3259
    %v3356 = vmul.f32 %v2972, %v3260
    %v3357 = vmul.f32 %v2973, %v3261
    %v3358 = vmul.f32 %v2974, %v3262
    %v3359 = vmul.f32 %v2975, %v3263
    %v3360 = vmul.f32 %v2976, %v3264
    %v3361 = vmul.f32 %v2977, %v3265
    %v3362 = vmul.f32 %v2978, %v3266
    %v3363 = vmul.f32 %v2979, %v3267
    %v3364 = vmul.f32 %v2980, %v3268
    %v3365 = vmul.f32 %v2981, %v3269
    %v3366 = vmul.f32 %v2982, %v3270
    %v3367 = vmul.f32 %v2983, %v3271
    %v3368 = vmul.f32 %v2984, %v3272
    %v3369 = vmul.f32 %v2985, %v3273
    %v3370 = vmul.f32 %v2986, %v3274
    %v3371 = vmul.f32 %v2987, %v3275
    %v3372 = vmul.f32 %v2988, %v3276
    %v3373 = vmul.f32 %v2989, %v3277
    %v3374 = vmul.f32 %v2990, %v3278
    %v3375 = vmul.f32 %v2991, %v3279
    %v3376 = vmul.f32 %v2992, %v3280
    %v3377 = vmul.f32 %v2993, %v3281
    %v3378 = vmul.f32 %v2994, %v3282
    %v3379 = vmul.f32 %v2995, %v3283
    %v3380 = vmul.f32 %v2996, %v3284
    %v3381 = vmul.f32 %v2997, %v3285
    %v3382 = vmul.f32 %v2998, %v3286
    %v3383 = vmul.f32 %v2999, %v3287
    %v3384 = vmul.f32 %v3000, %v3288
    %v3385 = vmul.f32 %v3001, %v3289
    %v3386 = vmul.f32 %v3002, %v3290
    %v3387 = vmul.f32 %v3003, %v3291
    %v3388 = vmul.f32 %v3004, %v3292
    %v3389 = vmul.f32 %v3005, %v3293
    %v3390 = vmul.f32 %v3006, %v3294
    %v3391 = vmul.f32 %v3007, %v3295
    %v3392 = vmul.f32 %v3008, %v3296
    %v3393 = vmul.f32 %v3009, %v3297
    %v3394 = vmul.f32 %v3010, %v3298
    %v3395 = vmul.f32 %v3011, %v3299
    %v3396 = vmul.f32 %v3012, %v3300
    %v3397 = vmul.f32 %v3013, %v3301
    %v3398 = vmul.f32 %v3014, %v3302
    %v3399 = vmul.f32 %v3015, %v3303
    %v3400 = vmul.f32 %v3016, %v3304
    %v3401 = vmul.f32 %v3017, %v3305
    %v3402 = vmul.f32 %v3018, %v3306
    %v3403 = vmul.f32 %v3019, %v3307
    %v3404 = vmul.f32 %v3020, %v3308
    %v3405 = vmul.f32 %v3021, %v3309
    %v3406 = vmul.f32 %v3022, %v3310
    %v3407 = vmul.f32 %v3023, %v3311
    %v3408 = vmul.f32 %v3024, %v3312
    %v3409 = vmul.f32 %v3025, %v3313
    %v3410 = vmul.f32 %v3026, %v3314
    %v3411 = vmul.f32 %v3027, %v3315
    %v3412 = vmul.f32 %v3028, %v3316
    %v3413 = vmul.f32 %v3029, %v3317
    %v3414 = vmul.f32 %v3030, %v3318
    %v3415 = vmul.f32 %v3031, %v3319
    %v3416 = vmul.f32 %v3032, %v3320
    %v3417 = vmul.f32 %v3033, %v3321
    %v3418 = vmul.f32 %v3034, %v3322
    %v3419 = vmul.f32 %v3035, %v3323
    %v3420 = vmul.f32 %v3036, %v3324
    %v3421 = vmul.f32 %v3037, %v3325
    %v3422 = vmul.f32 %v3038, %v3326
    %v3423 = vmul.f32 %v3039, %v3327
    %v3424 = vmul.f32 %v3040, %v3328
    %v3425 = vmul.f32 %v3041, %v3329
    %v3426 = vmul.f32 %v3042, %v3330
    %v3427 = vmul.f32 %v3043, %v3331
    %v3428 = vmul.f32 %v3044, %v3332
    %v3429 = vmul.f32 %v3045, %v3333
    %v3430 = vmul.f32 %v3046, %v3334
    %v3431 = vmul.f32 %v3047, %v3335
    %v3432 = vmul.f32 %v3048, %v3336
    %v3433 = vmul.f32 %v3049, %v3337
    %v3434 = vmul.f32 %v3050, %v3338
    %v3435 = vmul.f32 %v3051, %v3339
    %v3436 = vmul.f32 %v3052, %v3340
    %v3437 = vmul.f32 %v3053, %v3341
    %v3438 = vmul.f32 %v3054, %v3342
    %v3439 = vmul.f32 %v3055, %v3343
    %v3440 = vmul.f32 %v3056, %v3344
    %v3441 = vmul.f32 %v3057, %v3345
    %v3442 = vmul.f32 %v2580, 0.5
    %v3443 = vmul.f32 %v2583, 0.5
    %v3444 = vmul.f32 %v2588, 0.5
    %v3445 = vmul.f32 %v2591, 0.5
    %v3446 = vmul.f32 %v2596, 0.5
    %v3447 = vmul.f32 %v2599, 0.5
    %v3448 = vmul.f32 %v2604, 0.5
    %v3449 = vmul.f32 %v2607, 0.5
    %v3450 = vmul.f32 %v2612, 0.5
    %v3451 = vmul.f32 %v2615, 0.5
    %v3452 = vmul.f32 %v2620, 0.5
    %v3453 = vmul.f32 %v2623, 0.5
    %v3454 = vmul.f32 %v2628, 0.5
    %v3455 = vmul.f32 %v2631, 0.5
    %v3456 = vmul.f32 %v2636, 0.5
    %v3457 = vmul.f32 %v2639, 0.5
    %v3458 = vmul.f32 %v2644, 0.5
    %v3459 = vmul.f32 %v2647, 0.5
    %v3460 = vmul.f32 %v2652, 0.5
    %v3461 = vmul.f32 %v2655, 0.5
    %v3462 = vmul.f32 %v2660, 0.5
    %v3463 = vmul.f32 %v2663, 0.5
    %v3464 = vmul.f32 %v2668, 0.5
    %v3465 = vmul.f32 %v2671, 0.5
    %v3466 = vmul.f32 %v2676, 0.5
    %v3467 = vmul.f32 %v2679, 0.5
    %v3468 = vmul.f32 %v2684, 0.5
    %v3469 = vmul.f32 %v2687, 0.5
    %v3470 = vmul.f32 %v2692, 0.5
    %v3471 = vmul.f32 %v2695, 0.5
    %v3472 = vmul.f32 %v2700, 0.5
    %v3473 = vmul.f32 %v2703, 0.5
    %v3474 = vmul.f32 %v2708, 0.5
    %v3475 = vmul.f32 %v2711, 0.5
    %v3476 = vmul.f32 %v2716, 0.5
    %v3477 = vmul.f32 %v2719, 0.5
    %v3478 = vmul.f32 %v2724, 0.5
    %v3479 = vmul.f32 %v2727, 0.5
    %v3480 = vmul.f32 %v2732, 0.5
    %v3481 = vmul.f32 %v2735, 0.5
    %v3482 = vmul.f32 %v2740, 0.5
    %v3483 = vmul.f32 %v2743, 0.5
    %v3484 = vmul.f32 %v2748, 0.5
    %v3485 = vmul.f32 %v2751, 0.5
    %v3486 = vmul.f32 %v2756, 0.5
    %v3487 = vmul.f32 %v2759, 0.5
    %v3488 = vmul.f32 %v2764, 0.5
    %v3489 = vmul.f32 %v2767, 0.5
    %v3490 = vmul.f32 %v2772, 0.5
    %v3491 = vmul.f32 %v2775, 0.5
    %v3492 = vmul.f32 %v2780, 0.5
    %v3493 = vmul.f32 %v2783, 0.5
    %v3494 = vmul.f32 %v2788, 0.5
    %v3495 = vmul.f32 %v2791, 0.5
    %v3496 = vmul.f32 %v2796, 0.5
    %v3497 = vmul.f32 %v2799, 0.5
    %v3498 = vmul.f32 %v2804, 0.5
    %v3499 = vmul.f32 %v2807, 0.5
    %v3500 = vmul.f32 %v2812, 0.5
    %v3501 = vmul.f32 %v2815, 0.5
    %v3502 = vmul.f32 %v2820, 0.5
    %v3503 = vmul.f32 %v2823, 0.5
    %v3504 = vmul.f32 %v2828, 0.5
    %v3505 = vmul.f32 %v2831, 0.5
    %v3506 = vmul.f32 %v2836, 0.5
    %v3507 = vmul.f32 %v2839, 0.5
    %v3508 = vmul.f32 %v2844, 0.5
    %v3509 = vmul.f32 %v2847, 0.5
    %v3510 = vmul.f32 %v2852, 0.5
    %v3511 = vmul.f32 %v2855, 0.5
    %v3512 = vmul.f32 %v2860, 0.5
    %v3513 = vmul.f32 %v2863, 0.5
    %v3514 = vmul.f32 %v2868, 0.5
    %v3515 = vmul.f32 %v2871, 0.5
    %v3516 = vmul.f32 %v2876, 0.5
    %v3517 = vmul.f32 %v2879, 0.5
    %v3518 = vmul.f32 %v2884, 0.5
    %v3519 = vmul.f32 %v2887, 0.5
    %v3520 = vmul.f32 %v2892, 0.5
    %v3521 = vmul.f32 %v2895, 0.5
    %v3522 = vmul.f32 %v2900, 0.5
    %v3523 = vmul.f32 %v2903, 0.5
    %v3524 = vmul.f32 %v2908, 0.5
    %v3525 = vmul.f32 %v2911, 0.5
    %v3526 = vmul.f32 %v2916, 0.5
    %v3527 = vmul.f32 %v2919, 0.5
    %v3528 = vmul.f32 %v2924, 0.5
    %v3529 = vmul.f32 %v2927, 0.5
    %v3530 = vmul.f32 %v2932, 0.5
    %v3531 = vmul.f32 %v2935, 0.5
    %v3532 = vmul.f32 %v2940, 0.5
    %v3533 = vmul.f32 %v2943, 0.5
    %v3534 = vmul.f32 %v2948, 0.5
    %v3535 = vmul.f32 %v2951, 0.5
    %v3536 = vmul.f32 %v2956, 0.5
    %v3537 = vmul.f32 %v2959, 0.5
    %v3538 = vmul.f32 %v2580, 0.70710677
    %v3539 = vmul.f32 %v2583, 0.70710677
    %v3540 = vmul.f32 %v2588, 0.70710677
    %v3541 = vmul.f32 %v2591, 0.70710677
    %v3542 = vmul.f32 %v2596, 0.70710677
    %v3543 = vmul.f32 %v2599, 0.70710677
    %v3544 = vmul.f32 %v2604, 0.70710677
    %v3545 = vmul.f32 %v2607, 0.70710677
    %v3546 = vmul.f32 %v2612, 0.70710677
    %v3547 = vmul.f32 %v2615, 0.70710677
    %v3548 = vmul.f32 %v2620, 0.70710677
    %v3549 = vmul.f32 %v2623, 0.70710677
    %v3550 = vmul.f32 %v2628, 0.70710677
    %v3551 = vmul.f32 %v2631, 0.70710677
    %v3552 = vmul.f32 %v2636, 0.70710677
    %v3553 = vmul.f32 %v2639, 0.70710677
    %v3554 = vmul.f32 %v2644, 0.70710677
    %v3555 = vmul.f32 %v2647, 0.70710677
    %v3556 = vmul.f32 %v2652, 0.70710677
    %v3557 = vmul.f32 %v2655, 0.70710677
    %v3558 = vmul.f32 %v2660, 0.70710677
    %v3559 = vmul.f32 %v2663, 0.70710677
    %v3560 = vmul.f32 %v2668, 0.70710677
    %v3561 = vmul.f32 %v2671, 0.70710677
    %v3562 = vmul.f32 %v2676, 0.70710677
    %v3563 = vmul.f32 %v2679, 0.70710677
    %v3564 = vmul.f32 %v2684, 0.70710677
    %v3565 = vmul.f32 %v2687, 0.70710677
    %v3566 = vmul.f32 %v2692, 0.70710677
    %v3567 = vmul.f32 %v2695, 0.70710677
    %v3568 = vmul.f32 %v2700, 0.70710677
    %v3569 = vmul.f32 %v2703, 0.70710677
    %v3570 = vmul.f32 %v2708, 0.70710677
    %v3571 = vmul.f32 %v2711, 0.70710677
    %v3572 = vmul.f32 %v2716, 0.70710677
    %v3573 = vmul.f32 %v2719, 0.70710677
    %v3574 = vmul.f32 %v2724, 0.70710677
    %v3575 = vmul.f32 %v2727, 0.70710677
    %v3576 = vmul.f32 %v2732, 0.70710677
    %v3577 = vmul.f32 %v2735, 0.70710677
    %v3578 = vmul.f32 %v2740, 0.70710677
    %v3579 = vmul.f32 %v2743, 0.70710677
    %v3580 = vmul.f32 %v2748, 0.70710677
    %v3581 = vmul.f32 %v2751, 0.70710677
    %v3582 = vmul.f32 %v2756, 0.70710677
    %v3583 = vmul.f32 %v2759, 0.70710677
    %v3584 = vmul.f32 %v2764, 0.70710677
    %v3585 = vmul.f32 %v2767, 0.70710677
    %v3586 = vmul.f32 %v2772, 0.70710677
    %v3587 = vmul.f32 %v2775, 0.70710677
    %v3588 = vmul.f32 %v2780, 0.70710677
    %v3589 = vmul.f32 %v2783, 0.70710677
    %v3590 = vmul.f32 %v2788, 0.70710677
    %v3591 = vmul.f32 %v2791, 0.70710677
    %v3592 = vmul.f32 %v2796, 0.70710677
    %v3593 = vmul.f32 %v2799, 0.70710677
    %v3594 = vmul.f32 %v2804, 0.70710677
    %v3595 = vmul.f32 %v2807, 0.70710677
    %v3596 = vmul.f32 %v2812, 0.70710677
    %v3597 = vmul.f32 %v2815, 0.70710677
    %v3598 = vmul.f32 %v2820, 0.70710677
    %v3599 = vmul.f32 %v2823, 0.70710677
    %v3600 = vmul.f32 %v2828, 0.70710677
    %v3601 = vmul.f32 %v2831, 0.70710677
    %v3602 = vmul.f32 %v2836, 0.70710677
    %v3603 = vmul.f32 %v2839, 0.70710677
    %v3604 = vmul.f32 %v2844, 0.70710677
    %v3605 = vmul.f32 %v2847, 0.70710677
    %v3606 = vmul.f32 %v2852, 0.70710677
    %v3607 = vmul.f32 %v2855, 0.70710677
    %v3608 = vmul.f32 %v2860, 0.70710677
    %v3609 = vmul.f32 %v2863, 0.70710677
    %v3610 = vmul.f32 %v2868, 0.70710677
    %v3611 = vmul.f32 %v2871, 0.70710677
    %v3612 = vmul.f32 %v2876, 0.70710677
    %v3613 = vmul.f32 %v2879, 0.70710677
    %v3614 = vmul.f32 %v2884, 0.70710677
    %v3615 = vmul.f32 %v2887, 0.70710677
    %v3616 = vmul.f32 %v2892, 0.70710677
    %v3617 = vmul.f32 %v2895, 0.70710677
    %v3618 = vmul.f32 %v2900, 0.70710677
    %v3619 = vmul.f32 %v2903, 0.70710677
    %v3620 = vmul.f32 %v2908, 0.70710677
    %v3621 = vmul.f32 %v2911, 0.70710677
    %v3622 = vmul.f32 %v2916, 0.70710677
    %v3623 = vmul.f32 %v2919, 0.70710677
    %v3624 = vmul.f32 %v2924, 0.70710677
    %v3625 = vmul.f32 %v2927, 0.70710677
    %v3626 = vmul.f32 %v2932, 0.70710677
    %v3627 = vmul.f32 %v2935, 0.70710677
    %v3628 = vmul.f32 %v2940, 0.70710677
    %v3629 = vmul.f32 %v2943, 0.70710677
    %v3630 = vmul.f32 %v2948, 0.70710677
    %v3631 = vmul.f32 %v2951, 0.70710677
    %v3632 = vmul.f32 %v2956, 0.70710677
    %v3633 = vmul.f32 %v2959, 0.70710677
    %v3634 = verf.f32.pop %v3538
    %v3635 = verf.f32.pop %v3539
    %v3636 = verf.f32.pop %v3540
    %v3637 = verf.f32.pop %v3541
    %v3638 = verf.f32.pop %v3542
    %v3639 = verf.f32.pop %v3543
    %v3640 = verf.f32.pop %v3544
    %v3641 = verf.f32.pop %v3545
    %v3642 = verf.f32.pop %v3546
    %v3643 = verf.f32.pop %v3547
    %v3644 = verf.f32.pop %v3548
    %v3645 = verf.f32.pop %v3549
    %v3646 = verf.f32.pop %v3550
    %v3647 = verf.f32.pop %v3551
    %v3648 = verf.f32.pop %v3552
    %v3649 = verf.f32.pop %v3553
    %v3650 = verf.f32.pop %v3554
    %v3651 = verf.f32.pop %v3555
    %v3652 = verf.f32.pop %v3556
    %v3653 = verf.f32.pop %v3557
    %v3654 = verf.f32.pop %v3558
    %v3655 = verf.f32.pop %v3559
    %v3656 = verf.f32.pop %v3560
    %v3657 = verf.f32.pop %v3561
    %v3658 = verf.f32.pop %v3562
    %v3659 = verf.f32.pop %v3563
    %v3660 = verf.f32.pop %v3564
    %v3661 = verf.f32.pop %v3565
    %v3662 = verf.f32.pop %v3566
    %v3663 = verf.f32.pop %v3567
    %v3664 = verf.f32.pop %v3568
    %v3665 = verf.f32.pop %v3569
    %v3666 = verf.f32.pop %v3570
    %v3667 = verf.f32.pop %v3571
    %v3668 = verf.f32.pop %v3572
    %v3669 = verf.f32.pop %v3573
    %v3670 = verf.f32.pop %v3574
    %v3671 = verf.f32.pop %v3575
    %v3672 = verf.f32.pop %v3576
    %v3673 = verf.f32.pop %v3577
    %v3674 = verf.f32.pop %v3578
    %v3675 = verf.f32.pop %v3579
    %v3676 = verf.f32.pop %v3580
    %v3677 = verf.f32.pop %v3581
    %v3678 = verf.f32.pop %v3582
    %v3679 = verf.f32.pop %v3583
    %v3680 = verf.f32.pop %v3584
    %v3681 = verf.f32.pop %v3585
    %v3682 = verf.f32.pop %v3586
    %v3683 = verf.f32.pop %v3587
    %v3684 = verf.f32.pop %v3588
    %v3685 = verf.f32.pop %v3589
    %v3686 = verf.f32.pop %v3590
    %v3687 = verf.f32.pop %v3591
    %v3688 = verf.f32.pop %v3592
    %v3689 = verf.f32.pop %v3593
    %v3690 = verf.f32.pop %v3594
    %v3691 = verf.f32.pop %v3595
    %v3692 = verf.f32.pop %v3596
    %v3693 = verf.f32.pop %v3597
    %v3694 = verf.f32.pop %v3598
    %v3695 = verf.f32.pop %v3599
    %v3696 = verf.f32.pop %v3600
    %v3697 = verf.f32.pop %v3601
    %v3698 = verf.f32.pop %v3602
    %v3699 = verf.f32.pop %v3603
    %v3700 = verf.f32.pop %v3604
    %v3701 = verf.f32.pop %v3605
    %v3702 = verf.f32.pop %v3606
    %v3703 = verf.f32.pop %v3607
    %v3704 = verf.f32.pop %v3608
    %v3705 = verf.f32.pop %v3609
    %v3706 = verf.f32.pop %v3610
    %v3707 = verf.f32.pop %v3611
    %v3708 = verf.f32.pop %v3612
    %v3709 = verf.f32.pop %v3613
    %v3710 = verf.f32.pop %v3614
    %v3711 = verf.f32.pop %v3615
    %v3712 = verf.f32.pop %v3616
    %v3713 = verf.f32.pop %v3617
    %v3714 = verf.f32.pop %v3618
    %v3715 = verf.f32.pop %v3619
    %v3716 = verf.f32.pop %v3620
    %v3717 = verf.f32.pop %v3621
    %v3718 = verf.f32.pop %v3622
    %v3719 = verf.f32.pop %v3623
    %v3720 = verf.f32.pop %v3624
    %v3721 = verf.f32.pop %v3625
    %v3722 = verf.f32.pop %v3626
    %v3723 = verf.f32.pop %v3627
    %v3724 = verf.f32.pop %v3628
    %v3725 = verf.f32.pop %v3629
    %v3726 = verf.f32.pop %v3630
    %v3727 = verf.f32.pop %v3631
    %v3728 = verf.f32.pop %v3632
    %v3729 = verf.f32.pop %v3633
    %v3730 = vadd.f32 %v3634, 1.0
    %v3731 = vadd.f32 %v3635, 1.0
    %v3732 = vadd.f32 %v3636, 1.0
    %v3733 = vadd.f32 %v3637, 1.0
    %v3734 = vadd.f32 %v3638, 1.0
    %v3735 = vadd.f32 %v3639, 1.0
    %v3736 = vadd.f32 %v3640, 1.0
    %v3737 = vadd.f32 %v3641, 1.0
    %v3738 = vadd.f32 %v3642, 1.0
    %v3739 = vadd.f32 %v3643, 1.0
    %v3740 = vadd.f32 %v3644, 1.0
    %v3741 = vadd.f32 %v3645, 1.0
    %v3742 = vadd.f32 %v3646, 1.0
    %v3743 = vadd.f32 %v3647, 1.0
    %v3744 = vadd.f32 %v3648, 1.0
    %v3745 = vadd.f32 %v3649, 1.0
    %v3746 = vadd.f32 %v3650, 1.0
    %v3747 = vadd.f32 %v3651, 1.0
    %v3748 = vadd.f32 %v3652, 1.0
    %v3749 = vadd.f32 %v3653, 1.0
    %v3750 = vadd.f32 %v3654, 1.0
    %v3751 = vadd.f32 %v3655, 1.0
    %v3752 = vadd.f32 %v3656, 1.0
    %v3753 = vadd.f32 %v3657, 1.0
    %v3754 = vadd.f32 %v3658, 1.0
    %v3755 = vadd.f32 %v3659, 1.0
    %v3756 = vadd.f32 %v3660, 1.0
    %v3757 = vadd.f32 %v3661, 1.0
    %v3758 = vadd.f32 %v3662, 1.0
    %v3759 = vadd.f32 %v3663, 1.0
    %v3760 = vadd.f32 %v3664, 1.0
    %v3761 = vadd.f32 %v3665, 1.0
    %v3762 = vadd.f32 %v3666, 1.0
    %v3763 = vadd.f32 %v3667, 1.0
    %v3764 = vadd.f32 %v3668, 1.0
    %v3765 = vadd.f32 %v3669, 1.0
    %v3766 = vadd.f32 %v3670, 1.0
    %v3767 = vadd.f32 %v3671, 1.0
    %v3768 = vadd.f32 %v3672, 1.0
    %v3769 = vadd.f32 %v3673, 1.0
    %v3770 = vadd.f32 %v3674, 1.0
    %v3771 = vadd.f32 %v3675, 1.0
    %v3772 = vadd.f32 %v3676, 1.0
    %v3773 = vadd.f32 %v3677, 1.0
    %v3774 = vadd.f32 %v3678, 1.0
    %v3775 = vadd.f32 %v3679, 1.0
    %v3776 = vadd.f32 %v3680, 1.0
    %v3777 = vadd.f32 %v3681, 1.0
    %v3778 = vadd.f32 %v3682, 1.0
    %v3779 = vadd.f32 %v3683, 1.0
    %v3780 = vadd.f32 %v3684, 1.0
    %v3781 = vadd.f32 %v3685, 1.0
    %v3782 = vadd.f32 %v3686, 1.0
    %v3783 = vadd.f32 %v3687, 1.0
    %v3784 = vadd.f32 %v3688, 1.0
    %v3785 = vadd.f32 %v3689, 1.0
    %v3786 = vadd.f32 %v3690, 1.0
    %v3787 = vadd.f32 %v3691, 1.0
    %v3788 = vadd.f32 %v3692, 1.0
    %v3789 = vadd.f32 %v3693, 1.0
    %v3790 = vadd.f32 %v3694, 1.0
    %v3791 = vadd.f32 %v3695, 1.0
    %v3792 = vadd.f32 %v3696, 1.0
    %v3793 = vadd.f32 %v3697, 1.0
    %v3794 = vadd.f32 %v3698, 1.0
    %v3795 = vadd.f32 %v3699, 1.0
    %v3796 = vadd.f32 %v3700, 1.0
    %v3797 = vadd.f32 %v3701, 1.0
    %v3798 = vadd.f32 %v3702, 1.0
    %v3799 = vadd.f32 %v3703, 1.0
    %v3800 = vadd.f32 %v3704, 1.0
    %v3801 = vadd.f32 %v3705, 1.0
    %v3802 = vadd.f32 %v3706, 1.0
    %v3803 = vadd.f32 %v3707, 1.0
    %v3804 = vadd.f32 %v3708, 1.0
    %v3805 = vadd.f32 %v3709, 1.0
    %v3806 = vadd.f32 %v3710, 1.0
    %v3807 = vadd.f32 %v3711, 1.0
    %v3808 = vadd.f32 %v3712, 1.0
    %v3809 = vadd.f32 %v3713, 1.0
    %v3810 = vadd.f32 %v3714, 1.0
    %v3811 = vadd.f32 %v3715, 1.0
    %v3812 = vadd.f32 %v3716, 1.0
    %v3813 = vadd.f32 %v3717, 1.0
    %v3814 = vadd.f32 %v3718, 1.0
    %v3815 = vadd.f32 %v3719, 1.0
    %v3816 = vadd.f32 %v3720, 1.0
    %v3817 = vadd.f32 %v3721, 1.0
    %v3818 = vadd.f32 %v3722, 1.0
    %v3819 = vadd.f32 %v3723, 1.0
    %v3820 = vadd.f32 %v3724, 1.0
    %v3821 = vadd.f32 %v3725, 1.0
    %v3822 = vadd.f32 %v3726, 1.0
    %v3823 = vadd.f32 %v3727, 1.0
    %v3824 = vadd.f32 %v3728, 1.0
    %v3825 = vadd.f32 %v3729, 1.0
    %v3826 = vmul.f32 %v3442, %v3730
    %v3827 = vmul.f32 %v3443, %v3731
    %v3828 = vmul.f32 %v3444, %v3732
    %v3829 = vmul.f32 %v3445, %v3733
    %v3830 = vmul.f32 %v3446, %v3734
    %v3831 = vmul.f32 %v3447, %v3735
    %v3832 = vmul.f32 %v3448, %v3736
    %v3833 = vmul.f32 %v3449, %v3737
    %v3834 = vmul.f32 %v3450, %v3738
    %v3835 = vmul.f32 %v3451, %v3739
    %v3836 = vmul.f32 %v3452, %v3740
    %v3837 = vmul.f32 %v3453, %v3741
    %v3838 = vmul.f32 %v3454, %v3742
    %v3839 = vmul.f32 %v3455, %v3743
    %v3840 = vmul.f32 %v3456, %v3744
    %v3841 = vmul.f32 %v3457, %v3745
    %v3842 = vmul.f32 %v3458, %v3746
    %v3843 = vmul.f32 %v3459, %v3747
    %v3844 = vmul.f32 %v3460, %v3748
    %v3845 = vmul.f32 %v3461, %v3749
    %v3846 = vmul.f32 %v3462, %v3750
    %v3847 = vmul.f32 %v3463, %v3751
    %v3848 = vmul.f32 %v3464, %v3752
    %v3849 = vmul.f32 %v3465, %v3753
    %v3850 = vmul.f32 %v3466, %v3754
    %v3851 = vmul.f32 %v3467, %v3755
    %v3852 = vmul.f32 %v3468, %v3756
    %v3853 = vmul.f32 %v3469, %v3757
    %v3854 = vmul.f32 %v3470, %v3758
    %v3855 = vmul.f32 %v3471, %v3759
    %v3856 = vmul.f32 %v3472, %v3760
    %v3857 = vmul.f32 %v3473, %v3761
    %v3858 = vmul.f32 %v3474, %v3762
    %v3859 = vmul.f32 %v3475, %v3763
    %v3860 = vmul.f32 %v3476, %v3764
    %v3861 = vmul.f32 %v3477, %v3765
    %v3862 = vmul.f32 %v3478, %v3766
    %v3863 = vmul.f32 %v3479, %v3767
    %v3864 = vmul.f32 %v3480, %v3768
    %v3865 = vmul.f32 %v3481, %v3769
    %v3866 = vmul.f32 %v3482, %v3770
    %v3867 = vmul.f32 %v3483, %v3771
    %v3868 = vmul.f32 %v3484, %v3772
    %v3869 = vmul.f32 %v3485, %v3773
    %v3870 = vmul.f32 %v3486, %v3774
    %v3871 = vmul.f32 %v3487, %v3775
    %v3872 = vmul.f32 %v3488, %v3776
    %v3873 = vmul.f32 %v3489, %v3777
    %v3874 = vmul.f32 %v3490, %v3778
    %v3875 = vmul.f32 %v3491, %v3779
    %v3876 = vmul.f32 %v3492, %v3780
    %v3877 = vmul.f32 %v3493, %v3781
    %v3878 = vmul.f32 %v3494, %v3782
    %v3879 = vmul.f32 %v3495, %v3783
    %v3880 = vmul.f32 %v3496, %v3784
    %v3881 = vmul.f32 %v3497, %v3785
    %v3882 = vmul.f32 %v3498, %v3786
    %v3883 = vmul.f32 %v3499, %v3787
    %v3884 = vmul.f32 %v3500, %v3788
    %v3885 = vmul.f32 %v3501, %v3789
    %v3886 = vmul.f32 %v3502, %v3790
    %v3887 = vmul.f32 %v3503, %v3791
    %v3888 = vmul.f32 %v3504, %v3792
    %v3889 = vmul.f32 %v3505, %v3793
    %v3890 = vmul.f32 %v3506, %v3794
    %v3891 = vmul.f32 %v3507, %v3795
    %v3892 = vmul.f32 %v3508, %v3796
    %v3893 = vmul.f32 %v3509, %v3797
    %v3894 = vmul.f32 %v3510, %v3798
    %v3895 = vmul.f32 %v3511, %v3799
    %v3896 = vmul.f32 %v3512, %v3800
    %v3897 = vmul.f32 %v3513, %v3801
    %v3898 = vmul.f32 %v3514, %v3802
    %v3899 = vmul.f32 %v3515, %v3803
    %v3900 = vmul.f32 %v3516, %v3804
    %v3901 = vmul.f32 %v3517, %v3805
    %v3902 = vmul.f32 %v3518, %v3806
    %v3903 = vmul.f32 %v3519, %v3807
    %v3904 = vmul.f32 %v3520, %v3808
    %v3905 = vmul.f32 %v3521, %v3809
    %v3906 = vmul.f32 %v3522, %v3810
    %v3907 = vmul.f32 %v3523, %v3811
    %v3908 = vmul.f32 %v3524, %v3812
    %v3909 = vmul.f32 %v3525, %v3813
    %v3910 = vmul.f32 %v3526, %v3814
    %v3911 = vmul.f32 %v3527, %v3815
    %v3912 = vmul.f32 %v3528, %v3816
    %v3913 = vmul.f32 %v3529, %v3817
    %v3914 = vmul.f32 %v3530, %v3818
    %v3915 = vmul.f32 %v3531, %v3819
    %v3916 = vmul.f32 %v3532, %v3820
    %v3917 = vmul.f32 %v3533, %v3821
    %v3918 = vmul.f32 %v3534, %v3822
    %v3919 = vmul.f32 %v3535, %v3823
    %v3920 = vmul.f32 %v3536, %v3824
    %v3921 = vmul.f32 %v3537, %v3825
    %v3922 = vld [vmem:[%s5] sm:$0x1]
    %v3923 = vld [vmem:[%s6] sm:$0x1]
    %v3924 = vsel %vm162, %v3826, 0.0
    %3925 = vadd.xlane.f32.xlu0 %v3924
    %v3926 = vpop.xlane.xlu0 %3925
    %v3927 = vsel %vm162, %v3827, 0.0
    %3928 = vadd.xlane.f32.xlu0 %v3927
    %v3929 = vpop.xlane.xlu0 %3928
    %v3930 = vsel %vm162, %v3828, 0.0
    %3931 = vadd.xlane.f32.xlu0 %v3930
    %v3932 = vpop.xlane.xlu0 %3931
    %v3933 = vsel %vm162, %v3829, 0.0
    %3934 = vadd.xlane.f32.xlu0 %v3933
    %v3935 = vpop.xlane.xlu0 %3934
    %v3936 = vsel %vm162, %v3830, 0.0
    %3937 = vadd.xlane.f32.xlu0 %v3936
    %v3938 = vpop.xlane.xlu0 %3937
    %v3939 = vsel %vm162, %v3831, 0.0
    %3940 = vadd.xlane.f32.xlu0 %v3939
    %v3941 = vpop.xlane.xlu0 %3940
    %v3942 = vsel %vm162, %v3832, 0.0
    %3943 = vadd.xlane.f32.xlu0 %v3942
    %v3944 = vpop.xlane.xlu0 %3943
    %v3945 = vsel %vm162, %v3833, 0.0
    %3946 = vadd.xlane.f32.xlu0 %v3945
    %v3947 = vpop.xlane.xlu0 %3946
    %v3948 = vsel %vm162, %v3834, 0.0
    %3949 = vadd.xlane.f32.xlu0 %v3948
    %v3950 = vpop.xlane.xlu0 %3949
    %v3951 = vsel %vm162, %v3835, 0.0
    %3952 = vadd.xlane.f32.xlu0 %v3951
    %v3953 = vpop.xlane.xlu0 %3952
    %v3954 = vsel %vm162, %v3836, 0.0
    %3955 = vadd.xlane.f32.xlu0 %v3954
    %v3956 = vpop.xlane.xlu0 %3955
    %v3957 = vsel %vm162, %v3837, 0.0
    %3958 = vadd.xlane.f32.xlu0 %v3957
    %v3959 = vpop.xlane.xlu0 %3958
    %v3960 = vsel %vm162, %v3838, 0.0
    %3961 = vadd.xlane.f32.xlu0 %v3960
    %v3962 = vpop.xlane.xlu0 %3961
    %v3963 = vsel %vm162, %v3839, 0.0
    %3964 = vadd.xlane.f32.xlu0 %v3963
    %v3965 = vpop.xlane.xlu0 %3964
    %v3966 = vsel %vm162, %v3840, 0.0
    %3967 = vadd.xlane.f32.xlu0 %v3966
    %v3968 = vpop.xlane.xlu0 %3967
    %v3969 = vsel %vm162, %v3841, 0.0
    %3970 = vadd.xlane.f32.xlu0 %v3969
    %v3971 = vpop.xlane.xlu0 %3970
    %v3972 = vsel %vm162, %v3842, 0.0
    %3973 = vadd.xlane.f32.xlu0 %v3972
    %v3974 = vpop.xlane.xlu0 %3973
    %v3975 = vsel %vm162, %v3843, 0.0
    %3976 = vadd.xlane.f32.xlu0 %v3975
    %v3977 = vpop.xlane.xlu0 %3976
    %v3978 = vsel %vm162, %v3844, 0.0
    %3979 = vadd.xlane.f32.xlu0 %v3978
    %v3980 = vpop.xlane.xlu0 %3979
    %v3981 = vsel %vm162, %v3845, 0.0
    %3982 = vadd.xlane.f32.xlu0 %v3981
    %v3983 = vpop.xlane.xlu0 %3982
    %v3984 = vsel %vm162, %v3846, 0.0
    %3985 = vadd.xlane.f32.xlu0 %v3984
    %v3986 = vpop.xlane.xlu0 %3985
    %v3987 = vsel %vm162, %v3847, 0.0
    %3988 = vadd.xlane.f32.xlu0 %v3987
    %v3989 = vpop.xlane.xlu0 %3988
    %v3990 = vsel %vm162, %v3848, 0.0
    %3991 = vadd.xlane.f32.xlu0 %v3990
    %v3992 = vpop.xlane.xlu0 %3991
    %v3993 = vsel %vm162, %v3849, 0.0
    %3994 = vadd.xlane.f32.xlu0 %v3993
    %v3995 = vpop.xlane.xlu0 %3994
    %v3996 = vsel %vm162, %v3850, 0.0
    %3997 = vadd.xlane.f32.xlu0 %v3996
    %v3998 = vpop.xlane.xlu0 %3997
    %v3999 = vsel %vm162, %v3851, 0.0
    %4000 = vadd.xlane.f32.xlu0 %v3999
    %v4001 = vpop.xlane.xlu0 %4000
    %v4002 = vsel %vm162, %v3852, 0.0
    %4003 = vadd.xlane.f32.xlu0 %v4002
    %v4004 = vpop.xlane.xlu0 %4003
    %v4005 = vsel %vm162, %v3853, 0.0
    %4006 = vadd.xlane.f32.xlu0 %v4005
    %v4007 = vpop.xlane.xlu0 %4006
    %v4008 = vsel %vm162, %v3854, 0.0
    %4009 = vadd.xlane.f32.xlu0 %v4008
    %v4010 = vpop.xlane.xlu0 %4009
    %v4011 = vsel %vm162, %v3855, 0.0
    %4012 = vadd.xlane.f32.xlu0 %v4011
    %v4013 = vpop.xlane.xlu0 %4012
    %v4014 = vsel %vm162, %v3856, 0.0
    %4015 = vadd.xlane.f32.xlu0 %v4014
    %v4016 = vpop.xlane.xlu0 %4015
    %v4017 = vsel %vm162, %v3857, 0.0
    %4018 = vadd.xlane.f32.xlu0 %v4017
    %v4019 = vpop.xlane.xlu0 %4018
    %v4020 = vsel %vm162, %v3858, 0.0
    %4021 = vadd.xlane.f32.xlu0 %v4020
    %v4022 = vpop.xlane.xlu0 %4021
    %v4023 = vsel %vm162, %v3859, 0.0
    %4024 = vadd.xlane.f32.xlu0 %v4023
    %v4025 = vpop.xlane.xlu0 %4024
    %v4026 = vsel %vm162, %v3860, 0.0
    %4027 = vadd.xlane.f32.xlu0 %v4026
    %v4028 = vpop.xlane.xlu0 %4027
    %v4029 = vsel %vm162, %v3861, 0.0
    %4030 = vadd.xlane.f32.xlu0 %v4029
    %v4031 = vpop.xlane.xlu0 %4030
    %v4032 = vsel %vm162, %v3862, 0.0
    %4033 = vadd.xlane.f32.xlu0 %v4032
    %v4034 = vpop.xlane.xlu0 %4033
    %v4035 = vsel %vm162, %v3863, 0.0
    %4036 = vadd.xlane.f32.xlu0 %v4035
    %v4037 = vpop.xlane.xlu0 %4036
    %v4038 = vsel %vm162, %v3864, 0.0
    %4039 = vadd.xlane.f32.xlu0 %v4038
    %v4040 = vpop.xlane.xlu0 %4039
    %v4041 = vsel %vm162, %v3865, 0.0
    %4042 = vadd.xlane.f32.xlu0 %v4041
    %v4043 = vpop.xlane.xlu0 %4042
    %v4044 = vsel %vm162, %v3866, 0.0
    %4045 = vadd.xlane.f32.xlu0 %v4044
    %v4046 = vpop.xlane.xlu0 %4045
    %v4047 = vsel %vm162, %v3867, 0.0
    %4048 = vadd.xlane.f32.xlu0 %v4047
    %v4049 = vpop.xlane.xlu0 %4048
    %v4050 = vsel %vm162, %v3868, 0.0
    %4051 = vadd.xlane.f32.xlu0 %v4050
    %v4052 = vpop.xlane.xlu0 %4051
    %v4053 = vsel %vm162, %v3869, 0.0
    %4054 = vadd.xlane.f32.xlu0 %v4053
    %v4055 = vpop.xlane.xlu0 %4054
    %v4056 = vsel %vm162, %v3870, 0.0
    %4057 = vadd.xlane.f32.xlu0 %v4056
    %v4058 = vpop.xlane.xlu0 %4057
    %v4059 = vsel %vm162, %v3871, 0.0
    %4060 = vadd.xlane.f32.xlu0 %v4059
    %v4061 = vpop.xlane.xlu0 %4060
    %v4062 = vsel %vm162, %v3872, 0.0
    %4063 = vadd.xlane.f32.xlu0 %v4062
    %v4064 = vpop.xlane.xlu0 %4063
    %v4065 = vsel %vm162, %v3873, 0.0
    %4066 = vadd.xlane.f32.xlu0 %v4065
    %v4067 = vpop.xlane.xlu0 %4066
    %v4068 = vsel %vm162, %v3874, 0.0
    %4069 = vadd.xlane.f32.xlu0 %v4068
    %v4070 = vpop.xlane.xlu0 %4069
    %v4071 = vsel %vm162, %v3875, 0.0
    %4072 = vadd.xlane.f32.xlu0 %v4071
    %v4073 = vpop.xlane.xlu0 %4072
    %v4074 = vsel %vm162, %v3876, 0.0
    %4075 = vadd.xlane.f32.xlu0 %v4074
    %v4076 = vpop.xlane.xlu0 %4075
    %v4077 = vsel %vm162, %v3877, 0.0
    %4078 = vadd.xlane.f32.xlu0 %v4077
    %v4079 = vpop.xlane.xlu0 %4078
    %v4080 = vsel %vm162, %v3878, 0.0
    %4081 = vadd.xlane.f32.xlu0 %v4080
    %v4082 = vpop.xlane.xlu0 %4081
    %v4083 = vsel %vm162, %v3879, 0.0
    %4084 = vadd.xlane.f32.xlu0 %v4083
    %v4085 = vpop.xlane.xlu0 %4084
    %v4086 = vsel %vm162, %v3880, 0.0
    %4087 = vadd.xlane.f32.xlu0 %v4086
    %v4088 = vpop.xlane.xlu0 %4087
    %v4089 = vsel %vm162, %v3881, 0.0
    %4090 = vadd.xlane.f32.xlu0 %v4089
    %v4091 = vpop.xlane.xlu0 %4090
    %v4092 = vsel %vm162, %v3882, 0.0
    %4093 = vadd.xlane.f32.xlu0 %v4092
    %v4094 = vpop.xlane.xlu0 %4093
    %v4095 = vsel %vm162, %v3883, 0.0
    %4096 = vadd.xlane.f32.xlu0 %v4095
    %v4097 = vpop.xlane.xlu0 %4096
    %v4098 = vsel %vm162, %v3884, 0.0
    %4099 = vadd.xlane.f32.xlu0 %v4098
    %v4100 = vpop.xlane.xlu0 %4099
    %v4101 = vsel %vm162, %v3885, 0.0
    %4102 = vadd.xlane.f32.xlu0 %v4101
    %v4103 = vpop.xlane.xlu0 %4102
    %v4104 = vsel %vm162, %v3886, 0.0
    %4105 = vadd.xlane.f32.xlu0 %v4104
    %v4106 = vpop.xlane.xlu0 %4105
    %v4107 = vsel %vm162, %v3887, 0.0
    %4108 = vadd.xlane.f32.xlu0 %v4107
    %v4109 = vpop.xlane.xlu0 %4108
    %v4110 = vsel %vm162, %v3888, 0.0
    %4111 = vadd.xlane.f32.xlu0 %v4110
    %v4112 = vpop.xlane.xlu0 %4111
    %v4113 = vsel %vm162, %v3889, 0.0
    %4114 = vadd.xlane.f32.xlu0 %v4113
    %v4115 = vpop.xlane.xlu0 %4114
    %v4116 = vsel %vm162, %v3890, 0.0
    %4117 = vadd.xlane.f32.xlu0 %v4116
    %v4118 = vpop.xlane.xlu0 %4117
    %v4119 = vsel %vm162, %v3891, 0.0
    %4120 = vadd.xlane.f32.xlu0 %v4119
    %v4121 = vpop.xlane.xlu0 %4120
    %v4122 = vsel %vm162, %v3892, 0.0
    %4123 = vadd.xlane.f32.xlu0 %v4122
    %v4124 = vpop.xlane.xlu0 %4123
    %v4125 = vsel %vm162, %v3893, 0.0
    %4126 = vadd.xlane.f32.xlu0 %v4125
    %v4127 = vpop.xlane.xlu0 %4126
    %v4128 = vsel %vm162, %v3894, 0.0
    %4129 = vadd.xlane.f32.xlu0 %v4128
    %v4130 = vpop.xlane.xlu0 %4129
    %v4131 = vsel %vm162, %v3895, 0.0
    %4132 = vadd.xlane.f32.xlu0 %v4131
    %v4133 = vpop.xlane.xlu0 %4132
    %v4134 = vsel %vm162, %v3896, 0.0
    %4135 = vadd.xlane.f32.xlu0 %v4134
    %v4136 = vpop.xlane.xlu0 %4135
    %v4137 = vsel %vm162, %v3897, 0.0
    %4138 = vadd.xlane.f32.xlu0 %v4137
    %v4139 = vpop.xlane.xlu0 %4138
    %v4140 = vsel %vm162, %v3898, 0.0
    %4141 = vadd.xlane.f32.xlu0 %v4140
    %v4142 = vpop.xlane.xlu0 %4141
    %v4143 = vsel %vm162, %v3899, 0.0
    %4144 = vadd.xlane.f32.xlu0 %v4143
    %v4145 = vpop.xlane.xlu0 %4144
    %v4146 = vsel %vm162, %v3900, 0.0
    %4147 = vadd.xlane.f32.xlu0 %v4146
    %v4148 = vpop.xlane.xlu0 %4147
    %v4149 = vsel %vm162, %v3901, 0.0
    %4150 = vadd.xlane.f32.xlu0 %v4149
    %v4151 = vpop.xlane.xlu0 %4150
    %v4152 = vsel %vm162, %v3902, 0.0
    %4153 = vadd.xlane.f32.xlu0 %v4152
    %v4154 = vpop.xlane.xlu0 %4153
    %v4155 = vsel %vm162, %v3903, 0.0
    %4156 = vadd.xlane.f32.xlu0 %v4155
    %v4157 = vpop.xlane.xlu0 %4156
    %v4158 = vsel %vm162, %v3904, 0.0
    %4159 = vadd.xlane.f32.xlu0 %v4158
    %v4160 = vpop.xlane.xlu0 %4159
    %v4161 = vsel %vm162, %v3905, 0.0
    %4162 = vadd.xlane.f32.xlu0 %v4161
    %v4163 = vpop.xlane.xlu0 %4162
    %v4164 = vsel %vm162, %v3906, 0.0
    %4165 = vadd.xlane.f32.xlu0 %v4164
    %v4166 = vpop.xlane.xlu0 %4165
    %v4167 = vsel %vm162, %v3907, 0.0
    %4168 = vadd.xlane.f32.xlu0 %v4167
    %v4169 = vpop.xlane.xlu0 %4168
    %v4170 = vsel %vm162, %v3908, 0.0
    %4171 = vadd.xlane.f32.xlu0 %v4170
    %v4172 = vpop.xlane.xlu0 %4171
    %v4173 = vsel %vm162, %v3909, 0.0
    %4174 = vadd.xlane.f32.xlu0 %v4173
    %v4175 = vpop.xlane.xlu0 %4174
    %v4176 = vsel %vm162, %v3910, 0.0
    %4177 = vadd.xlane.f32.xlu0 %v4176
    %v4178 = vpop.xlane.xlu0 %4177
    %v4179 = vsel %vm162, %v3911, 0.0
    %4180 = vadd.xlane.f32.xlu0 %v4179
    %v4181 = vpop.xlane.xlu0 %4180
    %v4182 = vsel %vm162, %v3912, 0.0
    %4183 = vadd.xlane.f32.xlu0 %v4182
    %v4184 = vpop.xlane.xlu0 %4183
    %v4185 = vsel %vm162, %v3913, 0.0
    %4186 = vadd.xlane.f32.xlu0 %v4185
    %v4187 = vpop.xlane.xlu0 %4186
    %v4188 = vsel %vm162, %v3914, 0.0
    %4189 = vadd.xlane.f32.xlu0 %v4188
    %v4190 = vpop.xlane.xlu0 %4189
    %v4191 = vsel %vm162, %v3915, 0.0
    %4192 = vadd.xlane.f32.xlu0 %v4191
    %v4193 = vpop.xlane.xlu0 %4192
    %v4194 = vsel %vm162, %v3916, 0.0
    %4195 = vadd.xlane.f32.xlu0 %v4194
    %v4196 = vpop.xlane.xlu0 %4195
    %v4197 = vsel %vm162, %v3917, 0.0
    %4198 = vadd.xlane.f32.xlu0 %v4197
    %v4199 = vpop.xlane.xlu0 %4198
    %v4200 = vsel %vm162, %v3918, 0.0
    %4201 = vadd.xlane.f32.xlu0 %v4200
    %v4202 = vpop.xlane.xlu0 %4201
    %v4203 = vsel %vm162, %v3919, 0.0
    %4204 = vadd.xlane.f32.xlu0 %v4203
    %v4205 = vpop.xlane.xlu0 %4204
    %v4206 = vsel %vm162, %v3920, 0.0
    %4207 = vadd.xlane.f32.xlu0 %v4206
    %v4208 = vpop.xlane.xlu0 %4207
    %v4209 = vsel %vm162, %v3921, 0.0
    %4210 = vadd.xlane.f32.xlu0 %v4209
    %v4211 = vpop.xlane.xlu0 %4210
    %v4212 = vmul.f32 %v3926, %v451
    %v4213 = vmul.f32 %v3929, %v451
    %v4214 = vmul.f32 %v3932, %v451
    %v4215 = vmul.f32 %v3935, %v451
    %v4216 = vmul.f32 %v3938, %v451
    %v4217 = vmul.f32 %v3941, %v451
    %v4218 = vmul.f32 %v3944, %v451
    %v4219 = vmul.f32 %v3947, %v451
    %v4220 = vmul.f32 %v3950, %v451
    %v4221 = vmul.f32 %v3953, %v451
    %v4222 = vmul.f32 %v3956, %v451
    %v4223 = vmul.f32 %v3959, %v451
    %v4224 = vmul.f32 %v3962, %v451
    %v4225 = vmul.f32 %v3965, %v451
    %v4226 = vmul.f32 %v3968, %v451
    %v4227 = vmul.f32 %v3971, %v451
    %v4228 = vmul.f32 %v3974, %v451
    %v4229 = vmul.f32 %v3977, %v451
    %v4230 = vmul.f32 %v3980, %v451
    %v4231 = vmul.f32 %v3983, %v451
    %v4232 = vmul.f32 %v3986, %v451
    %v4233 = vmul.f32 %v3989, %v451
    %v4234 = vmul.f32 %v3992, %v451
    %v4235 = vmul.f32 %v3995, %v451
    %v4236 = vmul.f32 %v3998, %v451
    %v4237 = vmul.f32 %v4001, %v451
    %v4238 = vmul.f32 %v4004, %v451
    %v4239 = vmul.f32 %v4007, %v451
    %v4240 = vmul.f32 %v4010, %v451
    %v4241 = vmul.f32 %v4013, %v451
    %v4242 = vmul.f32 %v4016, %v451
    %v4243 = vmul.f32 %v4019, %v451
    %v4244 = vmul.f32 %v4022, %v451
    %v4245 = vmul.f32 %v4025, %v451
    %v4246 = vmul.f32 %v4028, %v451
    %v4247 = vmul.f32 %v4031, %v451
    %v4248 = vmul.f32 %v4034, %v451
    %v4249 = vmul.f32 %v4037, %v451
    %v4250 = vmul.f32 %v4040, %v451
    %v4251 = vmul.f32 %v4043, %v451
    %v4252 = vmul.f32 %v4046, %v451
    %v4253 = vmul.f32 %v4049, %v451
    %v4254 = vmul.f32 %v4052, %v451
    %v4255 = vmul.f32 %v4055, %v451
    %v4256 = vmul.f32 %v4058, %v451
    %v4257 = vmul.f32 %v4061, %v451
    %v4258 = vmul.f32 %v4064, %v451
    %v4259 = vmul.f32 %v4067, %v451
    %v4260 = vmul.f32 %v4070, %v451
    %v4261 = vmul.f32 %v4073, %v451
    %v4262 = vmul.f32 %v4076, %v451
    %v4263 = vmul.f32 %v4079, %v451
    %v4264 = vmul.f32 %v4082, %v451
    %v4265 = vmul.f32 %v4085, %v451
    %v4266 = vmul.f32 %v4088, %v451
    %v4267 = vmul.f32 %v4091, %v451
    %v4268 = vmul.f32 %v4094, %v451
    %v4269 = vmul.f32 %v4097, %v451
    %v4270 = vmul.f32 %v4100, %v451
    %v4271 = vmul.f32 %v4103, %v451
    %v4272 = vmul.f32 %v4106, %v451
    %v4273 = vmul.f32 %v4109, %v451
    %v4274 = vmul.f32 %v4112, %v451
    %v4275 = vmul.f32 %v4115, %v451
    %v4276 = vmul.f32 %v4118, %v451
    %v4277 = vmul.f32 %v4121, %v451
    %v4278 = vmul.f32 %v4124, %v451
    %v4279 = vmul.f32 %v4127, %v451
    %v4280 = vmul.f32 %v4130, %v451
    %v4281 = vmul.f32 %v4133, %v451
    %v4282 = vmul.f32 %v4136, %v451
    %v4283 = vmul.f32 %v4139, %v451
    %v4284 = vmul.f32 %v4142, %v451
    %v4285 = vmul.f32 %v4145, %v451
    %v4286 = vmul.f32 %v4148, %v451
    %v4287 = vmul.f32 %v4151, %v451
    %v4288 = vmul.f32 %v4154, %v451
    %v4289 = vmul.f32 %v4157, %v451
    %v4290 = vmul.f32 %v4160, %v451
    %v4291 = vmul.f32 %v4163, %v451
    %v4292 = vmul.f32 %v4166, %v451
    %v4293 = vmul.f32 %v4169, %v451
    %v4294 = vmul.f32 %v4172, %v451
    %v4295 = vmul.f32 %v4175, %v451
    %v4296 = vmul.f32 %v4178, %v451
    %v4297 = vmul.f32 %v4181, %v451
    %v4298 = vmul.f32 %v4184, %v451
    %v4299 = vmul.f32 %v4187, %v451
    %v4300 = vmul.f32 %v4190, %v451
    %v4301 = vmul.f32 %v4193, %v451
    %v4302 = vmul.f32 %v4196, %v451
    %v4303 = vmul.f32 %v4199, %v451
    %v4304 = vmul.f32 %v4202, %v451
    %v4305 = vmul.f32 %v4205, %v451
    %v4306 = vmul.f32 %v4208, %v451
    %v4307 = vmul.f32 %v4211, %v451
    %v4308 = vmul.f32 %v3826, %v3826
    %v4309 = vmul.f32 %v3827, %v3827
    %v4310 = vmul.f32 %v3828, %v3828
    %v4311 = vmul.f32 %v3829, %v3829
    %v4312 = vmul.f32 %v3830, %v3830
    %v4313 = vmul.f32 %v3831, %v3831
    %v4314 = vmul.f32 %v3832, %v3832
    %v4315 = vmul.f32 %v3833, %v3833
    %v4316 = vmul.f32 %v3834, %v3834
    %v4317 = vmul.f32 %v3835, %v3835
    %v4318 = vmul.f32 %v3836, %v3836
    %v4319 = vmul.f32 %v3837, %v3837
    %v4320 = vmul.f32 %v3838, %v3838
    %v4321 = vmul.f32 %v3839, %v3839
    %v4322 = vmul.f32 %v3840, %v3840
    %v4323 = vmul.f32 %v3841, %v3841
    %v4324 = vmul.f32 %v3842, %v3842
    %v4325 = vmul.f32 %v3843, %v3843
    %v4326 = vmul.f32 %v3844, %v3844
    %v4327 = vmul.f32 %v3845, %v3845
    %v4328 = vmul.f32 %v3846, %v3846
    %v4329 = vmul.f32 %v3847, %v3847
    %v4330 = vmul.f32 %v3848, %v3848
    %v4331 = vmul.f32 %v3849, %v3849
    %v4332 = vmul.f32 %v3850, %v3850
    %v4333 = vmul.f32 %v3851, %v3851
    %v4334 = vmul.f32 %v3852, %v3852
    %v4335 = vmul.f32 %v3853, %v3853
    %v4336 = vmul.f32 %v3854, %v3854
    %v4337 = vmul.f32 %v3855, %v3855
    %v4338 = vmul.f32 %v3856, %v3856
    %v4339 = vmul.f32 %v3857, %v3857
    %v4340 = vmul.f32 %v3858, %v3858
    %v4341 = vmul.f32 %v3859, %v3859
    %v4342 = vmul.f32 %v3860, %v3860
    %v4343 = vmul.f32 %v3861, %v3861
    %v4344 = vmul.f32 %v3862, %v3862
    %v4345 = vmul.f32 %v3863, %v3863
    %v4346 = vmul.f32 %v3864, %v3864
    %v4347 = vmul.f32 %v3865, %v3865
    %v4348 = vmul.f32 %v3866, %v3866
    %v4349 = vmul.f32 %v3867, %v3867
    %v4350 = vmul.f32 %v3868, %v3868
    %v4351 = vmul.f32 %v3869, %v3869
    %v4352 = vmul.f32 %v3870, %v3870
    %v4353 = vmul.f32 %v3871, %v3871
    %v4354 = vmul.f32 %v3872, %v3872
    %v4355 = vmul.f32 %v3873, %v3873
    %v4356 = vmul.f32 %v3874, %v3874
    %v4357 = vmul.f32 %v3875, %v3875
    %v4358 = vmul.f32 %v3876, %v3876
    %v4359 = vmul.f32 %v3877, %v3877
    %v4360 = vmul.f32 %v3878, %v3878
    %v4361 = vmul.f32 %v3879, %v3879
    %v4362 = vmul.f32 %v3880, %v3880
    %v4363 = vmul.f32 %v3881, %v3881
    %v4364 = vmul.f32 %v3882, %v3882
    %v4365 = vmul.f32 %v3883, %v3883
    %v4366 = vmul.f32 %v3884, %v3884
    %v4367 = vmul.f32 %v3885, %v3885
    %v4368 = vmul.f32 %v3886, %v3886
    %v4369 = vmul.f32 %v3887, %v3887
    %v4370 = vmul.f32 %v3888, %v3888
    %v4371 = vmul.f32 %v3889, %v3889
    %v4372 = vmul.f32 %v3890, %v3890
    %v4373 = vmul.f32 %v3891, %v3891
    %v4374 = vmul.f32 %v3892, %v3892
    %v4375 = vmul.f32 %v3893, %v3893
    %v4376 = vmul.f32 %v3894, %v3894
    %v4377 = vmul.f32 %v3895, %v3895
    %v4378 = vmul.f32 %v3896, %v3896
    %v4379 = vmul.f32 %v3897, %v3897
    %v4380 = vmul.f32 %v3898, %v3898
    %v4381 = vmul.f32 %v3899, %v3899
    %v4382 = vmul.f32 %v3900, %v3900
    %v4383 = vmul.f32 %v3901, %v3901
    %v4384 = vmul.f32 %v3902, %v3902
    %v4385 = vmul.f32 %v3903, %v3903
    %v4386 = vmul.f32 %v3904, %v3904
    %v4387 = vmul.f32 %v3905, %v3905
    %v4388 = vmul.f32 %v3906, %v3906
    %v4389 = vmul.f32 %v3907, %v3907
    %v4390 = vmul.f32 %v3908, %v3908
    %v4391 = vmul.f32 %v3909, %v3909
    %v4392 = vmul.f32 %v3910, %v3910
    %v4393 = vmul.f32 %v3911, %v3911
    %v4394 = vmul.f32 %v3912, %v3912
    %v4395 = vmul.f32 %v3913, %v3913
    %v4396 = vmul.f32 %v3914, %v3914
    %v4397 = vmul.f32 %v3915, %v3915
    %v4398 = vmul.f32 %v3916, %v3916
    %v4399 = vmul.f32 %v3917, %v3917
    %v4400 = vmul.f32 %v3918, %v3918
    %v4401 = vmul.f32 %v3919, %v3919
    %v4402 = vmul.f32 %v3920, %v3920
    %v4403 = vmul.f32 %v3921, %v3921
    %v4404 = vsel %vm162, %v4308, 0.0
    %4405 = vadd.xlane.f32.xlu0 %v4404
    %v4406 = vpop.xlane.xlu0 %4405
    %v4407 = vsel %vm162, %v4309, 0.0
    %4408 = vadd.xlane.f32.xlu0 %v4407
    %v4409 = vpop.xlane.xlu0 %4408
    %v4410 = vsel %vm162, %v4310, 0.0
    %4411 = vadd.xlane.f32.xlu0 %v4410
    %v4412 = vpop.xlane.xlu0 %4411
    %v4413 = vsel %vm162, %v4311, 0.0
    %4414 = vadd.xlane.f32.xlu0 %v4413
    %v4415 = vpop.xlane.xlu0 %4414
    %v4416 = vsel %vm162, %v4312, 0.0
    %4417 = vadd.xlane.f32.xlu0 %v4416
    %v4418 = vpop.xlane.xlu0 %4417
    %v4419 = vsel %vm162, %v4313, 0.0
    %4420 = vadd.xlane.f32.xlu0 %v4419
    %v4421 = vpop.xlane.xlu0 %4420
    %v4422 = vsel %vm162, %v4314, 0.0
    %4423 = vadd.xlane.f32.xlu0 %v4422
    %v4424 = vpop.xlane.xlu0 %4423
    %v4425 = vsel %vm162, %v4315, 0.0
    %4426 = vadd.xlane.f32.xlu0 %v4425
    %v4427 = vpop.xlane.xlu0 %4426
    %v4428 = vsel %vm162, %v4316, 0.0
    %4429 = vadd.xlane.f32.xlu0 %v4428
    %v4430 = vpop.xlane.xlu0 %4429
    %v4431 = vsel %vm162, %v4317, 0.0
    %4432 = vadd.xlane.f32.xlu0 %v4431
    %v4433 = vpop.xlane.xlu0 %4432
    %v4434 = vsel %vm162, %v4318, 0.0
    %4435 = vadd.xlane.f32.xlu0 %v4434
    %v4436 = vpop.xlane.xlu0 %4435
    %v4437 = vsel %vm162, %v4319, 0.0
    %4438 = vadd.xlane.f32.xlu0 %v4437
    %v4439 = vpop.xlane.xlu0 %4438
    %v4440 = vsel %vm162, %v4320, 0.0
    %4441 = vadd.xlane.f32.xlu0 %v4440
    %v4442 = vpop.xlane.xlu0 %4441
    %v4443 = vsel %vm162, %v4321, 0.0
    %4444 = vadd.xlane.f32.xlu0 %v4443
    %v4445 = vpop.xlane.xlu0 %4444
    %v4446 = vsel %vm162, %v4322, 0.0
    %4447 = vadd.xlane.f32.xlu0 %v4446
    %v4448 = vpop.xlane.xlu0 %4447
    %v4449 = vsel %vm162, %v4323, 0.0
    %4450 = vadd.xlane.f32.xlu0 %v4449
    %v4451 = vpop.xlane.xlu0 %4450
    %v4452 = vsel %vm162, %v4324, 0.0
    %4453 = vadd.xlane.f32.xlu0 %v4452
    %v4454 = vpop.xlane.xlu0 %4453
    %v4455 = vsel %vm162, %v4325, 0.0
    %4456 = vadd.xlane.f32.xlu0 %v4455
    %v4457 = vpop.xlane.xlu0 %4456
    %v4458 = vsel %vm162, %v4326, 0.0
    %4459 = vadd.xlane.f32.xlu0 %v4458
    %v4460 = vpop.xlane.xlu0 %4459
    %v4461 = vsel %vm162, %v4327, 0.0
    %4462 = vadd.xlane.f32.xlu0 %v4461
    %v4463 = vpop.xlane.xlu0 %4462
    %v4464 = vsel %vm162, %v4328, 0.0
    %4465 = vadd.xlane.f32.xlu0 %v4464
    %v4466 = vpop.xlane.xlu0 %4465
    %v4467 = vsel %vm162, %v4329, 0.0
    %4468 = vadd.xlane.f32.xlu0 %v4467
    %v4469 = vpop.xlane.xlu0 %4468
    %v4470 = vsel %vm162, %v4330, 0.0
    %4471 = vadd.xlane.f32.xlu0 %v4470
    %v4472 = vpop.xlane.xlu0 %4471
    %v4473 = vsel %vm162, %v4331, 0.0
    %4474 = vadd.xlane.f32.xlu0 %v4473
    %v4475 = vpop.xlane.xlu0 %4474
    %v4476 = vsel %vm162, %v4332, 0.0
    %4477 = vadd.xlane.f32.xlu0 %v4476
    %v4478 = vpop.xlane.xlu0 %4477
    %v4479 = vsel %vm162, %v4333, 0.0
    %4480 = vadd.xlane.f32.xlu0 %v4479
    %v4481 = vpop.xlane.xlu0 %4480
    %v4482 = vsel %vm162, %v4334, 0.0
    %4483 = vadd.xlane.f32.xlu0 %v4482
    %v4484 = vpop.xlane.xlu0 %4483
    %v4485 = vsel %vm162, %v4335, 0.0
    %4486 = vadd.xlane.f32.xlu0 %v4485
    %v4487 = vpop.xlane.xlu0 %4486
    %v4488 = vsel %vm162, %v4336, 0.0
    %4489 = vadd.xlane.f32.xlu0 %v4488
    %v4490 = vpop.xlane.xlu0 %4489
    %v4491 = vsel %vm162, %v4337, 0.0
    %4492 = vadd.xlane.f32.xlu0 %v4491
    %v4493 = vpop.xlane.xlu0 %4492
    %v4494 = vsel %vm162, %v4338, 0.0
    %4495 = vadd.xlane.f32.xlu0 %v4494
    %v4496 = vpop.xlane.xlu0 %4495
    %v4497 = vsel %vm162, %v4339, 0.0
    %4498 = vadd.xlane.f32.xlu0 %v4497
    %v4499 = vpop.xlane.xlu0 %4498
    %v4500 = vsel %vm162, %v4340, 0.0
    %4501 = vadd.xlane.f32.xlu0 %v4500
    %v4502 = vpop.xlane.xlu0 %4501
    %v4503 = vsel %vm162, %v4341, 0.0
    %4504 = vadd.xlane.f32.xlu0 %v4503
    %v4505 = vpop.xlane.xlu0 %4504
    %v4506 = vsel %vm162, %v4342, 0.0
    %4507 = vadd.xlane.f32.xlu0 %v4506
    %v4508 = vpop.xlane.xlu0 %4507
    %v4509 = vsel %vm162, %v4343, 0.0
    %4510 = vadd.xlane.f32.xlu0 %v4509
    %v4511 = vpop.xlane.xlu0 %4510
    %v4512 = vsel %vm162, %v4344, 0.0
    %4513 = vadd.xlane.f32.xlu0 %v4512
    %v4514 = vpop.xlane.xlu0 %4513
    %v4515 = vsel %vm162, %v4345, 0.0
    %4516 = vadd.xlane.f32.xlu0 %v4515
    %v4517 = vpop.xlane.xlu0 %4516
    %v4518 = vsel %vm162, %v4346, 0.0
    %4519 = vadd.xlane.f32.xlu0 %v4518
    %v4520 = vpop.xlane.xlu0 %4519
    %v4521 = vsel %vm162, %v4347, 0.0
    %4522 = vadd.xlane.f32.xlu0 %v4521
    %v4523 = vpop.xlane.xlu0 %4522
    %v4524 = vsel %vm162, %v4348, 0.0
    %4525 = vadd.xlane.f32.xlu0 %v4524
    %v4526 = vpop.xlane.xlu0 %4525
    %v4527 = vsel %vm162, %v4349, 0.0
    %4528 = vadd.xlane.f32.xlu0 %v4527
    %v4529 = vpop.xlane.xlu0 %4528
    %v4530 = vsel %vm162, %v4350, 0.0
    %4531 = vadd.xlane.f32.xlu0 %v4530
    %v4532 = vpop.xlane.xlu0 %4531
    %v4533 = vsel %vm162, %v4351, 0.0
    %4534 = vadd.xlane.f32.xlu0 %v4533
    %v4535 = vpop.xlane.xlu0 %4534
    %v4536 = vsel %vm162, %v4352, 0.0
    %4537 = vadd.xlane.f32.xlu0 %v4536
    %v4538 = vpop.xlane.xlu0 %4537
    %v4539 = vsel %vm162, %v4353, 0.0
    %4540 = vadd.xlane.f32.xlu0 %v4539
    %v4541 = vpop.xlane.xlu0 %4540
    %v4542 = vsel %vm162, %v4354, 0.0
    %4543 = vadd.xlane.f32.xlu0 %v4542
    %v4544 = vpop.xlane.xlu0 %4543
    %v4545 = vsel %vm162, %v4355, 0.0
    %4546 = vadd.xlane.f32.xlu0 %v4545
    %v4547 = vpop.xlane.xlu0 %4546
    %v4548 = vsel %vm162, %v4356, 0.0
    %4549 = vadd.xlane.f32.xlu0 %v4548
    %v4550 = vpop.xlane.xlu0 %4549
    %v4551 = vsel %vm162, %v4357, 0.0
    %4552 = vadd.xlane.f32.xlu0 %v4551
    %v4553 = vpop.xlane.xlu0 %4552
    %v4554 = vsel %vm162, %v4358, 0.0
    %4555 = vadd.xlane.f32.xlu0 %v4554
    %v4556 = vpop.xlane.xlu0 %4555
    %v4557 = vsel %vm162, %v4359, 0.0
    %4558 = vadd.xlane.f32.xlu0 %v4557
    %v4559 = vpop.xlane.xlu0 %4558
    %v4560 = vsel %vm162, %v4360, 0.0
    %4561 = vadd.xlane.f32.xlu0 %v4560
    %v4562 = vpop.xlane.xlu0 %4561
    %v4563 = vsel %vm162, %v4361, 0.0
    %4564 = vadd.xlane.f32.xlu0 %v4563
    %v4565 = vpop.xlane.xlu0 %4564
    %v4566 = vsel %vm162, %v4362, 0.0
    %4567 = vadd.xlane.f32.xlu0 %v4566
    %v4568 = vpop.xlane.xlu0 %4567
    %v4569 = vsel %vm162, %v4363, 0.0
    %4570 = vadd.xlane.f32.xlu0 %v4569
    %v4571 = vpop.xlane.xlu0 %4570
    %v4572 = vsel %vm162, %v4364, 0.0
    %4573 = vadd.xlane.f32.xlu0 %v4572
    %v4574 = vpop.xlane.xlu0 %4573
    %v4575 = vsel %vm162, %v4365, 0.0
    %4576 = vadd.xlane.f32.xlu0 %v4575
    %v4577 = vpop.xlane.xlu0 %4576
    %v4578 = vsel %vm162, %v4366, 0.0
    %4579 = vadd.xlane.f32.xlu0 %v4578
    %v4580 = vpop.xlane.xlu0 %4579
    %v4581 = vsel %vm162, %v4367, 0.0
    %4582 = vadd.xlane.f32.xlu0 %v4581
    %v4583 = vpop.xlane.xlu0 %4582
    %v4584 = vsel %vm162, %v4368, 0.0
    %4585 = vadd.xlane.f32.xlu0 %v4584
    %v4586 = vpop.xlane.xlu0 %4585
    %v4587 = vsel %vm162, %v4369, 0.0
    %4588 = vadd.xlane.f32.xlu0 %v4587
    %v4589 = vpop.xlane.xlu0 %4588
    %v4590 = vsel %vm162, %v4370, 0.0
    %4591 = vadd.xlane.f32.xlu0 %v4590
    %v4592 = vpop.xlane.xlu0 %4591
    %v4593 = vsel %vm162, %v4371, 0.0
    %4594 = vadd.xlane.f32.xlu0 %v4593
    %v4595 = vpop.xlane.xlu0 %4594
    %v4596 = vsel %vm162, %v4372, 0.0
    %4597 = vadd.xlane.f32.xlu0 %v4596
    %v4598 = vpop.xlane.xlu0 %4597
    %v4599 = vsel %vm162, %v4373, 0.0
    %4600 = vadd.xlane.f32.xlu0 %v4599
    %v4601 = vpop.xlane.xlu0 %4600
    %v4602 = vsel %vm162, %v4374, 0.0
    %4603 = vadd.xlane.f32.xlu0 %v4602
    %v4604 = vpop.xlane.xlu0 %4603
    %v4605 = vsel %vm162, %v4375, 0.0
    %4606 = vadd.xlane.f32.xlu0 %v4605
    %v4607 = vpop.xlane.xlu0 %4606
    %v4608 = vsel %vm162, %v4376, 0.0
    %4609 = vadd.xlane.f32.xlu0 %v4608
    %v4610 = vpop.xlane.xlu0 %4609
    %v4611 = vsel %vm162, %v4377, 0.0
    %4612 = vadd.xlane.f32.xlu0 %v4611
    %v4613 = vpop.xlane.xlu0 %4612
    %v4614 = vsel %vm162, %v4378, 0.0
    %4615 = vadd.xlane.f32.xlu0 %v4614
    %v4616 = vpop.xlane.xlu0 %4615
    %v4617 = vsel %vm162, %v4379, 0.0
    %4618 = vadd.xlane.f32.xlu0 %v4617
    %v4619 = vpop.xlane.xlu0 %4618
    %v4620 = vsel %vm162, %v4380, 0.0
    %4621 = vadd.xlane.f32.xlu0 %v4620
    %v4622 = vpop.xlane.xlu0 %4621
    %v4623 = vsel %vm162, %v4381, 0.0
    %4624 = vadd.xlane.f32.xlu0 %v4623
    %v4625 = vpop.xlane.xlu0 %4624
    %v4626 = vsel %vm162, %v4382, 0.0
    %4627 = vadd.xlane.f32.xlu0 %v4626
    %v4628 = vpop.xlane.xlu0 %4627
    %v4629 = vsel %vm162, %v4383, 0.0
    %4630 = vadd.xlane.f32.xlu0 %v4629
    %v4631 = vpop.xlane.xlu0 %4630
    %v4632 = vsel %vm162, %v4384, 0.0
    %4633 = vadd.xlane.f32.xlu0 %v4632
    %v4634 = vpop.xlane.xlu0 %4633
    %v4635 = vsel %vm162, %v4385, 0.0
    %4636 = vadd.xlane.f32.xlu0 %v4635
    %v4637 = vpop.xlane.xlu0 %4636
    %v4638 = vsel %vm162, %v4386, 0.0
    %4639 = vadd.xlane.f32.xlu0 %v4638
    %v4640 = vpop.xlane.xlu0 %4639
    %v4641 = vsel %vm162, %v4387, 0.0
    %4642 = vadd.xlane.f32.xlu0 %v4641
    %v4643 = vpop.xlane.xlu0 %4642
    %v4644 = vsel %vm162, %v4388, 0.0
    %4645 = vadd.xlane.f32.xlu0 %v4644
    %v4646 = vpop.xlane.xlu0 %4645
    %v4647 = vsel %vm162, %v4389, 0.0
    %4648 = vadd.xlane.f32.xlu0 %v4647
    %v4649 = vpop.xlane.xlu0 %4648
    %v4650 = vsel %vm162, %v4390, 0.0
    %4651 = vadd.xlane.f32.xlu0 %v4650
    %v4652 = vpop.xlane.xlu0 %4651
    %v4653 = vsel %vm162, %v4391, 0.0
    %4654 = vadd.xlane.f32.xlu0 %v4653
    %v4655 = vpop.xlane.xlu0 %4654
    %v4656 = vsel %vm162, %v4392, 0.0
    %4657 = vadd.xlane.f32.xlu0 %v4656
    %v4658 = vpop.xlane.xlu0 %4657
    %v4659 = vsel %vm162, %v4393, 0.0
    %4660 = vadd.xlane.f32.xlu0 %v4659
    %v4661 = vpop.xlane.xlu0 %4660
    %v4662 = vsel %vm162, %v4394, 0.0
    %4663 = vadd.xlane.f32.xlu0 %v4662
    %v4664 = vpop.xlane.xlu0 %4663
    %v4665 = vsel %vm162, %v4395, 0.0
    %4666 = vadd.xlane.f32.xlu0 %v4665
    %v4667 = vpop.xlane.xlu0 %4666
    %v4668 = vsel %vm162, %v4396, 0.0
    %4669 = vadd.xlane.f32.xlu0 %v4668
    %v4670 = vpop.xlane.xlu0 %4669
    %v4671 = vsel %vm162, %v4397, 0.0
    %4672 = vadd.xlane.f32.xlu0 %v4671
    %v4673 = vpop.xlane.xlu0 %4672
    %v4674 = vsel %vm162, %v4398, 0.0
    %4675 = vadd.xlane.f32.xlu0 %v4674
    %v4676 = vpop.xlane.xlu0 %4675
    %v4677 = vsel %vm162, %v4399, 0.0
    %4678 = vadd.xlane.f32.xlu0 %v4677
    %v4679 = vpop.xlane.xlu0 %4678
    %v4680 = vsel %vm162, %v4400, 0.0
    %4681 = vadd.xlane.f32.xlu0 %v4680
    %v4682 = vpop.xlane.xlu0 %4681
    %v4683 = vsel %vm162, %v4401, 0.0
    %4684 = vadd.xlane.f32.xlu0 %v4683
    %v4685 = vpop.xlane.xlu0 %4684
    %v4686 = vsel %vm162, %v4402, 0.0
    %4687 = vadd.xlane.f32.xlu0 %v4686
    %v4688 = vpop.xlane.xlu0 %4687
    %v4689 = vsel %vm162, %v4403, 0.0
    %4690 = vadd.xlane.f32.xlu0 %v4689
    %v4691 = vpop.xlane.xlu0 %4690
    %v4692 = vmul.f32 %v4406, %v451
    %v4693 = vmul.f32 %v4409, %v451
    %v4694 = vmul.f32 %v4412, %v451
    %v4695 = vmul.f32 %v4415, %v451
    %v4696 = vmul.f32 %v4418, %v451
    %v4697 = vmul.f32 %v4421, %v451
    %v4698 = vmul.f32 %v4424, %v451
    %v4699 = vmul.f32 %v4427, %v451
    %v4700 = vmul.f32 %v4430, %v451
    %v4701 = vmul.f32 %v4433, %v451
    %v4702 = vmul.f32 %v4436, %v451
    %v4703 = vmul.f32 %v4439, %v451
    %v4704 = vmul.f32 %v4442, %v451
    %v4705 = vmul.f32 %v4445, %v451
    %v4706 = vmul.f32 %v4448, %v451
    %v4707 = vmul.f32 %v4451, %v451
    %v4708 = vmul.f32 %v4454, %v451
    %v4709 = vmul.f32 %v4457, %v451
    %v4710 = vmul.f32 %v4460, %v451
    %v4711 = vmul.f32 %v4463, %v451
    %v4712 = vmul.f32 %v4466, %v451
    %v4713 = vmul.f32 %v4469, %v451
    %v4714 = vmul.f32 %v4472, %v451
    %v4715 = vmul.f32 %v4475, %v451
    %v4716 = vmul.f32 %v4478, %v451
    %v4717 = vmul.f32 %v4481, %v451
    %v4718 = vmul.f32 %v4484, %v451
    %v4719 = vmul.f32 %v4487, %v451
    %v4720 = vmul.f32 %v4490, %v451
    %v4721 = vmul.f32 %v4493, %v451
    %v4722 = vmul.f32 %v4496, %v451
    %v4723 = vmul.f32 %v4499, %v451
    %v4724 = vmul.f32 %v4502, %v451
    %v4725 = vmul.f32 %v4505, %v451
    %v4726 = vmul.f32 %v4508, %v451
    %v4727 = vmul.f32 %v4511, %v451
    %v4728 = vmul.f32 %v4514, %v451
    %v4729 = vmul.f32 %v4517, %v451
    %v4730 = vmul.f32 %v4520, %v451
    %v4731 = vmul.f32 %v4523, %v451
    %v4732 = vmul.f32 %v4526, %v451
    %v4733 = vmul.f32 %v4529, %v451
    %v4734 = vmul.f32 %v4532, %v451
    %v4735 = vmul.f32 %v4535, %v451
    %v4736 = vmul.f32 %v4538, %v451
    %v4737 = vmul.f32 %v4541, %v451
    %v4738 = vmul.f32 %v4544, %v451
    %v4739 = vmul.f32 %v4547, %v451
    %v4740 = vmul.f32 %v4550, %v451
    %v4741 = vmul.f32 %v4553, %v451
    %v4742 = vmul.f32 %v4556, %v451
    %v4743 = vmul.f32 %v4559, %v451
    %v4744 = vmul.f32 %v4562, %v451
    %v4745 = vmul.f32 %v4565, %v451
    %v4746 = vmul.f32 %v4568, %v451
    %v4747 = vmul.f32 %v4571, %v451
    %v4748 = vmul.f32 %v4574, %v451
    %v4749 = vmul.f32 %v4577, %v451
    %v4750 = vmul.f32 %v4580, %v451
    %v4751 = vmul.f32 %v4583, %v451
    %v4752 = vmul.f32 %v4586, %v451
    %v4753 = vmul.f32 %v4589, %v451
    %v4754 = vmul.f32 %v4592, %v451
    %v4755 = vmul.f32 %v4595, %v451
    %v4756 = vmul.f32 %v4598, %v451
    %v4757 = vmul.f32 %v4601, %v451
    %v4758 = vmul.f32 %v4604, %v451
    %v4759 = vmul.f32 %v4607, %v451
    %v4760 = vmul.f32 %v4610, %v451
    %v4761 = vmul.f32 %v4613, %v451
    %v4762 = vmul.f32 %v4616, %v451
    %v4763 = vmul.f32 %v4619, %v451
    %v4764 = vmul.f32 %v4622, %v451
    %v4765 = vmul.f32 %v4625, %v451
    %v4766 = vmul.f32 %v4628, %v451
    %v4767 = vmul.f32 %v4631, %v451
    %v4768 = vmul.f32 %v4634, %v451
    %v4769 = vmul.f32 %v4637, %v451
    %v4770 = vmul.f32 %v4640, %v451
    %v4771 = vmul.f32 %v4643, %v451
    %v4772 = vmul.f32 %v4646, %v451
    %v4773 = vmul.f32 %v4649, %v451
    %v4774 = vmul.f32 %v4652, %v451
    %v4775 = vmul.f32 %v4655, %v451
    %v4776 = vmul.f32 %v4658, %v451
    %v4777 = vmul.f32 %v4661, %v451
    %v4778 = vmul.f32 %v4664, %v451
    %v4779 = vmul.f32 %v4667, %v451
    %v4780 = vmul.f32 %v4670, %v451
    %v4781 = vmul.f32 %v4673, %v451
    %v4782 = vmul.f32 %v4676, %v451
    %v4783 = vmul.f32 %v4679, %v451
    %v4784 = vmul.f32 %v4682, %v451
    %v4785 = vmul.f32 %v4685, %v451
    %v4786 = vmul.f32 %v4688, %v451
    %v4787 = vmul.f32 %v4691, %v451
    %v4788 = vmul.f32 %v4212, %v4212
    %v4789 = vmul.f32 %v4213, %v4213
    %v4790 = vmul.f32 %v4214, %v4214
    %v4791 = vmul.f32 %v4215, %v4215
    %v4792 = vmul.f32 %v4216, %v4216
    %v4793 = vmul.f32 %v4217, %v4217
    %v4794 = vmul.f32 %v4218, %v4218
    %v4795 = vmul.f32 %v4219, %v4219
    %v4796 = vmul.f32 %v4220, %v4220
    %v4797 = vmul.f32 %v4221, %v4221
    %v4798 = vmul.f32 %v4222, %v4222
    %v4799 = vmul.f32 %v4223, %v4223
    %v4800 = vmul.f32 %v4224, %v4224
    %v4801 = vmul.f32 %v4225, %v4225
    %v4802 = vmul.f32 %v4226, %v4226
    %v4803 = vmul.f32 %v4227, %v4227
    %v4804 = vmul.f32 %v4228, %v4228
    %v4805 = vmul.f32 %v4229, %v4229
    %v4806 = vmul.f32 %v4230, %v4230
    %v4807 = vmul.f32 %v4231, %v4231
    %v4808 = vmul.f32 %v4232, %v4232
    %v4809 = vmul.f32 %v4233, %v4233
    %v4810 = vmul.f32 %v4234, %v4234
    %v4811 = vmul.f32 %v4235, %v4235
    %v4812 = vmul.f32 %v4236, %v4236
    %v4813 = vmul.f32 %v4237, %v4237
    %v4814 = vmul.f32 %v4238, %v4238
    %v4815 = vmul.f32 %v4239, %v4239
    %v4816 = vmul.f32 %v4240, %v4240
    %v4817 = vmul.f32 %v4241, %v4241
    %v4818 = vmul.f32 %v4242, %v4242
    %v4819 = vmul.f32 %v4243, %v4243
    %v4820 = vmul.f32 %v4244, %v4244
    %v4821 = vmul.f32 %v4245, %v4245
    %v4822 = vmul.f32 %v4246, %v4246
    %v4823 = vmul.f32 %v4247, %v4247
    %v4824 = vmul.f32 %v4248, %v4248
    %v4825 = vmul.f32 %v4249, %v4249
    %v4826 = vmul.f32 %v4250, %v4250
    %v4827 = vmul.f32 %v4251, %v4251
    %v4828 = vmul.f32 %v4252, %v4252
    %v4829 = vmul.f32 %v4253, %v4253
    %v4830 = vmul.f32 %v4254, %v4254
    %v4831 = vmul.f32 %v4255, %v4255
    %v4832 = vmul.f32 %v4256, %v4256
    %v4833 = vmul.f32 %v4257, %v4257
    %v4834 = vmul.f32 %v4258, %v4258
    %v4835 = vmul.f32 %v4259, %v4259
    %v4836 = vmul.f32 %v4260, %v4260
    %v4837 = vmul.f32 %v4261, %v4261
    %v4838 = vmul.f32 %v4262, %v4262
    %v4839 = vmul.f32 %v4263, %v4263
    %v4840 = vmul.f32 %v4264, %v4264
    %v4841 = vmul.f32 %v4265, %v4265
    %v4842 = vmul.f32 %v4266, %v4266
    %v4843 = vmul.f32 %v4267, %v4267
    %v4844 = vmul.f32 %v4268, %v4268
    %v4845 = vmul.f32 %v4269, %v4269
    %v4846 = vmul.f32 %v4270, %v4270
    %v4847 = vmul.f32 %v4271, %v4271
    %v4848 = vmul.f32 %v4272, %v4272
    %v4849 = vmul.f32 %v4273, %v4273
    %v4850 = vmul.f32 %v4274, %v4274
    %v4851 = vmul.f32 %v4275, %v4275
    %v4852 = vmul.f32 %v4276, %v4276
    %v4853 = vmul.f32 %v4277, %v4277
    %v4854 = vmul.f32 %v4278, %v4278
    %v4855 = vmul.f32 %v4279, %v4279
    %v4856 = vmul.f32 %v4280, %v4280
    %v4857 = vmul.f32 %v4281, %v4281
    %v4858 = vmul.f32 %v4282, %v4282
    %v4859 = vmul.f32 %v4283, %v4283
    %v4860 = vmul.f32 %v4284, %v4284
    %v4861 = vmul.f32 %v4285, %v4285
    %v4862 = vmul.f32 %v4286, %v4286
    %v4863 = vmul.f32 %v4287, %v4287
    %v4864 = vmul.f32 %v4288, %v4288
    %v4865 = vmul.f32 %v4289, %v4289
    %v4866 = vmul.f32 %v4290, %v4290
    %v4867 = vmul.f32 %v4291, %v4291
    %v4868 = vmul.f32 %v4292, %v4292
    %v4869 = vmul.f32 %v4293, %v4293
    %v4870 = vmul.f32 %v4294, %v4294
    %v4871 = vmul.f32 %v4295, %v4295
    %v4872 = vmul.f32 %v4296, %v4296
    %v4873 = vmul.f32 %v4297, %v4297
    %v4874 = vmul.f32 %v4298, %v4298
    %v4875 = vmul.f32 %v4299, %v4299
    %v4876 = vmul.f32 %v4300, %v4300
    %v4877 = vmul.f32 %v4301, %v4301
    %v4878 = vmul.f32 %v4302, %v4302
    %v4879 = vmul.f32 %v4303, %v4303
    %v4880 = vmul.f32 %v4304, %v4304
    %v4881 = vmul.f32 %v4305, %v4305
    %v4882 = vmul.f32 %v4306, %v4306
    %v4883 = vmul.f32 %v4307, %v4307
    %v4884 = vsub.f32 %v4692, %v4788
    %v4885 = vsub.f32 %v4693, %v4789
    %v4886 = vsub.f32 %v4694, %v4790
    %v4887 = vsub.f32 %v4695, %v4791
    %v4888 = vsub.f32 %v4696, %v4792
    %v4889 = vsub.f32 %v4697, %v4793
    %v4890 = vsub.f32 %v4698, %v4794
    %v4891 = vsub.f32 %v4699, %v4795
    %v4892 = vsub.f32 %v4700, %v4796
    %v4893 = vsub.f32 %v4701, %v4797
    %v4894 = vsub.f32 %v4702, %v4798
    %v4895 = vsub.f32 %v4703, %v4799
    %v4896 = vsub.f32 %v4704, %v4800
    %v4897 = vsub.f32 %v4705, %v4801
    %v4898 = vsub.f32 %v4706, %v4802
    %v4899 = vsub.f32 %v4707, %v4803
    %v4900 = vsub.f32 %v4708, %v4804
    %v4901 = vsub.f32 %v4709, %v4805
    %v4902 = vsub.f32 %v4710, %v4806
    %v4903 = vsub.f32 %v4711, %v4807
    %v4904 = vsub.f32 %v4712, %v4808
    %v4905 = vsub.f32 %v4713, %v4809
    %v4906 = vsub.f32 %v4714, %v4810
    %v4907 = vsub.f32 %v4715, %v4811
    %v4908 = vsub.f32 %v4716, %v4812
    %v4909 = vsub.f32 %v4717, %v4813
    %v4910 = vsub.f32 %v4718, %v4814
    %v4911 = vsub.f32 %v4719, %v4815
    %v4912 = vsub.f32 %v4720, %v4816
    %v4913 = vsub.f32 %v4721, %v4817
    %v4914 = vsub.f32 %v4722, %v4818
    %v4915 = vsub.f32 %v4723, %v4819
    %v4916 = vsub.f32 %v4724, %v4820
    %v4917 = vsub.f32 %v4725, %v4821
    %v4918 = vsub.f32 %v4726, %v4822
    %v4919 = vsub.f32 %v4727, %v4823
    %v4920 = vsub.f32 %v4728, %v4824
    %v4921 = vsub.f32 %v4729, %v4825
    %v4922 = vsub.f32 %v4730, %v4826
    %v4923 = vsub.f32 %v4731, %v4827
    %v4924 = vsub.f32 %v4732, %v4828
    %v4925 = vsub.f32 %v4733, %v4829
    %v4926 = vsub.f32 %v4734, %v4830
    %v4927 = vsub.f32 %v4735, %v4831
    %v4928 = vsub.f32 %v4736, %v4832
    %v4929 = vsub.f32 %v4737, %v4833
    %v4930 = vsub.f32 %v4738, %v4834
    %v4931 = vsub.f32 %v4739, %v4835
    %v4932 = vsub.f32 %v4740, %v4836
    %v4933 = vsub.f32 %v4741, %v4837
    %v4934 = vsub.f32 %v4742, %v4838
    %v4935 = vsub.f32 %v4743, %v4839
    %v4936 = vsub.f32 %v4744, %v4840
    %v4937 = vsub.f32 %v4745, %v4841
    %v4938 = vsub.f32 %v4746, %v4842
    %v4939 = vsub.f32 %v4747, %v4843
    %v4940 = vsub.f32 %v4748, %v4844
    %v4941 = vsub.f32 %v4749, %v4845
    %v4942 = vsub.f32 %v4750, %v4846
    %v4943 = vsub.f32 %v4751, %v4847
    %v4944 = vsub.f32 %v4752, %v4848
    %v4945 = vsub.f32 %v4753, %v4849
    %v4946 = vsub.f32 %v4754, %v4850
    %v4947 = vsub.f32 %v4755, %v4851
    %v4948 = vsub.f32 %v4756, %v4852
    %v4949 = vsub.f32 %v4757, %v4853
    %v4950 = vsub.f32 %v4758, %v4854
    %v4951 = vsub.f32 %v4759, %v4855
    %v4952 = vsub.f32 %v4760, %v4856
    %v4953 = vsub.f32 %v4761, %v4857
    %v4954 = vsub.f32 %v4762, %v4858
    %v4955 = vsub.f32 %v4763, %v4859
    %v4956 = vsub.f32 %v4764, %v4860
    %v4957 = vsub.f32 %v4765, %v4861
    %v4958 = vsub.f32 %v4766, %v4862
    %v4959 = vsub.f32 %v4767, %v4863
    %v4960 = vsub.f32 %v4768, %v4864
    %v4961 = vsub.f32 %v4769, %v4865
    %v4962 = vsub.f32 %v4770, %v4866
    %v4963 = vsub.f32 %v4771, %v4867
    %v4964 = vsub.f32 %v4772, %v4868
    %v4965 = vsub.f32 %v4773, %v4869
    %v4966 = vsub.f32 %v4774, %v4870
    %v4967 = vsub.f32 %v4775, %v4871
    %v4968 = vsub.f32 %v4776, %v4872
    %v4969 = vsub.f32 %v4777, %v4873
    %v4970 = vsub.f32 %v4778, %v4874
    %v4971 = vsub.f32 %v4779, %v4875
    %v4972 = vsub.f32 %v4780, %v4876
    %v4973 = vsub.f32 %v4781, %v4877
    %v4974 = vsub.f32 %v4782, %v4878
    %v4975 = vsub.f32 %v4783, %v4879
    %v4976 = vsub.f32 %v4784, %v4880
    %v4977 = vsub.f32 %v4785, %v4881
    %v4978 = vsub.f32 %v4786, %v4882
    %v4979 = vsub.f32 %v4787, %v4883
    %v4980 = vmax.f32 %v4884, 0.0
    %v4981 = vmax.f32 %v4885, 0.0
    %v4982 = vmax.f32 %v4886, 0.0
    %v4983 = vmax.f32 %v4887, 0.0
    %v4984 = vmax.f32 %v4888, 0.0
    %v4985 = vmax.f32 %v4889, 0.0
    %v4986 = vmax.f32 %v4890, 0.0
    %v4987 = vmax.f32 %v4891, 0.0
    %v4988 = vmax.f32 %v4892, 0.0
    %v4989 = vmax.f32 %v4893, 0.0
    %v4990 = vmax.f32 %v4894, 0.0
    %v4991 = vmax.f32 %v4895, 0.0
    %v4992 = vmax.f32 %v4896, 0.0
    %v4993 = vmax.f32 %v4897, 0.0
    %v4994 = vmax.f32 %v4898, 0.0
    %v4995 = vmax.f32 %v4899, 0.0
    %v4996 = vmax.f32 %v4900, 0.0
    %v4997 = vmax.f32 %v4901, 0.0
    %v4998 = vmax.f32 %v4902, 0.0
    %v4999 = vmax.f32 %v4903, 0.0
    %v5000 = vmax.f32 %v4904, 0.0
    %v5001 = vmax.f32 %v4905, 0.0
    %v5002 = vmax.f32 %v4906, 0.0
    %v5003 = vmax.f32 %v4907, 0.0
    %v5004 = vmax.f32 %v4908, 0.0
    %v5005 = vmax.f32 %v4909, 0.0
    %v5006 = vmax.f32 %v4910, 0.0
    %v5007 = vmax.f32 %v4911, 0.0
    %v5008 = vmax.f32 %v4912, 0.0
    %v5009 = vmax.f32 %v4913, 0.0
    %v5010 = vmax.f32 %v4914, 0.0
    %v5011 = vmax.f32 %v4915, 0.0
    %v5012 = vmax.f32 %v4916, 0.0
    %v5013 = vmax.f32 %v4917, 0.0
    %v5014 = vmax.f32 %v4918, 0.0
    %v5015 = vmax.f32 %v4919, 0.0
    %v5016 = vmax.f32 %v4920, 0.0
    %v5017 = vmax.f32 %v4921, 0.0
    %v5018 = vmax.f32 %v4922, 0.0
    %v5019 = vmax.f32 %v4923, 0.0
    %v5020 = vmax.f32 %v4924, 0.0
    %v5021 = vmax.f32 %v4925, 0.0
    %v5022 = vmax.f32 %v4926, 0.0
    %v5023 = vmax.f32 %v4927, 0.0
    %v5024 = vmax.f32 %v4928, 0.0
    %v5025 = vmax.f32 %v4929, 0.0
    %v5026 = vmax.f32 %v4930, 0.0
    %v5027 = vmax.f32 %v4931, 0.0
    %v5028 = vmax.f32 %v4932, 0.0
    %v5029 = vmax.f32 %v4933, 0.0
    %v5030 = vmax.f32 %v4934, 0.0
    %v5031 = vmax.f32 %v4935, 0.0
    %v5032 = vmax.f32 %v4936, 0.0
    %v5033 = vmax.f32 %v4937, 0.0
    %v5034 = vmax.f32 %v4938, 0.0
    %v5035 = vmax.f32 %v4939, 0.0
    %v5036 = vmax.f32 %v4940, 0.0
    %v5037 = vmax.f32 %v4941, 0.0
    %v5038 = vmax.f32 %v4942, 0.0
    %v5039 = vmax.f32 %v4943, 0.0
    %v5040 = vmax.f32 %v4944, 0.0
    %v5041 = vmax.f32 %v4945, 0.0
    %v5042 = vmax.f32 %v4946, 0.0
    %v5043 = vmax.f32 %v4947, 0.0
    %v5044 = vmax.f32 %v4948, 0.0
    %v5045 = vmax.f32 %v4949, 0.0
    %v5046 = vmax.f32 %v4950, 0.0
    %v5047 = vmax.f32 %v4951, 0.0
    %v5048 = vmax.f32 %v4952, 0.0
    %v5049 = vmax.f32 %v4953, 0.0
    %v5050 = vmax.f32 %v4954, 0.0
    %v5051 = vmax.f32 %v4955, 0.0
    %v5052 = vmax.f32 %v4956, 0.0
    %v5053 = vmax.f32 %v4957, 0.0
    %v5054 = vmax.f32 %v4958, 0.0
    %v5055 = vmax.f32 %v4959, 0.0
    %v5056 = vmax.f32 %v4960, 0.0
    %v5057 = vmax.f32 %v4961, 0.0
    %v5058 = vmax.f32 %v4962, 0.0
    %v5059 = vmax.f32 %v4963, 0.0
    %v5060 = vmax.f32 %v4964, 0.0
    %v5061 = vmax.f32 %v4965, 0.0
    %v5062 = vmax.f32 %v4966, 0.0
    %v5063 = vmax.f32 %v4967, 0.0
    %v5064 = vmax.f32 %v4968, 0.0
    %v5065 = vmax.f32 %v4969, 0.0
    %v5066 = vmax.f32 %v4970, 0.0
    %v5067 = vmax.f32 %v4971, 0.0
    %v5068 = vmax.f32 %v4972, 0.0
    %v5069 = vmax.f32 %v4973, 0.0
    %v5070 = vmax.f32 %v4974, 0.0
    %v5071 = vmax.f32 %v4975, 0.0
    %v5072 = vmax.f32 %v4976, 0.0
    %v5073 = vmax.f32 %v4977, 0.0
    %v5074 = vmax.f32 %v4978, 0.0
    %v5075 = vmax.f32 %v4979, 0.0
    %v5076 = vsub.f32 %v3826, %v4212
    %v5077 = vsub.f32 %v3827, %v4213
    %v5078 = vsub.f32 %v3828, %v4214
    %v5079 = vsub.f32 %v3829, %v4215
    %v5080 = vsub.f32 %v3830, %v4216
    %v5081 = vsub.f32 %v3831, %v4217
    %v5082 = vsub.f32 %v3832, %v4218
    %v5083 = vsub.f32 %v3833, %v4219
    %v5084 = vsub.f32 %v3834, %v4220
    %v5085 = vsub.f32 %v3835, %v4221
    %v5086 = vsub.f32 %v3836, %v4222
    %v5087 = vsub.f32 %v3837, %v4223
    %v5088 = vsub.f32 %v3838, %v4224
    %v5089 = vsub.f32 %v3839, %v4225
    %v5090 = vsub.f32 %v3840, %v4226
    %v5091 = vsub.f32 %v3841, %v4227
    %v5092 = vsub.f32 %v3842, %v4228
    %v5093 = vsub.f32 %v3843, %v4229
    %v5094 = vsub.f32 %v3844, %v4230
    %v5095 = vsub.f32 %v3845, %v4231
    %v5096 = vsub.f32 %v3846, %v4232
    %v5097 = vsub.f32 %v3847, %v4233
    %v5098 = vsub.f32 %v3848, %v4234
    %v5099 = vsub.f32 %v3849, %v4235
    %v5100 = vsub.f32 %v3850, %v4236
    %v5101 = vsub.f32 %v3851, %v4237
    %v5102 = vsub.f32 %v3852, %v4238
    %v5103 = vsub.f32 %v3853, %v4239
    %v5104 = vsub.f32 %v3854, %v4240
    %v5105 = vsub.f32 %v3855, %v4241
    %v5106 = vsub.f32 %v3856, %v4242
    %v5107 = vsub.f32 %v3857, %v4243
    %v5108 = vsub.f32 %v3858, %v4244
    %v5109 = vsub.f32 %v3859, %v4245
    %v5110 = vsub.f32 %v3860, %v4246
    %v5111 = vsub.f32 %v3861, %v4247
    %v5112 = vsub.f32 %v3862, %v4248
    %v5113 = vsub.f32 %v3863, %v4249
    %v5114 = vsub.f32 %v3864, %v4250
    %v5115 = vsub.f32 %v3865, %v4251
    %v5116 = vsub.f32 %v3866, %v4252
    %v5117 = vsub.f32 %v3867, %v4253
    %v5118 = vsub.f32 %v3868, %v4254
    %v5119 = vsub.f32 %v3869, %v4255
    %v5120 = vsub.f32 %v3870, %v4256
    %v5121 = vsub.f32 %v3871, %v4257
    %v5122 = vsub.f32 %v3872, %v4258
    %v5123 = vsub.f32 %v3873, %v4259
    %v5124 = vsub.f32 %v3874, %v4260
    %v5125 = vsub.f32 %v3875, %v4261
    %v5126 = vsub.f32 %v3876, %v4262
    %v5127 = vsub.f32 %v3877, %v4263
    %v5128 = vsub.f32 %v3878, %v4264
    %v5129 = vsub.f32 %v3879, %v4265
    %v5130 = vsub.f32 %v3880, %v4266
    %v5131 = vsub.f32 %v3881, %v4267
    %v5132 = vsub.f32 %v3882, %v4268
    %v5133 = vsub.f32 %v3883, %v4269
    %v5134 = vsub.f32 %v3884, %v4270
    %v5135 = vsub.f32 %v3885, %v4271
    %v5136 = vsub.f32 %v3886, %v4272
    %v5137 = vsub.f32 %v3887, %v4273
    %v5138 = vsub.f32 %v3888, %v4274
    %v5139 = vsub.f32 %v3889, %v4275
    %v5140 = vsub.f32 %v3890, %v4276
    %v5141 = vsub.f32 %v3891, %v4277
    %v5142 = vsub.f32 %v3892, %v4278
    %v5143 = vsub.f32 %v3893, %v4279
    %v5144 = vsub.f32 %v3894, %v4280
    %v5145 = vsub.f32 %v3895, %v4281
    %v5146 = vsub.f32 %v3896, %v4282
    %v5147 = vsub.f32 %v3897, %v4283
    %v5148 = vsub.f32 %v3898, %v4284
    %v5149 = vsub.f32 %v3899, %v4285
    %v5150 = vsub.f32 %v3900, %v4286
    %v5151 = vsub.f32 %v3901, %v4287
    %v5152 = vsub.f32 %v3902, %v4288
    %v5153 = vsub.f32 %v3903, %v4289
    %v5154 = vsub.f32 %v3904, %v4290
    %v5155 = vsub.f32 %v3905, %v4291
    %v5156 = vsub.f32 %v3906, %v4292
    %v5157 = vsub.f32 %v3907, %v4293
    %v5158 = vsub.f32 %v3908, %v4294
    %v5159 = vsub.f32 %v3909, %v4295
    %v5160 = vsub.f32 %v3910, %v4296
    %v5161 = vsub.f32 %v3911, %v4297
    %v5162 = vsub.f32 %v3912, %v4298
    %v5163 = vsub.f32 %v3913, %v4299
    %v5164 = vsub.f32 %v3914, %v4300
    %v5165 = vsub.f32 %v3915, %v4301
    %v5166 = vsub.f32 %v3916, %v4302
    %v5167 = vsub.f32 %v3917, %v4303
    %v5168 = vsub.f32 %v3918, %v4304
    %v5169 = vsub.f32 %v3919, %v4305
    %v5170 = vsub.f32 %v3920, %v4306
    %v5171 = vsub.f32 %v3921, %v4307
    %v5172 = vadd.f32 %v4980, 1e-05
    %v5173 = vadd.f32 %v4981, 1e-05
    %v5174 = vadd.f32 %v4982, 1e-05
    %v5175 = vadd.f32 %v4983, 1e-05
    %v5176 = vadd.f32 %v4984, 1e-05
    %v5177 = vadd.f32 %v4985, 1e-05
    %v5178 = vadd.f32 %v4986, 1e-05
    %v5179 = vadd.f32 %v4987, 1e-05
    %v5180 = vadd.f32 %v4988, 1e-05
    %v5181 = vadd.f32 %v4989, 1e-05
    %v5182 = vadd.f32 %v4990, 1e-05
    %v5183 = vadd.f32 %v4991, 1e-05
    %v5184 = vadd.f32 %v4992, 1e-05
    %v5185 = vadd.f32 %v4993, 1e-05
    %v5186 = vadd.f32 %v4994, 1e-05
    %v5187 = vadd.f32 %v4995, 1e-05
    %v5188 = vadd.f32 %v4996, 1e-05
    %v5189 = vadd.f32 %v4997, 1e-05
    %v5190 = vadd.f32 %v4998, 1e-05
    %v5191 = vadd.f32 %v4999, 1e-05
    %v5192 = vadd.f32 %v5000, 1e-05
    %v5193 = vadd.f32 %v5001, 1e-05
    %v5194 = vadd.f32 %v5002, 1e-05
    %v5195 = vadd.f32 %v5003, 1e-05
    %v5196 = vadd.f32 %v5004, 1e-05
    %v5197 = vadd.f32 %v5005, 1e-05
    %v5198 = vadd.f32 %v5006, 1e-05
    %v5199 = vadd.f32 %v5007, 1e-05
    %v5200 = vadd.f32 %v5008, 1e-05
    %v5201 = vadd.f32 %v5009, 1e-05
    %v5202 = vadd.f32 %v5010, 1e-05
    %v5203 = vadd.f32 %v5011, 1e-05
    %v5204 = vadd.f32 %v5012, 1e-05
    %v5205 = vadd.f32 %v5013, 1e-05
    %v5206 = vadd.f32 %v5014, 1e-05
    %v5207 = vadd.f32 %v5015, 1e-05
    %v5208 = vadd.f32 %v5016, 1e-05
    %v5209 = vadd.f32 %v5017, 1e-05
    %v5210 = vadd.f32 %v5018, 1e-05
    %v5211 = vadd.f32 %v5019, 1e-05
    %v5212 = vadd.f32 %v5020, 1e-05
    %v5213 = vadd.f32 %v5021, 1e-05
    %v5214 = vadd.f32 %v5022, 1e-05
    %v5215 = vadd.f32 %v5023, 1e-05
    %v5216 = vadd.f32 %v5024, 1e-05
    %v5217 = vadd.f32 %v5025, 1e-05
    %v5218 = vadd.f32 %v5026, 1e-05
    %v5219 = vadd.f32 %v5027, 1e-05
    %v5220 = vadd.f32 %v5028, 1e-05
    %v5221 = vadd.f32 %v5029, 1e-05
    %v5222 = vadd.f32 %v5030, 1e-05
    %v5223 = vadd.f32 %v5031, 1e-05
    %v5224 = vadd.f32 %v5032, 1e-05
    %v5225 = vadd.f32 %v5033, 1e-05
    %v5226 = vadd.f32 %v5034, 1e-05
    %v5227 = vadd.f32 %v5035, 1e-05
    %v5228 = vadd.f32 %v5036, 1e-05
    %v5229 = vadd.f32 %v5037, 1e-05
    %v5230 = vadd.f32 %v5038, 1e-05
    %v5231 = vadd.f32 %v5039, 1e-05
    %v5232 = vadd.f32 %v5040, 1e-05
    %v5233 = vadd.f32 %v5041, 1e-05
    %v5234 = vadd.f32 %v5042, 1e-05
    %v5235 = vadd.f32 %v5043, 1e-05
    %v5236 = vadd.f32 %v5044, 1e-05
    %v5237 = vadd.f32 %v5045, 1e-05
    %v5238 = vadd.f32 %v5046, 1e-05
    %v5239 = vadd.f32 %v5047, 1e-05
    %v5240 = vadd.f32 %v5048, 1e-05
    %v5241 = vadd.f32 %v5049, 1e-05
    %v5242 = vadd.f32 %v5050, 1e-05
    %v5243 = vadd.f32 %v5051, 1e-05
    %v5244 = vadd.f32 %v5052, 1e-05
    %v5245 = vadd.f32 %v5053, 1e-05
    %v5246 = vadd.f32 %v5054, 1e-05
    %v5247 = vadd.f32 %v5055, 1e-05
    %v5248 = vadd.f32 %v5056, 1e-05
    %v5249 = vadd.f32 %v5057, 1e-05
    %v5250 = vadd.f32 %v5058, 1e-05
    %v5251 = vadd.f32 %v5059, 1e-05
    %v5252 = vadd.f32 %v5060, 1e-05
    %v5253 = vadd.f32 %v5061, 1e-05
    %v5254 = vadd.f32 %v5062, 1e-05
    %v5255 = vadd.f32 %v5063, 1e-05
    %v5256 = vadd.f32 %v5064, 1e-05
    %v5257 = vadd.f32 %v5065, 1e-05
    %v5258 = vadd.f32 %v5066, 1e-05
    %v5259 = vadd.f32 %v5067, 1e-05
    %v5260 = vadd.f32 %v5068, 1e-05
    %v5261 = vadd.f32 %v5069, 1e-05
    %v5262 = vadd.f32 %v5070, 1e-05
    %v5263 = vadd.f32 %v5071, 1e-05
    %v5264 = vadd.f32 %v5072, 1e-05
    %v5265 = vadd.f32 %v5073, 1e-05
    %v5266 = vadd.f32 %v5074, 1e-05
    %v5267 = vadd.f32 %v5075, 1e-05
    %v5268 = vrsqrt.pop %v5172
    %v5269 = vrsqrt.pop %v5173
    %v5270 = vrsqrt.pop %v5174
    %v5271 = vrsqrt.pop %v5175
    %v5272 = vrsqrt.pop %v5176
    %v5273 = vrsqrt.pop %v5177
    %v5274 = vrsqrt.pop %v5178
    %v5275 = vrsqrt.pop %v5179
    %v5276 = vrsqrt.pop %v5180
    %v5277 = vrsqrt.pop %v5181
    %v5278 = vrsqrt.pop %v5182
    %v5279 = vrsqrt.pop %v5183
    %v5280 = vrsqrt.pop %v5184
    %v5281 = vrsqrt.pop %v5185
    %v5282 = vrsqrt.pop %v5186
    %v5283 = vrsqrt.pop %v5187
    %v5284 = vrsqrt.pop %v5188
    %v5285 = vrsqrt.pop %v5189
    %v5286 = vrsqrt.pop %v5190
    %v5287 = vrsqrt.pop %v5191
    %v5288 = vrsqrt.pop %v5192
    %v5289 = vrsqrt.pop %v5193
    %v5290 = vrsqrt.pop %v5194
    %v5291 = vrsqrt.pop %v5195
    %v5292 = vrsqrt.pop %v5196
    %v5293 = vrsqrt.pop %v5197
    %v5294 = vrsqrt.pop %v5198
    %v5295 = vrsqrt.pop %v5199
    %v5296 = vrsqrt.pop %v5200
    %v5297 = vrsqrt.pop %v5201
    %v5298 = vrsqrt.pop %v5202
    %v5299 = vrsqrt.pop %v5203
    %v5300 = vrsqrt.pop %v5204
    %v5301 = vrsqrt.pop %v5205
    %v5302 = vrsqrt.pop %v5206
    %v5303 = vrsqrt.pop %v5207
    %v5304 = vrsqrt.pop %v5208
    %v5305 = vrsqrt.pop %v5209
    %v5306 = vrsqrt.pop %v5210
    %v5307 = vrsqrt.pop %v5211
    %v5308 = vrsqrt.pop %v5212
    %v5309 = vrsqrt.pop %v5213
    %v5310 = vrsqrt.pop %v5214
    %v5311 = vrsqrt.pop %v5215
    %v5312 = vrsqrt.pop %v5216
    %v5313 = vrsqrt.pop %v5217
    %v5314 = vrsqrt.pop %v5218
    %v5315 = vrsqrt.pop %v5219
    %v5316 = vrsqrt.pop %v5220
    %v5317 = vrsqrt.pop %v5221
    %v5318 = vrsqrt.pop %v5222
    %v5319 = vrsqrt.pop %v5223
    %v5320 = vrsqrt.pop %v5224
    %v5321 = vrsqrt.pop %v5225
    %v5322 = vrsqrt.pop %v5226
    %v5323 = vrsqrt.pop %v5227
    %v5324 = vrsqrt.pop %v5228
    %v5325 = vrsqrt.pop %v5229
    %v5326 = vrsqrt.pop %v5230
    %v5327 = vrsqrt.pop %v5231
    %v5328 = vrsqrt.pop %v5232
    %v5329 = vrsqrt.pop %v5233
    %v5330 = vrsqrt.pop %v5234
    %v5331 = vrsqrt.pop %v5235
    %v5332 = vrsqrt.pop %v5236
    %v5333 = vrsqrt.pop %v5237
    %v5334 = vrsqrt.pop %v5238
    %v5335 = vrsqrt.pop %v5239
    %v5336 = vrsqrt.pop %v5240
    %v5337 = vrsqrt.pop %v5241
    %v5338 = vrsqrt.pop %v5242
    %v5339 = vrsqrt.pop %v5243
    %v5340 = vrsqrt.pop %v5244
    %v5341 = vrsqrt.pop %v5245
    %v5342 = vrsqrt.pop %v5246
    %v5343 = vrsqrt.pop %v5247
    %v5344 = vrsqrt.pop %v5248
    %v5345 = vrsqrt.pop %v5249
    %v5346 = vrsqrt.pop %v5250
    %v5347 = vrsqrt.pop %v5251
    %v5348 = vrsqrt.pop %v5252
    %v5349 = vrsqrt.pop %v5253
    %v5350 = vrsqrt.pop %v5254
    %v5351 = vrsqrt.pop %v5255
    %v5352 = vrsqrt.pop %v5256
    %v5353 = vrsqrt.pop %v5257
    %v5354 = vrsqrt.pop %v5258
    %v5355 = vrsqrt.pop %v5259
    %v5356 = vrsqrt.pop %v5260
    %v5357 = vrsqrt.pop %v5261
    %v5358 = vrsqrt.pop %v5262
    %v5359 = vrsqrt.pop %v5263
    %v5360 = vrsqrt.pop %v5264
    %v5361 = vrsqrt.pop %v5265
    %v5362 = vrsqrt.pop %v5266
    %v5363 = vrsqrt.pop %v5267
    %v5364 = vmul.f32 %v5076, %v5268
    %v5365 = vmul.f32 %v5077, %v5269
    %v5366 = vmul.f32 %v5078, %v5270
    %v5367 = vmul.f32 %v5079, %v5271
    %v5368 = vmul.f32 %v5080, %v5272
    %v5369 = vmul.f32 %v5081, %v5273
    %v5370 = vmul.f32 %v5082, %v5274
    %v5371 = vmul.f32 %v5083, %v5275
    %v5372 = vmul.f32 %v5084, %v5276
    %v5373 = vmul.f32 %v5085, %v5277
    %v5374 = vmul.f32 %v5086, %v5278
    %v5375 = vmul.f32 %v5087, %v5279
    %v5376 = vmul.f32 %v5088, %v5280
    %v5377 = vmul.f32 %v5089, %v5281
    %v5378 = vmul.f32 %v5090, %v5282
    %v5379 = vmul.f32 %v5091, %v5283
    %v5380 = vmul.f32 %v5092, %v5284
    %v5381 = vmul.f32 %v5093, %v5285
    %v5382 = vmul.f32 %v5094, %v5286
    %v5383 = vmul.f32 %v5095, %v5287
    %v5384 = vmul.f32 %v5096, %v5288
    %v5385 = vmul.f32 %v5097, %v5289
    %v5386 = vmul.f32 %v5098, %v5290
    %v5387 = vmul.f32 %v5099, %v5291
    %v5388 = vmul.f32 %v5100, %v5292
    %v5389 = vmul.f32 %v5101, %v5293
    %v5390 = vmul.f32 %v5102, %v5294
    %v5391 = vmul.f32 %v5103, %v5295
    %v5392 = vmul.f32 %v5104, %v5296
    %v5393 = vmul.f32 %v5105, %v5297
    %v5394 = vmul.f32 %v5106, %v5298
    %v5395 = vmul.f32 %v5107, %v5299
    %v5396 = vmul.f32 %v5108, %v5300
    %v5397 = vmul.f32 %v5109, %v5301
    %v5398 = vmul.f32 %v5110, %v5302
    %v5399 = vmul.f32 %v5111, %v5303
    %v5400 = vmul.f32 %v5112, %v5304
    %v5401 = vmul.f32 %v5113, %v5305
    %v5402 = vmul.f32 %v5114, %v5306
    %v5403 = vmul.f32 %v5115, %v5307
    %v5404 = vmul.f32 %v5116, %v5308
    %v5405 = vmul.f32 %v5117, %v5309
    %v5406 = vmul.f32 %v5118, %v5310
    %v5407 = vmul.f32 %v5119, %v5311
    %v5408 = vmul.f32 %v5120, %v5312
    %v5409 = vmul.f32 %v5121, %v5313
    %v5410 = vmul.f32 %v5122, %v5314
    %v5411 = vmul.f32 %v5123, %v5315
    %v5412 = vmul.f32 %v5124, %v5316
    %v5413 = vmul.f32 %v5125, %v5317
    %v5414 = vmul.f32 %v5126, %v5318
    %v5415 = vmul.f32 %v5127, %v5319
    %v5416 = vmul.f32 %v5128, %v5320
    %v5417 = vmul.f32 %v5129, %v5321
    %v5418 = vmul.f32 %v5130, %v5322
    %v5419 = vmul.f32 %v5131, %v5323
    %v5420 = vmul.f32 %v5132, %v5324
    %v5421 = vmul.f32 %v5133, %v5325
    %v5422 = vmul.f32 %v5134, %v5326
    %v5423 = vmul.f32 %v5135, %v5327
    %v5424 = vmul.f32 %v5136, %v5328
    %v5425 = vmul.f32 %v5137, %v5329
    %v5426 = vmul.f32 %v5138, %v5330
    %v5427 = vmul.f32 %v5139, %v5331
    %v5428 = vmul.f32 %v5140, %v5332
    %v5429 = vmul.f32 %v5141, %v5333
    %v5430 = vmul.f32 %v5142, %v5334
    %v5431 = vmul.f32 %v5143, %v5335
    %v5432 = vmul.f32 %v5144, %v5336
    %v5433 = vmul.f32 %v5145, %v5337
    %v5434 = vmul.f32 %v5146, %v5338
    %v5435 = vmul.f32 %v5147, %v5339
    %v5436 = vmul.f32 %v5148, %v5340
    %v5437 = vmul.f32 %v5149, %v5341
    %v5438 = vmul.f32 %v5150, %v5342
    %v5439 = vmul.f32 %v5151, %v5343
    %v5440 = vmul.f32 %v5152, %v5344
    %v5441 = vmul.f32 %v5153, %v5345
    %v5442 = vmul.f32 %v5154, %v5346
    %v5443 = vmul.f32 %v5155, %v5347
    %v5444 = vmul.f32 %v5156, %v5348
    %v5445 = vmul.f32 %v5157, %v5349
    %v5446 = vmul.f32 %v5158, %v5350
    %v5447 = vmul.f32 %v5159, %v5351
    %v5448 = vmul.f32 %v5160, %v5352
    %v5449 = vmul.f32 %v5161, %v5353
    %v5450 = vmul.f32 %v5162, %v5354
    %v5451 = vmul.f32 %v5163, %v5355
    %v5452 = vmul.f32 %v5164, %v5356
    %v5453 = vmul.f32 %v5165, %v5357
    %v5454 = vmul.f32 %v5166, %v5358
    %v5455 = vmul.f32 %v5167, %v5359
    %v5456 = vmul.f32 %v5168, %v5360
    %v5457 = vmul.f32 %v5169, %v5361
    %v5458 = vmul.f32 %v5170, %v5362
    %v5459 = vmul.f32 %v5171, %v5363
    %v5461 = vlaneseq
    %v5462 = vshrl.u32 %v5461, 7
    %v5463 = vsub.s32 0, %v5462
    %v5464 = vrot.slane %v3922, %v5463
    %v5466 = vmul.f32 %v5364, %v5464
    %v5467 = vmul.f32 %v5365, %v5464
    %v5468 = vmul.f32 %v5366, %v5464
    %v5469 = vmul.f32 %v5367, %v5464
    %v5470 = vmul.f32 %v5368, %v5464
    %v5471 = vmul.f32 %v5369, %v5464
    %v5472 = vmul.f32 %v5370, %v5464
    %v5473 = vmul.f32 %v5371, %v5464
    %v5474 = vmul.f32 %v5372, %v5464
    %v5475 = vmul.f32 %v5373, %v5464
    %v5476 = vmul.f32 %v5374, %v5464
    %v5477 = vmul.f32 %v5375, %v5464
    %v5478 = vmul.f32 %v5376, %v5464
    %v5479 = vmul.f32 %v5377, %v5464
    %v5480 = vmul.f32 %v5378, %v5464
    %v5481 = vmul.f32 %v5379, %v5464
    %v5482 = vmul.f32 %v5380, %v5464
    %v5483 = vmul.f32 %v5381, %v5464
    %v5484 = vmul.f32 %v5382, %v5464
    %v5485 = vmul.f32 %v5383, %v5464
    %v5486 = vmul.f32 %v5384, %v5464
    %v5487 = vmul.f32 %v5385, %v5464
    %v5488 = vmul.f32 %v5386, %v5464
    %v5489 = vmul.f32 %v5387, %v5464
    %v5490 = vmul.f32 %v5388, %v5464
    %v5491 = vmul.f32 %v5389, %v5464
    %v5492 = vmul.f32 %v5390, %v5464
    %v5493 = vmul.f32 %v5391, %v5464
    %v5494 = vmul.f32 %v5392, %v5464
    %v5495 = vmul.f32 %v5393, %v5464
    %v5496 = vmul.f32 %v5394, %v5464
    %v5497 = vmul.f32 %v5395, %v5464
    %v5498 = vmul.f32 %v5396, %v5464
    %v5499 = vmul.f32 %v5397, %v5464
    %v5500 = vmul.f32 %v5398, %v5464
    %v5501 = vmul.f32 %v5399, %v5464
    %v5502 = vmul.f32 %v5400, %v5464
    %v5503 = vmul.f32 %v5401, %v5464
    %v5504 = vmul.f32 %v5402, %v5464
    %v5505 = vmul.f32 %v5403, %v5464
    %v5506 = vmul.f32 %v5404, %v5464
    %v5507 = vmul.f32 %v5405, %v5464
    %v5508 = vmul.f32 %v5406, %v5464
    %v5509 = vmul.f32 %v5407, %v5464
    %v5510 = vmul.f32 %v5408, %v5464
    %v5511 = vmul.f32 %v5409, %v5464
    %v5512 = vmul.f32 %v5410, %v5464
    %v5513 = vmul.f32 %v5411, %v5464
    %v5514 = vmul.f32 %v5412, %v5464
    %v5515 = vmul.f32 %v5413, %v5464
    %v5516 = vmul.f32 %v5414, %v5464
    %v5517 = vmul.f32 %v5415, %v5464
    %v5518 = vmul.f32 %v5416, %v5464
    %v5519 = vmul.f32 %v5417, %v5464
    %v5520 = vmul.f32 %v5418, %v5464
    %v5521 = vmul.f32 %v5419, %v5464
    %v5522 = vmul.f32 %v5420, %v5464
    %v5523 = vmul.f32 %v5421, %v5464
    %v5524 = vmul.f32 %v5422, %v5464
    %v5525 = vmul.f32 %v5423, %v5464
    %v5526 = vmul.f32 %v5424, %v5464
    %v5527 = vmul.f32 %v5425, %v5464
    %v5528 = vmul.f32 %v5426, %v5464
    %v5529 = vmul.f32 %v5427, %v5464
    %v5530 = vmul.f32 %v5428, %v5464
    %v5531 = vmul.f32 %v5429, %v5464
    %v5532 = vmul.f32 %v5430, %v5464
    %v5533 = vmul.f32 %v5431, %v5464
    %v5534 = vmul.f32 %v5432, %v5464
    %v5535 = vmul.f32 %v5433, %v5464
    %v5536 = vmul.f32 %v5434, %v5464
    %v5537 = vmul.f32 %v5435, %v5464
    %v5538 = vmul.f32 %v5436, %v5464
    %v5539 = vmul.f32 %v5437, %v5464
    %v5540 = vmul.f32 %v5438, %v5464
    %v5541 = vmul.f32 %v5439, %v5464
    %v5542 = vmul.f32 %v5440, %v5464
    %v5543 = vmul.f32 %v5441, %v5464
    %v5544 = vmul.f32 %v5442, %v5464
    %v5545 = vmul.f32 %v5443, %v5464
    %v5546 = vmul.f32 %v5444, %v5464
    %v5547 = vmul.f32 %v5445, %v5464
    %v5548 = vmul.f32 %v5446, %v5464
    %v5549 = vmul.f32 %v5447, %v5464
    %v5550 = vmul.f32 %v5448, %v5464
    %v5551 = vmul.f32 %v5449, %v5464
    %v5552 = vmul.f32 %v5450, %v5464
    %v5553 = vmul.f32 %v5451, %v5464
    %v5554 = vmul.f32 %v5452, %v5464
    %v5555 = vmul.f32 %v5453, %v5464
    %v5556 = vmul.f32 %v5454, %v5464
    %v5557 = vmul.f32 %v5455, %v5464
    %v5558 = vmul.f32 %v5456, %v5464
    %v5559 = vmul.f32 %v5457, %v5464
    %v5560 = vmul.f32 %v5458, %v5464
    %v5561 = vmul.f32 %v5459, %v5464
    %v5563 = vlaneseq
    %v5564 = vshrl.u32 %v5563, 7
    %v5565 = vsub.s32 0, %v5564
    %v5566 = vrot.slane %v3923, %v5565
    %v5568 = vadd.f32 %v5466, %v5566
    %v5569 = vadd.f32 %v5467, %v5566
    %v5570 = vadd.f32 %v5468, %v5566
    %v5571 = vadd.f32 %v5469, %v5566
    %v5572 = vadd.f32 %v5470, %v5566
    %v5573 = vadd.f32 %v5471, %v5566
    %v5574 = vadd.f32 %v5472, %v5566
    %v5575 = vadd.f32 %v5473, %v5566
    %v5576 = vadd.f32 %v5474, %v5566
    %v5577 = vadd.f32 %v5475, %v5566
    %v5578 = vadd.f32 %v5476, %v5566
    %v5579 = vadd.f32 %v5477, %v5566
    %v5580 = vadd.f32 %v5478, %v5566
    %v5581 = vadd.f32 %v5479, %v5566
    %v5582 = vadd.f32 %v5480, %v5566
    %v5583 = vadd.f32 %v5481, %v5566
    %v5584 = vadd.f32 %v5482, %v5566
    %v5585 = vadd.f32 %v5483, %v5566
    %v5586 = vadd.f32 %v5484, %v5566
    %v5587 = vadd.f32 %v5485, %v5566
    %v5588 = vadd.f32 %v5486, %v5566
    %v5589 = vadd.f32 %v5487, %v5566
    %v5590 = vadd.f32 %v5488, %v5566
    %v5591 = vadd.f32 %v5489, %v5566
    %v5592 = vadd.f32 %v5490, %v5566
    %v5593 = vadd.f32 %v5491, %v5566
    %v5594 = vadd.f32 %v5492, %v5566
    %v5595 = vadd.f32 %v5493, %v5566
    %v5596 = vadd.f32 %v5494, %v5566
    %v5597 = vadd.f32 %v5495, %v5566
    %v5598 = vadd.f32 %v5496, %v5566
    %v5599 = vadd.f32 %v5497, %v5566
    %v5600 = vadd.f32 %v5498, %v5566
    %v5601 = vadd.f32 %v5499, %v5566
    %v5602 = vadd.f32 %v5500, %v5566
    %v5603 = vadd.f32 %v5501, %v5566
    %v5604 = vadd.f32 %v5502, %v5566
    %v5605 = vadd.f32 %v5503, %v5566
    %v5606 = vadd.f32 %v5504, %v5566
    %v5607 = vadd.f32 %v5505, %v5566
    %v5608 = vadd.f32 %v5506, %v5566
    %v5609 = vadd.f32 %v5507, %v5566
    %v5610 = vadd.f32 %v5508, %v5566
    %v5611 = vadd.f32 %v5509, %v5566
    %v5612 = vadd.f32 %v5510, %v5566
    %v5613 = vadd.f32 %v5511, %v5566
    %v5614 = vadd.f32 %v5512, %v5566
    %v5615 = vadd.f32 %v5513, %v5566
    %v5616 = vadd.f32 %v5514, %v5566
    %v5617 = vadd.f32 %v5515, %v5566
    %v5618 = vadd.f32 %v5516, %v5566
    %v5619 = vadd.f32 %v5517, %v5566
    %v5620 = vadd.f32 %v5518, %v5566
    %v5621 = vadd.f32 %v5519, %v5566
    %v5622 = vadd.f32 %v5520, %v5566
    %v5623 = vadd.f32 %v5521, %v5566
    %v5624 = vadd.f32 %v5522, %v5566
    %v5625 = vadd.f32 %v5523, %v5566
    %v5626 = vadd.f32 %v5524, %v5566
    %v5627 = vadd.f32 %v5525, %v5566
    %v5628 = vadd.f32 %v5526, %v5566
    %v5629 = vadd.f32 %v5527, %v5566
    %v5630 = vadd.f32 %v5528, %v5566
    %v5631 = vadd.f32 %v5529, %v5566
    %v5632 = vadd.f32 %v5530, %v5566
    %v5633 = vadd.f32 %v5531, %v5566
    %v5634 = vadd.f32 %v5532, %v5566
    %v5635 = vadd.f32 %v5533, %v5566
    %v5636 = vadd.f32 %v5534, %v5566
    %v5637 = vadd.f32 %v5535, %v5566
    %v5638 = vadd.f32 %v5536, %v5566
    %v5639 = vadd.f32 %v5537, %v5566
    %v5640 = vadd.f32 %v5538, %v5566
    %v5641 = vadd.f32 %v5539, %v5566
    %v5642 = vadd.f32 %v5540, %v5566
    %v5643 = vadd.f32 %v5541, %v5566
    %v5644 = vadd.f32 %v5542, %v5566
    %v5645 = vadd.f32 %v5543, %v5566
    %v5646 = vadd.f32 %v5544, %v5566
    %v5647 = vadd.f32 %v5545, %v5566
    %v5648 = vadd.f32 %v5546, %v5566
    %v5649 = vadd.f32 %v5547, %v5566
    %v5650 = vadd.f32 %v5548, %v5566
    %v5651 = vadd.f32 %v5549, %v5566
    %v5652 = vadd.f32 %v5550, %v5566
    %v5653 = vadd.f32 %v5551, %v5566
    %v5654 = vadd.f32 %v5552, %v5566
    %v5655 = vadd.f32 %v5553, %v5566
    %v5656 = vadd.f32 %v5554, %v5566
    %v5657 = vadd.f32 %v5555, %v5566
    %v5658 = vadd.f32 %v5556, %v5566
    %v5659 = vadd.f32 %v5557, %v5566
    %v5660 = vadd.f32 %v5558, %v5566
    %v5661 = vadd.f32 %v5559, %v5566
    %v5662 = vadd.f32 %v5560, %v5566
    %v5663 = vadd.f32 %v5561, %v5566
    %s5664 = sld [smem:[#allocation2]]
    %v5665 = vstv %s5664
    %v5666 = vmul.f32 %v5665, %v5568
    %v5667 = vmul.f32 %v5665, %v5569
    %v5668 = vmul.f32 %v5665, %v5570
    %v5669 = vmul.f32 %v5665, %v5571
    %v5670 = vmul.f32 %v5665, %v5572
    %v5671 = vmul.f32 %v5665, %v5573
    %v5672 = vmul.f32 %v5665, %v5574
    %v5673 = vmul.f32 %v5665, %v5575
    %v5674 = vmul.f32 %v5665, %v5576
    %v5675 = vmul.f32 %v5665, %v5577
    %v5676 = vmul.f32 %v5665, %v5578
    %v5677 = vmul.f32 %v5665, %v5579
    %s5678 = sld [smem:[#allocation2 + $0x1]]
    %v5679 = vstv %s5678
    %v5680 = vmul.f32 %v5679, %v5580
    %v5681 = vmul.f32 %v5679, %v5581
    %v5682 = vmul.f32 %v5679, %v5582
    %v5683 = vmul.f32 %v5679, %v5583
    %v5684 = vmul.f32 %v5679, %v5584
    %v5685 = vmul.f32 %v5679, %v5585
    %v5686 = vmul.f32 %v5679, %v5586
    %v5687 = vmul.f32 %v5679, %v5587
    %v5688 = vmul.f32 %v5679, %v5588
    %v5689 = vmul.f32 %v5679, %v5589
    %v5690 = vmul.f32 %v5679, %v5590
    %v5691 = vmul.f32 %v5679, %v5591
    %v5692 = vadd.f32 %v5666, %v5680
    %v5693 = vadd.f32 %v5667, %v5681
    %v5694 = vadd.f32 %v5668, %v5682
    %v5695 = vadd.f32 %v5669, %v5683
    %v5696 = vadd.f32 %v5670, %v5684
    %v5697 = vadd.f32 %v5671, %v5685
    %v5698 = vadd.f32 %v5672, %v5686
    %v5699 = vadd.f32 %v5673, %v5687
    %v5700 = vadd.f32 %v5674, %v5688
    %v5701 = vadd.f32 %v5675, %v5689
    %v5702 = vadd.f32 %v5676, %v5690
    %v5703 = vadd.f32 %v5677, %v5691
    %s5704 = sld [smem:[#allocation2 + $0x2]]
    %v5705 = vstv %s5704
    %v5706 = vmul.f32 %v5705, %v5592
    %v5707 = vmul.f32 %v5705, %v5593
    %v5708 = vmul.f32 %v5705, %v5594
    %v5709 = vmul.f32 %v5705, %v5595
    %v5710 = vmul.f32 %v5705, %v5596
    %v5711 = vmul.f32 %v5705, %v5597
    %v5712 = vmul.f32 %v5705, %v5598
    %v5713 = vmul.f32 %v5705, %v5599
    %v5714 = vmul.f32 %v5705, %v5600
    %v5715 = vmul.f32 %v5705, %v5601
    %v5716 = vmul.f32 %v5705, %v5602
    %v5717 = vmul.f32 %v5705, %v5603
    %v5718 = vadd.f32 %v5692, %v5706
    %v5719 = vadd.f32 %v5693, %v5707
    %v5720 = vadd.f32 %v5694, %v5708
    %v5721 = vadd.f32 %v5695, %v5709
    %v5722 = vadd.f32 %v5696, %v5710
    %v5723 = vadd.f32 %v5697, %v5711
    %v5724 = vadd.f32 %v5698, %v5712
    %v5725 = vadd.f32 %v5699, %v5713
    %v5726 = vadd.f32 %v5700, %v5714
    %v5727 = vadd.f32 %v5701, %v5715
    %v5728 = vadd.f32 %v5702, %v5716
    %v5729 = vadd.f32 %v5703, %v5717
    %s5730 = sld [smem:[#allocation2 + $0x3]]
    %v5731 = vstv %s5730
    %v5732 = vmul.f32 %v5731, %v5604
    %v5733 = vmul.f32 %v5731, %v5605
    %v5734 = vmul.f32 %v5731, %v5606
    %v5735 = vmul.f32 %v5731, %v5607
    %v5736 = vmul.f32 %v5731, %v5608
    %v5737 = vmul.f32 %v5731, %v5609
    %v5738 = vmul.f32 %v5731, %v5610
    %v5739 = vmul.f32 %v5731, %v5611
    %v5740 = vmul.f32 %v5731, %v5612
    %v5741 = vmul.f32 %v5731, %v5613
    %v5742 = vmul.f32 %v5731, %v5614
    %v5743 = vmul.f32 %v5731, %v5615
    %v5744 = vadd.f32 %v5718, %v5732
    %v5745 = vadd.f32 %v5719, %v5733
    %v5746 = vadd.f32 %v5720, %v5734
    %v5747 = vadd.f32 %v5721, %v5735
    %v5748 = vadd.f32 %v5722, %v5736
    %v5749 = vadd.f32 %v5723, %v5737
    %v5750 = vadd.f32 %v5724, %v5738
    %v5751 = vadd.f32 %v5725, %v5739
    %v5752 = vadd.f32 %v5726, %v5740
    %v5753 = vadd.f32 %v5727, %v5741
    %v5754 = vadd.f32 %v5728, %v5742
    %v5755 = vadd.f32 %v5729, %v5743
    %s5756 = sld [smem:[#allocation2 + $0x4]]
    %v5757 = vstv %s5756
    %v5758 = vmul.f32 %v5757, %v5616
    %v5759 = vmul.f32 %v5757, %v5617
    %v5760 = vmul.f32 %v5757, %v5618
    %v5761 = vmul.f32 %v5757, %v5619
    %v5762 = vmul.f32 %v5757, %v5620
    %v5763 = vmul.f32 %v5757, %v5621
    %v5764 = vmul.f32 %v5757, %v5622
    %v5765 = vmul.f32 %v5757, %v5623
    %v5766 = vmul.f32 %v5757, %v5624
    %v5767 = vmul.f32 %v5757, %v5625
    %v5768 = vmul.f32 %v5757, %v5626
    %v5769 = vmul.f32 %v5757, %v5627
    %v5770 = vadd.f32 %v5744, %v5758
    %v5771 = vadd.f32 %v5745, %v5759
    %v5772 = vadd.f32 %v5746, %v5760
    %v5773 = vadd.f32 %v5747, %v5761
    %v5774 = vadd.f32 %v5748, %v5762
    %v5775 = vadd.f32 %v5749, %v5763
    %v5776 = vadd.f32 %v5750, %v5764
    %v5777 = vadd.f32 %v5751, %v5765
    %v5778 = vadd.f32 %v5752, %v5766
    %v5779 = vadd.f32 %v5753, %v5767
    %v5780 = vadd.f32 %v5754, %v5768
    %v5781 = vadd.f32 %v5755, %v5769
    %s5782 = sld [smem:[#allocation2 + $0x5]]
    %v5783 = vstv %s5782
    %v5784 = vmul.f32 %v5783, %v5628
    %v5785 = vmul.f32 %v5783, %v5629
    %v5786 = vmul.f32 %v5783, %v5630
    %v5787 = vmul.f32 %v5783, %v5631
    %v5788 = vmul.f32 %v5783, %v5632
    %v5789 = vmul.f32 %v5783, %v5633
    %v5790 = vmul.f32 %v5783, %v5634
    %v5791 = vmul.f32 %v5783, %v5635
    %v5792 = vmul.f32 %v5783, %v5636
    %v5793 = vmul.f32 %v5783, %v5637
    %v5794 = vmul.f32 %v5783, %v5638
    %v5795 = vmul.f32 %v5783, %v5639
    %v5796 = vadd.f32 %v5770, %v5784
    %v5797 = vadd.f32 %v5771, %v5785
    %v5798 = vadd.f32 %v5772, %v5786
    %v5799 = vadd.f32 %v5773, %v5787
    %v5800 = vadd.f32 %v5774, %v5788
    %v5801 = vadd.f32 %v5775, %v5789
    %v5802 = vadd.f32 %v5776, %v5790
    %v5803 = vadd.f32 %v5777, %v5791
    %v5804 = vadd.f32 %v5778, %v5792
    %v5805 = vadd.f32 %v5779, %v5793
    %v5806 = vadd.f32 %v5780, %v5794
    %v5807 = vadd.f32 %v5781, %v5795
    %s5808 = sld [smem:[#allocation2 + $0x6]]
    %v5809 = vstv %s5808
    %v5810 = vmul.f32 %v5809, %v5640
    %v5811 = vmul.f32 %v5809, %v5641
    %v5812 = vmul.f32 %v5809, %v5642
    %v5813 = vmul.f32 %v5809, %v5643
    %v5814 = vmul.f32 %v5809, %v5644
    %v5815 = vmul.f32 %v5809, %v5645
    %v5816 = vmul.f32 %v5809, %v5646
    %v5817 = vmul.f32 %v5809, %v5647
    %v5818 = vmul.f32 %v5809, %v5648
    %v5819 = vmul.f32 %v5809, %v5649
    %v5820 = vmul.f32 %v5809, %v5650
    %v5821 = vmul.f32 %v5809, %v5651
    %v5822 = vadd.f32 %v5796, %v5810
    %v5823 = vadd.f32 %v5797, %v5811
    %v5824 = vadd.f32 %v5798, %v5812
    %v5825 = vadd.f32 %v5799, %v5813
    %v5826 = vadd.f32 %v5800, %v5814
    %v5827 = vadd.f32 %v5801, %v5815
    %v5828 = vadd.f32 %v5802, %v5816
    %v5829 = vadd.f32 %v5803, %v5817
    %v5830 = vadd.f32 %v5804, %v5818
    %v5831 = vadd.f32 %v5805, %v5819
    %v5832 = vadd.f32 %v5806, %v5820
    %v5833 = vadd.f32 %v5807, %v5821
    %s5834 = sld [smem:[#allocation2 + $0x7]]
    %v5835 = vstv %s5834
    %v5836 = vmul.f32 %v5835, %v5652
    %v5837 = vmul.f32 %v5835, %v5653
    %v5838 = vmul.f32 %v5835, %v5654
    %v5839 = vmul.f32 %v5835, %v5655
    %v5840 = vmul.f32 %v5835, %v5656
    %v5841 = vmul.f32 %v5835, %v5657
    %v5842 = vmul.f32 %v5835, %v5658
    %v5843 = vmul.f32 %v5835, %v5659
    %v5844 = vmul.f32 %v5835, %v5660
    %v5845 = vmul.f32 %v5835, %v5661
    %v5846 = vmul.f32 %v5835, %v5662
    %v5847 = vmul.f32 %v5835, %v5663
    %v5848 = vadd.f32 %v5822, %v5836
    %v5849 = vadd.f32 %v5823, %v5837
    %v5850 = vadd.f32 %v5824, %v5838
    %v5851 = vadd.f32 %v5825, %v5839
    %v5852 = vadd.f32 %v5826, %v5840
    %v5853 = vadd.f32 %v5827, %v5841
    %v5854 = vadd.f32 %v5828, %v5842
    %v5855 = vadd.f32 %v5829, %v5843
    %v5856 = vadd.f32 %v5830, %v5844
    %v5857 = vadd.f32 %v5831, %v5845
    %v5858 = vadd.f32 %v5832, %v5846
    %v5859 = vadd.f32 %v5833, %v5847
    %s5860 = sld [smem:[#allocation4]]
    %s5861 = sadd.f32 %s5860, 1.0
    %v5862 = vstv %s5861
    %v5863 = vadd.f32 %v5848, %v5862
    %v5864 = vadd.f32 %v5849, %v5862
    %v5865 = vadd.f32 %v5850, %v5862
    %v5866 = vadd.f32 %v5851, %v5862
    %v5867 = vadd.f32 %v5852, %v5862
    %v5868 = vadd.f32 %v5853, %v5862
    %v5869 = vadd.f32 %v5854, %v5862
    %v5870 = vadd.f32 %v5855, %v5862
    %v5871 = vadd.f32 %v5856, %v5862
    %v5872 = vadd.f32 %v5857, %v5862
    %v5873 = vadd.f32 %v5858, %v5862
    %v5874 = vadd.f32 %v5859, %v5862
    %s5875 = sld [smem:[#allocation2 + $0x80]]
    %v5876 = vstv %s5875
    %v5877 = vmul.f32 %v5876, %v5568
    %v5878 = vmul.f32 %v5876, %v5569
    %v5879 = vmul.f32 %v5876, %v5570
    %v5880 = vmul.f32 %v5876, %v5571
    %v5881 = vmul.f32 %v5876, %v5572
    %v5882 = vmul.f32 %v5876, %v5573
    %v5883 = vmul.f32 %v5876, %v5574
    %v5884 = vmul.f32 %v5876, %v5575
    %v5885 = vmul.f32 %v5876, %v5576
    %v5886 = vmul.f32 %v5876, %v5577
    %v5887 = vmul.f32 %v5876, %v5578
    %v5888 = vmul.f32 %v5876, %v5579
    %s5889 = sld [smem:[#allocation2 + $0x81]]
    %v5890 = vstv %s5889
    %v5891 = vmul.f32 %v5890, %v5580
    %v5892 = vmul.f32 %v5890, %v5581
    %v5893 = vmul.f32 %v5890, %v5582
    %v5894 = vmul.f32 %v5890, %v5583
    %v5895 = vmul.f32 %v5890, %v5584
    %v5896 = vmul.f32 %v5890, %v5585
    %v5897 = vmul.f32 %v5890, %v5586
    %v5898 = vmul.f32 %v5890, %v5587
    %v5899 = vmul.f32 %v5890, %v5588
    %v5900 = vmul.f32 %v5890, %v5589
    %v5901 = vmul.f32 %v5890, %v5590
    %v5902 = vmul.f32 %v5890, %v5591
    %v5903 = vadd.f32 %v5877, %v5891
    %v5904 = vadd.f32 %v5878, %v5892
    %v5905 = vadd.f32 %v5879, %v5893
    %v5906 = vadd.f32 %v5880, %v5894
    %v5907 = vadd.f32 %v5881, %v5895
    %v5908 = vadd.f32 %v5882, %v5896
    %v5909 = vadd.f32 %v5883, %v5897
    %v5910 = vadd.f32 %v5884, %v5898
    %v5911 = vadd.f32 %v5885, %v5899
    %v5912 = vadd.f32 %v5886, %v5900
    %v5913 = vadd.f32 %v5887, %v5901
    %v5914 = vadd.f32 %v5888, %v5902
    %s5915 = sld [smem:[#allocation2 + $0x82]]
    %v5916 = vstv %s5915
    %v5917 = vmul.f32 %v5916, %v5592
    %v5918 = vmul.f32 %v5916, %v5593
    %v5919 = vmul.f32 %v5916, %v5594
    %v5920 = vmul.f32 %v5916, %v5595
    %v5921 = vmul.f32 %v5916, %v5596
    %v5922 = vmul.f32 %v5916, %v5597
    %v5923 = vmul.f32 %v5916, %v5598
    %v5924 = vmul.f32 %v5916, %v5599
    %v5925 = vmul.f32 %v5916, %v5600
    %v5926 = vmul.f32 %v5916, %v5601
    %v5927 = vmul.f32 %v5916, %v5602
    %v5928 = vmul.f32 %v5916, %v5603
    %v5929 = vadd.f32 %v5903, %v5917
    %v5930 = vadd.f32 %v5904, %v5918
    %v5931 = vadd.f32 %v5905, %v5919
    %v5932 = vadd.f32 %v5906, %v5920
    %v5933 = vadd.f32 %v5907, %v5921
    %v5934 = vadd.f32 %v5908, %v5922
    %v5935 = vadd.f32 %v5909, %v5923
    %v5936 = vadd.f32 %v5910, %v5924
    %v5937 = vadd.f32 %v5911, %v5925
    %v5938 = vadd.f32 %v5912, %v5926
    %v5939 = vadd.f32 %v5913, %v5927
    %v5940 = vadd.f32 %v5914, %v5928
    %s5941 = sld [smem:[#allocation2 + $0x83]]
    %v5942 = vstv %s5941
    %v5943 = vmul.f32 %v5942, %v5604
    %v5944 = vmul.f32 %v5942, %v5605
    %v5945 = vmul.f32 %v5942, %v5606
    %v5946 = vmul.f32 %v5942, %v5607
    %v5947 = vmul.f32 %v5942, %v5608
    %v5948 = vmul.f32 %v5942, %v5609
    %v5949 = vmul.f32 %v5942, %v5610
    %v5950 = vmul.f32 %v5942, %v5611
    %v5951 = vmul.f32 %v5942, %v5612
    %v5952 = vmul.f32 %v5942, %v5613
    %v5953 = vmul.f32 %v5942, %v5614
    %v5954 = vmul.f32 %v5942, %v5615
    %v5955 = vadd.f32 %v5929, %v5943
    %v5956 = vadd.f32 %v5930, %v5944
    %v5957 = vadd.f32 %v5931, %v5945
    %v5958 = vadd.f32 %v5932, %v5946
    %v5959 = vadd.f32 %v5933, %v5947
    %v5960 = vadd.f32 %v5934, %v5948
    %v5961 = vadd.f32 %v5935, %v5949
    %v5962 = vadd.f32 %v5936, %v5950
    %v5963 = vadd.f32 %v5937, %v5951
    %v5964 = vadd.f32 %v5938, %v5952
    %v5965 = vadd.f32 %v5939, %v5953
    %v5966 = vadd.f32 %v5940, %v5954
    %s5967 = sld [smem:[#allocation2 + $0x84]]
    %v5968 = vstv %s5967
    %v5969 = vmul.f32 %v5968, %v5616
    %v5970 = vmul.f32 %v5968, %v5617
    %v5971 = vmul.f32 %v5968, %v5618
    %v5972 = vmul.f32 %v5968, %v5619
    %v5973 = vmul.f32 %v5968, %v5620
    %v5974 = vmul.f32 %v5968, %v5621
    %v5975 = vmul.f32 %v5968, %v5622
    %v5976 = vmul.f32 %v5968, %v5623
    %v5977 = vmul.f32 %v5968, %v5624
    %v5978 = vmul.f32 %v5968, %v5625
    %v5979 = vmul.f32 %v5968, %v5626
    %v5980 = vmul.f32 %v5968, %v5627
    %v5981 = vadd.f32 %v5955, %v5969
    %v5982 = vadd.f32 %v5956, %v5970
    %v5983 = vadd.f32 %v5957, %v5971
    %v5984 = vadd.f32 %v5958, %v5972
    %v5985 = vadd.f32 %v5959, %v5973
    %v5986 = vadd.f32 %v5960, %v5974
    %v5987 = vadd.f32 %v5961, %v5975
    %v5988 = vadd.f32 %v5962, %v5976
    %v5989 = vadd.f32 %v5963, %v5977
    %v5990 = vadd.f32 %v5964, %v5978
    %v5991 = vadd.f32 %v5965, %v5979
    %v5992 = vadd.f32 %v5966, %v5980
    %s5993 = sld [smem:[#allocation2 + $0x85]]
    %v5994 = vstv %s5993
    %v5995 = vmul.f32 %v5994, %v5628
    %v5996 = vmul.f32 %v5994, %v5629
    %v5997 = vmul.f32 %v5994, %v5630
    %v5998 = vmul.f32 %v5994, %v5631
    %v5999 = vmul.f32 %v5994, %v5632
    %v6000 = vmul.f32 %v5994, %v5633
    %v6001 = vmul.f32 %v5994, %v5634
    %v6002 = vmul.f32 %v5994, %v5635
    %v6003 = vmul.f32 %v5994, %v5636
    %v6004 = vmul.f32 %v5994, %v5637
    %v6005 = vmul.f32 %v5994, %v5638
    %v6006 = vmul.f32 %v5994, %v5639
    %v6007 = vadd.f32 %v5981, %v5995
    %v6008 = vadd.f32 %v5982, %v5996
    %v6009 = vadd.f32 %v5983, %v5997
    %v6010 = vadd.f32 %v5984, %v5998
    %v6011 = vadd.f32 %v5985, %v5999
    %v6012 = vadd.f32 %v5986, %v6000
    %v6013 = vadd.f32 %v5987, %v6001
    %v6014 = vadd.f32 %v5988, %v6002
    %v6015 = vadd.f32 %v5989, %v6003
    %v6016 = vadd.f32 %v5990, %v6004
    %v6017 = vadd.f32 %v5991, %v6005
    %v6018 = vadd.f32 %v5992, %v6006
    %s6019 = sld [smem:[#allocation2 + $0x86]]
    %v6020 = vstv %s6019
    %v6021 = vmul.f32 %v6020, %v5640
    %v6022 = vmul.f32 %v6020, %v5641
    %v6023 = vmul.f32 %v6020, %v5642
    %v6024 = vmul.f32 %v6020, %v5643
    %v6025 = vmul.f32 %v6020, %v5644
    %v6026 = vmul.f32 %v6020, %v5645
    %v6027 = vmul.f32 %v6020, %v5646
    %v6028 = vmul.f32 %v6020, %v5647
    %v6029 = vmul.f32 %v6020, %v5648
    %v6030 = vmul.f32 %v6020, %v5649
    %v6031 = vmul.f32 %v6020, %v5650
    %v6032 = vmul.f32 %v6020, %v5651
    %v6033 = vadd.f32 %v6007, %v6021
    %v6034 = vadd.f32 %v6008, %v6022
    %v6035 = vadd.f32 %v6009, %v6023
    %v6036 = vadd.f32 %v6010, %v6024
    %v6037 = vadd.f32 %v6011, %v6025
    %v6038 = vadd.f32 %v6012, %v6026
    %v6039 = vadd.f32 %v6013, %v6027
    %v6040 = vadd.f32 %v6014, %v6028
    %v6041 = vadd.f32 %v6015, %v6029
    %v6042 = vadd.f32 %v6016, %v6030
    %v6043 = vadd.f32 %v6017, %v6031
    %v6044 = vadd.f32 %v6018, %v6032
    %s6045 = sld [smem:[#allocation2 + $0x87]]
    %v6046 = vstv %s6045
    %v6047 = vmul.f32 %v6046, %v5652
    %v6048 = vmul.f32 %v6046, %v5653
    %v6049 = vmul.f32 %v6046, %v5654
    %v6050 = vmul.f32 %v6046, %v5655
    %v6051 = vmul.f32 %v6046, %v5656
    %v6052 = vmul.f32 %v6046, %v5657
    %v6053 = vmul.f32 %v6046, %v5658
    %v6054 = vmul.f32 %v6046, %v5659
    %v6055 = vmul.f32 %v6046, %v5660
    %v6056 = vmul.f32 %v6046, %v5661
    %v6057 = vmul.f32 %v6046, %v5662
    %v6058 = vmul.f32 %v6046, %v5663
    %v6059 = vadd.f32 %v6033, %v6047
    %v6060 = vadd.f32 %v6034, %v6048
    %v6061 = vadd.f32 %v6035, %v6049
    %v6062 = vadd.f32 %v6036, %v6050
    %v6063 = vadd.f32 %v6037, %v6051
    %v6064 = vadd.f32 %v6038, %v6052
    %v6065 = vadd.f32 %v6039, %v6053
    %v6066 = vadd.f32 %v6040, %v6054
    %v6067 = vadd.f32 %v6041, %v6055
    %v6068 = vadd.f32 %v6042, %v6056
    %v6069 = vadd.f32 %v6043, %v6057
    %v6070 = vadd.f32 %v6044, %v6058
    %s6071 = sld [smem:[#allocation4 + $0x1]]
    %s6072 = sadd.f32 %s6071, 1.0
    %v6073 = vstv %s6072
    %v6074 = vadd.f32 %v6059, %v6073
    %v6075 = vadd.f32 %v6060, %v6073
    %v6076 = vadd.f32 %v6061, %v6073
    %v6077 = vadd.f32 %v6062, %v6073
    %v6078 = vadd.f32 %v6063, %v6073
    %v6079 = vadd.f32 %v6064, %v6073
    %v6080 = vadd.f32 %v6065, %v6073
    %v6081 = vadd.f32 %v6066, %v6073
    %v6082 = vadd.f32 %v6067, %v6073
    %v6083 = vadd.f32 %v6068, %v6073
    %v6084 = vadd.f32 %v6069, %v6073
    %v6085 = vadd.f32 %v6070, %v6073
    %s6086 = sld [smem:[#allocation2 + $0x100]]
    %v6087 = vstv %s6086
    %v6088 = vmul.f32 %v6087, %v5568
    %v6089 = vmul.f32 %v6087, %v5569
    %v6090 = vmul.f32 %v6087, %v5570
    %v6091 = vmul.f32 %v6087, %v5571
    %v6092 = vmul.f32 %v6087, %v5572
    %v6093 = vmul.f32 %v6087, %v5573
    %v6094 = vmul.f32 %v6087, %v5574
    %v6095 = vmul.f32 %v6087, %v5575
    %v6096 = vmul.f32 %v6087, %v5576
    %v6097 = vmul.f32 %v6087, %v5577
    %v6098 = vmul.f32 %v6087, %v5578
    %v6099 = vmul.f32 %v6087, %v5579
    %s6100 = sld [smem:[#allocation2 + $0x101]]
    %v6101 = vstv %s6100
    %v6102 = vmul.f32 %v6101, %v5580
    %v6103 = vmul.f32 %v6101, %v5581
    %v6104 = vmul.f32 %v6101, %v5582
    %v6105 = vmul.f32 %v6101, %v5583
    %v6106 = vmul.f32 %v6101, %v5584
    %v6107 = vmul.f32 %v6101, %v5585
    %v6108 = vmul.f32 %v6101, %v5586
    %v6109 = vmul.f32 %v6101, %v5587
    %v6110 = vmul.f32 %v6101, %v5588
    %v6111 = vmul.f32 %v6101, %v5589
    %v6112 = vmul.f32 %v6101, %v5590
    %v6113 = vmul.f32 %v6101, %v5591
    %v6114 = vadd.f32 %v6088, %v6102
    %v6115 = vadd.f32 %v6089, %v6103
    %v6116 = vadd.f32 %v6090, %v6104
    %v6117 = vadd.f32 %v6091, %v6105
    %v6118 = vadd.f32 %v6092, %v6106
    %v6119 = vadd.f32 %v6093, %v6107
    %v6120 = vadd.f32 %v6094, %v6108
    %v6121 = vadd.f32 %v6095, %v6109
    %v6122 = vadd.f32 %v6096, %v6110
    %v6123 = vadd.f32 %v6097, %v6111
    %v6124 = vadd.f32 %v6098, %v6112
    %v6125 = vadd.f32 %v6099, %v6113
    %s6126 = sld [smem:[#allocation2 + $0x102]]
    %v6127 = vstv %s6126
    %v6128 = vmul.f32 %v6127, %v5592
    %v6129 = vmul.f32 %v6127, %v5593
    %v6130 = vmul.f32 %v6127, %v5594
    %v6131 = vmul.f32 %v6127, %v5595
    %v6132 = vmul.f32 %v6127, %v5596
    %v6133 = vmul.f32 %v6127, %v5597
    %v6134 = vmul.f32 %v6127, %v5598
    %v6135 = vmul.f32 %v6127, %v5599
    %v6136 = vmul.f32 %v6127, %v5600
    %v6137 = vmul.f32 %v6127, %v5601
    %v6138 = vmul.f32 %v6127, %v5602
    %v6139 = vmul.f32 %v6127, %v5603
    %v6140 = vadd.f32 %v6114, %v6128
    %v6141 = vadd.f32 %v6115, %v6129
    %v6142 = vadd.f32 %v6116, %v6130
    %v6143 = vadd.f32 %v6117, %v6131
    %v6144 = vadd.f32 %v6118, %v6132
    %v6145 = vadd.f32 %v6119, %v6133
    %v6146 = vadd.f32 %v6120, %v6134
    %v6147 = vadd.f32 %v6121, %v6135
    %v6148 = vadd.f32 %v6122, %v6136
    %v6149 = vadd.f32 %v6123, %v6137
    %v6150 = vadd.f32 %v6124, %v6138
    %v6151 = vadd.f32 %v6125, %v6139
    %s6152 = sld [smem:[#allocation2 + $0x103]]
    %v6153 = vstv %s6152
    %v6154 = vmul.f32 %v6153, %v5604
    %v6155 = vmul.f32 %v6153, %v5605
    %v6156 = vmul.f32 %v6153, %v5606
    %v6157 = vmul.f32 %v6153, %v5607
    %v6158 = vmul.f32 %v6153, %v5608
    %v6159 = vmul.f32 %v6153, %v5609
    %v6160 = vmul.f32 %v6153, %v5610
    %v6161 = vmul.f32 %v6153, %v5611
    %v6162 = vmul.f32 %v6153, %v5612
    %v6163 = vmul.f32 %v6153, %v5613
    %v6164 = vmul.f32 %v6153, %v5614
    %v6165 = vmul.f32 %v6153, %v5615
    %v6166 = vadd.f32 %v6140, %v6154
    %v6167 = vadd.f32 %v6141, %v6155
    %v6168 = vadd.f32 %v6142, %v6156
    %v6169 = vadd.f32 %v6143, %v6157
    %v6170 = vadd.f32 %v6144, %v6158
    %v6171 = vadd.f32 %v6145, %v6159
    %v6172 = vadd.f32 %v6146, %v6160
    %v6173 = vadd.f32 %v6147, %v6161
    %v6174 = vadd.f32 %v6148, %v6162
    %v6175 = vadd.f32 %v6149, %v6163
    %v6176 = vadd.f32 %v6150, %v6164
    %v6177 = vadd.f32 %v6151, %v6165
    %s6178 = sld [smem:[#allocation2 + $0x104]]
    %v6179 = vstv %s6178
    %v6180 = vmul.f32 %v6179, %v5616
    %v6181 = vmul.f32 %v6179, %v5617
    %v6182 = vmul.f32 %v6179, %v5618
    %v6183 = vmul.f32 %v6179, %v5619
    %v6184 = vmul.f32 %v6179, %v5620
    %v6185 = vmul.f32 %v6179, %v5621
    %v6186 = vmul.f32 %v6179, %v5622
    %v6187 = vmul.f32 %v6179, %v5623
    %v6188 = vmul.f32 %v6179, %v5624
    %v6189 = vmul.f32 %v6179, %v5625
    %v6190 = vmul.f32 %v6179, %v5626
    %v6191 = vmul.f32 %v6179, %v5627
    %v6192 = vadd.f32 %v6166, %v6180
    %v6193 = vadd.f32 %v6167, %v6181
    %v6194 = vadd.f32 %v6168, %v6182
    %v6195 = vadd.f32 %v6169, %v6183
    %v6196 = vadd.f32 %v6170, %v6184
    %v6197 = vadd.f32 %v6171, %v6185
    %v6198 = vadd.f32 %v6172, %v6186
    %v6199 = vadd.f32 %v6173, %v6187
    %v6200 = vadd.f32 %v6174, %v6188
    %v6201 = vadd.f32 %v6175, %v6189
    %v6202 = vadd.f32 %v6176, %v6190
    %v6203 = vadd.f32 %v6177, %v6191
    %s6204 = sld [smem:[#allocation2 + $0x105]]
    %v6205 = vstv %s6204
    %v6206 = vmul.f32 %v6205, %v5628
    %v6207 = vmul.f32 %v6205, %v5629
    %v6208 = vmul.f32 %v6205, %v5630
    %v6209 = vmul.f32 %v6205, %v5631
    %v6210 = vmul.f32 %v6205, %v5632
    %v6211 = vmul.f32 %v6205, %v5633
    %v6212 = vmul.f32 %v6205, %v5634
    %v6213 = vmul.f32 %v6205, %v5635
    %v6214 = vmul.f32 %v6205, %v5636
    %v6215 = vmul.f32 %v6205, %v5637
    %v6216 = vmul.f32 %v6205, %v5638
    %v6217 = vmul.f32 %v6205, %v5639
    %v6218 = vadd.f32 %v6192, %v6206
    %v6219 = vadd.f32 %v6193, %v6207
    %v6220 = vadd.f32 %v6194, %v6208
    %v6221 = vadd.f32 %v6195, %v6209
    %v6222 = vadd.f32 %v6196, %v6210
    %v6223 = vadd.f32 %v6197, %v6211
    %v6224 = vadd.f32 %v6198, %v6212
    %v6225 = vadd.f32 %v6199, %v6213
    %v6226 = vadd.f32 %v6200, %v6214
    %v6227 = vadd.f32 %v6201, %v6215
    %v6228 = vadd.f32 %v6202, %v6216
    %v6229 = vadd.f32 %v6203, %v6217
    %s6230 = sld [smem:[#allocation2 + $0x106]]
    %v6231 = vstv %s6230
    %v6232 = vmul.f32 %v6231, %v5640
    %v6233 = vmul.f32 %v6231, %v5641
    %v6234 = vmul.f32 %v6231, %v5642
    %v6235 = vmul.f32 %v6231, %v5643
    %v6236 = vmul.f32 %v6231, %v5644
    %v6237 = vmul.f32 %v6231, %v5645
    %v6238 = vmul.f32 %v6231, %v5646
    %v6239 = vmul.f32 %v6231, %v5647
    %v6240 = vmul.f32 %v6231, %v5648
    %v6241 = vmul.f32 %v6231, %v5649
    %v6242 = vmul.f32 %v6231, %v5650
    %v6243 = vmul.f32 %v6231, %v5651
    %v6244 = vadd.f32 %v6218, %v6232
    %v6245 = vadd.f32 %v6219, %v6233
    %v6246 = vadd.f32 %v6220, %v6234
    %v6247 = vadd.f32 %v6221, %v6235
    %v6248 = vadd.f32 %v6222, %v6236
    %v6249 = vadd.f32 %v6223, %v6237
    %v6250 = vadd.f32 %v6224, %v6238
    %v6251 = vadd.f32 %v6225, %v6239
    %v6252 = vadd.f32 %v6226, %v6240
    %v6253 = vadd.f32 %v6227, %v6241
    %v6254 = vadd.f32 %v6228, %v6242
    %v6255 = vadd.f32 %v6229, %v6243
    %s6256 = sld [smem:[#allocation2 + $0x107]]
    %v6257 = vstv %s6256
    %v6258 = vmul.f32 %v6257, %v5652
    %v6259 = vmul.f32 %v6257, %v5653
    %v6260 = vmul.f32 %v6257, %v5654
    %v6261 = vmul.f32 %v6257, %v5655
    %v6262 = vmul.f32 %v6257, %v5656
    %v6263 = vmul.f32 %v6257, %v5657
    %v6264 = vmul.f32 %v6257, %v5658
    %v6265 = vmul.f32 %v6257, %v5659
    %v6266 = vmul.f32 %v6257, %v5660
    %v6267 = vmul.f32 %v6257, %v5661
    %v6268 = vmul.f32 %v6257, %v5662
    %v6269 = vmul.f32 %v6257, %v5663
    %v6270 = vadd.f32 %v6244, %v6258
    %v6271 = vadd.f32 %v6245, %v6259
    %v6272 = vadd.f32 %v6246, %v6260
    %v6273 = vadd.f32 %v6247, %v6261
    %v6274 = vadd.f32 %v6248, %v6262
    %v6275 = vadd.f32 %v6249, %v6263
    %v6276 = vadd.f32 %v6250, %v6264
    %v6277 = vadd.f32 %v6251, %v6265
    %v6278 = vadd.f32 %v6252, %v6266
    %v6279 = vadd.f32 %v6253, %v6267
    %v6280 = vadd.f32 %v6254, %v6268
    %v6281 = vadd.f32 %v6255, %v6269
    %s6282 = sld [smem:[#allocation4 + $0x2]]
    %s6283 = sadd.f32 %s6282, 1.0
    %v6284 = vstv %s6283
    %v6285 = vadd.f32 %v6270, %v6284
    %v6286 = vadd.f32 %v6271, %v6284
    %v6287 = vadd.f32 %v6272, %v6284
    %v6288 = vadd.f32 %v6273, %v6284
    %v6289 = vadd.f32 %v6274, %v6284
    %v6290 = vadd.f32 %v6275, %v6284
    %v6291 = vadd.f32 %v6276, %v6284
    %v6292 = vadd.f32 %v6277, %v6284
    %v6293 = vadd.f32 %v6278, %v6284
    %v6294 = vadd.f32 %v6279, %v6284
    %v6295 = vadd.f32 %v6280, %v6284
    %v6296 = vadd.f32 %v6281, %v6284
    %s6297 = sld [smem:[#allocation2 + $0x180]]
    %v6298 = vstv %s6297
    %v6299 = vmul.f32 %v6298, %v5568
    %v6300 = vmul.f32 %v6298, %v5569
    %v6301 = vmul.f32 %v6298, %v5570
    %v6302 = vmul.f32 %v6298, %v5571
    %v6303 = vmul.f32 %v6298, %v5572
    %v6304 = vmul.f32 %v6298, %v5573
    %v6305 = vmul.f32 %v6298, %v5574
    %v6306 = vmul.f32 %v6298, %v5575
    %v6307 = vmul.f32 %v6298, %v5576
    %v6308 = vmul.f32 %v6298, %v5577
    %v6309 = vmul.f32 %v6298, %v5578
    %v6310 = vmul.f32 %v6298, %v5579
    %s6311 = sld [smem:[#allocation2 + $0x181]]
    %v6312 = vstv %s6311
    %v6313 = vmul.f32 %v6312, %v5580
    %v6314 = vmul.f32 %v6312, %v5581
    %v6315 = vmul.f32 %v6312, %v5582
    %v6316 = vmul.f32 %v6312, %v5583
    %v6317 = vmul.f32 %v6312, %v5584
    %v6318 = vmul.f32 %v6312, %v5585
    %v6319 = vmul.f32 %v6312, %v5586
    %v6320 = vmul.f32 %v6312, %v5587
    %v6321 = vmul.f32 %v6312, %v5588
    %v6322 = vmul.f32 %v6312, %v5589
    %v6323 = vmul.f32 %v6312, %v5590
    %v6324 = vmul.f32 %v6312, %v5591
    %v6325 = vadd.f32 %v6299, %v6313
    %v6326 = vadd.f32 %v6300, %v6314
    %v6327 = vadd.f32 %v6301, %v6315
    %v6328 = vadd.f32 %v6302, %v6316
    %v6329 = vadd.f32 %v6303, %v6317
    %v6330 = vadd.f32 %v6304, %v6318
    %v6331 = vadd.f32 %v6305, %v6319
    %v6332 = vadd.f32 %v6306, %v6320
    %v6333 = vadd.f32 %v6307, %v6321
    %v6334 = vadd.f32 %v6308, %v6322
    %v6335 = vadd.f32 %v6309, %v6323
    %v6336 = vadd.f32 %v6310, %v6324
    %s6337 = sld [smem:[#allocation2 + $0x182]]
    %v6338 = vstv %s6337
    %v6339 = vmul.f32 %v6338, %v5592
    %v6340 = vmul.f32 %v6338, %v5593
    %v6341 = vmul.f32 %v6338, %v5594
    %v6342 = vmul.f32 %v6338, %v5595
    %v6343 = vmul.f32 %v6338, %v5596
    %v6344 = vmul.f32 %v6338, %v5597
    %v6345 = vmul.f32 %v6338, %v5598
    %v6346 = vmul.f32 %v6338, %v5599
    %v6347 = vmul.f32 %v6338, %v5600
    %v6348 = vmul.f32 %v6338, %v5601
    %v6349 = vmul.f32 %v6338, %v5602
    %v6350 = vmul.f32 %v6338, %v5603
    %v6351 = vadd.f32 %v6325, %v6339
    %v6352 = vadd.f32 %v6326, %v6340
    %v6353 = vadd.f32 %v6327, %v6341
    %v6354 = vadd.f32 %v6328, %v6342
    %v6355 = vadd.f32 %v6329, %v6343
    %v6356 = vadd.f32 %v6330, %v6344
    %v6357 = vadd.f32 %v6331, %v6345
    %v6358 = vadd.f32 %v6332, %v6346
    %v6359 = vadd.f32 %v6333, %v6347
    %v6360 = vadd.f32 %v6334, %v6348
    %v6361 = vadd.f32 %v6335, %v6349
    %v6362 = vadd.f32 %v6336, %v6350
    %s6363 = sld [smem:[#allocation2 + $0x183]]
    %v6364 = vstv %s6363
    %v6365 = vmul.f32 %v6364, %v5604
    %v6366 = vmul.f32 %v6364, %v5605
    %v6367 = vmul.f32 %v6364, %v5606
    %v6368 = vmul.f32 %v6364, %v5607
    %v6369 = vmul.f32 %v6364, %v5608
    %v6370 = vmul.f32 %v6364, %v5609
    %v6371 = vmul.f32 %v6364, %v5610
    %v6372 = vmul.f32 %v6364, %v5611
    %v6373 = vmul.f32 %v6364, %v5612
    %v6374 = vmul.f32 %v6364, %v5613
    %v6375 = vmul.f32 %v6364, %v5614
    %v6376 = vmul.f32 %v6364, %v5615
    %v6377 = vadd.f32 %v6351, %v6365
    %v6378 = vadd.f32 %v6352, %v6366
    %v6379 = vadd.f32 %v6353, %v6367
    %v6380 = vadd.f32 %v6354, %v6368
    %v6381 = vadd.f32 %v6355, %v6369
    %v6382 = vadd.f32 %v6356, %v6370
    %v6383 = vadd.f32 %v6357, %v6371
    %v6384 = vadd.f32 %v6358, %v6372
    %v6385 = vadd.f32 %v6359, %v6373
    %v6386 = vadd.f32 %v6360, %v6374
    %v6387 = vadd.f32 %v6361, %v6375
    %v6388 = vadd.f32 %v6362, %v6376
    %s6389 = sld [smem:[#allocation2 + $0x184]]
    %v6390 = vstv %s6389
    %v6391 = vmul.f32 %v6390, %v5616
    %v6392 = vmul.f32 %v6390, %v5617
    %v6393 = vmul.f32 %v6390, %v5618
    %v6394 = vmul.f32 %v6390, %v5619
    %v6395 = vmul.f32 %v6390, %v5620
    %v6396 = vmul.f32 %v6390, %v5621
    %v6397 = vmul.f32 %v6390, %v5622
    %v6398 = vmul.f32 %v6390, %v5623
    %v6399 = vmul.f32 %v6390, %v5624
    %v6400 = vmul.f32 %v6390, %v5625
    %v6401 = vmul.f32 %v6390, %v5626
    %v6402 = vmul.f32 %v6390, %v5627
    %v6403 = vadd.f32 %v6377, %v6391
    %v6404 = vadd.f32 %v6378, %v6392
    %v6405 = vadd.f32 %v6379, %v6393
    %v6406 = vadd.f32 %v6380, %v6394
    %v6407 = vadd.f32 %v6381, %v6395
    %v6408 = vadd.f32 %v6382, %v6396
    %v6409 = vadd.f32 %v6383, %v6397
    %v6410 = vadd.f32 %v6384, %v6398
    %v6411 = vadd.f32 %v6385, %v6399
    %v6412 = vadd.f32 %v6386, %v6400
    %v6413 = vadd.f32 %v6387, %v6401
    %v6414 = vadd.f32 %v6388, %v6402
    %s6415 = sld [smem:[#allocation2 + $0x185]]
    %v6416 = vstv %s6415
    %v6417 = vmul.f32 %v6416, %v5628
    %v6418 = vmul.f32 %v6416, %v5629
    %v6419 = vmul.f32 %v6416, %v5630
    %v6420 = vmul.f32 %v6416, %v5631
    %v6421 = vmul.f32 %v6416, %v5632
    %v6422 = vmul.f32 %v6416, %v5633
    %v6423 = vmul.f32 %v6416, %v5634
    %v6424 = vmul.f32 %v6416, %v5635
    %v6425 = vmul.f32 %v6416, %v5636
    %v6426 = vmul.f32 %v6416, %v5637
    %v6427 = vmul.f32 %v6416, %v5638
    %v6428 = vmul.f32 %v6416, %v5639
    %v6429 = vadd.f32 %v6403, %v6417
    %v6430 = vadd.f32 %v6404, %v6418
    %v6431 = vadd.f32 %v6405, %v6419
    %v6432 = vadd.f32 %v6406, %v6420
    %v6433 = vadd.f32 %v6407, %v6421
    %v6434 = vadd.f32 %v6408, %v6422
    %v6435 = vadd.f32 %v6409, %v6423
    %v6436 = vadd.f32 %v6410, %v6424
    %v6437 = vadd.f32 %v6411, %v6425
    %v6438 = vadd.f32 %v6412, %v6426
    %v6439 = vadd.f32 %v6413, %v6427
    %v6440 = vadd.f32 %v6414, %v6428
    %s6441 = sld [smem:[#allocation2 + $0x186]]
    %v6442 = vstv %s6441
    %v6443 = vmul.f32 %v6442, %v5640
    %v6444 = vmul.f32 %v6442, %v5641
    %v6445 = vmul.f32 %v6442, %v5642
    %v6446 = vmul.f32 %v6442, %v5643
    %v6447 = vmul.f32 %v6442, %v5644
    %v6448 = vmul.f32 %v6442, %v5645
    %v6449 = vmul.f32 %v6442, %v5646
    %v6450 = vmul.f32 %v6442, %v5647
    %v6451 = vmul.f32 %v6442, %v5648
    %v6452 = vmul.f32 %v6442, %v5649
    %v6453 = vmul.f32 %v6442, %v5650
    %v6454 = vmul.f32 %v6442, %v5651
    %v6455 = vadd.f32 %v6429, %v6443
    %v6456 = vadd.f32 %v6430, %v6444
    %v6457 = vadd.f32 %v6431, %v6445
    %v6458 = vadd.f32 %v6432, %v6446
    %v6459 = vadd.f32 %v6433, %v6447
    %v6460 = vadd.f32 %v6434, %v6448
    %v6461 = vadd.f32 %v6435, %v6449
    %v6462 = vadd.f32 %v6436, %v6450
    %v6463 = vadd.f32 %v6437, %v6451
    %v6464 = vadd.f32 %v6438, %v6452
    %v6465 = vadd.f32 %v6439, %v6453
    %v6466 = vadd.f32 %v6440, %v6454
    %s6467 = sld [smem:[#allocation2 + $0x187]]
    %v6468 = vstv %s6467
    %v6469 = vmul.f32 %v6468, %v5652
    %v6470 = vmul.f32 %v6468, %v5653
    %v6471 = vmul.f32 %v6468, %v5654
    %v6472 = vmul.f32 %v6468, %v5655
    %v6473 = vmul.f32 %v6468, %v5656
    %v6474 = vmul.f32 %v6468, %v5657
    %v6475 = vmul.f32 %v6468, %v5658
    %v6476 = vmul.f32 %v6468, %v5659
    %v6477 = vmul.f32 %v6468, %v5660
    %v6478 = vmul.f32 %v6468, %v5661
    %v6479 = vmul.f32 %v6468, %v5662
    %v6480 = vmul.f32 %v6468, %v5663
    %v6481 = vadd.f32 %v6455, %v6469
    %v6482 = vadd.f32 %v6456, %v6470
    %v6483 = vadd.f32 %v6457, %v6471
    %v6484 = vadd.f32 %v6458, %v6472
    %v6485 = vadd.f32 %v6459, %v6473
    %v6486 = vadd.f32 %v6460, %v6474
    %v6487 = vadd.f32 %v6461, %v6475
    %v6488 = vadd.f32 %v6462, %v6476
    %v6489 = vadd.f32 %v6463, %v6477
    %v6490 = vadd.f32 %v6464, %v6478
    %v6491 = vadd.f32 %v6465, %v6479
    %v6492 = vadd.f32 %v6466, %v6480
    %s6493 = sld [smem:[#allocation4 + $0x3]]
    %s6494 = sadd.f32 %s6493, 1.0
    %v6495 = vstv %s6494
    %v6496 = vadd.f32 %v6481, %v6495
    %v6497 = vadd.f32 %v6482, %v6495
    %v6498 = vadd.f32 %v6483, %v6495
    %v6499 = vadd.f32 %v6484, %v6495
    %v6500 = vadd.f32 %v6485, %v6495
    %v6501 = vadd.f32 %v6486, %v6495
    %v6502 = vadd.f32 %v6487, %v6495
    %v6503 = vadd.f32 %v6488, %v6495
    %v6504 = vadd.f32 %v6489, %v6495
    %v6505 = vadd.f32 %v6490, %v6495
    %v6506 = vadd.f32 %v6491, %v6495
    %v6507 = vadd.f32 %v6492, %v6495
    %s6508 = sld [smem:[#allocation2 + $0x200]]
    %v6509 = vstv %s6508
    %v6510 = vmul.f32 %v6509, %v5568
    %v6511 = vmul.f32 %v6509, %v5569
    %v6512 = vmul.f32 %v6509, %v5570
    %v6513 = vmul.f32 %v6509, %v5571
    %v6514 = vmul.f32 %v6509, %v5572
    %v6515 = vmul.f32 %v6509, %v5573
    %v6516 = vmul.f32 %v6509, %v5574
    %v6517 = vmul.f32 %v6509, %v5575
    %v6518 = vmul.f32 %v6509, %v5576
    %v6519 = vmul.f32 %v6509, %v5577
    %v6520 = vmul.f32 %v6509, %v5578
    %v6521 = vmul.f32 %v6509, %v5579
    %s6522 = sld [smem:[#allocation2 + $0x201]]
    %v6523 = vstv %s6522
    %v6524 = vmul.f32 %v6523, %v5580
    %v6525 = vmul.f32 %v6523, %v5581
    %v6526 = vmul.f32 %v6523, %v5582
    %v6527 = vmul.f32 %v6523, %v5583
    %v6528 = vmul.f32 %v6523, %v5584
    %v6529 = vmul.f32 %v6523, %v5585
    %v6530 = vmul.f32 %v6523, %v5586
    %v6531 = vmul.f32 %v6523, %v5587
    %v6532 = vmul.f32 %v6523, %v5588
    %v6533 = vmul.f32 %v6523, %v5589
    %v6534 = vmul.f32 %v6523, %v5590
    %v6535 = vmul.f32 %v6523, %v5591
    %v6536 = vadd.f32 %v6510, %v6524
    %v6537 = vadd.f32 %v6511, %v6525
    %v6538 = vadd.f32 %v6512, %v6526
    %v6539 = vadd.f32 %v6513, %v6527
    %v6540 = vadd.f32 %v6514, %v6528
    %v6541 = vadd.f32 %v6515, %v6529
    %v6542 = vadd.f32 %v6516, %v6530
    %v6543 = vadd.f32 %v6517, %v6531
    %v6544 = vadd.f32 %v6518, %v6532
    %v6545 = vadd.f32 %v6519, %v6533
    %v6546 = vadd.f32 %v6520, %v6534
    %v6547 = vadd.f32 %v6521, %v6535
    %s6548 = sld [smem:[#allocation2 + $0x202]]
    %v6549 = vstv %s6548
    %v6550 = vmul.f32 %v6549, %v5592
    %v6551 = vmul.f32 %v6549, %v5593
    %v6552 = vmul.f32 %v6549, %v5594
    %v6553 = vmul.f32 %v6549, %v5595
    %v6554 = vmul.f32 %v6549, %v5596
    %v6555 = vmul.f32 %v6549, %v5597
    %v6556 = vmul.f32 %v6549, %v5598
    %v6557 = vmul.f32 %v6549, %v5599
    %v6558 = vmul.f32 %v6549, %v5600
    %v6559 = vmul.f32 %v6549, %v5601
    %v6560 = vmul.f32 %v6549, %v5602
    %v6561 = vmul.f32 %v6549, %v5603
    %v6562 = vadd.f32 %v6536, %v6550
    %v6563 = vadd.f32 %v6537, %v6551
    %v6564 = vadd.f32 %v6538, %v6552
    %v6565 = vadd.f32 %v6539, %v6553
    %v6566 = vadd.f32 %v6540, %v6554
    %v6567 = vadd.f32 %v6541, %v6555
    %v6568 = vadd.f32 %v6542, %v6556
    %v6569 = vadd.f32 %v6543, %v6557
    %v6570 = vadd.f32 %v6544, %v6558
    %v6571 = vadd.f32 %v6545, %v6559
    %v6572 = vadd.f32 %v6546, %v6560
    %v6573 = vadd.f32 %v6547, %v6561
    %s6574 = sld [smem:[#allocation2 + $0x203]]
    %v6575 = vstv %s6574
    %v6576 = vmul.f32 %v6575, %v5604
    %v6577 = vmul.f32 %v6575, %v5605
    %v6578 = vmul.f32 %v6575, %v5606
    %v6579 = vmul.f32 %v6575, %v5607
    %v6580 = vmul.f32 %v6575, %v5608
    %v6581 = vmul.f32 %v6575, %v5609
    %v6582 = vmul.f32 %v6575, %v5610
    %v6583 = vmul.f32 %v6575, %v5611
    %v6584 = vmul.f32 %v6575, %v5612
    %v6585 = vmul.f32 %v6575, %v5613
    %v6586 = vmul.f32 %v6575, %v5614
    %v6587 = vmul.f32 %v6575, %v5615
    %v6588 = vadd.f32 %v6562, %v6576
    %v6589 = vadd.f32 %v6563, %v6577
    %v6590 = vadd.f32 %v6564, %v6578
    %v6591 = vadd.f32 %v6565, %v6579
    %v6592 = vadd.f32 %v6566, %v6580
    %v6593 = vadd.f32 %v6567, %v6581
    %v6594 = vadd.f32 %v6568, %v6582
    %v6595 = vadd.f32 %v6569, %v6583
    %v6596 = vadd.f32 %v6570, %v6584
    %v6597 = vadd.f32 %v6571, %v6585
    %v6598 = vadd.f32 %v6572, %v6586
    %v6599 = vadd.f32 %v6573, %v6587
    %s6600 = sld [smem:[#allocation2 + $0x204]]
    %v6601 = vstv %s6600
    %v6602 = vmul.f32 %v6601, %v5616
    %v6603 = vmul.f32 %v6601, %v5617
    %v6604 = vmul.f32 %v6601, %v5618
    %v6605 = vmul.f32 %v6601, %v5619
    %v6606 = vmul.f32 %v6601, %v5620
    %v6607 = vmul.f32 %v6601, %v5621
    %v6608 = vmul.f32 %v6601, %v5622
    %v6609 = vmul.f32 %v6601, %v5623
    %v6610 = vmul.f32 %v6601, %v5624
    %v6611 = vmul.f32 %v6601, %v5625
    %v6612 = vmul.f32 %v6601, %v5626
    %v6613 = vmul.f32 %v6601, %v5627
    %v6614 = vadd.f32 %v6588, %v6602
    %v6615 = vadd.f32 %v6589, %v6603
    %v6616 = vadd.f32 %v6590, %v6604
    %v6617 = vadd.f32 %v6591, %v6605
    %v6618 = vadd.f32 %v6592, %v6606
    %v6619 = vadd.f32 %v6593, %v6607
    %v6620 = vadd.f32 %v6594, %v6608
    %v6621 = vadd.f32 %v6595, %v6609
    %v6622 = vadd.f32 %v6596, %v6610
    %v6623 = vadd.f32 %v6597, %v6611
    %v6624 = vadd.f32 %v6598, %v6612
    %v6625 = vadd.f32 %v6599, %v6613
    %s6626 = sld [smem:[#allocation2 + $0x205]]
    %v6627 = vstv %s6626
    %v6628 = vmul.f32 %v6627, %v5628
    %v6629 = vmul.f32 %v6627, %v5629
    %v6630 = vmul.f32 %v6627, %v5630
    %v6631 = vmul.f32 %v6627, %v5631
    %v6632 = vmul.f32 %v6627, %v5632
    %v6633 = vmul.f32 %v6627, %v5633
    %v6634 = vmul.f32 %v6627, %v5634
    %v6635 = vmul.f32 %v6627, %v5635
    %v6636 = vmul.f32 %v6627, %v5636
    %v6637 = vmul.f32 %v6627, %v5637
    %v6638 = vmul.f32 %v6627, %v5638
    %v6639 = vmul.f32 %v6627, %v5639
    %v6640 = vadd.f32 %v6614, %v6628
    %v6641 = vadd.f32 %v6615, %v6629
    %v6642 = vadd.f32 %v6616, %v6630
    %v6643 = vadd.f32 %v6617, %v6631
    %v6644 = vadd.f32 %v6618, %v6632
    %v6645 = vadd.f32 %v6619, %v6633
    %v6646 = vadd.f32 %v6620, %v6634
    %v6647 = vadd.f32 %v6621, %v6635
    %v6648 = vadd.f32 %v6622, %v6636
    %v6649 = vadd.f32 %v6623, %v6637
    %v6650 = vadd.f32 %v6624, %v6638
    %v6651 = vadd.f32 %v6625, %v6639
    %s6652 = sld [smem:[#allocation2 + $0x206]]
    %v6653 = vstv %s6652
    %v6654 = vmul.f32 %v6653, %v5640
    %v6655 = vmul.f32 %v6653, %v5641
    %v6656 = vmul.f32 %v6653, %v5642
    %v6657 = vmul.f32 %v6653, %v5643
    %v6658 = vmul.f32 %v6653, %v5644
    %v6659 = vmul.f32 %v6653, %v5645
    %v6660 = vmul.f32 %v6653, %v5646
    %v6661 = vmul.f32 %v6653, %v5647
    %v6662 = vmul.f32 %v6653, %v5648
    %v6663 = vmul.f32 %v6653, %v5649
    %v6664 = vmul.f32 %v6653, %v5650
    %v6665 = vmul.f32 %v6653, %v5651
    %v6666 = vadd.f32 %v6640, %v6654
    %v6667 = vadd.f32 %v6641, %v6655
    %v6668 = vadd.f32 %v6642, %v6656
    %v6669 = vadd.f32 %v6643, %v6657
    %v6670 = vadd.f32 %v6644, %v6658
    %v6671 = vadd.f32 %v6645, %v6659
    %v6672 = vadd.f32 %v6646, %v6660
    %v6673 = vadd.f32 %v6647, %v6661
    %v6674 = vadd.f32 %v6648, %v6662
    %v6675 = vadd.f32 %v6649, %v6663
    %v6676 = vadd.f32 %v6650, %v6664
    %v6677 = vadd.f32 %v6651, %v6665
    %s6678 = sld [smem:[#allocation2 + $0x207]]
    %v6679 = vstv %s6678
    %v6680 = vmul.f32 %v6679, %v5652
    %v6681 = vmul.f32 %v6679, %v5653
    %v6682 = vmul.f32 %v6679, %v5654
    %v6683 = vmul.f32 %v6679, %v5655
    %v6684 = vmul.f32 %v6679, %v5656
    %v6685 = vmul.f32 %v6679, %v5657
    %v6686 = vmul.f32 %v6679, %v5658
    %v6687 = vmul.f32 %v6679, %v5659
    %v6688 = vmul.f32 %v6679, %v5660
    %v6689 = vmul.f32 %v6679, %v5661
    %v6690 = vmul.f32 %v6679, %v5662
    %v6691 = vmul.f32 %v6679, %v5663
    %v6692 = vadd.f32 %v6666, %v6680
    %v6693 = vadd.f32 %v6667, %v6681
    %v6694 = vadd.f32 %v6668, %v6682
    %v6695 = vadd.f32 %v6669, %v6683
    %v6696 = vadd.f32 %v6670, %v6684
    %v6697 = vadd.f32 %v6671, %v6685
    %v6698 = vadd.f32 %v6672, %v6686
    %v6699 = vadd.f32 %v6673, %v6687
    %v6700 = vadd.f32 %v6674, %v6688
    %v6701 = vadd.f32 %v6675, %v6689
    %v6702 = vadd.f32 %v6676, %v6690
    %v6703 = vadd.f32 %v6677, %v6691
    %s6704 = sld [smem:[#allocation4 + $0x4]]
    %s6705 = sadd.f32 %s6704, 1.0
    %v6706 = vstv %s6705
    %v6707 = vadd.f32 %v6692, %v6706
    %v6708 = vadd.f32 %v6693, %v6706
    %v6709 = vadd.f32 %v6694, %v6706
    %v6710 = vadd.f32 %v6695, %v6706
    %v6711 = vadd.f32 %v6696, %v6706
    %v6712 = vadd.f32 %v6697, %v6706
    %v6713 = vadd.f32 %v6698, %v6706
    %v6714 = vadd.f32 %v6699, %v6706
    %v6715 = vadd.f32 %v6700, %v6706
    %v6716 = vadd.f32 %v6701, %v6706
    %v6717 = vadd.f32 %v6702, %v6706
    %v6718 = vadd.f32 %v6703, %v6706
    %s6719 = sld [smem:[#allocation2 + $0x280]]
    %v6720 = vstv %s6719
    %v6721 = vmul.f32 %v6720, %v5568
    %v6722 = vmul.f32 %v6720, %v5569
    %v6723 = vmul.f32 %v6720, %v5570
    %v6724 = vmul.f32 %v6720, %v5571
    %v6725 = vmul.f32 %v6720, %v5572
    %v6726 = vmul.f32 %v6720, %v5573
    %v6727 = vmul.f32 %v6720, %v5574
    %v6728 = vmul.f32 %v6720, %v5575
    %v6729 = vmul.f32 %v6720, %v5576
    %v6730 = vmul.f32 %v6720, %v5577
    %v6731 = vmul.f32 %v6720, %v5578
    %v6732 = vmul.f32 %v6720, %v5579
    %s6733 = sld [smem:[#allocation2 + $0x281]]
    %v6734 = vstv %s6733
    %v6735 = vmul.f32 %v6734, %v5580
    %v6736 = vmul.f32 %v6734, %v5581
    %v6737 = vmul.f32 %v6734, %v5582
    %v6738 = vmul.f32 %v6734, %v5583
    %v6739 = vmul.f32 %v6734, %v5584
    %v6740 = vmul.f32 %v6734, %v5585
    %v6741 = vmul.f32 %v6734, %v5586
    %v6742 = vmul.f32 %v6734, %v5587
    %v6743 = vmul.f32 %v6734, %v5588
    %v6744 = vmul.f32 %v6734, %v5589
    %v6745 = vmul.f32 %v6734, %v5590
    %v6746 = vmul.f32 %v6734, %v5591
    %v6747 = vadd.f32 %v6721, %v6735
    %v6748 = vadd.f32 %v6722, %v6736
    %v6749 = vadd.f32 %v6723, %v6737
    %v6750 = vadd.f32 %v6724, %v6738
    %v6751 = vadd.f32 %v6725, %v6739
    %v6752 = vadd.f32 %v6726, %v6740
    %v6753 = vadd.f32 %v6727, %v6741
    %v6754 = vadd.f32 %v6728, %v6742
    %v6755 = vadd.f32 %v6729, %v6743
    %v6756 = vadd.f32 %v6730, %v6744
    %v6757 = vadd.f32 %v6731, %v6745
    %v6758 = vadd.f32 %v6732, %v6746
    %s6759 = sld [smem:[#allocation2 + $0x282]]
    %v6760 = vstv %s6759
    %v6761 = vmul.f32 %v6760, %v5592
    %v6762 = vmul.f32 %v6760, %v5593
    %v6763 = vmul.f32 %v6760, %v5594
    %v6764 = vmul.f32 %v6760, %v5595
    %v6765 = vmul.f32 %v6760, %v5596
    %v6766 = vmul.f32 %v6760, %v5597
    %v6767 = vmul.f32 %v6760, %v5598
    %v6768 = vmul.f32 %v6760, %v5599
    %v6769 = vmul.f32 %v6760, %v5600
    %v6770 = vmul.f32 %v6760, %v5601
    %v6771 = vmul.f32 %v6760, %v5602
    %v6772 = vmul.f32 %v6760, %v5603
    %v6773 = vadd.f32 %v6747, %v6761
    %v6774 = vadd.f32 %v6748, %v6762
    %v6775 = vadd.f32 %v6749, %v6763
    %v6776 = vadd.f32 %v6750, %v6764
    %v6777 = vadd.f32 %v6751, %v6765
    %v6778 = vadd.f32 %v6752, %v6766
    %v6779 = vadd.f32 %v6753, %v6767
    %v6780 = vadd.f32 %v6754, %v6768
    %v6781 = vadd.f32 %v6755, %v6769
    %v6782 = vadd.f32 %v6756, %v6770
    %v6783 = vadd.f32 %v6757, %v6771
    %v6784 = vadd.f32 %v6758, %v6772
    %s6785 = sld [smem:[#allocation2 + $0x283]]
    %v6786 = vstv %s6785
    %v6787 = vmul.f32 %v6786, %v5604
    %v6788 = vmul.f32 %v6786, %v5605
    %v6789 = vmul.f32 %v6786, %v5606
    %v6790 = vmul.f32 %v6786, %v5607
    %v6791 = vmul.f32 %v6786, %v5608
    %v6792 = vmul.f32 %v6786, %v5609
    %v6793 = vmul.f32 %v6786, %v5610
    %v6794 = vmul.f32 %v6786, %v5611
    %v6795 = vmul.f32 %v6786, %v5612
    %v6796 = vmul.f32 %v6786, %v5613
    %v6797 = vmul.f32 %v6786, %v5614
    %v6798 = vmul.f32 %v6786, %v5615
    %v6799 = vadd.f32 %v6773, %v6787
    %v6800 = vadd.f32 %v6774, %v6788
    %v6801 = vadd.f32 %v6775, %v6789
    %v6802 = vadd.f32 %v6776, %v6790
    %v6803 = vadd.f32 %v6777, %v6791
    %v6804 = vadd.f32 %v6778, %v6792
    %v6805 = vadd.f32 %v6779, %v6793
    %v6806 = vadd.f32 %v6780, %v6794
    %v6807 = vadd.f32 %v6781, %v6795
    %v6808 = vadd.f32 %v6782, %v6796
    %v6809 = vadd.f32 %v6783, %v6797
    %v6810 = vadd.f32 %v6784, %v6798
    %s6811 = sld [smem:[#allocation2 + $0x284]]
    %v6812 = vstv %s6811
    %v6813 = vmul.f32 %v6812, %v5616
    %v6814 = vmul.f32 %v6812, %v5617
    %v6815 = vmul.f32 %v6812, %v5618
    %v6816 = vmul.f32 %v6812, %v5619
    %v6817 = vmul.f32 %v6812, %v5620
    %v6818 = vmul.f32 %v6812, %v5621
    %v6819 = vmul.f32 %v6812, %v5622
    %v6820 = vmul.f32 %v6812, %v5623
    %v6821 = vmul.f32 %v6812, %v5624
    %v6822 = vmul.f32 %v6812, %v5625
    %v6823 = vmul.f32 %v6812, %v5626
    %v6824 = vmul.f32 %v6812, %v5627
    %v6825 = vadd.f32 %v6799, %v6813
    %v6826 = vadd.f32 %v6800, %v6814
    %v6827 = vadd.f32 %v6801, %v6815
    %v6828 = vadd.f32 %v6802, %v6816
    %v6829 = vadd.f32 %v6803, %v6817
    %v6830 = vadd.f32 %v6804, %v6818
    %v6831 = vadd.f32 %v6805, %v6819
    %v6832 = vadd.f32 %v6806, %v6820
    %v6833 = vadd.f32 %v6807, %v6821
    %v6834 = vadd.f32 %v6808, %v6822
    %v6835 = vadd.f32 %v6809, %v6823
    %v6836 = vadd.f32 %v6810, %v6824
    %s6837 = sld [smem:[#allocation2 + $0x285]]
    %v6838 = vstv %s6837
    %v6839 = vmul.f32 %v6838, %v5628
    %v6840 = vmul.f32 %v6838, %v5629
    %v6841 = vmul.f32 %v6838, %v5630
    %v6842 = vmul.f32 %v6838, %v5631
    %v6843 = vmul.f32 %v6838, %v5632
    %v6844 = vmul.f32 %v6838, %v5633
    %v6845 = vmul.f32 %v6838, %v5634
    %v6846 = vmul.f32 %v6838, %v5635
    %v6847 = vmul.f32 %v6838, %v5636
    %v6848 = vmul.f32 %v6838, %v5637
    %v6849 = vmul.f32 %v6838, %v5638
    %v6850 = vmul.f32 %v6838, %v5639
    %v6851 = vadd.f32 %v6825, %v6839
    %v6852 = vadd.f32 %v6826, %v6840
    %v6853 = vadd.f32 %v6827, %v6841
    %v6854 = vadd.f32 %v6828, %v6842
    %v6855 = vadd.f32 %v6829, %v6843
    %v6856 = vadd.f32 %v6830, %v6844
    %v6857 = vadd.f32 %v6831, %v6845
    %v6858 = vadd.f32 %v6832, %v6846
    %v6859 = vadd.f32 %v6833, %v6847
    %v6860 = vadd.f32 %v6834, %v6848
    %v6861 = vadd.f32 %v6835, %v6849
    %v6862 = vadd.f32 %v6836, %v6850
    %s6863 = sld [smem:[#allocation2 + $0x286]]
    %v6864 = vstv %s6863
    %v6865 = vmul.f32 %v6864, %v5640
    %v6866 = vmul.f32 %v6864, %v5641
    %v6867 = vmul.f32 %v6864, %v5642
    %v6868 = vmul.f32 %v6864, %v5643
    %v6869 = vmul.f32 %v6864, %v5644
    %v6870 = vmul.f32 %v6864, %v5645
    %v6871 = vmul.f32 %v6864, %v5646
    %v6872 = vmul.f32 %v6864, %v5647
    %v6873 = vmul.f32 %v6864, %v5648
    %v6874 = vmul.f32 %v6864, %v5649
    %v6875 = vmul.f32 %v6864, %v5650
    %v6876 = vmul.f32 %v6864, %v5651
    %v6877 = vadd.f32 %v6851, %v6865
    %v6878 = vadd.f32 %v6852, %v6866
    %v6879 = vadd.f32 %v6853, %v6867
    %v6880 = vadd.f32 %v6854, %v6868
    %v6881 = vadd.f32 %v6855, %v6869
    %v6882 = vadd.f32 %v6856, %v6870
    %v6883 = vadd.f32 %v6857, %v6871
    %v6884 = vadd.f32 %v6858, %v6872
    %v6885 = vadd.f32 %v6859, %v6873
    %v6886 = vadd.f32 %v6860, %v6874
    %v6887 = vadd.f32 %v6861, %v6875
    %v6888 = vadd.f32 %v6862, %v6876
    %s6889 = sld [smem:[#allocation2 + $0x287]]
    %v6890 = vstv %s6889
    %v6891 = vmul.f32 %v6890, %v5652
    %v6892 = vmul.f32 %v6890, %v5653
    %v6893 = vmul.f32 %v6890, %v5654
    %v6894 = vmul.f32 %v6890, %v5655
    %v6895 = vmul.f32 %v6890, %v5656
    %v6896 = vmul.f32 %v6890, %v5657
    %v6897 = vmul.f32 %v6890, %v5658
    %v6898 = vmul.f32 %v6890, %v5659
    %v6899 = vmul.f32 %v6890, %v5660
    %v6900 = vmul.f32 %v6890, %v5661
    %v6901 = vmul.f32 %v6890, %v5662
    %v6902 = vmul.f32 %v6890, %v5663
    %v6903 = vadd.f32 %v6877, %v6891
    %v6904 = vadd.f32 %v6878, %v6892
    %v6905 = vadd.f32 %v6879, %v6893
    %v6906 = vadd.f32 %v6880, %v6894
    %v6907 = vadd.f32 %v6881, %v6895
    %v6908 = vadd.f32 %v6882, %v6896
    %v6909 = vadd.f32 %v6883, %v6897
    %v6910 = vadd.f32 %v6884, %v6898
    %v6911 = vadd.f32 %v6885, %v6899
    %v6912 = vadd.f32 %v6886, %v6900
    %v6913 = vadd.f32 %v6887, %v6901
    %v6914 = vadd.f32 %v6888, %v6902
    %s6915 = sld [smem:[#allocation4 + $0x5]]
    %s6916 = sadd.f32 %s6915, 1.0
    %v6917 = vstv %s6916
    %v6918 = vadd.f32 %v6903, %v6917
    %v6919 = vadd.f32 %v6904, %v6917
    %v6920 = vadd.f32 %v6905, %v6917
    %v6921 = vadd.f32 %v6906, %v6917
    %v6922 = vadd.f32 %v6907, %v6917
    %v6923 = vadd.f32 %v6908, %v6917
    %v6924 = vadd.f32 %v6909, %v6917
    %v6925 = vadd.f32 %v6910, %v6917
    %v6926 = vadd.f32 %v6911, %v6917
    %v6927 = vadd.f32 %v6912, %v6917
    %v6928 = vadd.f32 %v6913, %v6917
    %v6929 = vadd.f32 %v6914, %v6917
    %s6930 = sld [smem:[#allocation2 + $0x300]]
    %v6931 = vstv %s6930
    %v6932 = vmul.f32 %v6931, %v5568
    %v6933 = vmul.f32 %v6931, %v5569
    %v6934 = vmul.f32 %v6931, %v5570
    %v6935 = vmul.f32 %v6931, %v5571
    %v6936 = vmul.f32 %v6931, %v5572
    %v6937 = vmul.f32 %v6931, %v5573
    %v6938 = vmul.f32 %v6931, %v5574
    %v6939 = vmul.f32 %v6931, %v5575
    %v6940 = vmul.f32 %v6931, %v5576
    %v6941 = vmul.f32 %v6931, %v5577
    %v6942 = vmul.f32 %v6931, %v5578
    %v6943 = vmul.f32 %v6931, %v5579
    %s6944 = sld [smem:[#allocation2 + $0x301]]
    %v6945 = vstv %s6944
    %v6946 = vmul.f32 %v6945, %v5580
    %v6947 = vmul.f32 %v6945, %v5581
    %v6948 = vmul.f32 %v6945, %v5582
    %v6949 = vmul.f32 %v6945, %v5583
    %v6950 = vmul.f32 %v6945, %v5584
    %v6951 = vmul.f32 %v6945, %v5585
    %v6952 = vmul.f32 %v6945, %v5586
    %v6953 = vmul.f32 %v6945, %v5587
    %v6954 = vmul.f32 %v6945, %v5588
    %v6955 = vmul.f32 %v6945, %v5589
    %v6956 = vmul.f32 %v6945, %v5590
    %v6957 = vmul.f32 %v6945, %v5591
    %v6958 = vadd.f32 %v6932, %v6946
    %v6959 = vadd.f32 %v6933, %v6947
    %v6960 = vadd.f32 %v6934, %v6948
    %v6961 = vadd.f32 %v6935, %v6949
    %v6962 = vadd.f32 %v6936, %v6950
    %v6963 = vadd.f32 %v6937, %v6951
    %v6964 = vadd.f32 %v6938, %v6952
    %v6965 = vadd.f32 %v6939, %v6953
    %v6966 = vadd.f32 %v6940, %v6954
    %v6967 = vadd.f32 %v6941, %v6955
    %v6968 = vadd.f32 %v6942, %v6956
    %v6969 = vadd.f32 %v6943, %v6957
    %s6970 = sld [smem:[#allocation2 + $0x302]]
    %v6971 = vstv %s6970
    %v6972 = vmul.f32 %v6971, %v5592
    %v6973 = vmul.f32 %v6971, %v5593
    %v6974 = vmul.f32 %v6971, %v5594
    %v6975 = vmul.f32 %v6971, %v5595
    %v6976 = vmul.f32 %v6971, %v5596
    %v6977 = vmul.f32 %v6971, %v5597
    %v6978 = vmul.f32 %v6971, %v5598
    %v6979 = vmul.f32 %v6971, %v5599
    %v6980 = vmul.f32 %v6971, %v5600
    %v6981 = vmul.f32 %v6971, %v5601
    %v6982 = vmul.f32 %v6971, %v5602
    %v6983 = vmul.f32 %v6971, %v5603
    %v6984 = vadd.f32 %v6958, %v6972
    %v6985 = vadd.f32 %v6959, %v6973
    %v6986 = vadd.f32 %v6960, %v6974
    %v6987 = vadd.f32 %v6961, %v6975
    %v6988 = vadd.f32 %v6962, %v6976
    %v6989 = vadd.f32 %v6963, %v6977
    %v6990 = vadd.f32 %v6964, %v6978
    %v6991 = vadd.f32 %v6965, %v6979
    %v6992 = vadd.f32 %v6966, %v6980
    %v6993 = vadd.f32 %v6967, %v6981
    %v6994 = vadd.f32 %v6968, %v6982
    %v6995 = vadd.f32 %v6969, %v6983
    %s6996 = sld [smem:[#allocation2 + $0x303]]
    %v6997 = vstv %s6996
    %v6998 = vmul.f32 %v6997, %v5604
    %v6999 = vmul.f32 %v6997, %v5605
    %v7000 = vmul.f32 %v6997, %v5606
    %v7001 = vmul.f32 %v6997, %v5607
    %v7002 = vmul.f32 %v6997, %v5608
    %v7003 = vmul.f32 %v6997, %v5609
    %v7004 = vmul.f32 %v6997, %v5610
    %v7005 = vmul.f32 %v6997, %v5611
    %v7006 = vmul.f32 %v6997, %v5612
    %v7007 = vmul.f32 %v6997, %v5613
    %v7008 = vmul.f32 %v6997, %v5614
    %v7009 = vmul.f32 %v6997, %v5615
    %v7010 = vadd.f32 %v6984, %v6998
    %v7011 = vadd.f32 %v6985, %v6999
    %v7012 = vadd.f32 %v6986, %v7000
    %v7013 = vadd.f32 %v6987, %v7001
    %v7014 = vadd.f32 %v6988, %v7002
    %v7015 = vadd.f32 %v6989, %v7003
    %v7016 = vadd.f32 %v6990, %v7004
    %v7017 = vadd.f32 %v6991, %v7005
    %v7018 = vadd.f32 %v6992, %v7006
    %v7019 = vadd.f32 %v6993, %v7007
    %v7020 = vadd.f32 %v6994, %v7008
    %v7021 = vadd.f32 %v6995, %v7009
    %s7022 = sld [smem:[#allocation2 + $0x304]]
    %v7023 = vstv %s7022
    %v7024 = vmul.f32 %v7023, %v5616
    %v7025 = vmul.f32 %v7023, %v5617
    %v7026 = vmul.f32 %v7023, %v5618
    %v7027 = vmul.f32 %v7023, %v5619
    %v7028 = vmul.f32 %v7023, %v5620
    %v7029 = vmul.f32 %v7023, %v5621
    %v7030 = vmul.f32 %v7023, %v5622
    %v7031 = vmul.f32 %v7023, %v5623
    %v7032 = vmul.f32 %v7023, %v5624
    %v7033 = vmul.f32 %v7023, %v5625
    %v7034 = vmul.f32 %v7023, %v5626
    %v7035 = vmul.f32 %v7023, %v5627
    %v7036 = vadd.f32 %v7010, %v7024
    %v7037 = vadd.f32 %v7011, %v7025
    %v7038 = vadd.f32 %v7012, %v7026
    %v7039 = vadd.f32 %v7013, %v7027
    %v7040 = vadd.f32 %v7014, %v7028
    %v7041 = vadd.f32 %v7015, %v7029
    %v7042 = vadd.f32 %v7016, %v7030
    %v7043 = vadd.f32 %v7017, %v7031
    %v7044 = vadd.f32 %v7018, %v7032
    %v7045 = vadd.f32 %v7019, %v7033
    %v7046 = vadd.f32 %v7020, %v7034
    %v7047 = vadd.f32 %v7021, %v7035
    %s7048 = sld [smem:[#allocation2 + $0x305]]
    %v7049 = vstv %s7048
    %v7050 = vmul.f32 %v7049, %v5628
    %v7051 = vmul.f32 %v7049, %v5629
    %v7052 = vmul.f32 %v7049, %v5630
    %v7053 = vmul.f32 %v7049, %v5631
    %v7054 = vmul.f32 %v7049, %v5632
    %v7055 = vmul.f32 %v7049, %v5633
    %v7056 = vmul.f32 %v7049, %v5634
    %v7057 = vmul.f32 %v7049, %v5635
    %v7058 = vmul.f32 %v7049, %v5636
    %v7059 = vmul.f32 %v7049, %v5637
    %v7060 = vmul.f32 %v7049, %v5638
    %v7061 = vmul.f32 %v7049, %v5639
    %v7062 = vadd.f32 %v7036, %v7050
    %v7063 = vadd.f32 %v7037, %v7051
    %v7064 = vadd.f32 %v7038, %v7052
    %v7065 = vadd.f32 %v7039, %v7053
    %v7066 = vadd.f32 %v7040, %v7054
    %v7067 = vadd.f32 %v7041, %v7055
    %v7068 = vadd.f32 %v7042, %v7056
    %v7069 = vadd.f32 %v7043, %v7057
    %v7070 = vadd.f32 %v7044, %v7058
    %v7071 = vadd.f32 %v7045, %v7059
    %v7072 = vadd.f32 %v7046, %v7060
    %v7073 = vadd.f32 %v7047, %v7061
    %s7074 = sld [smem:[#allocation2 + $0x306]]
    %v7075 = vstv %s7074
    %v7076 = vmul.f32 %v7075, %v5640
    %v7077 = vmul.f32 %v7075, %v5641
    %v7078 = vmul.f32 %v7075, %v5642
    %v7079 = vmul.f32 %v7075, %v5643
    %v7080 = vmul.f32 %v7075, %v5644
    %v7081 = vmul.f32 %v7075, %v5645
    %v7082 = vmul.f32 %v7075, %v5646
    %v7083 = vmul.f32 %v7075, %v5647
    %v7084 = vmul.f32 %v7075, %v5648
    %v7085 = vmul.f32 %v7075, %v5649
    %v7086 = vmul.f32 %v7075, %v5650
    %v7087 = vmul.f32 %v7075, %v5651
    %v7088 = vadd.f32 %v7062, %v7076
    %v7089 = vadd.f32 %v7063, %v7077
    %v7090 = vadd.f32 %v7064, %v7078
    %v7091 = vadd.f32 %v7065, %v7079
    %v7092 = vadd.f32 %v7066, %v7080
    %v7093 = vadd.f32 %v7067, %v7081
    %v7094 = vadd.f32 %v7068, %v7082
    %v7095 = vadd.f32 %v7069, %v7083
    %v7096 = vadd.f32 %v7070, %v7084
    %v7097 = vadd.f32 %v7071, %v7085
    %v7098 = vadd.f32 %v7072, %v7086
    %v7099 = vadd.f32 %v7073, %v7087
    %s7100 = sld [smem:[#allocation2 + $0x307]]
    %v7101 = vstv %s7100
    %v7102 = vmul.f32 %v7101, %v5652
    %v7103 = vmul.f32 %v7101, %v5653
    %v7104 = vmul.f32 %v7101, %v5654
    %v7105 = vmul.f32 %v7101, %v5655
    %v7106 = vmul.f32 %v7101, %v5656
    %v7107 = vmul.f32 %v7101, %v5657
    %v7108 = vmul.f32 %v7101, %v5658
    %v7109 = vmul.f32 %v7101, %v5659
    %v7110 = vmul.f32 %v7101, %v5660
    %v7111 = vmul.f32 %v7101, %v5661
    %v7112 = vmul.f32 %v7101, %v5662
    %v7113 = vmul.f32 %v7101, %v5663
    %v7114 = vadd.f32 %v7088, %v7102
    %v7115 = vadd.f32 %v7089, %v7103
    %v7116 = vadd.f32 %v7090, %v7104
    %v7117 = vadd.f32 %v7091, %v7105
    %v7118 = vadd.f32 %v7092, %v7106
    %v7119 = vadd.f32 %v7093, %v7107
    %v7120 = vadd.f32 %v7094, %v7108
    %v7121 = vadd.f32 %v7095, %v7109
    %v7122 = vadd.f32 %v7096, %v7110
    %v7123 = vadd.f32 %v7097, %v7111
    %v7124 = vadd.f32 %v7098, %v7112
    %v7125 = vadd.f32 %v7099, %v7113
    %s7126 = sld [smem:[#allocation4 + $0x6]]
    %s7127 = sadd.f32 %s7126, 1.0
    %v7128 = vstv %s7127
    %v7129 = vadd.f32 %v7114, %v7128
    %v7130 = vadd.f32 %v7115, %v7128
    %v7131 = vadd.f32 %v7116, %v7128
    %v7132 = vadd.f32 %v7117, %v7128
    %v7133 = vadd.f32 %v7118, %v7128
    %v7134 = vadd.f32 %v7119, %v7128
    %v7135 = vadd.f32 %v7120, %v7128
    %v7136 = vadd.f32 %v7121, %v7128
    %v7137 = vadd.f32 %v7122, %v7128
    %v7138 = vadd.f32 %v7123, %v7128
    %v7139 = vadd.f32 %v7124, %v7128
    %v7140 = vadd.f32 %v7125, %v7128
    %s7141 = sld [smem:[#allocation2 + $0x380]]
    %v7142 = vstv %s7141
    %v7143 = vmul.f32 %v7142, %v5568
    %v7144 = vmul.f32 %v7142, %v5569
    %v7145 = vmul.f32 %v7142, %v5570
    %v7146 = vmul.f32 %v7142, %v5571
    %v7147 = vmul.f32 %v7142, %v5572
    %v7148 = vmul.f32 %v7142, %v5573
    %v7149 = vmul.f32 %v7142, %v5574
    %v7150 = vmul.f32 %v7142, %v5575
    %v7151 = vmul.f32 %v7142, %v5576
    %v7152 = vmul.f32 %v7142, %v5577
    %v7153 = vmul.f32 %v7142, %v5578
    %v7154 = vmul.f32 %v7142, %v5579
    %s7155 = sld [smem:[#allocation2 + $0x381]]
    %v7156 = vstv %s7155
    %v7157 = vmul.f32 %v7156, %v5580
    %v7158 = vmul.f32 %v7156, %v5581
    %v7159 = vmul.f32 %v7156, %v5582
    %v7160 = vmul.f32 %v7156, %v5583
    %v7161 = vmul.f32 %v7156, %v5584
    %v7162 = vmul.f32 %v7156, %v5585
    %v7163 = vmul.f32 %v7156, %v5586
    %v7164 = vmul.f32 %v7156, %v5587
    %v7165 = vmul.f32 %v7156, %v5588
    %v7166 = vmul.f32 %v7156, %v5589
    %v7167 = vmul.f32 %v7156, %v5590
    %v7168 = vmul.f32 %v7156, %v5591
    %v7169 = vadd.f32 %v7143, %v7157
    %v7170 = vadd.f32 %v7144, %v7158
    %v7171 = vadd.f32 %v7145, %v7159
    %v7172 = vadd.f32 %v7146, %v7160
    %v7173 = vadd.f32 %v7147, %v7161
    %v7174 = vadd.f32 %v7148, %v7162
    %v7175 = vadd.f32 %v7149, %v7163
    %v7176 = vadd.f32 %v7150, %v7164
    %v7177 = vadd.f32 %v7151, %v7165
    %v7178 = vadd.f32 %v7152, %v7166
    %v7179 = vadd.f32 %v7153, %v7167
    %v7180 = vadd.f32 %v7154, %v7168
    %s7181 = sld [smem:[#allocation2 + $0x382]]
    %v7182 = vstv %s7181
    %v7183 = vmul.f32 %v7182, %v5592
    %v7184 = vmul.f32 %v7182, %v5593
    %v7185 = vmul.f32 %v7182, %v5594
    %v7186 = vmul.f32 %v7182, %v5595
    %v7187 = vmul.f32 %v7182, %v5596
    %v7188 = vmul.f32 %v7182, %v5597
    %v7189 = vmul.f32 %v7182, %v5598
    %v7190 = vmul.f32 %v7182, %v5599
    %v7191 = vmul.f32 %v7182, %v5600
    %v7192 = vmul.f32 %v7182, %v5601
    %v7193 = vmul.f32 %v7182, %v5602
    %v7194 = vmul.f32 %v7182, %v5603
    %v7195 = vadd.f32 %v7169, %v7183
    %v7196 = vadd.f32 %v7170, %v7184
    %v7197 = vadd.f32 %v7171, %v7185
    %v7198 = vadd.f32 %v7172, %v7186
    %v7199 = vadd.f32 %v7173, %v7187
    %v7200 = vadd.f32 %v7174, %v7188
    %v7201 = vadd.f32 %v7175, %v7189
    %v7202 = vadd.f32 %v7176, %v7190
    %v7203 = vadd.f32 %v7177, %v7191
    %v7204 = vadd.f32 %v7178, %v7192
    %v7205 = vadd.f32 %v7179, %v7193
    %v7206 = vadd.f32 %v7180, %v7194
    %s7207 = sld [smem:[#allocation2 + $0x383]]
    %v7208 = vstv %s7207
    %v7209 = vmul.f32 %v7208, %v5604
    %v7210 = vmul.f32 %v7208, %v5605
    %v7211 = vmul.f32 %v7208, %v5606
    %v7212 = vmul.f32 %v7208, %v5607
    %v7213 = vmul.f32 %v7208, %v5608
    %v7214 = vmul.f32 %v7208, %v5609
    %v7215 = vmul.f32 %v7208, %v5610
    %v7216 = vmul.f32 %v7208, %v5611
    %v7217 = vmul.f32 %v7208, %v5612
    %v7218 = vmul.f32 %v7208, %v5613
    %v7219 = vmul.f32 %v7208, %v5614
    %v7220 = vmul.f32 %v7208, %v5615
    %v7221 = vadd.f32 %v7195, %v7209
    %v7222 = vadd.f32 %v7196, %v7210
    %v7223 = vadd.f32 %v7197, %v7211
    %v7224 = vadd.f32 %v7198, %v7212
    %v7225 = vadd.f32 %v7199, %v7213
    %v7226 = vadd.f32 %v7200, %v7214
    %v7227 = vadd.f32 %v7201, %v7215
    %v7228 = vadd.f32 %v7202, %v7216
    %v7229 = vadd.f32 %v7203, %v7217
    %v7230 = vadd.f32 %v7204, %v7218
    %v7231 = vadd.f32 %v7205, %v7219
    %v7232 = vadd.f32 %v7206, %v7220
    %s7233 = sld [smem:[#allocation2 + $0x384]]
    %v7234 = vstv %s7233
    %v7235 = vmul.f32 %v7234, %v5616
    %v7236 = vmul.f32 %v7234, %v5617
    %v7237 = vmul.f32 %v7234, %v5618
    %v7238 = vmul.f32 %v7234, %v5619
    %v7239 = vmul.f32 %v7234, %v5620
    %v7240 = vmul.f32 %v7234, %v5621
    %v7241 = vmul.f32 %v7234, %v5622
    %v7242 = vmul.f32 %v7234, %v5623
    %v7243 = vmul.f32 %v7234, %v5624
    %v7244 = vmul.f32 %v7234, %v5625
    %v7245 = vmul.f32 %v7234, %v5626
    %v7246 = vmul.f32 %v7234, %v5627
    %v7247 = vadd.f32 %v7221, %v7235
    %v7248 = vadd.f32 %v7222, %v7236
    %v7249 = vadd.f32 %v7223, %v7237
    %v7250 = vadd.f32 %v7224, %v7238
    %v7251 = vadd.f32 %v7225, %v7239
    %v7252 = vadd.f32 %v7226, %v7240
    %v7253 = vadd.f32 %v7227, %v7241
    %v7254 = vadd.f32 %v7228, %v7242
    %v7255 = vadd.f32 %v7229, %v7243
    %v7256 = vadd.f32 %v7230, %v7244
    %v7257 = vadd.f32 %v7231, %v7245
    %v7258 = vadd.f32 %v7232, %v7246
    %s7259 = sld [smem:[#allocation2 + $0x385]]
    %v7260 = vstv %s7259
    %v7261 = vmul.f32 %v7260, %v5628
    %v7262 = vmul.f32 %v7260, %v5629
    %v7263 = vmul.f32 %v7260, %v5630
    %v7264 = vmul.f32 %v7260, %v5631
    %v7265 = vmul.f32 %v7260, %v5632
    %v7266 = vmul.f32 %v7260, %v5633
    %v7267 = vmul.f32 %v7260, %v5634
    %v7268 = vmul.f32 %v7260, %v5635
    %v7269 = vmul.f32 %v7260, %v5636
    %v7270 = vmul.f32 %v7260, %v5637
    %v7271 = vmul.f32 %v7260, %v5638
    %v7272 = vmul.f32 %v7260, %v5639
    %v7273 = vadd.f32 %v7247, %v7261
    %v7274 = vadd.f32 %v7248, %v7262
    %v7275 = vadd.f32 %v7249, %v7263
    %v7276 = vadd.f32 %v7250, %v7264
    %v7277 = vadd.f32 %v7251, %v7265
    %v7278 = vadd.f32 %v7252, %v7266
    %v7279 = vadd.f32 %v7253, %v7267
    %v7280 = vadd.f32 %v7254, %v7268
    %v7281 = vadd.f32 %v7255, %v7269
    %v7282 = vadd.f32 %v7256, %v7270
    %v7283 = vadd.f32 %v7257, %v7271
    %v7284 = vadd.f32 %v7258, %v7272
    %s7285 = sld [smem:[#allocation2 + $0x386]]
    %v7286 = vstv %s7285
    %v7287 = vmul.f32 %v7286, %v5640
    %v7288 = vmul.f32 %v7286, %v5641
    %v7289 = vmul.f32 %v7286, %v5642
    %v7290 = vmul.f32 %v7286, %v5643
    %v7291 = vmul.f32 %v7286, %v5644
    %v7292 = vmul.f32 %v7286, %v5645
    %v7293 = vmul.f32 %v7286, %v5646
    %v7294 = vmul.f32 %v7286, %v5647
    %v7295 = vmul.f32 %v7286, %v5648
    %v7296 = vmul.f32 %v7286, %v5649
    %v7297 = vmul.f32 %v7286, %v5650
    %v7298 = vmul.f32 %v7286, %v5651
    %v7299 = vadd.f32 %v7273, %v7287
    %v7300 = vadd.f32 %v7274, %v7288
    %v7301 = vadd.f32 %v7275, %v7289
    %v7302 = vadd.f32 %v7276, %v7290
    %v7303 = vadd.f32 %v7277, %v7291
    %v7304 = vadd.f32 %v7278, %v7292
    %v7305 = vadd.f32 %v7279, %v7293
    %v7306 = vadd.f32 %v7280, %v7294
    %v7307 = vadd.f32 %v7281, %v7295
    %v7308 = vadd.f32 %v7282, %v7296
    %v7309 = vadd.f32 %v7283, %v7297
    %v7310 = vadd.f32 %v7284, %v7298
    %s7311 = sld [smem:[#allocation2 + $0x387]]
    %v7312 = vstv %s7311
    %v7313 = vmul.f32 %v7312, %v5652
    %v7314 = vmul.f32 %v7312, %v5653
    %v7315 = vmul.f32 %v7312, %v5654
    %v7316 = vmul.f32 %v7312, %v5655
    %v7317 = vmul.f32 %v7312, %v5656
    %v7318 = vmul.f32 %v7312, %v5657
    %v7319 = vmul.f32 %v7312, %v5658
    %v7320 = vmul.f32 %v7312, %v5659
    %v7321 = vmul.f32 %v7312, %v5660
    %v7322 = vmul.f32 %v7312, %v5661
    %v7323 = vmul.f32 %v7312, %v5662
    %v7324 = vmul.f32 %v7312, %v5663
    %v7325 = vadd.f32 %v7299, %v7313
    %v7326 = vadd.f32 %v7300, %v7314
    %v7327 = vadd.f32 %v7301, %v7315
    %v7328 = vadd.f32 %v7302, %v7316
    %v7329 = vadd.f32 %v7303, %v7317
    %v7330 = vadd.f32 %v7304, %v7318
    %v7331 = vadd.f32 %v7305, %v7319
    %v7332 = vadd.f32 %v7306, %v7320
    %v7333 = vadd.f32 %v7307, %v7321
    %v7334 = vadd.f32 %v7308, %v7322
    %v7335 = vadd.f32 %v7309, %v7323
    %v7336 = vadd.f32 %v7310, %v7324
    %s7337 = sld [smem:[#allocation4 + $0x7]]
    %s7338 = sadd.f32 %s7337, 1.0
    %v7339 = vstv %s7338
    %v7340 = vadd.f32 %v7325, %v7339
    %v7341 = vadd.f32 %v7326, %v7339
    %v7342 = vadd.f32 %v7327, %v7339
    %v7343 = vadd.f32 %v7328, %v7339
    %v7344 = vadd.f32 %v7329, %v7339
    %v7345 = vadd.f32 %v7330, %v7339
    %v7346 = vadd.f32 %v7331, %v7339
    %v7347 = vadd.f32 %v7332, %v7339
    %v7348 = vadd.f32 %v7333, %v7339
    %v7349 = vadd.f32 %v7334, %v7339
    %v7350 = vadd.f32 %v7335, %v7339
    %v7351 = vadd.f32 %v7336, %v7339
    %v7352 = vmul.f32 %v3346, %v5863
    %v7353 = vmul.f32 %v3347, %v5864
    %v7354 = vmul.f32 %v3348, %v5865
    %v7355 = vmul.f32 %v3349, %v5866
    %v7356 = vmul.f32 %v3350, %v5867
    %v7357 = vmul.f32 %v3351, %v5868
    %v7358 = vmul.f32 %v3352, %v5869
    %v7359 = vmul.f32 %v3353, %v5870
    %v7360 = vmul.f32 %v3354, %v5871
    %v7361 = vmul.f32 %v3355, %v5872
    %v7362 = vmul.f32 %v3356, %v5873
    %v7363 = vmul.f32 %v3357, %v5874
    %v7364 = vmul.f32 %v3358, %v6074
    %v7365 = vmul.f32 %v3359, %v6075
    %v7366 = vmul.f32 %v3360, %v6076
    %v7367 = vmul.f32 %v3361, %v6077
    %v7368 = vmul.f32 %v3362, %v6078
    %v7369 = vmul.f32 %v3363, %v6079
    %v7370 = vmul.f32 %v3364, %v6080
    %v7371 = vmul.f32 %v3365, %v6081
    %v7372 = vmul.f32 %v3366, %v6082
    %v7373 = vmul.f32 %v3367, %v6083
    %v7374 = vmul.f32 %v3368, %v6084
    %v7375 = vmul.f32 %v3369, %v6085
    %v7376 = vmul.f32 %v3370, %v6285
    %v7377 = vmul.f32 %v3371, %v6286
    %v7378 = vmul.f32 %v3372, %v6287
    %v7379 = vmul.f32 %v3373, %v6288
    %v7380 = vmul.f32 %v3374, %v6289
    %v7381 = vmul.f32 %v3375, %v6290
    %v7382 = vmul.f32 %v3376, %v6291
    %v7383 = vmul.f32 %v3377, %v6292
    %v7384 = vmul.f32 %v3378, %v6293
    %v7385 = vmul.f32 %v3379, %v6294
    %v7386 = vmul.f32 %v3380, %v6295
    %v7387 = vmul.f32 %v3381, %v6296
    %v7388 = vmul.f32 %v3382, %v6496
    %v7389 = vmul.f32 %v3383, %v6497
    %v7390 = vmul.f32 %v3384, %v6498
    %v7391 = vmul.f32 %v3385, %v6499
    %v7392 = vmul.f32 %v3386, %v6500
    %v7393 = vmul.f32 %v3387, %v6501
    %v7394 = vmul.f32 %v3388, %v6502
    %v7395 = vmul.f32 %v3389, %v6503
    %v7396 = vmul.f32 %v3390, %v6504
    %v7397 = vmul.f32 %v3391, %v6505
    %v7398 = vmul.f32 %v3392, %v6506
    %v7399 = vmul.f32 %v3393, %v6507
    %v7400 = vmul.f32 %v3394, %v6707
    %v7401 = vmul.f32 %v3395, %v6708
    %v7402 = vmul.f32 %v3396, %v6709
    %v7403 = vmul.f32 %v3397, %v6710
    %v7404 = vmul.f32 %v3398, %v6711
    %v7405 = vmul.f32 %v3399, %v6712
    %v7406 = vmul.f32 %v3400, %v6713
    %v7407 = vmul.f32 %v3401, %v6714
    %v7408 = vmul.f32 %v3402, %v6715
    %v7409 = vmul.f32 %v3403, %v6716
    %v7410 = vmul.f32 %v3404, %v6717
    %v7411 = vmul.f32 %v3405, %v6718
    %v7412 = vmul.f32 %v3406, %v6918
    %v7413 = vmul.f32 %v3407, %v6919
    %v7414 = vmul.f32 %v3408, %v6920
    %v7415 = vmul.f32 %v3409, %v6921
    %v7416 = vmul.f32 %v3410, %v6922
    %v7417 = vmul.f32 %v3411, %v6923
    %v7418 = vmul.f32 %v3412, %v6924
    %v7419 = vmul.f32 %v3413, %v6925
    %v7420 = vmul.f32 %v3414, %v6926
    %v7421 = vmul.f32 %v3415, %v6927
    %v7422 = vmul.f32 %v3416, %v6928
    %v7423 = vmul.f32 %v3417, %v6929
    %v7424 = vmul.f32 %v3418, %v7129
    %v7425 = vmul.f32 %v3419, %v7130
    %v7426 = vmul.f32 %v3420, %v7131
    %v7427 = vmul.f32 %v3421, %v7132
    %v7428 = vmul.f32 %v3422, %v7133
    %v7429 = vmul.f32 %v3423, %v7134
    %v7430 = vmul.f32 %v3424, %v7135
    %v7431 = vmul.f32 %v3425, %v7136
    %v7432 = vmul.f32 %v3426, %v7137
    %v7433 = vmul.f32 %v3427, %v7138
    %v7434 = vmul.f32 %v3428, %v7139
    %v7435 = vmul.f32 %v3429, %v7140
    %v7436 = vmul.f32 %v3430, %v7340
    %v7437 = vmul.f32 %v3431, %v7341
    %v7438 = vmul.f32 %v3432, %v7342
    %v7439 = vmul.f32 %v3433, %v7343
    %v7440 = vmul.f32 %v3434, %v7344
    %v7441 = vmul.f32 %v3435, %v7345
    %v7442 = vmul.f32 %v3436, %v7346
    %v7443 = vmul.f32 %v3437, %v7347
    %v7444 = vmul.f32 %v3438, %v7348
    %v7445 = vmul.f32 %v3439, %v7349
    %v7446 = vmul.f32 %v3440, %v7350
    %v7447 = vmul.f32 %v3441, %v7351
    %v7448 = vpack.c.bf16 %v7353, %v7352
    %v7449 = vpack.c.bf16 %v7355, %v7354
    %v7450 = vpack.c.bf16 %v7357, %v7356
    %v7451 = vpack.c.bf16 %v7359, %v7358
    %v7452 = vpack.c.bf16 %v7361, %v7360
    %v7453 = vpack.c.bf16 %v7363, %v7362
    %v7454 = vpack.c.bf16 %v7365, %v7364
    %v7455 = vpack.c.bf16 %v7367, %v7366
    %v7456 = vpack.c.bf16 %v7369, %v7368
    %v7457 = vpack.c.bf16 %v7371, %v7370
    %v7458 = vpack.c.bf16 %v7373, %v7372
    %v7459 = vpack.c.bf16 %v7375, %v7374
    %v7460 = vpack.c.bf16 %v7377, %v7376
    %v7461 = vpack.c.bf16 %v7379, %v7378
    %v7462 = vpack.c.bf16 %v7381, %v7380
    %v7463 = vpack.c.bf16 %v7383, %v7382
    %v7464 = vpack.c.bf16 %v7385, %v7384
    %v7465 = vpack.c.bf16 %v7387, %v7386
    %v7466 = vpack.c.bf16 %v7389, %v7388
    %v7467 = vpack.c.bf16 %v7391, %v7390
    %v7468 = vpack.c.bf16 %v7393, %v7392
    %v7469 = vpack.c.bf16 %v7395, %v7394
    %v7470 = vpack.c.bf16 %v7397, %v7396
    %v7471 = vpack.c.bf16 %v7399, %v7398
    %v7472 = vpack.c.bf16 %v7401, %v7400
    %v7473 = vpack.c.bf16 %v7403, %v7402
    %v7474 = vpack.c.bf16 %v7405, %v7404
    %v7475 = vpack.c.bf16 %v7407, %v7406
    %v7476 = vpack.c.bf16 %v7409, %v7408
    %v7477 = vpack.c.bf16 %v7411, %v7410
    %v7478 = vpack.c.bf16 %v7413, %v7412
    %v7479 = vpack.c.bf16 %v7415, %v7414
    %v7480 = vpack.c.bf16 %v7417, %v7416
    %v7481 = vpack.c.bf16 %v7419, %v7418
    %v7482 = vpack.c.bf16 %v7421, %v7420
    %v7483 = vpack.c.bf16 %v7423, %v7422
    %v7484 = vpack.c.bf16 %v7425, %v7424
    %v7485 = vpack.c.bf16 %v7427, %v7426
    %v7486 = vpack.c.bf16 %v7429, %v7428
    %v7487 = vpack.c.bf16 %v7431, %v7430
    %v7488 = vpack.c.bf16 %v7433, %v7432
    %v7489 = vpack.c.bf16 %v7435, %v7434
    %v7490 = vpack.c.bf16 %v7437, %v7436
    %v7491 = vpack.c.bf16 %v7439, %v7438
    %v7492 = vpack.c.bf16 %v7441, %v7440
    %v7493 = vpack.c.bf16 %v7443, %v7442
    %v7494 = vpack.c.bf16 %v7445, %v7444
    %v7495 = vpack.c.bf16 %v7447, %v7446
    %v7496 = vld [vmem:[%s9] sm:$0xf]
    %v7497 = vld [vmem:[%s9 + $0x4] sm:$0xf]
    %v7498 = vld [vmem:[%s9 + $0x8] sm:$0xf]
    %v7499 = vld [vmem:[%s9 + $0xc] sm:$0xf]
    %v7500 = vld [vmem:[%s10] sm:$0x1]
    %v7502 = vlaneseq
    %v7503 = vshrl.u32 %v7502, 7
    %v7504 = vsub.s32 0, %v7503
    %v7505 = vrot.slane %v7500, %v7504
    %v7511 = vunpack.c.l.b16 %v7496
    %v7512 = vunpack.c.l.b16 %v7497
    %v7513 = vunpack.c.l.b16 %v7498
    %v7514 = vunpack.c.l.b16 %v7499
    %v7515 = vpack.c.b16 %v7512, %v7511
    %v7516 = vpack.c.b16 %v7514, %v7513
    %v7520 = vsel %vm162, %v7448, 0
    %v7523 = vsel %vm162, %v7449, 0
    %v7526 = vsel %vm162, %v7450, 0
    %v7529 = vsel %vm162, %v7451, 0
    %v7532 = vsel %vm162, %v7452, 0
    %v7535 = vsel %vm162, %v7453, 0
    %v7538 = vsel %vm162, %v7454, 0
    %v7541 = vsel %vm162, %v7455, 0
    %v7544 = vsel %vm162, %v7456, 0
    %v7547 = vsel %vm162, %v7457, 0
    %v7550 = vsel %vm162, %v7458, 0
    %v7553 = vsel %vm162, %v7459, 0
    %v7556 = vsel %vm162, %v7460, 0
    %v7559 = vsel %vm162, %v7461, 0
    %v7562 = vsel %vm162, %v7462, 0
    %v7565 = vsel %vm162, %v7463, 0
    %v7568 = vsel %vm162, %v7464, 0
    %v7571 = vsel %vm162, %v7465, 0
    %v7574 = vsel %vm162, %v7466, 0
    %v7577 = vsel %vm162, %v7467, 0
    %v7580 = vsel %vm162, %v7468, 0
    %v7583 = vsel %vm162, %v7469, 0
    %v7586 = vsel %vm162, %v7470, 0
    %v7589 = vsel %vm162, %v7471, 0
    %v7592 = vsel %vm162, %v7472, 0
    %v7595 = vsel %vm162, %v7473, 0
    %v7598 = vsel %vm162, %v7474, 0
    %v7601 = vsel %vm162, %v7475, 0
    %v7604 = vsel %vm162, %v7476, 0
    %v7607 = vsel %vm162, %v7477, 0
    %v7610 = vsel %vm162, %v7478, 0
    %v7613 = vsel %vm162, %v7479, 0
    %v7616 = vsel %vm162, %v7480, 0
    %v7619 = vsel %vm162, %v7481, 0
    %v7622 = vsel %vm162, %v7482, 0
    %v7625 = vsel %vm162, %v7483, 0
    %v7628 = vsel %vm162, %v7484, 0
    %v7631 = vsel %vm162, %v7485, 0
    %v7634 = vsel %vm162, %v7486, 0
    %v7637 = vsel %vm162, %v7487, 0
    %v7640 = vsel %vm162, %v7488, 0
    %v7643 = vsel %vm162, %v7489, 0
    %v7646 = vsel %vm162, %v7490, 0
    %v7649 = vsel %vm162, %v7491, 0
    %v7652 = vsel %vm162, %v7492, 0
    %v7655 = vsel %vm162, %v7493, 0
    %v7658 = vsel %vm162, %v7494, 0
    %v7661 = vsel %vm162, %v7495, 0
    %7663 = vmatprep.subr.bf16.mxu0 0
    %7664 = vmatpush1.bf16.msra.mxu0 %v7515
    %7665 = vmatprep.subr.bf16.mxu0 0
    %7666 = vmatpush1.bf16.msra.mxu0 %v7516
    %7667 = vmatprep.subr.bf16.mxu0 0
    %7668 = vmatpush1.bf16.msra.mxu0 0
    %7669 = vmatprep.subr.bf16.mxu0 0
    %7670 = vmatpush1.bf16.msra.mxu0 0
    %7671 = vmatprep.subr.bf16.mxu0 0
    %7672 = vmatpush1.bf16.msra.mxu0 0
    %7673 = vmatprep.subr.bf16.mxu0 0
    %7674 = vmatpush1.bf16.msra.mxu0 0
    %7675 = vmatprep.subr.bf16.mxu0 0
    %7676 = vmatpush1.bf16.msra.mxu0 0
    %7677 = vmatprep.subr.bf16.mxu0 0
    %7678 = vmatpush1.bf16.msra.mxu0 0
    %7679 = vmatprep.subr.bf16.mxu0 0
    %7680 = vmatpush1.bf16.msra.mxu0 0
    %7681 = vmatprep.subr.bf16.mxu0 0
    %7682 = vmatpush1.bf16.msra.mxu0 0
    %7683 = vmatprep.subr.bf16.mxu0 0
    %7684 = vmatpush1.bf16.msra.mxu0 0
    %7685 = vmatprep.subr.bf16.mxu0 0
    %7686 = vmatpush1.bf16.msra.mxu0 0
    %7687 = vmatprep.subr.bf16.mxu0 0
    %7688 = vmatpush1.bf16.msra.mxu0 0
    %7689 = vmatprep.subr.bf16.mxu0 0
    %7690 = vmatpush1.bf16.msra.mxu0 0
    %7691 = vmatprep.subr.bf16.mxu0 0
    %7692 = vmatpush1.bf16.msra.mxu0 0
    %7693 = vmatprep.subr.bf16.mxu0 0
    %7694 = vmatpush1.bf16.msra.mxu0 0
    %7695 = vmatprep.mubr.bf16.mxu0 0
    %7696 = vmatmul.mubr.bf16.gmra.mrb[0].mxu0 %v7520
    %v7697 = vpop.f32.mrb[0].mxu0
    %v7698 = vadd.f32 %v7505, %v7697
    %v7699 = vpop.f32.mrb[0].mxu0
    %v7700 = vpop.f32.mrb[0].mxu0
    %v7701 = vadd.f32 %v7505, %v7700
    %v7702 = vpop.f32.mrb[0].mxu0
    %7703 = vmatprep.mubr.bf16.mxu0 0
    %7704 = vmatmul.mubr.bf16.gmra.mrb[0].mxu0 %v7523
    %v7705 = vpop.f32.mrb[0].mxu0
    %v7706 = vadd.f32 %v7505, %v7705
    %v7707 = vpop.f32.mrb[0].mxu0
    %v7708 = vpop.f32.mrb[0].mxu0
    %v7709 = vadd.f32 %v7505, %v7708
    %v7710 = vpop.f32.mrb[0].mxu0
    %7711 = vmatprep.mubr.bf16.mxu0 0
    %7712 = vmatmul.mubr.bf16.gmra.mrb[0].mxu0 %v7526
    %v7713 = vpop.f32.mrb[0].mxu0
    %v7714 = vadd.f32 %v7505, %v7713
    %v7715 = vpop.f32.mrb[0].mxu0
    %v7716 = vpop.f32.mrb[0].mxu0
    %v7717 = vadd.f32 %v7505, %v7716
    %v7718 = vpop.f32.mrb[0].mxu0
    %7719 = vmatprep.mubr.bf16.mxu0 0
    %7720 = vmatmul.mubr.bf16.gmra.mrb[0].mxu0 %v7529
    %v7721 = vpop.f32.mrb[0].mxu0
    %v7722 = vadd.f32 %v7505, %v7721
    %v7723 = vpop.f32.mrb[0].mxu0
    %v7724 = vpop.f32.mrb[0].mxu0
    %v7725 = vadd.f32 %v7505, %v7724
    %v7726 = vpop.f32.mrb[0].mxu0
    %7727 = vmatprep.mubr.bf16.mxu0 0
    %7728 = vmatmul.mubr.bf16.gmra.mrb[0].mxu0 %v7532
    %v7729 = vpop.f32.mrb[0].mxu0
    %v7730 = vadd.f32 %v7505, %v7729
    %v7731 = vpop.f32.mrb[0].mxu0
    %v7732 = vpop.f32.mrb[0].mxu0
    %v7733 = vadd.f32 %v7505, %v7732
    %v7734 = vpop.f32.mrb[0].mxu0
    %7735 = vmatprep.mubr.bf16.mxu0 0
    %7736 = vmatmul.mubr.bf16.gmra.mrb[0].mxu0 %v7535
    %v7737 = vpop.f32.mrb[0].mxu0
    %v7738 = vadd.f32 %v7505, %v7737
    %v7739 = vpop.f32.mrb[0].mxu0
    %v7740 = vpop.f32.mrb[0].mxu0
    %v7741 = vadd.f32 %v7505, %v7740
    %v7742 = vpop.f32.mrb[0].mxu0
    %7743 = vmatprep.mubr.bf16.mxu0 0
    %7744 = vmatmul.mubr.bf16.gmra.mrb[0].mxu0 %v7538
    %v7745 = vpop.f32.mrb[0].mxu0
    %v7746 = vadd.f32 %v7505, %v7745
    %v7747 = vpop.f32.mrb[0].mxu0
    %v7748 = vpop.f32.mrb[0].mxu0
    %v7749 = vadd.f32 %v7505, %v7748
    %v7750 = vpop.f32.mrb[0].mxu0
    %7751 = vmatprep.mubr.bf16.mxu0 0
    %7752 = vmatmul.mubr.bf16.gmra.mrb[0].mxu0 %v7541
    %v7753 = vpop.f32.mrb[0].mxu0
    %v7754 = vadd.f32 %v7505, %v7753
    %v7755 = vpop.f32.mrb[0].mxu0
    %v7756 = vpop.f32.mrb[0].mxu0
    %v7757 = vadd.f32 %v7505, %v7756
    %v7758 = vpop.f32.mrb[0].mxu0
    %7759 = vmatprep.mubr.bf16.mxu0 0
    %7760 = vmatmul.mubr.bf16.gmra.mrb[0].mxu0 %v7544
    %v7761 = vpop.f32.mrb[0].mxu0
    %v7762 = vadd.f32 %v7505, %v7761
    %v7763 = vpop.f32.mrb[0].mxu0
    %v7764 = vpop.f32.mrb[0].mxu0
    %v7765 = vadd.f32 %v7505, %v7764
    %v7766 = vpop.f32.mrb[0].mxu0
    %7767 = vmatprep.mubr.bf16.mxu0 0
    %7768 = vmatmul.mubr.bf16.gmra.mrb[0].mxu0 %v7547
    %v7769 = vpop.f32.mrb[0].mxu0
    %v7770 = vadd.f32 %v7505, %v7769
    %v7771 = vpop.f32.mrb[0].mxu0
    %v7772 = vpop.f32.mrb[0].mxu0
    %v7773 = vadd.f32 %v7505, %v7772
    %v7774 = vpop.f32.mrb[0].mxu0
    %7775 = vmatprep.mubr.bf16.mxu0 0
    %7776 = vmatmul.mubr.bf16.gmra.mrb[0].mxu0 %v7550
    %v7777 = vpop.f32.mrb[0].mxu0
    %v7778 = vadd.f32 %v7505, %v7777
    %v7779 = vpop.f32.mrb[0].mxu0
    %v7780 = vpop.f32.mrb[0].mxu0
    %v7781 = vadd.f32 %v7505, %v7780
    %v7782 = vpop.f32.mrb[0].mxu0
    %7783 = vmatprep.mubr.bf16.mxu0 0
    %7784 = vmatmul.mubr.bf16.gmra.mrb[0].mxu0 %v7553
    %v7785 = vpop.f32.mrb[0].mxu0
    %v7786 = vadd.f32 %v7505, %v7785
    %v7787 = vpop.f32.mrb[0].mxu0
    %v7788 = vpop.f32.mrb[0].mxu0
    %v7789 = vadd.f32 %v7505, %v7788
    %v7790 = vpop.f32.mrb[0].mxu0
    %7791 = vmatprep.mubr.bf16.mxu0 0
    %7792 = vmatmul.mubr.bf16.gmra.mrb[0].mxu0 %v7556
    %v7793 = vpop.f32.mrb[0].mxu0
    %v7794 = vadd.f32 %v7505, %v7793
    %v7795 = vpop.f32.mrb[0].mxu0
    %v7796 = vpop.f32.mrb[0].mxu0
    %v7797 = vadd.f32 %v7505, %v7796
    %v7798 = vpop.f32.mrb[0].mxu0
    %7799 = vmatprep.mubr.bf16.mxu0 0
    %7800 = vmatmul.mubr.bf16.gmra.mrb[0].mxu0 %v7559
    %v7801 = vpop.f32.mrb[0].mxu0
    %v7802 = vadd.f32 %v7505, %v7801
    %v7803 = vpop.f32.mrb[0].mxu0
    %v7804 = vpop.f32.mrb[0].mxu0
    %v7805 = vadd.f32 %v7505, %v7804
    %v7806 = vpop.f32.mrb[0].mxu0
    %7807 = vmatprep.mubr.bf16.mxu0 0
    %7808 = vmatmul.mubr.bf16.gmra.mrb[0].mxu0 %v7562
    %v7809 = vpop.f32.mrb[0].mxu0
    %v7810 = vadd.f32 %v7505, %v7809
    %v7811 = vpop.f32.mrb[0].mxu0
    %v7812 = vpop.f32.mrb[0].mxu0
    %v7813 = vadd.f32 %v7505, %v7812
    %v7814 = vpop.f32.mrb[0].mxu0
    %7815 = vmatprep.mubr.bf16.mxu0 0
    %7816 = vmatmul.mubr.bf16.gmra.mrb[0].mxu0 %v7565
    %v7817 = vpop.f32.mrb[0].mxu0
    %v7818 = vadd.f32 %v7505, %v7817
    %v7819 = vpop.f32.mrb[0].mxu0
    %v7820 = vpop.f32.mrb[0].mxu0
    %v7821 = vadd.f32 %v7505, %v7820
    %v7822 = vpop.f32.mrb[0].mxu0
    %7823 = vmatprep.mubr.bf16.mxu0 0
    %7824 = vmatmul.mubr.bf16.gmra.mrb[0].mxu0 %v7568
    %v7825 = vpop.f32.mrb[0].mxu0
    %v7826 = vadd.f32 %v7505, %v7825
    %v7827 = vpop.f32.mrb[0].mxu0
    %v7828 = vpop.f32.mrb[0].mxu0
    %v7829 = vadd.f32 %v7505, %v7828
    %v7830 = vpop.f32.mrb[0].mxu0
    %7831 = vmatprep.mubr.bf16.mxu0 0
    %7832 = vmatmul.mubr.bf16.gmra.mrb[0].mxu0 %v7571
    %v7833 = vpop.f32.mrb[0].mxu0
    %v7834 = vadd.f32 %v7505, %v7833
    %v7835 = vpop.f32.mrb[0].mxu0
    %v7836 = vpop.f32.mrb[0].mxu0
    %v7837 = vadd.f32 %v7505, %v7836
    %v7838 = vpop.f32.mrb[0].mxu0
    %7839 = vmatprep.mubr.bf16.mxu0 0
    %7840 = vmatmul.mubr.bf16.gmra.mrb[0].mxu0 %v7574
    %v7841 = vpop.f32.mrb[0].mxu0
    %v7842 = vadd.f32 %v7505, %v7841
    %v7843 = vpop.f32.mrb[0].mxu0
    %v7844 = vpop.f32.mrb[0].mxu0
    %v7845 = vadd.f32 %v7505, %v7844
    %v7846 = vpop.f32.mrb[0].mxu0
    %7847 = vmatprep.mubr.bf16.mxu0 0
    %7848 = vmatmul.mubr.bf16.gmra.mrb[0].mxu0 %v7577
    %v7849 = vpop.f32.mrb[0].mxu0
    %v7850 = vadd.f32 %v7505, %v7849
    %v7851 = vpop.f32.mrb[0].mxu0
    %v7852 = vpop.f32.mrb[0].mxu0
    %v7853 = vadd.f32 %v7505, %v7852
    %v7854 = vpop.f32.mrb[0].mxu0
    %7855 = vmatprep.mubr.bf16.mxu0 0
    %7856 = vmatmul.mubr.bf16.gmra.mrb[0].mxu0 %v7580
    %v7857 = vpop.f32.mrb[0].mxu0
    %v7858 = vadd.f32 %v7505, %v7857
    %v7859 = vpop.f32.mrb[0].mxu0
    %v7860 = vpop.f32.mrb[0].mxu0
    %v7861 = vadd.f32 %v7505, %v7860
    %v7862 = vpop.f32.mrb[0].mxu0
    %7863 = vmatprep.mubr.bf16.mxu0 0
    %7864 = vmatmul.mubr.bf16.gmra.mrb[0].mxu0 %v7583
    %v7865 = vpop.f32.mrb[0].mxu0
    %v7866 = vadd.f32 %v7505, %v7865
    %v7867 = vpop.f32.mrb[0].mxu0
    %v7868 = vpop.f32.mrb[0].mxu0
    %v7869 = vadd.f32 %v7505, %v7868
    %v7870 = vpop.f32.mrb[0].mxu0
    %7871 = vmatprep.mubr.bf16.mxu0 0
    %7872 = vmatmul.mubr.bf16.gmra.mrb[0].mxu0 %v7586
    %v7873 = vpop.f32.mrb[0].mxu0
    %v7874 = vadd.f32 %v7505, %v7873
    %v7875 = vpop.f32.mrb[0].mxu0
    %v7876 = vpop.f32.mrb[0].mxu0
    %v7877 = vadd.f32 %v7505, %v7876
    %v7878 = vpop.f32.mrb[0].mxu0
    %7879 = vmatprep.mubr.bf16.mxu0 0
    %7880 = vmatmul.mubr.bf16.gmra.mrb[0].mxu0 %v7589
    %v7881 = vpop.f32.mrb[0].mxu0
    %v7882 = vadd.f32 %v7505, %v7881
    %v7883 = vpop.f32.mrb[0].mxu0
    %v7884 = vpop.f32.mrb[0].mxu0
    %v7885 = vadd.f32 %v7505, %v7884
    %v7886 = vpop.f32.mrb[0].mxu0
    %7887 = vmatprep.mubr.bf16.mxu0 0
    %7888 = vmatmul.mubr.bf16.gmra.mrb[0].mxu0 %v7592
    %v7889 = vpop.f32.mrb[0].mxu0
    %v7890 = vadd.f32 %v7505, %v7889
    %v7891 = vpop.f32.mrb[0].mxu0
    %v7892 = vpop.f32.mrb[0].mxu0
    %v7893 = vadd.f32 %v7505, %v7892
    %v7894 = vpop.f32.mrb[0].mxu0
    %7895 = vmatprep.mubr.bf16.mxu0 0
    %7896 = vmatmul.mubr.bf16.gmra.mrb[0].mxu0 %v7595
    %v7897 = vpop.f32.mrb[0].mxu0
    %v7898 = vadd.f32 %v7505, %v7897
    %v7899 = vpop.f32.mrb[0].mxu0
    %v7900 = vpop.f32.mrb[0].mxu0
    %v7901 = vadd.f32 %v7505, %v7900
    %v7902 = vpop.f32.mrb[0].mxu0
    %7903 = vmatprep.mubr.bf16.mxu0 0
    %7904 = vmatmul.mubr.bf16.gmra.mrb[0].mxu0 %v7598
    %v7905 = vpop.f32.mrb[0].mxu0
    %v7906 = vadd.f32 %v7505, %v7905
    %v7907 = vpop.f32.mrb[0].mxu0
    %v7908 = vpop.f32.mrb[0].mxu0
    %v7909 = vadd.f32 %v7505, %v7908
    %v7910 = vpop.f32.mrb[0].mxu0
    %7911 = vmatprep.mubr.bf16.mxu0 0
    %7912 = vmatmul.mubr.bf16.gmra.mrb[0].mxu0 %v7601
    %v7913 = vpop.f32.mrb[0].mxu0
    %v7914 = vadd.f32 %v7505, %v7913
    %v7915 = vpop.f32.mrb[0].mxu0
    %v7916 = vpop.f32.mrb[0].mxu0
    %v7917 = vadd.f32 %v7505, %v7916
    %v7918 = vpop.f32.mrb[0].mxu0
    %7919 = vmatprep.mubr.bf16.mxu0 0
    %7920 = vmatmul.mubr.bf16.gmra.mrb[0].mxu0 %v7604
    %v7921 = vpop.f32.mrb[0].mxu0
    %v7922 = vadd.f32 %v7505, %v7921
    %v7923 = vpop.f32.mrb[0].mxu0
    %v7924 = vpop.f32.mrb[0].mxu0
    %v7925 = vadd.f32 %v7505, %v7924
    %v7926 = vpop.f32.mrb[0].mxu0
    %7927 = vmatprep.mubr.bf16.mxu0 0
    %7928 = vmatmul.mubr.bf16.gmra.mrb[0].mxu0 %v7607
    %v7929 = vpop.f32.mrb[0].mxu0
    %v7930 = vadd.f32 %v7505, %v7929
    %v7931 = vpop.f32.mrb[0].mxu0
    %v7932 = vpop.f32.mrb[0].mxu0
    %v7933 = vadd.f32 %v7505, %v7932
    %v7934 = vpop.f32.mrb[0].mxu0
    %7935 = vmatprep.mubr.bf16.mxu0 0
    %7936 = vmatmul.mubr.bf16.gmra.mrb[0].mxu0 %v7610
    %v7937 = vpop.f32.mrb[0].mxu0
    %v7938 = vadd.f32 %v7505, %v7937
    %v7939 = vpop.f32.mrb[0].mxu0
    %v7940 = vpop.f32.mrb[0].mxu0
    %v7941 = vadd.f32 %v7505, %v7940
    %v7942 = vpop.f32.mrb[0].mxu0
    %7943 = vmatprep.mubr.bf16.mxu0 0
    %7944 = vmatmul.mubr.bf16.gmra.mrb[0].mxu0 %v7613
    %v7945 = vpop.f32.mrb[0].mxu0
    %v7946 = vadd.f32 %v7505, %v7945
    %v7947 = vpop.f32.mrb[0].mxu0
    %v7948 = vpop.f32.mrb[0].mxu0
    %v7949 = vadd.f32 %v7505, %v7948
    %v7950 = vpop.f32.mrb[0].mxu0
    %7951 = vmatprep.mubr.bf16.mxu0 0
    %7952 = vmatmul.mubr.bf16.gmra.mrb[0].mxu0 %v7616
    %v7953 = vpop.f32.mrb[0].mxu0
    %v7954 = vadd.f32 %v7505, %v7953
    %v7955 = vpop.f32.mrb[0].mxu0
    %v7956 = vpop.f32.mrb[0].mxu0
    %v7957 = vadd.f32 %v7505, %v7956
    %v7958 = vpop.f32.mrb[0].mxu0
    %7959 = vmatprep.mubr.bf16.mxu0 0
    %7960 = vmatmul.mubr.bf16.gmra.mrb[0].mxu0 %v7619
    %v7961 = vpop.f32.mrb[0].mxu0
    %v7962 = vadd.f32 %v7505, %v7961
    %v7963 = vpop.f32.mrb[0].mxu0
    %v7964 = vpop.f32.mrb[0].mxu0
    %v7965 = vadd.f32 %v7505, %v7964
    %v7966 = vpop.f32.mrb[0].mxu0
    %7967 = vmatprep.mubr.bf16.mxu0 0
    %7968 = vmatmul.mubr.bf16.gmra.mrb[0].mxu0 %v7622
    %v7969 = vpop.f32.mrb[0].mxu0
    %v7970 = vadd.f32 %v7505, %v7969
    %v7971 = vpop.f32.mrb[0].mxu0
    %v7972 = vpop.f32.mrb[0].mxu0
    %v7973 = vadd.f32 %v7505, %v7972
    %v7974 = vpop.f32.mrb[0].mxu0
    %7975 = vmatprep.mubr.bf16.mxu0 0
    %7976 = vmatmul.mubr.bf16.gmra.mrb[0].mxu0 %v7625
    %v7977 = vpop.f32.mrb[0].mxu0
    %v7978 = vadd.f32 %v7505, %v7977
    %v7979 = vpop.f32.mrb[0].mxu0
    %v7980 = vpop.f32.mrb[0].mxu0
    %v7981 = vadd.f32 %v7505, %v7980
    %v7982 = vpop.f32.mrb[0].mxu0
    %7983 = vmatprep.mubr.bf16.mxu0 0
    %7984 = vmatmul.mubr.bf16.gmra.mrb[0].mxu0 %v7628
    %v7985 = vpop.f32.mrb[0].mxu0
    %v7986 = vadd.f32 %v7505, %v7985
    %v7987 = vpop.f32.mrb[0].mxu0
    %v7988 = vpop.f32.mrb[0].mxu0
    %v7989 = vadd.f32 %v7505, %v7988
    %v7990 = vpop.f32.mrb[0].mxu0
    %7991 = vmatprep.mubr.bf16.mxu0 0
    %7992 = vmatmul.mubr.bf16.gmra.mrb[0].mxu0 %v7631
    %v7993 = vpop.f32.mrb[0].mxu0
    %v7994 = vadd.f32 %v7505, %v7993
    %v7995 = vpop.f32.mrb[0].mxu0
    %v7996 = vpop.f32.mrb[0].mxu0
    %v7997 = vadd.f32 %v7505, %v7996
    %v7998 = vpop.f32.mrb[0].mxu0
    %7999 = vmatprep.mubr.bf16.mxu0 0
    %8000 = vmatmul.mubr.bf16.gmra.mrb[0].mxu0 %v7634
    %v8001 = vpop.f32.mrb[0].mxu0
    %v8002 = vadd.f32 %v7505, %v8001
    %v8003 = vpop.f32.mrb[0].mxu0
    %v8004 = vpop.f32.mrb[0].mxu0
    %v8005 = vadd.f32 %v7505, %v8004
    %v8006 = vpop.f32.mrb[0].mxu0
    %8007 = vmatprep.mubr.bf16.mxu0 0
    %8008 = vmatmul.mubr.bf16.gmra.mrb[0].mxu0 %v7637
    %v8009 = vpop.f32.mrb[0].mxu0
    %v8010 = vadd.f32 %v7505, %v8009
    %v8011 = vpop.f32.mrb[0].mxu0
    %v8012 = vpop.f32.mrb[0].mxu0
    %v8013 = vadd.f32 %v7505, %v8012
    %v8014 = vpop.f32.mrb[0].mxu0
    %8015 = vmatprep.mubr.bf16.mxu0 0
    %8016 = vmatmul.mubr.bf16.gmra.mrb[0].mxu0 %v7640
    %v8017 = vpop.f32.mrb[0].mxu0
    %v8018 = vadd.f32 %v7505, %v8017
    %v8019 = vpop.f32.mrb[0].mxu0
    %v8020 = vpop.f32.mrb[0].mxu0
    %v8021 = vadd.f32 %v7505, %v8020
    %v8022 = vpop.f32.mrb[0].mxu0
    %8023 = vmatprep.mubr.bf16.mxu0 0
    %8024 = vmatmul.mubr.bf16.gmra.mrb[0].mxu0 %v7643
    %v8025 = vpop.f32.mrb[0].mxu0
    %v8026 = vadd.f32 %v7505, %v8025
    %v8027 = vpop.f32.mrb[0].mxu0
    %v8028 = vpop.f32.mrb[0].mxu0
    %v8029 = vadd.f32 %v7505, %v8028
    %v8030 = vpop.f32.mrb[0].mxu0
    %8031 = vmatprep.mubr.bf16.mxu0 0
    %8032 = vmatmul.mubr.bf16.gmra.mrb[0].mxu0 %v7646
    %v8033 = vpop.f32.mrb[0].mxu0
    %v8034 = vadd.f32 %v7505, %v8033
    %v8035 = vpop.f32.mrb[0].mxu0
    %v8036 = vpop.f32.mrb[0].mxu0
    %v8037 = vadd.f32 %v7505, %v8036
    %v8038 = vpop.f32.mrb[0].mxu0
    %8039 = vmatprep.mubr.bf16.mxu0 0
    %8040 = vmatmul.mubr.bf16.gmra.mrb[0].mxu0 %v7649
    %v8041 = vpop.f32.mrb[0].mxu0
    %v8042 = vadd.f32 %v7505, %v8041
    %v8043 = vpop.f32.mrb[0].mxu0
    %v8044 = vpop.f32.mrb[0].mxu0
    %v8045 = vadd.f32 %v7505, %v8044
    %v8046 = vpop.f32.mrb[0].mxu0
    %8047 = vmatprep.mubr.bf16.mxu0 0
    %8048 = vmatmul.mubr.bf16.gmra.mrb[0].mxu0 %v7652
    %v8049 = vpop.f32.mrb[0].mxu0
    %v8050 = vadd.f32 %v7505, %v8049
    %v8051 = vpop.f32.mrb[0].mxu0
    %v8052 = vpop.f32.mrb[0].mxu0
    %v8053 = vadd.f32 %v7505, %v8052
    %v8054 = vpop.f32.mrb[0].mxu0
    %8055 = vmatprep.mubr.bf16.mxu0 0
    %8056 = vmatmul.mubr.bf16.gmra.mrb[0].mxu0 %v7655
    %v8057 = vpop.f32.mrb[0].mxu0
    %v8058 = vadd.f32 %v7505, %v8057
    %v8059 = vpop.f32.mrb[0].mxu0
    %v8060 = vpop.f32.mrb[0].mxu0
    %v8061 = vadd.f32 %v7505, %v8060
    %v8062 = vpop.f32.mrb[0].mxu0
    %8063 = vmatprep.mubr.bf16.mxu0 0
    %8064 = vmatmul.mubr.bf16.gmra.mrb[0].mxu0 %v7658
    %v8065 = vpop.f32.mrb[0].mxu0
    %v8066 = vadd.f32 %v7505, %v8065
    %v8067 = vpop.f32.mrb[0].mxu0
    %v8068 = vpop.f32.mrb[0].mxu0
    %v8069 = vadd.f32 %v7505, %v8068
    %v8070 = vpop.f32.mrb[0].mxu0
    %8071 = vmatprep.mubr.bf16.mxu0 0
    %8072 = vmatmul.mubr.bf16.gmra.mrb[0].mxu0 %v7661
    %v8073 = vpop.f32.mrb[0].mxu0
    %v8074 = vadd.f32 %v7505, %v8073
    %v8075 = vpop.f32.mrb[0].mxu0
    %v8076 = vpop.f32.mrb[0].mxu0
    %v8077 = vadd.f32 %v7505, %v8076
    %v8078 = vpop.f32.mrb[0].mxu0
    %8079 = vdwg.mxu0
    %v8080 = vadd.f32 %v7698, %v64
    %v8081 = vadd.f32 %v7701, %v65
    %v8082 = vadd.f32 %v7706, %v66
    %v8083 = vadd.f32 %v7709, %v67
    %v8084 = vadd.f32 %v7714, %v68
    %v8085 = vadd.f32 %v7717, %v69
    %v8086 = vadd.f32 %v7722, %v70
    %v8087 = vadd.f32 %v7725, %v71
    %v8088 = vadd.f32 %v7730, %v72
    %v8089 = vadd.f32 %v7733, %v73
    %v8090 = vadd.f32 %v7738, %v74
    %v8091 = vadd.f32 %v7741, %v75
    %v8092 = vadd.f32 %v7746, %v76
    %v8093 = vadd.f32 %v7749, %v77
    %v8094 = vadd.f32 %v7754, %v78
    %v8095 = vadd.f32 %v7757, %v79
    %v8096 = vadd.f32 %v7762, %v80
    %v8097 = vadd.f32 %v7765, %v81
    %v8098 = vadd.f32 %v7770, %v82
    %v8099 = vadd.f32 %v7773, %v83
    %v8100 = vadd.f32 %v7778, %v84
    %v8101 = vadd.f32 %v7781, %v85
    %v8102 = vadd.f32 %v7786, %v86
    %v8103 = vadd.f32 %v7789, %v87
    %v8104 = vadd.f32 %v7794, %v88
    %v8105 = vadd.f32 %v7797, %v89
    %v8106 = vadd.f32 %v7802, %v90
    %v8107 = vadd.f32 %v7805, %v91
    %v8108 = vadd.f32 %v7810, %v92
    %v8109 = vadd.f32 %v7813, %v93
    %v8110 = vadd.f32 %v7818, %v94
    %v8111 = vadd.f32 %v7821, %v95
    %v8112 = vadd.f32 %v7826, %v96
    %v8113 = vadd.f32 %v7829, %v97
    %v8114 = vadd.f32 %v7834, %v98
    %v8115 = vadd.f32 %v7837, %v99
    %v8116 = vadd.f32 %v7842, %v100
    %v8117 = vadd.f32 %v7845, %v101
    %v8118 = vadd.f32 %v7850, %v102
    %v8119 = vadd.f32 %v7853, %v103
    %v8120 = vadd.f32 %v7858, %v104
    %v8121 = vadd.f32 %v7861, %v105
    %v8122 = vadd.f32 %v7866, %v106
    %v8123 = vadd.f32 %v7869, %v107
    %v8124 = vadd.f32 %v7874, %v108
    %v8125 = vadd.f32 %v7877, %v109
    %v8126 = vadd.f32 %v7882, %v110
    %v8127 = vadd.f32 %v7885, %v111
    %v8128 = vadd.f32 %v7890, %v112
    %v8129 = vadd.f32 %v7893, %v113
    %v8130 = vadd.f32 %v7898, %v114
    %v8131 = vadd.f32 %v7901, %v115
    %v8132 = vadd.f32 %v7906, %v116
    %v8133 = vadd.f32 %v7909, %v117
    %v8134 = vadd.f32 %v7914, %v118
    %v8135 = vadd.f32 %v7917, %v119
    %v8136 = vadd.f32 %v7922, %v120
    %v8137 = vadd.f32 %v7925, %v121
    %v8138 = vadd.f32 %v7930, %v122
    %v8139 = vadd.f32 %v7933, %v123
    %v8140 = vadd.f32 %v7938, %v124
    %v8141 = vadd.f32 %v7941, %v125
    %v8142 = vadd.f32 %v7946, %v126
    %v8143 = vadd.f32 %v7949, %v127
    %v8144 = vadd.f32 %v7954, %v128
    %v8145 = vadd.f32 %v7957, %v129
    %v8146 = vadd.f32 %v7962, %v130
    %v8147 = vadd.f32 %v7965, %v131
    %v8148 = vadd.f32 %v7970, %v132
    %v8149 = vadd.f32 %v7973, %v133
    %v8150 = vadd.f32 %v7978, %v134
    %v8151 = vadd.f32 %v7981, %v135
    %v8152 = vadd.f32 %v7986, %v136
    %v8153 = vadd.f32 %v7989, %v137
    %v8154 = vadd.f32 %v7994, %v138
    %v8155 = vadd.f32 %v7997, %v139
    %v8156 = vadd.f32 %v8002, %v140
    %v8157 = vadd.f32 %v8005, %v141
    %v8158 = vadd.f32 %v8010, %v142
    %v8159 = vadd.f32 %v8013, %v143
    %v8160 = vadd.f32 %v8018, %v144
    %v8161 = vadd.f32 %v8021, %v145
    %v8162 = vadd.f32 %v8026, %v146
    %v8163 = vadd.f32 %v8029, %v147
    %v8164 = vadd.f32 %v8034, %v148
    %v8165 = vadd.f32 %v8037, %v149
    %v8166 = vadd.f32 %v8042, %v150
    %v8167 = vadd.f32 %v8045, %v151
    %v8168 = vadd.f32 %v8050, %v152
    %v8169 = vadd.f32 %v8053, %v153
    %v8170 = vadd.f32 %v8058, %v154
    %v8171 = vadd.f32 %v8061, %v155
    %v8172 = vadd.f32 %v8066, %v156
    %v8173 = vadd.f32 %v8069, %v157
    %v8174 = vadd.f32 %v8074, %v158
    %v8175 = vadd.f32 %v8077, %v159
    %8188 = vrot.lane.b32.xlu0 %v8092, 32
    %v8189 = vpop.permute.xlu0 %8188
    %8190 = vrot.lane.b32.xlu0 %v8093, 32
    %v8191 = vpop.permute.xlu0 %8190
    %8192 = vrot.lane.b32.xlu0 %v8094, 32
    %v8193 = vpop.permute.xlu0 %8192
    %8194 = vrot.lane.b32.xlu0 %v8095, 32
    %v8195 = vpop.permute.xlu0 %8194
    %8196 = vrot.lane.b32.xlu0 %v8096, 32
    %v8197 = vpop.permute.xlu0 %8196
    %8198 = vrot.lane.b32.xlu0 %v8097, 32
    %v8199 = vpop.permute.xlu0 %8198
    %8200 = vrot.lane.b32.xlu0 %v8098, 32
    %v8201 = vpop.permute.xlu0 %8200
    %8202 = vrot.lane.b32.xlu0 %v8099, 32
    %v8203 = vpop.permute.xlu0 %8202
    %8204 = vrot.lane.b32.xlu0 %v8100, 32
    %v8205 = vpop.permute.xlu0 %8204
    %8206 = vrot.lane.b32.xlu0 %v8101, 32
    %v8207 = vpop.permute.xlu0 %8206
    %8208 = vrot.lane.b32.xlu0 %v8102, 32
    %v8209 = vpop.permute.xlu0 %8208
    %8210 = vrot.lane.b32.xlu0 %v8103, 32
    %v8211 = vpop.permute.xlu0 %8210
    %8236 = vrot.lane.b32.xlu0 %v8104, 64
    %v8237 = vpop.permute.xlu0 %8236
    %8238 = vrot.lane.b32.xlu0 %v8105, 64
    %v8239 = vpop.permute.xlu0 %8238
    %8240 = vrot.lane.b32.xlu0 %v8106, 64
    %v8241 = vpop.permute.xlu0 %8240
    %8242 = vrot.lane.b32.xlu0 %v8107, 64
    %v8243 = vpop.permute.xlu0 %8242
    %8244 = vrot.lane.b32.xlu0 %v8108, 64
    %v8245 = vpop.permute.xlu0 %8244
    %8246 = vrot.lane.b32.xlu0 %v8109, 64
    %v8247 = vpop.permute.xlu0 %8246
    %8248 = vrot.lane.b32.xlu0 %v8110, 64
    %v8249 = vpop.permute.xlu0 %8248
    %8250 = vrot.lane.b32.xlu0 %v8111, 64
    %v8251 = vpop.permute.xlu0 %8250
    %8252 = vrot.lane.b32.xlu0 %v8112, 64
    %v8253 = vpop.permute.xlu0 %8252
    %8254 = vrot.lane.b32.xlu0 %v8113, 64
    %v8255 = vpop.permute.xlu0 %8254
    %8256 = vrot.lane.b32.xlu0 %v8114, 64
    %v8257 = vpop.permute.xlu0 %8256
    %8258 = vrot.lane.b32.xlu0 %v8115, 64
    %v8259 = vpop.permute.xlu0 %8258
    %8284 = vrot.lane.b32.xlu0 %v8116, 96
    %v8285 = vpop.permute.xlu0 %8284
    %8286 = vrot.lane.b32.xlu0 %v8117, 96
    %v8287 = vpop.permute.xlu0 %8286
    %8288 = vrot.lane.b32.xlu0 %v8118, 96
    %v8289 = vpop.permute.xlu0 %8288
    %8290 = vrot.lane.b32.xlu0 %v8119, 96
    %v8291 = vpop.permute.xlu0 %8290
    %8292 = vrot.lane.b32.xlu0 %v8120, 96
    %v8293 = vpop.permute.xlu0 %8292
    %8294 = vrot.lane.b32.xlu0 %v8121, 96
    %v8295 = vpop.permute.xlu0 %8294
    %8296 = vrot.lane.b32.xlu0 %v8122, 96
    %v8297 = vpop.permute.xlu0 %8296
    %8298 = vrot.lane.b32.xlu0 %v8123, 96
    %v8299 = vpop.permute.xlu0 %8298
    %8300 = vrot.lane.b32.xlu0 %v8124, 96
    %v8301 = vpop.permute.xlu0 %8300
    %8302 = vrot.lane.b32.xlu0 %v8125, 96
    %v8303 = vpop.permute.xlu0 %8302
    %8304 = vrot.lane.b32.xlu0 %v8126, 96
    %v8305 = vpop.permute.xlu0 %8304
    %8306 = vrot.lane.b32.xlu0 %v8127, 96
    %v8307 = vpop.permute.xlu0 %8306
    %8332 = vrot.lane.b32.xlu0 %v8140, 32
    %v8333 = vpop.permute.xlu0 %8332
    %8334 = vrot.lane.b32.xlu0 %v8141, 32
    %v8335 = vpop.permute.xlu0 %8334
    %8336 = vrot.lane.b32.xlu0 %v8142, 32
    %v8337 = vpop.permute.xlu0 %8336
    %8338 = vrot.lane.b32.xlu0 %v8143, 32
    %v8339 = vpop.permute.xlu0 %8338
    %8340 = vrot.lane.b32.xlu0 %v8144, 32
    %v8341 = vpop.permute.xlu0 %8340
    %8342 = vrot.lane.b32.xlu0 %v8145, 32
    %v8343 = vpop.permute.xlu0 %8342
    %8344 = vrot.lane.b32.xlu0 %v8146, 32
    %v8345 = vpop.permute.xlu0 %8344
    %8346 = vrot.lane.b32.xlu0 %v8147, 32
    %v8347 = vpop.permute.xlu0 %8346
    %8348 = vrot.lane.b32.xlu0 %v8148, 32
    %v8349 = vpop.permute.xlu0 %8348
    %8350 = vrot.lane.b32.xlu0 %v8149, 32
    %v8351 = vpop.permute.xlu0 %8350
    %8352 = vrot.lane.b32.xlu0 %v8150, 32
    %v8353 = vpop.permute.xlu0 %8352
    %8354 = vrot.lane.b32.xlu0 %v8151, 32
    %v8355 = vpop.permute.xlu0 %8354
    %8380 = vrot.lane.b32.xlu0 %v8152, 64
    %v8381 = vpop.permute.xlu0 %8380
    %8382 = vrot.lane.b32.xlu0 %v8153, 64
    %v8383 = vpop.permute.xlu0 %8382
    %8384 = vrot.lane.b32.xlu0 %v8154, 64
    %v8385 = vpop.permute.xlu0 %8384
    %8386 = vrot.lane.b32.xlu0 %v8155, 64
    %v8387 = vpop.permute.xlu0 %8386
    %8388 = vrot.lane.b32.xlu0 %v8156, 64
    %v8389 = vpop.permute.xlu0 %8388
    %8390 = vrot.lane.b32.xlu0 %v8157, 64
    %v8391 = vpop.permute.xlu0 %8390
    %8392 = vrot.lane.b32.xlu0 %v8158, 64
    %v8393 = vpop.permute.xlu0 %8392
    %8394 = vrot.lane.b32.xlu0 %v8159, 64
    %v8395 = vpop.permute.xlu0 %8394
    %8396 = vrot.lane.b32.xlu0 %v8160, 64
    %v8397 = vpop.permute.xlu0 %8396
    %8398 = vrot.lane.b32.xlu0 %v8161, 64
    %v8399 = vpop.permute.xlu0 %8398
    %8400 = vrot.lane.b32.xlu0 %v8162, 64
    %v8401 = vpop.permute.xlu0 %8400
    %8402 = vrot.lane.b32.xlu0 %v8163, 64
    %v8403 = vpop.permute.xlu0 %8402
    %8428 = vrot.lane.b32.xlu0 %v8164, 96
    %v8429 = vpop.permute.xlu0 %8428
    %8430 = vrot.lane.b32.xlu0 %v8165, 96
    %v8431 = vpop.permute.xlu0 %8430
    %8432 = vrot.lane.b32.xlu0 %v8166, 96
    %v8433 = vpop.permute.xlu0 %8432
    %8434 = vrot.lane.b32.xlu0 %v8167, 96
    %v8435 = vpop.permute.xlu0 %8434
    %8436 = vrot.lane.b32.xlu0 %v8168, 96
    %v8437 = vpop.permute.xlu0 %8436
    %8438 = vrot.lane.b32.xlu0 %v8169, 96
    %v8439 = vpop.permute.xlu0 %8438
    %8440 = vrot.lane.b32.xlu0 %v8170, 96
    %v8441 = vpop.permute.xlu0 %8440
    %8442 = vrot.lane.b32.xlu0 %v8171, 96
    %v8443 = vpop.permute.xlu0 %8442
    %8444 = vrot.lane.b32.xlu0 %v8172, 96
    %v8445 = vpop.permute.xlu0 %8444
    %8446 = vrot.lane.b32.xlu0 %v8173, 96
    %v8447 = vpop.permute.xlu0 %8446
    %8448 = vrot.lane.b32.xlu0 %v8174, 96
    %v8449 = vpop.permute.xlu0 %8448
    %8450 = vrot.lane.b32.xlu0 %v8175, 96
    %v8451 = vpop.permute.xlu0 %8450
    %v8464 = vsel %vm162, %v8080, %v8189
    %v8465 = vsel %vm162, %v8081, %v8191
    %v8466 = vsel %vm162, %v8082, %v8193
    %v8467 = vsel %vm162, %v8083, %v8195
    %v8468 = vsel %vm162, %v8084, %v8197
    %v8469 = vsel %vm162, %v8085, %v8199
    %v8470 = vsel %vm162, %v8086, %v8201
    %v8471 = vsel %vm162, %v8087, %v8203
    %v8472 = vsel %vm162, %v8088, %v8205
    %v8473 = vsel %vm162, %v8089, %v8207
    %v8474 = vsel %vm162, %v8090, %v8209
    %v8475 = vsel %vm162, %v8091, %v8211
    %vm8476 = vcmask 523264
    %v8477 = vsel %vm8476, %v8464, %v8237
    %v8478 = vsel %vm8476, %v8465, %v8239
    %v8479 = vsel %vm8476, %v8466, %v8241
    %v8480 = vsel %vm8476, %v8467, %v8243
    %v8481 = vsel %vm8476, %v8468, %v8245
    %v8482 = vsel %vm8476, %v8469, %v8247
    %v8483 = vsel %vm8476, %v8470, %v8249
    %v8484 = vsel %vm8476, %v8471, %v8251
    %v8485 = vsel %vm8476, %v8472, %v8253
    %v8486 = vsel %vm8476, %v8473, %v8255
    %v8487 = vsel %vm8476, %v8474, %v8257
    %v8488 = vsel %vm8476, %v8475, %v8259
    %vm8489 = vcmask 785408
    %v8490 = vsel %vm8489, %v8477, %v8285
    %v8491 = vsel %vm8489, %v8478, %v8287
    %v8492 = vsel %vm8489, %v8479, %v8289
    %v8493 = vsel %vm8489, %v8480, %v8291
    %v8494 = vsel %vm8489, %v8481, %v8293
    %v8495 = vsel %vm8489, %v8482, %v8295
    %v8496 = vsel %vm8489, %v8483, %v8297
    %v8497 = vsel %vm8489, %v8484, %v8299
    %v8498 = vsel %vm8489, %v8485, %v8301
    %v8499 = vsel %vm8489, %v8486, %v8303
    %v8500 = vsel %vm8489, %v8487, %v8305
    %v8501 = vsel %vm8489, %v8488, %v8307
    %v8502 = vsel %vm162, %v8128, %v8333
    %v8503 = vsel %vm162, %v8129, %v8335
    %v8504 = vsel %vm162, %v8130, %v8337
    %v8505 = vsel %vm162, %v8131, %v8339
    %v8506 = vsel %vm162, %v8132, %v8341
    %v8507 = vsel %vm162, %v8133, %v8343
    %v8508 = vsel %vm162, %v8134, %v8345
    %v8509 = vsel %vm162, %v8135, %v8347
    %v8510 = vsel %vm162, %v8136, %v8349
    %v8511 = vsel %vm162, %v8137, %v8351
    %v8512 = vsel %vm162, %v8138, %v8353
    %v8513 = vsel %vm162, %v8139, %v8355
    %v8514 = vsel %vm8476, %v8502, %v8381
    %v8515 = vsel %vm8476, %v8503, %v8383
    %v8516 = vsel %vm8476, %v8504, %v8385
    %v8517 = vsel %vm8476, %v8505, %v8387
    %v8518 = vsel %vm8476, %v8506, %v8389
    %v8519 = vsel %vm8476, %v8507, %v8391
    %v8520 = vsel %vm8476, %v8508, %v8393
    %v8521 = vsel %vm8476, %v8509, %v8395
    %v8522 = vsel %vm8476, %v8510, %v8397
    %v8523 = vsel %vm8476, %v8511, %v8399
    %v8524 = vsel %vm8476, %v8512, %v8401
    %v8525 = vsel %vm8476, %v8513, %v8403
    %v8526 = vsel %vm8489, %v8514, %v8429
    %v8527 = vsel %vm8489, %v8515, %v8431
    %v8528 = vsel %vm8489, %v8516, %v8433
    %v8529 = vsel %vm8489, %v8517, %v8435
    %v8530 = vsel %vm8489, %v8518, %v8437
    %v8531 = vsel %vm8489, %v8519, %v8439
    %v8532 = vsel %vm8489, %v8520, %v8441
    %v8533 = vsel %vm8489, %v8521, %v8443
    %v8534 = vsel %vm8489, %v8522, %v8445
    %v8535 = vsel %vm8489, %v8523, %v8447
    %v8536 = vsel %vm8489, %v8524, %v8449
    %v8537 = vsel %vm8489, %v8525, %v8451
    %8538 = vst [vmem:[%s11] sm:$0xff] %v8490
    %8539 = vst [vmem:[%s11 + $0x8] sm:$0xff] %v8526
    %8540 = vst [vmem:[%s11 + $0x10] sm:$0xff] %v8491
    %8541 = vst [vmem:[%s11 + $0x18] sm:$0xff] %v8527
    %8542 = vst [vmem:[%s11 + $0x20] sm:$0xff] %v8492
    %8543 = vst [vmem:[%s11 + $0x28] sm:$0xff] %v8528
    %8544 = vst [vmem:[%s11 + $0x30] sm:$0xff] %v8493
    %8545 = vst [vmem:[%s11 + $0x38] sm:$0xff] %v8529
    %8546 = vst [vmem:[%s11 + $0x40] sm:$0xff] %v8494
    %8547 = vst [vmem:[%s11 + $0x48] sm:$0xff] %v8530
    %8548 = vst [vmem:[%s11 + $0x50] sm:$0xff] %v8495
    %8549 = vst [vmem:[%s11 + $0x58] sm:$0xff] %v8531
    %8550 = vst [vmem:[%s11 + $0x60] sm:$0xff] %v8496
    %8551 = vst [vmem:[%s11 + $0x68] sm:$0xff] %v8532
    %8552 = vst [vmem:[%s11 + $0x70] sm:$0xff] %v8497
    %8553 = vst [vmem:[%s11 + $0x78] sm:$0xff] %v8533
    %8554 = vst [vmem:[%s11 + $0x80] sm:$0xff] %v8498
    %8555 = vst [vmem:[%s11 + $0x88] sm:$0xff] %v8534
    %8556 = vst [vmem:[%s11 + $0x90] sm:$0xff] %v8499
    %8557 = vst [vmem:[%s11 + $0x98] sm:$0xff] %v8535
    %8558 = vst [vmem:[%s11 + $0xa0] sm:$0xff] %v8500
    %8559 = vst [vmem:[%s11 + $0xa8] sm:$0xff] %v8536
    %8560 = vst [vmem:[%s11 + $0xb0] sm:$0xff] %v8501
    %8561 = vst [vmem:[%s11 + $0xb8] sm:$0xff] %v8537
    // Predicated region
    $region54: #{block_gmlp_layer.1} parent=1 // pred_check
      _
    $region55: #{block_gmlp_layer.1} parent=1 // pred_check_branch
      %8563 = sbr.rel (0) target = $region57
    $region56: #{block_gmlp_layer.1} parent=1 // pred_region
      _
    $region57: #{block_gmlp_layer.1} parent=1 // pred_fallthru
      _
    // Predicated region
    $region58: #{block_gmlp_layer.1} parent=1 // pred_check
      _
    $region59: #{block_gmlp_layer.1} parent=1 // pred_check_branch
      %8565 = sbr.rel (0) target = $region61
    $region60: #{block_gmlp_layer.1} parent=1 // pred_region
      _
    $region61: #{block_gmlp_layer.1} parent=1 // pred_fallthru
      _
    %8566 = vsyncpa [#allocation3], 1
    %8567 = vsyncpa [#allocation5], 1

</llo_original>
